<compile_context>
chip_gen: v7x
topology: tpu7x:2x2x1
jax: 0.10.0
libtpu: 0.0.40
codegen_flags: <defaults>
</compile_context>

<pallas_src>
import functools

import jax
import jax.numpy as jnp
from jax import lax
from jax.experimental import pallas as pl
from jax.experimental.pallas import tpu as pltpu


# ----------------------------------------------------------------------------
# Dynamic routing, batched over lane segments.
#
# slabs:   list of (C, W) arrays.  Each W-lane row is a concatenation of
#          independent "units" (one per (sample, ...) pair); one capsule
#          vector lives in one lane segment.
# seg_sum: (W, W) block-diagonal ones matrix.  X @ seg_sum puts, in every
#          lane, the sum of X over that lane's segment (sum + broadcast in a
#          single matmul).
# Faithful to the reference Routing module (n_iters - 1 update steps,
# squared-norm squash, logits accumulated with pre-softmax b).
# ----------------------------------------------------------------------------
def _route_seg(slabs, seg_sum, n_iters):
    M = len(slabs)
    C, W = slabs[0].shape
    f32 = jnp.float32
    logits = [jnp.zeros((C, W), f32) for _ in range(M)]
    vj = jnp.zeros((C, W), f32)
    for _ in range(n_iters - 1):
        mx = logits[0]
        for m in range(1, M):
            mx = jnp.maximum(mx, logits[m])
        es = [jnp.exp(lg - mx) for lg in logits]
        den = es[0]
        for m in range(1, M):
            den = den + es[m]
        inv = pl.reciprocal(den, approx=True)
        sj = (es[0] * inv) * slabs[0]
        for m in range(1, M):
            sj = sj + (es[m] * inv) * slabs[m]
        sq = jnp.dot(sj * sj, seg_sum, preferred_element_type=f32)
        vj = (sq * pl.reciprocal(1.0 + sq, approx=True)
              * sj * pl.reciprocal(sq + 1e-8, approx=True))
        prod = jnp.concatenate([slabs[m] * vj for m in range(M)], axis=0)
        upd = jnp.dot(prod, seg_sum, preferred_element_type=f32)
        logits = [logits[m] + upd[m * C:(m + 1) * C, :] for m in range(M)]
    return vj


# ----------------------------------------------------------------------------
# Fused TimeCaps forward for one block of TB samples (one grid step).
# ----------------------------------------------------------------------------
def _timecaps_kernel(x_ref, w1_ref, w2_ref, wa_ref, wb_ref, wkb_ref,
                     wda_ref, wdb_ref, sL_ref, sLn_ref, s32_ref, p_ref,
                     sod_ref, o_ref,
                     *, L, g1, g2, g3, gB, cp, n, Ln, cSA, aSA, CoA,
                     p1, p2, pA, pB, TB, n_iters):
    f32 = jnp.float32
    TBL = TB * L
    x = x_ref[0]                                       # (1, TB*L), lane-batched

    lane = lax.broadcasted_iota(jnp.int32, (1, TBL), 1)
    pos_L = lane % L
    pos_Ln = lane % Ln
    ones_row = jnp.ones((1, TBL), f32)

    def shifted(a, d):
        # y[:, i] = a[:, i + d], zeros where i + d is out of [0, TBL).
        if d == 0:
            return a
        z = jnp.zeros((a.shape[0], abs(d)), f32)
        if d > 0:
            return jnp.concatenate([a[:, d:], z], axis=1)
        return jnp.concatenate([z, a[:, :TBL + d]], axis=1)

    def stack_taps(a, g, pad, pos, win):
        # Build the (g*Cin, TB*L) conv operand: tap-t block is `a` shifted by
        # (t - pad), zeroed outside each `win`-lane window (sample / segment
        # seams), so one matmul does the whole conv.
        blocks = []
        for t in range(g):
            d = t - pad
            m = ((pos + d >= 0) & (pos + d < win)).astype(f32)
            blocks.append(shifted(a, d) * m)
        return jnp.concatenate(blocks, axis=0)

    # ---- conv1: Conv1d(1 -> K, g1, 'same', no bias) -------------------------
    h = jnp.dot(w1_ref[...], stack_taps(x, g1, p1, pos_L, L),
                preferred_element_type=f32)                      # (K, TBL)

    # ============================ Cell_A =====================================
    # psi_m: Conv1d(K -> K, g2, 'same', no bias) -> single matmul.
    m_act = jnp.dot(w2_ref[...], stack_taps(h, g2, p2, pos_L, L),
                    preferred_element_type=f32)                  # (K, TBL)
    # squash over the time axis (per channel, per sample).
    s_L = sL_ref[...]
    sq = jnp.dot(m_act * m_act, s_L, preferred_element_type=f32)
    msq = (sq * pl.reciprocal(1.0 + sq, approx=True)
           * m_act * pl.reciprocal(sq + 1e-8, approx=True))

    # psi_m_A: strided Conv2d via zero-expanded, channel-permuted weights;
    # bias folded through the trailing ones row.
    a3 = jnp.concatenate([stack_taps(msq, g3, pA, pos_L, L), ones_row], axis=0)
    xa = jnp.dot(wa_ref[...], a3, preferred_element_type=f32)    # (cp*CoA, TBL)
    slabs_a = [xa[hh * CoA:(hh + 1) * CoA, :] for hh in range(cp)]
    vja = _route_seg(slabs_a, s_L, n_iters)                      # (CoA, TBL)

    # ============================ Cell_B =====================================
    h_aug = jnp.concatenate([h, ones_row], axis=0)
    b_full = jnp.dot(wb_ref[...], h_aug, preferred_element_type=f32)  # (CB, TBL)
    a4 = jnp.concatenate([stack_taps(b_full, gB, pB, pos_Ln, Ln), ones_row],
                         axis=0)
    xb = jnp.dot(wkb_ref[...], a4, preferred_element_type=f32)   # (CoB, TBL)
    # squash per (channel, sample, segment) over Ln.
    s_Ln = sLn_ref[...]
    sqb = jnp.dot(xb * xb, s_Ln, preferred_element_type=f32)
    xbs = (sqb * pl.reciprocal(1.0 + sqb, approx=True)
           * xb * pl.reciprocal(sqb + 1e-8, approx=True))
    # Permute lanes sample-major -> segment-major so the n routing slabs are
    # contiguous lane blocks (one small matmul, no gathers).
    xbp = jnp.dot(xbs, p_ref[...], preferred_element_type=f32)   # (CoB, TBL)
    tbl_n = TB * Ln
    slabs_b = [xbp[:, hh * tbl_n:(hh + 1) * tbl_n] for hh in range(n)]
    vjb = _route_seg(slabs_b, s32_ref[...], n_iters)             # (CoB, TB*Ln)

    # ============================ DigitCaps ==================================
    # u[m, s*NC*Od + j*Od + o] = (alpha*X_A ++ beta*X_B)[s, m, :] @ W[j, :, o]
    # via per-sample block-diagonal weights (alpha/beta folded on host), so
    # the output is already in routing layout.
    u = jnp.dot(vjb, wdb_ref[...], preferred_element_type=f32)   # (cSA, TB*NC*Od)
    for a in range(aSA):
        u = u + jnp.dot(vja[a * cSA:(a + 1) * cSA, :],
                        wda_ref[a * TBL:(a + 1) * TBL, :],
                        preferred_element_type=f32)
    slabs_d = [u[m:m + 1, :] for m in range(cSA)]
    vd = _route_seg(slabs_d, sod_ref[...], n_iters)              # (1, TB*NC*Od)
    o_ref[0] = vd


# ----------------------------------------------------------------------------
# Wrapper: tiny one-off host-side weight re-layouts + the fused pallas_call.
# ----------------------------------------------------------------------------
def timecaps_forward(params, x, cfg, n_iters=3, tb=8):
    L, K, n = cfg["L"], cfg["K"], cfg["n"]
    g1, g2, g3, gB = cfg["g1"], cfg["g2"], cfg["g3"], cfg["gB"]
    cp, ap = cfg["cp"], cfg["ap"]
    cSA, aSA = cfg["cSA"], cfg["aSA"]
    cb, ab = cfg["cb"], cfg["ab"]
    cSB, aSB = cfg["cSB"], cfg["aSB"]
    n_classes = cfg["n_classes"]
    Ln = L // n
    CoA = cSA * aSA
    CB = cb * ab
    CoB = cSB * aSB
    Od = 32
    p1 = (g1 - 1) // 2
    p2 = (g2 - 1) // 2
    pA = (g3 - 1) // 2
    pB = 2                         # reference hard-codes int(5/2 - 0.5)

    # Implicit constraints of the reference module.
    assert n_iters >= 2
    assert L % n == 0
    assert cp * ap == K
    assert g1 % 2 == 1 and g2 % 2 == 1 and g3 % 2 == 1 and gB % 2 == 1
    assert cSB * aSB == cSA, "torch concat requires cSB*aSB == cSA"
    assert cSA == aSA, "digit_caps input_dim formula requires cSA == aSA"
    # TODO(synk): gB != 2*pB+1 changes the psi_k_B output width; only the
    # reference configuration (gB=5, pad_B=2) is supported here.
    assert gB == 2 * pB + 1
    D = aSA * L + Ln
    assert params["digit_W"].shape[1] == D

    f32 = jnp.float32
    N = x.shape[0]
    n_blk = -(-N // tb)                     # cdiv
    n_pad = n_blk * tb
    TBL = tb * L
    WOUT = tb * n_classes * Od

    xf = x.astype(f32).reshape(N, L)
    if n_pad != N:
        xf = jnp.pad(xf, ((0, n_pad - N), (0, 0)))
    x3 = xf.reshape(n_blk, 1, TBL)          # TB samples lane-concatenated

    # ---- one-off weight re-layouts (tiny, host side) -------------------------
    w1 = params["conv1_w"].reshape(K, g1).astype(f32)
    w2 = params["psi_m_w"].transpose(0, 2, 1).reshape(K, g2 * K).astype(f32)

    # psi_m_A: permute output channels o = m*aSA + a -> row o' = a*cSA + m so
    # the DigitCaps regroup becomes contiguous row blocks of the routed output;
    # zero-expand over the strided input-channel window; tap-major; bias folded
    # as a trailing column (multiplied by an in-kernel ones row).
    perm = jnp.array([m * aSA + a for a in range(aSA) for m in range(cSA)],
                     dtype=jnp.int32)
    wa_p = params["psi_m_A_w"].astype(f32)[perm]                  # (CoA, ap, g3)
    ba_p = params["psi_m_A_b"].astype(f32)[perm]                  # (CoA,)
    wfull = jnp.zeros((cp, CoA, K, g3), f32)
    for hh in range(cp):
        wfull = wfull.at[hh, :, hh * ap:(hh + 1) * ap, :].set(wa_p)
    wa_s = wfull.transpose(0, 1, 3, 2).reshape(cp * CoA, g3 * K)
    wa_sb = jnp.concatenate(
        [wa_s, jnp.tile(ba_p, cp).reshape(cp * CoA, 1)], axis=1)  # (cp*CoA, g3*K+1)

    wb_b = jnp.concatenate([params["convB_w"].reshape(CB, K).astype(f32),
                            params["convB_b"].reshape(CB, 1).astype(f32)],
                           axis=1)                                # (CB, K+1)
    wkb_s = params["psi_k_B_w"].astype(f32).transpose(0, 2, 1).reshape(CoB, gB * CB)
    wkb_sb = jnp.concatenate([wkb_s,
                              params["psi_k_B_b"].reshape(CoB, 1).astype(f32)],
                             axis=1)                              # (CoB, gB*CB+1)

    # DigitCaps weights: alpha/beta folded in; per-sample block-diagonal so the
    # lane-batched matmul output lands directly in digit-routing layout.
    wd = params["digit_W"].transpose(1, 0, 2).reshape(D, n_classes * Od).astype(f32)
    wd_a = params["alpha"].astype(f32) * wd[:aSA * L]
    wd_b = params["beta"].astype(f32) * wd[aSA * L:]
    eye_tb = jnp.eye(tb, dtype=f32)
    wda_bd = jnp.concatenate(
        [jnp.kron(eye_tb, wd_a[a * L:(a + 1) * L, :]) for a in range(aSA)],
        axis=0)                                                   # (aSA*TBL, WOUT)
    wdb_bd = jnp.kron(eye_tb, wd_b)                               # (tb*Ln, WOUT)

    # Constant block-diagonal segment-sum / permutation matrices.
    s_L = jnp.kron(jnp.eye(tb, dtype=f32), jnp.ones((L, L), f32))           # (TBL, TBL)
    s_Ln = jnp.kron(jnp.eye(tb * n, dtype=f32), jnp.ones((Ln, Ln), f32))    # (TBL, TBL)
    s_32 = jnp.kron(jnp.eye(tb, dtype=f32), jnp.ones((Ln, Ln), f32))        # (tb*Ln, tb*Ln)
    s_Od = jnp.kron(jnp.eye(tb * n_classes, dtype=f32),
                    jnp.ones((Od, Od), f32))                                # (WOUT, WOUT)
    old = jnp.arange(TBL)
    new = (old % L) // Ln * (tb * Ln) + (old // L) * Ln + (old % Ln)
    p_mat = jax.nn.one_hot(new, TBL, dtype=f32)        # sample-major -> segment-major

    kernel = functools.partial(
        _timecaps_kernel, L=L, g1=g1, g2=g2, g3=g3, gB=gB, cp=cp, n=n, Ln=Ln,
        cSA=cSA, aSA=aSA, CoA=CoA, p1=p1, p2=p2, pA=pA, pB=pB, TB=tb,
        n_iters=n_iters)

    out = pl.pallas_call(
        kernel,
        out_shape=jax.ShapeDtypeStruct((n_blk, 1, WOUT), f32),
        grid=(n_blk,),
        in_specs=[
            pl.BlockSpec((1, 1, TBL), lambda i: (i, 0, 0)),
            pl.BlockSpec((K, g1), lambda i: (0, 0)),
            pl.BlockSpec((K, g2 * K), lambda i: (0, 0)),
            pl.BlockSpec((cp * CoA, g3 * K + 1), lambda i: (0, 0)),
            pl.BlockSpec((CB, K + 1), lambda i: (0, 0)),
            pl.BlockSpec((CoB, gB * CB + 1), lambda i: (0, 0)),
            pl.BlockSpec((aSA * TBL, WOUT), lambda i: (0, 0)),
            pl.BlockSpec((tb * Ln, WOUT), lambda i: (0, 0)),
            pl.BlockSpec((TBL, TBL), lambda i: (0, 0)),
            pl.BlockSpec((TBL, TBL), lambda i: (0, 0)),
            pl.BlockSpec((tb * Ln, tb * Ln), lambda i: (0, 0)),
            pl.BlockSpec((TBL, TBL), lambda i: (0, 0)),
            pl.BlockSpec((WOUT, WOUT), lambda i: (0, 0)),
        ],
        out_specs=pl.BlockSpec((1, 1, WOUT), lambda i: (i, 0, 0)),
        compiler_params=pltpu.CompilerParams(
            dimension_semantics=("parallel",)),
    )(x3, w1, w2, wa_sb, wb_b, wkb_sb, wda_bd, wdb_bd,
      s_L, s_Ln, s_32, p_mat, s_Od)

    return out.reshape(n_pad, n_classes * Od)[:N].reshape(N, n_classes, Od)


# ----------------------------------------------------------------------------
def init_params(cfg, key):
    L, K = cfg["L"], cfg["K"]
    cp, ap = cfg["cp"], cfg["ap"]
    cSA, aSA = cfg["cSA"], cfg["aSA"]
    cb, ab = cfg["cb"], cfg["ab"]
    cSB, aSB = cfg["cSB"], cfg["aSB"]
    g1, g2, g3, gB = cfg["g1"], cfg["g2"], cfg["g3"], cfg["gB"]
    n_classes = cfg["n_classes"]
    Ln = L // cfg["n"]
    ks = jax.random.split(key, 9)
    f32 = jnp.float32
    return {
        "conv1_w":   0.1 * jax.random.normal(ks[0], (K, 1, g1), f32),
        "psi_m_w":   0.1 * jax.random.normal(ks[1], (K, K, g2), f32),
        "psi_m_A_w": 0.1 * jax.random.normal(ks[2], (cSA * aSA, ap, g3), f32),
        "psi_m_A_b": 0.01 * jax.random.normal(ks[3], (cSA * aSA,), f32),
        "convB_w":   0.1 * jax.random.normal(ks[4], (cb * ab, K, 1), f32),
        "convB_b":   0.01 * jax.random.normal(ks[5], (cb * ab,), f32),
        "psi_k_B_w": 0.1 * jax.random.normal(ks[6], (cSB * aSB, cb * ab, gB), f32),
        "psi_k_B_b": 0.01 * jax.random.normal(ks[7], (cSB * aSB,), f32),
        "digit_W":   0.1 * jax.random.normal(ks[8], (n_classes, cSA * L + Ln, 32), f32),
        "alpha": jnp.float32(0.5),
        "beta":  jnp.float32(0.5),
    }


if __name__ == "__main__":
    cfg = dict(L=16, K=8, g1=3, cp=4, ap=2, g2=3, n=4,
               cSA=4, aSA=4, g3=3, cb=2, ab=2, cSB=2, aSB=2, gB=5,
               n_classes=3)

    key = jax.random.PRNGKey(0)
    k_in, k_par = jax.random.split(key)
    params = init_params(cfg, k_par)

    N = 16                                   # 2 grid steps of TB=8 samples each
    x = jax.random.normal(k_in, (N, 1, cfg["L"]), jnp.float32)   # (N, 1, L)

    fwd = jax.jit(functools.partial(timecaps_forward, cfg=cfg))
    out = jax.block_until_ready(fwd(params, x))
    assert out.shape == (N, cfg["n_classes"], 32)
    assert bool(jnp.all(jnp.isfinite(out)))
    print("KERNEL_OK")
</pallas_src>

<mosaic_0001>
module attributes {stable_mosaic.version = 11 : i64} {
  func.func @_timecaps_kernel(%arg0: i32, %arg1: memref<1x1x128xf32, #tpu.memory_space<vmem>>, %arg2: memref<8x3xf32, #tpu.memory_space<vmem>>, %arg3: memref<8x24xf32, #tpu.memory_space<vmem>>, %arg4: memref<64x25xf32, #tpu.memory_space<vmem>>, %arg5: memref<4x9xf32, #tpu.memory_space<vmem>>, %arg6: memref<4x21xf32, #tpu.memory_space<vmem>>, %arg7: memref<512x768xf32, #tpu.memory_space<vmem>>, %arg8: memref<32x768xf32, #tpu.memory_space<vmem>>, %arg9: memref<128x128xf32, #tpu.memory_space<vmem>>, %arg10: memref<128x128xf32, #tpu.memory_space<vmem>>, %arg11: memref<32x32xf32, #tpu.memory_space<vmem>>, %arg12: memref<128x128xf32, #tpu.memory_space<vmem>>, %arg13: memref<768x768xf32, #tpu.memory_space<vmem>>, %arg14: memref<1x1x768xf32, #tpu.memory_space<vmem>>) attributes {dimension_semantics = [#tpu.dimension_semantics<parallel>], iteration_bounds = array<i64: 2>, scalar_prefetch = 0 : i64, scratch_operands = 0 : i64, tpu.core_type = #tpu.core_type<tc>, window_params = [{transform_indices = @transform_0, window_bounds = array<i64: 1, 1, 128>}, {pipeline_mode = #tpu.pipeline_mode<synchronous>, transform_indices = @transform_1, window_bounds = array<i64: 8, 3>}, {pipeline_mode = #tpu.pipeline_mode<synchronous>, transform_indices = @transform_2, window_bounds = array<i64: 8, 24>}, {pipeline_mode = #tpu.pipeline_mode<synchronous>, transform_indices = @transform_3, window_bounds = array<i64: 64, 25>}, {pipeline_mode = #tpu.pipeline_mode<synchronous>, transform_indices = @transform_4, window_bounds = array<i64: 4, 9>}, {pipeline_mode = #tpu.pipeline_mode<synchronous>, transform_indices = @transform_5, window_bounds = array<i64: 4, 21>}, {pipeline_mode = #tpu.pipeline_mode<synchronous>, transform_indices = @transform_6, window_bounds = array<i64: 512, 768>}, {pipeline_mode = #tpu.pipeline_mode<synchronous>, transform_indices = @transform_7, window_bounds = array<i64: 32, 768>}, {pipeline_mode = #tpu.pipeline_mode<synchronous>, transform_indices = @transform_8, window_bounds = array<i64: 128, 128>}, {pipeline_mode = #tpu.pipeline_mode<synchronous>, transform_indices = @transform_9, window_bounds = array<i64: 128, 128>}, {pipeline_mode = #tpu.pipeline_mode<synchronous>, transform_indices = @transform_10, window_bounds = array<i64: 32, 32>}, {pipeline_mode = #tpu.pipeline_mode<synchronous>, transform_indices = @transform_11, window_bounds = array<i64: 128, 128>}, {pipeline_mode = #tpu.pipeline_mode<synchronous>, transform_indices = @transform_12, window_bounds = array<i64: 768, 768>}, {transform_indices = @transform_13, window_bounds = array<i64: 1, 1, 768>}]} {
    %c0 = arith.constant 0 : index
    %c0_0 = arith.constant 0 : index
    %c0_1 = arith.constant 0 : index
    %0 = vector.load %arg1[%c0, %c0_0, %c0_1] : memref<1x1x128xf32, #tpu.memory_space<vmem>>, vector<1x1x128xf32>
    %1 = vector.shape_cast %0 : vector<1x1x128xf32> to vector<1x128xf32>
    %2 = tpu.iota {dimensions = array<i32: 1>} : vector<1x128xi32>
    %c16_i32 = arith.constant 16 : i32
    %c0_i32 = arith.constant 0 : i32
    %3 = arith.cmpi eq, %c16_i32, %c0_i32 : i32
    %c1_i32 = arith.constant 1 : i32
    %4 = arith.select %3, %c1_i32, %c16_i32 : i32
    %5 = vector.broadcast %4 : i32 to vector<1x128xi32>
    %6 = arith.remsi %2, %5 : vector<1x128xi32>
    %c0_i32_2 = arith.constant 0 : i32
    %7 = vector.broadcast %c0_i32_2 : i32 to vector<1x128xi32>
    %8 = arith.cmpi ne, %6, %7 : vector<1x128xi32>
    %c0_i32_3 = arith.constant 0 : i32
    %9 = vector.broadcast %c0_i32_3 : i32 to vector<1x128xi32>
    %10 = arith.cmpi slt, %6, %9 : vector<1x128xi32>
    %c0_i32_4 = arith.constant 0 : i32
    %11 = arith.cmpi slt, %4, %c0_i32_4 : i32
    %12 = vector.broadcast %11 : i1 to vector<1x128xi1>
    %13 = vector.broadcast %12 : vector<1x128xi1> to vector<1x128xi1>
    %14 = arith.xori %10, %13 : vector<1x128xi1>
    %15 = arith.andi %14, %8 : vector<1x128xi1>
    %16 = vector.broadcast %4 : i32 to vector<1x128xi32>
    %17 = arith.addi %6, %16 : vector<1x128xi32>
    %18 = arith.select %15, %17, %6 : vector<1x128xi1>, vector<1x128xi32>
    %c4_i32 = arith.constant 4 : i32
    %c0_i32_5 = arith.constant 0 : i32
    %19 = arith.cmpi eq, %c4_i32, %c0_i32_5 : i32
    %c1_i32_6 = arith.constant 1 : i32
    %20 = arith.select %19, %c1_i32_6, %c4_i32 : i32
    %21 = vector.broadcast %20 : i32 to vector<1x128xi32>
    %22 = arith.remsi %2, %21 : vector<1x128xi32>
    %c0_i32_7 = arith.constant 0 : i32
    %23 = vector.broadcast %c0_i32_7 : i32 to vector<1x128xi32>
    %24 = arith.cmpi ne, %22, %23 : vector<1x128xi32>
    %c0_i32_8 = arith.constant 0 : i32
    %25 = vector.broadcast %c0_i32_8 : i32 to vector<1x128xi32>
    %26 = arith.cmpi slt, %22, %25 : vector<1x128xi32>
    %c0_i32_9 = arith.constant 0 : i32
    %27 = arith.cmpi slt, %20, %c0_i32_9 : i32
    %28 = vector.broadcast %27 : i1 to vector<1x128xi1>
    %29 = vector.broadcast %28 : vector<1x128xi1> to vector<1x128xi1>
    %30 = arith.xori %26, %29 : vector<1x128xi1>
    %31 = arith.andi %30, %24 : vector<1x128xi1>
    %32 = vector.broadcast %20 : i32 to vector<1x128xi32>
    %33 = arith.addi %22, %32 : vector<1x128xi32>
    %34 = arith.select %31, %33, %22 : vector<1x128xi1>, vector<1x128xi32>
    %cst = arith.constant 1.000000e+00 : f32
    %35 = vector.broadcast %cst : f32 to vector<1x128xf32>
    %c0_10 = arith.constant 0 : index
    %c0_11 = arith.constant 0 : index
    %36 = vector.load %arg2[%c0_10, %c0_11] : memref<8x3xf32, #tpu.memory_space<vmem>>, vector<8x3xf32>
    %c-1_i32 = arith.constant -1 : i32
    %37 = vector.broadcast %c-1_i32 : i32 to vector<1x128xi32>
    %38 = arith.addi %18, %37 : vector<1x128xi32>
    %c0_i32_12 = arith.constant 0 : i32
    %39 = vector.broadcast %c0_i32_12 : i32 to vector<1x128xi32>
    %40 = arith.cmpi sge, %38, %39 : vector<1x128xi32>
    %c-1_i32_13 = arith.constant -1 : i32
    %41 = vector.broadcast %c-1_i32_13 : i32 to vector<1x128xi32>
    %42 = arith.addi %18, %41 : vector<1x128xi32>
    %c16_i32_14 = arith.constant 16 : i32
    %43 = vector.broadcast %c16_i32_14 : i32 to vector<1x128xi32>
    %44 = arith.cmpi slt, %42, %43 : vector<1x128xi32>
    %45 = arith.andi %40, %44 : vector<1x128xi1>
    %46 = arith.extui %45 : vector<1x128xi1> to vector<1x128xi32>
    %47 = arith.sitofp %46 : vector<1x128xi32> to vector<1x128xf32>
    %cst_15 = arith.constant 0.000000e+00 : f32
    %48 = vector.broadcast %cst_15 : f32 to vector<1x1xf32>
    %49 = vector.extract_strided_slice %1 {offsets = [0, 0], sizes = [1, 127], strides = [1, 1]} : vector<1x128xf32> to vector<1x127xf32>
    %50 = tpu.concatenate %48, %49 in 1 : vector<1x1xf32>, vector<1x127xf32> -> vector<1x128xf32>
    %51 = arith.mulf %50, %47 : vector<1x128xf32>
    %c0_i32_16 = arith.constant 0 : i32
    %52 = vector.broadcast %c0_i32_16 : i32 to vector<1x128xi32>
    %53 = arith.addi %18, %52 : vector<1x128xi32>
    %c0_i32_17 = arith.constant 0 : i32
    %54 = vector.broadcast %c0_i32_17 : i32 to vector<1x128xi32>
    %55 = arith.cmpi sge, %53, %54 : vector<1x128xi32>
    %c0_i32_18 = arith.constant 0 : i32
    %56 = vector.broadcast %c0_i32_18 : i32 to vector<1x128xi32>
    %57 = arith.addi %18, %56 : vector<1x128xi32>
    %c16_i32_19 = arith.constant 16 : i32
    %58 = vector.broadcast %c16_i32_19 : i32 to vector<1x128xi32>
    %59 = arith.cmpi slt, %57, %58 : vector<1x128xi32>
    %60 = arith.andi %55, %59 : vector<1x128xi1>
    %61 = arith.extui %60 : vector<1x128xi1> to vector<1x128xi32>
    %62 = arith.sitofp %61 : vector<1x128xi32> to vector<1x128xf32>
    %63 = arith.mulf %1, %62 : vector<1x128xf32>
    %c1_i32_20 = arith.constant 1 : i32
    %64 = vector.broadcast %c1_i32_20 : i32 to vector<1x128xi32>
    %65 = arith.addi %18, %64 : vector<1x128xi32>
    %c0_i32_21 = arith.constant 0 : i32
    %66 = vector.broadcast %c0_i32_21 : i32 to vector<1x128xi32>
    %67 = arith.cmpi sge, %65, %66 : vector<1x128xi32>
    %c1_i32_22 = arith.constant 1 : i32
    %68 = vector.broadcast %c1_i32_22 : i32 to vector<1x128xi32>
    %69 = arith.addi %18, %68 : vector<1x128xi32>
    %c16_i32_23 = arith.constant 16 : i32
    %70 = vector.broadcast %c16_i32_23 : i32 to vector<1x128xi32>
    %71 = arith.cmpi slt, %69, %70 : vector<1x128xi32>
    %72 = arith.andi %67, %71 : vector<1x128xi1>
    %73 = arith.extui %72 : vector<1x128xi1> to vector<1x128xi32>
    %74 = arith.sitofp %73 : vector<1x128xi32> to vector<1x128xf32>
    %cst_24 = arith.constant 0.000000e+00 : f32
    %75 = vector.broadcast %cst_24 : f32 to vector<1x1xf32>
    %76 = vector.extract_strided_slice %1 {offsets = [0, 1], sizes = [1, 127], strides = [1, 1]} : vector<1x128xf32> to vector<1x127xf32>
    %77 = tpu.concatenate %76, %75 in 1 : vector<1x127xf32>, vector<1x1xf32> -> vector<1x128xf32>
    %78 = arith.mulf %77, %74 : vector<1x128xf32>
    %79 = tpu.concatenate %51, %63, %78 in 0 : vector<1x128xf32>, vector<1x128xf32>, vector<1x128xf32> -> vector<3x128xf32>
    %cst_25 = arith.constant dense<0.000000e+00> : vector<8x128xf32>
    %80 = tpu.matmul %36, %79, %cst_25 {dimension_numbers = #tpu.dot_dimension_numbers<[1], [0], [0], [1], [0, 0, 1, 1], [], []>} : vector<8x3xf32>, vector<3x128xf32>, vector<8x128xf32> -> vector<8x128xf32>
    %c0_26 = arith.constant 0 : index
    %c0_27 = arith.constant 0 : index
    %81 = vector.load %arg3[%c0_26, %c0_27] : memref<8x24xf32, #tpu.memory_space<vmem>>, vector<8x24xf32>
    %c-1_i32_28 = arith.constant -1 : i32
    %82 = vector.broadcast %c-1_i32_28 : i32 to vector<1x128xi32>
    %83 = arith.addi %18, %82 : vector<1x128xi32>
    %c0_i32_29 = arith.constant 0 : i32
    %84 = vector.broadcast %c0_i32_29 : i32 to vector<1x128xi32>
    %85 = arith.cmpi sge, %83, %84 : vector<1x128xi32>
    %c-1_i32_30 = arith.constant -1 : i32
    %86 = vector.broadcast %c-1_i32_30 : i32 to vector<1x128xi32>
    %87 = arith.addi %18, %86 : vector<1x128xi32>
    %c16_i32_31 = arith.constant 16 : i32
    %88 = vector.broadcast %c16_i32_31 : i32 to vector<1x128xi32>
    %89 = arith.cmpi slt, %87, %88 : vector<1x128xi32>
    %90 = arith.andi %85, %89 : vector<1x128xi1>
    %91 = arith.extui %90 : vector<1x128xi1> to vector<1x128xi32>
    %92 = arith.sitofp %91 : vector<1x128xi32> to vector<1x128xf32>
    %cst_32 = arith.constant 0.000000e+00 : f32
    %93 = vector.broadcast %cst_32 : f32 to vector<8x1xf32>
    %94 = vector.extract_strided_slice %80 {offsets = [0, 0], sizes = [8, 127], strides = [1, 1]} : vector<8x128xf32> to vector<8x127xf32>
    %95 = tpu.concatenate %93, %94 in 1 : vector<8x1xf32>, vector<8x127xf32> -> vector<8x128xf32>
    %96 = vector.broadcast %92 : vector<1x128xf32> to vector<8x128xf32>
    %97 = arith.mulf %95, %96 : vector<8x128xf32>
    %c0_i32_33 = arith.constant 0 : i32
    %98 = vector.broadcast %c0_i32_33 : i32 to vector<1x128xi32>
    %99 = arith.addi %18, %98 : vector<1x128xi32>
    %c0_i32_34 = arith.constant 0 : i32
    %100 = vector.broadcast %c0_i32_34 : i32 to vector<1x128xi32>
    %101 = arith.cmpi sge, %99, %100 : vector<1x128xi32>
    %c0_i32_35 = arith.constant 0 : i32
    %102 = vector.broadcast %c0_i32_35 : i32 to vector<1x128xi32>
    %103 = arith.addi %18, %102 : vector<1x128xi32>
    %c16_i32_36 = arith.constant 16 : i32
    %104 = vector.broadcast %c16_i32_36 : i32 to vector<1x128xi32>
    %105 = arith.cmpi slt, %103, %104 : vector<1x128xi32>
    %106 = arith.andi %101, %105 : vector<1x128xi1>
    %107 = arith.extui %106 : vector<1x128xi1> to vector<1x128xi32>
    %108 = arith.sitofp %107 : vector<1x128xi32> to vector<1x128xf32>
    %109 = vector.broadcast %108 : vector<1x128xf32> to vector<8x128xf32>
    %110 = arith.mulf %80, %109 : vector<8x128xf32>
    %c1_i32_37 = arith.constant 1 : i32
    %111 = vector.broadcast %c1_i32_37 : i32 to vector<1x128xi32>
    %112 = arith.addi %18, %111 : vector<1x128xi32>
    %c0_i32_38 = arith.constant 0 : i32
    %113 = vector.broadcast %c0_i32_38 : i32 to vector<1x128xi32>
    %114 = arith.cmpi sge, %112, %113 : vector<1x128xi32>
    %c1_i32_39 = arith.constant 1 : i32
    %115 = vector.broadcast %c1_i32_39 : i32 to vector<1x128xi32>
    %116 = arith.addi %18, %115 : vector<1x128xi32>
    %c16_i32_40 = arith.constant 16 : i32
    %117 = vector.broadcast %c16_i32_40 : i32 to vector<1x128xi32>
    %118 = arith.cmpi slt, %116, %117 : vector<1x128xi32>
    %119 = arith.andi %114, %118 : vector<1x128xi1>
    %120 = arith.extui %119 : vector<1x128xi1> to vector<1x128xi32>
    %121 = arith.sitofp %120 : vector<1x128xi32> to vector<1x128xf32>
    %cst_41 = arith.constant 0.000000e+00 : f32
    %122 = vector.broadcast %cst_41 : f32 to vector<8x1xf32>
    %123 = vector.extract_strided_slice %80 {offsets = [0, 1], sizes = [8, 127], strides = [1, 1]} : vector<8x128xf32> to vector<8x127xf32>
    %124 = tpu.concatenate %123, %122 in 1 : vector<8x127xf32>, vector<8x1xf32> -> vector<8x128xf32>
    %125 = vector.broadcast %121 : vector<1x128xf32> to vector<8x128xf32>
    %126 = arith.mulf %124, %125 : vector<8x128xf32>
    %127 = tpu.concatenate %97, %110, %126 in 0 : vector<8x128xf32>, vector<8x128xf32>, vector<8x128xf32> -> vector<24x128xf32>
    %cst_42 = arith.constant dense<0.000000e+00> : vector<8x128xf32>
    %128 = tpu.matmul %81, %127, %cst_42 {dimension_numbers = #tpu.dot_dimension_numbers<[1], [0], [0], [1], [0, 0, 1, 1], [], []>} : vector<8x24xf32>, vector<24x128xf32>, vector<8x128xf32> -> vector<8x128xf32>
    %c0_43 = arith.constant 0 : index
    %c0_44 = arith.constant 0 : index
    %129 = vector.load %arg9[%c0_43, %c0_44] : memref<128x128xf32, #tpu.memory_space<vmem>>, vector<128x128xf32>
    %130 = arith.mulf %128, %128 : vector<8x128xf32>
    %cst_45 = arith.constant dense<0.000000e+00> : vector<8x128xf32>
    %131 = tpu.matmul %130, %129, %cst_45 {dimension_numbers = #tpu.dot_dimension_numbers<[1], [0], [0], [1], [0, 0, 1, 1], [], []>} : vector<8x128xf32>, vector<128x128xf32>, vector<8x128xf32> -> vector<8x128xf32>
    %cst_46 = arith.constant 1.000000e+00 : f32
    %132 = vector.broadcast %cst_46 : f32 to vector<8x128xf32>
    %133 = arith.addf %132, %131 : vector<8x128xf32>
    %134 = tpu.reciprocal %133 {approx = true} : vector<8x128xf32> -> vector<8x128xf32>
    %135 = arith.mulf %131, %134 : vector<8x128xf32>
    %136 = arith.mulf %135, %128 : vector<8x128xf32>
    %cst_47 = arith.constant 9.99999993E-9 : f32
    %137 = vector.broadcast %cst_47 : f32 to vector<8x128xf32>
    %138 = arith.addf %131, %137 : vector<8x128xf32>
    %139 = tpu.reciprocal %138 {approx = true} : vector<8x128xf32> -> vector<8x128xf32>
    %140 = arith.mulf %136, %139 : vector<8x128xf32>
    %c-1_i32_48 = arith.constant -1 : i32
    %141 = vector.broadcast %c-1_i32_48 : i32 to vector<1x128xi32>
    %142 = arith.addi %18, %141 : vector<1x128xi32>
    %c0_i32_49 = arith.constant 0 : i32
    %143 = vector.broadcast %c0_i32_49 : i32 to vector<1x128xi32>
    %144 = arith.cmpi sge, %142, %143 : vector<1x128xi32>
    %c-1_i32_50 = arith.constant -1 : i32
    %145 = vector.broadcast %c-1_i32_50 : i32 to vector<1x128xi32>
    %146 = arith.addi %18, %145 : vector<1x128xi32>
    %c16_i32_51 = arith.constant 16 : i32
    %147 = vector.broadcast %c16_i32_51 : i32 to vector<1x128xi32>
    %148 = arith.cmpi slt, %146, %147 : vector<1x128xi32>
    %149 = arith.andi %144, %148 : vector<1x128xi1>
    %150 = arith.extui %149 : vector<1x128xi1> to vector<1x128xi32>
    %151 = arith.sitofp %150 : vector<1x128xi32> to vector<1x128xf32>
    %cst_52 = arith.constant 0.000000e+00 : f32
    %152 = vector.broadcast %cst_52 : f32 to vector<8x1xf32>
    %153 = vector.extract_strided_slice %140 {offsets = [0, 0], sizes = [8, 127], strides = [1, 1]} : vector<8x128xf32> to vector<8x127xf32>
    %154 = tpu.concatenate %152, %153 in 1 : vector<8x1xf32>, vector<8x127xf32> -> vector<8x128xf32>
    %155 = vector.broadcast %151 : vector<1x128xf32> to vector<8x128xf32>
    %156 = arith.mulf %154, %155 : vector<8x128xf32>
    %c0_i32_53 = arith.constant 0 : i32
    %157 = vector.broadcast %c0_i32_53 : i32 to vector<1x128xi32>
    %158 = arith.addi %18, %157 : vector<1x128xi32>
    %c0_i32_54 = arith.constant 0 : i32
    %159 = vector.broadcast %c0_i32_54 : i32 to vector<1x128xi32>
    %160 = arith.cmpi sge, %158, %159 : vector<1x128xi32>
    %c0_i32_55 = arith.constant 0 : i32
    %161 = vector.broadcast %c0_i32_55 : i32 to vector<1x128xi32>
    %162 = arith.addi %18, %161 : vector<1x128xi32>
    %c16_i32_56 = arith.constant 16 : i32
    %163 = vector.broadcast %c16_i32_56 : i32 to vector<1x128xi32>
    %164 = arith.cmpi slt, %162, %163 : vector<1x128xi32>
    %165 = arith.andi %160, %164 : vector<1x128xi1>
    %166 = arith.extui %165 : vector<1x128xi1> to vector<1x128xi32>
    %167 = arith.sitofp %166 : vector<1x128xi32> to vector<1x128xf32>
    %168 = vector.broadcast %167 : vector<1x128xf32> to vector<8x128xf32>
    %169 = arith.mulf %140, %168 : vector<8x128xf32>
    %c1_i32_57 = arith.constant 1 : i32
    %170 = vector.broadcast %c1_i32_57 : i32 to vector<1x128xi32>
    %171 = arith.addi %18, %170 : vector<1x128xi32>
    %c0_i32_58 = arith.constant 0 : i32
    %172 = vector.broadcast %c0_i32_58 : i32 to vector<1x128xi32>
    %173 = arith.cmpi sge, %171, %172 : vector<1x128xi32>
    %c1_i32_59 = arith.constant 1 : i32
    %174 = vector.broadcast %c1_i32_59 : i32 to vector<1x128xi32>
    %175 = arith.addi %18, %174 : vector<1x128xi32>
    %c16_i32_60 = arith.constant 16 : i32
    %176 = vector.broadcast %c16_i32_60 : i32 to vector<1x128xi32>
    %177 = arith.cmpi slt, %175, %176 : vector<1x128xi32>
    %178 = arith.andi %173, %177 : vector<1x128xi1>
    %179 = arith.extui %178 : vector<1x128xi1> to vector<1x128xi32>
    %180 = arith.sitofp %179 : vector<1x128xi32> to vector<1x128xf32>
    %cst_61 = arith.constant 0.000000e+00 : f32
    %181 = vector.broadcast %cst_61 : f32 to vector<8x1xf32>
    %182 = vector.extract_strided_slice %140 {offsets = [0, 1], sizes = [8, 127], strides = [1, 1]} : vector<8x128xf32> to vector<8x127xf32>
    %183 = tpu.concatenate %182, %181 in 1 : vector<8x127xf32>, vector<8x1xf32> -> vector<8x128xf32>
    %184 = vector.broadcast %180 : vector<1x128xf32> to vector<8x128xf32>
    %185 = arith.mulf %183, %184 : vector<8x128xf32>
    %186 = tpu.concatenate %156, %169, %185 in 0 : vector<8x128xf32>, vector<8x128xf32>, vector<8x128xf32> -> vector<24x128xf32>
    %187 = tpu.concatenate %186, %35 in 0 : vector<24x128xf32>, vector<1x128xf32> -> vector<25x128xf32>
    %c0_62 = arith.constant 0 : index
    %c0_63 = arith.constant 0 : index
    %188 = vector.load %arg4[%c0_62, %c0_63] : memref<64x25xf32, #tpu.memory_space<vmem>>, vector<64x25xf32>
    %cst_64 = arith.constant dense<0.000000e+00> : vector<64x128xf32>
    %189 = tpu.matmul %188, %187, %cst_64 {dimension_numbers = #tpu.dot_dimension_numbers<[1], [0], [0], [1], [0, 0, 1, 1], [], []>} : vector<64x25xf32>, vector<25x128xf32>, vector<64x128xf32> -> vector<64x128xf32>
    %190 = vector.extract_strided_slice %189 {offsets = [0, 0], sizes = [16, 128], strides = [1, 1]} : vector<64x128xf32> to vector<16x128xf32>
    %191 = vector.extract_strided_slice %189 {offsets = [16, 0], sizes = [16, 128], strides = [1, 1]} : vector<64x128xf32> to vector<16x128xf32>
    %192 = vector.extract_strided_slice %189 {offsets = [32, 0], sizes = [16, 128], strides = [1, 1]} : vector<64x128xf32> to vector<16x128xf32>
    %193 = vector.extract_strided_slice %189 {offsets = [48, 0], sizes = [16, 128], strides = [1, 1]} : vector<64x128xf32> to vector<16x128xf32>
    %cst_65 = arith.constant 0.000000e+00 : f32
    %194 = vector.broadcast %cst_65 : f32 to vector<16x128xf32>
    %cst_66 = arith.constant 0.000000e+00 : f32
    %195 = vector.broadcast %cst_66 : f32 to vector<16x128xf32>
    %cst_67 = arith.constant 0.000000e+00 : f32
    %196 = vector.broadcast %cst_67 : f32 to vector<16x128xf32>
    %cst_68 = arith.constant 0.000000e+00 : f32
    %197 = vector.broadcast %cst_68 : f32 to vector<16x128xf32>
    %198 = arith.maximumf %194, %195 : vector<16x128xf32>
    %199 = arith.maximumf %198, %196 : vector<16x128xf32>
    %200 = arith.maximumf %199, %197 : vector<16x128xf32>
    %201 = arith.subf %194, %200 : vector<16x128xf32>
    %202 = math.exp %201 : vector<16x128xf32>
    %203 = arith.subf %195, %200 : vector<16x128xf32>
    %204 = math.exp %203 : vector<16x128xf32>
    %205 = arith.subf %196, %200 : vector<16x128xf32>
    %206 = math.exp %205 : vector<16x128xf32>
    %207 = arith.subf %197, %200 : vector<16x128xf32>
    %208 = math.exp %207 : vector<16x128xf32>
    %209 = arith.addf %202, %204 : vector<16x128xf32>
    %210 = arith.addf %209, %206 : vector<16x128xf32>
    %211 = arith.addf %210, %208 : vector<16x128xf32>
    %212 = tpu.reciprocal %211 {approx = true} : vector<16x128xf32> -> vector<16x128xf32>
    %213 = arith.mulf %202, %212 : vector<16x128xf32>
    %214 = arith.mulf %213, %190 : vector<16x128xf32>
    %215 = arith.mulf %204, %212 : vector<16x128xf32>
    %216 = arith.mulf %215, %191 : vector<16x128xf32>
    %217 = arith.addf %214, %216 : vector<16x128xf32>
    %218 = arith.mulf %206, %212 : vector<16x128xf32>
    %219 = arith.mulf %218, %192 : vector<16x128xf32>
    %220 = arith.addf %217, %219 : vector<16x128xf32>
    %221 = arith.mulf %208, %212 : vector<16x128xf32>
    %222 = arith.mulf %221, %193 : vector<16x128xf32>
    %223 = arith.addf %220, %222 : vector<16x128xf32>
    %224 = arith.mulf %223, %223 : vector<16x128xf32>
    %cst_69 = arith.constant dense<0.000000e+00> : vector<16x128xf32>
    %225 = tpu.matmul %224, %129, %cst_69 {dimension_numbers = #tpu.dot_dimension_numbers<[1], [0], [0], [1], [0, 0, 1, 1], [], []>} : vector<16x128xf32>, vector<128x128xf32>, vector<16x128xf32> -> vector<16x128xf32>
    %cst_70 = arith.constant 1.000000e+00 : f32
    %226 = vector.broadcast %cst_70 : f32 to vector<16x128xf32>
    %227 = arith.addf %226, %225 : vector<16x128xf32>
    %228 = tpu.reciprocal %227 {approx = true} : vector<16x128xf32> -> vector<16x128xf32>
    %229 = arith.mulf %225, %228 : vector<16x128xf32>
    %230 = arith.mulf %229, %223 : vector<16x128xf32>
    %cst_71 = arith.constant 9.99999993E-9 : f32
    %231 = vector.broadcast %cst_71 : f32 to vector<16x128xf32>
    %232 = arith.addf %225, %231 : vector<16x128xf32>
    %233 = tpu.reciprocal %232 {approx = true} : vector<16x128xf32> -> vector<16x128xf32>
    %234 = arith.mulf %230, %233 : vector<16x128xf32>
    %235 = arith.mulf %190, %234 : vector<16x128xf32>
    %236 = arith.mulf %191, %234 : vector<16x128xf32>
    %237 = arith.mulf %192, %234 : vector<16x128xf32>
    %238 = arith.mulf %193, %234 : vector<16x128xf32>
    %239 = tpu.concatenate %235, %236, %237, %238 in 0 : vector<16x128xf32>, vector<16x128xf32>, vector<16x128xf32>, vector<16x128xf32> -> vector<64x128xf32>
    %cst_72 = arith.constant dense<0.000000e+00> : vector<64x128xf32>
    %240 = tpu.matmul %239, %129, %cst_72 {dimension_numbers = #tpu.dot_dimension_numbers<[1], [0], [0], [1], [0, 0, 1, 1], [], []>} : vector<64x128xf32>, vector<128x128xf32>, vector<64x128xf32> -> vector<64x128xf32>
    %241 = vector.extract_strided_slice %240 {offsets = [0, 0], sizes = [16, 128], strides = [1, 1]} : vector<64x128xf32> to vector<16x128xf32>
    %242 = arith.addf %194, %241 : vector<16x128xf32>
    %243 = vector.extract_strided_slice %240 {offsets = [16, 0], sizes = [16, 128], strides = [1, 1]} : vector<64x128xf32> to vector<16x128xf32>
    %244 = arith.addf %195, %243 : vector<16x128xf32>
    %245 = vector.extract_strided_slice %240 {offsets = [32, 0], sizes = [16, 128], strides = [1, 1]} : vector<64x128xf32> to vector<16x128xf32>
    %246 = arith.addf %196, %245 : vector<16x128xf32>
    %247 = vector.extract_strided_slice %240 {offsets = [48, 0], sizes = [16, 128], strides = [1, 1]} : vector<64x128xf32> to vector<16x128xf32>
    %248 = arith.addf %197, %247 : vector<16x128xf32>
    %249 = arith.maximumf %242, %244 : vector<16x128xf32>
    %250 = arith.maximumf %249, %246 : vector<16x128xf32>
    %251 = arith.maximumf %250, %248 : vector<16x128xf32>
    %252 = arith.subf %242, %251 : vector<16x128xf32>
    %253 = math.exp %252 : vector<16x128xf32>
    %254 = arith.subf %244, %251 : vector<16x128xf32>
    %255 = math.exp %254 : vector<16x128xf32>
    %256 = arith.subf %246, %251 : vector<16x128xf32>
    %257 = math.exp %256 : vector<16x128xf32>
    %258 = arith.subf %248, %251 : vector<16x128xf32>
    %259 = math.exp %258 : vector<16x128xf32>
    %260 = arith.addf %253, %255 : vector<16x128xf32>
    %261 = arith.addf %260, %257 : vector<16x128xf32>
    %262 = arith.addf %261, %259 : vector<16x128xf32>
    %263 = tpu.reciprocal %262 {approx = true} : vector<16x128xf32> -> vector<16x128xf32>
    %264 = arith.mulf %253, %263 : vector<16x128xf32>
    %265 = arith.mulf %264, %190 : vector<16x128xf32>
    %266 = arith.mulf %255, %263 : vector<16x128xf32>
    %267 = arith.mulf %266, %191 : vector<16x128xf32>
    %268 = arith.addf %265, %267 : vector<16x128xf32>
    %269 = arith.mulf %257, %263 : vector<16x128xf32>
    %270 = arith.mulf %269, %192 : vector<16x128xf32>
    %271 = arith.addf %268, %270 : vector<16x128xf32>
    %272 = arith.mulf %259, %263 : vector<16x128xf32>
    %273 = arith.mulf %272, %193 : vector<16x128xf32>
    %274 = arith.addf %271, %273 : vector<16x128xf32>
    %275 = arith.mulf %274, %274 : vector<16x128xf32>
    %cst_73 = arith.constant dense<0.000000e+00> : vector<16x128xf32>
    %276 = tpu.matmul %275, %129, %cst_73 {dimension_numbers = #tpu.dot_dimension_numbers<[1], [0], [0], [1], [0, 0, 1, 1], [], []>} : vector<16x128xf32>, vector<128x128xf32>, vector<16x128xf32> -> vector<16x128xf32>
    %cst_74 = arith.constant 1.000000e+00 : f32
    %277 = vector.broadcast %cst_74 : f32 to vector<16x128xf32>
    %278 = arith.addf %277, %276 : vector<16x128xf32>
    %279 = tpu.reciprocal %278 {approx = true} : vector<16x128xf32> -> vector<16x128xf32>
    %280 = arith.mulf %276, %279 : vector<16x128xf32>
    %281 = arith.mulf %280, %274 : vector<16x128xf32>
    %cst_75 = arith.constant 9.99999993E-9 : f32
    %282 = vector.broadcast %cst_75 : f32 to vector<16x128xf32>
    %283 = arith.addf %276, %282 : vector<16x128xf32>
    %284 = tpu.reciprocal %283 {approx = true} : vector<16x128xf32> -> vector<16x128xf32>
    %285 = arith.mulf %281, %284 : vector<16x128xf32>
    %286 = tpu.concatenate %80, %35 in 0 : vector<8x128xf32>, vector<1x128xf32> -> vector<9x128xf32>
    %c0_76 = arith.constant 0 : index
    %c0_77 = arith.constant 0 : index
    %287 = vector.load %arg5[%c0_76, %c0_77] : memref<4x9xf32, #tpu.memory_space<vmem>>, vector<4x9xf32>
    %cst_78 = arith.constant dense<0.000000e+00> : vector<4x128xf32>
    %288 = tpu.matmul %287, %286, %cst_78 {dimension_numbers = #tpu.dot_dimension_numbers<[1], [0], [0], [1], [0, 0, 1, 1], [], []>} : vector<4x9xf32>, vector<9x128xf32>, vector<4x128xf32> -> vector<4x128xf32>
    %c-2_i32 = arith.constant -2 : i32
    %289 = vector.broadcast %c-2_i32 : i32 to vector<1x128xi32>
    %290 = arith.addi %34, %289 : vector<1x128xi32>
    %c0_i32_79 = arith.constant 0 : i32
    %291 = vector.broadcast %c0_i32_79 : i32 to vector<1x128xi32>
    %292 = arith.cmpi sge, %290, %291 : vector<1x128xi32>
    %c-2_i32_80 = arith.constant -2 : i32
    %293 = vector.broadcast %c-2_i32_80 : i32 to vector<1x128xi32>
    %294 = arith.addi %34, %293 : vector<1x128xi32>
    %c4_i32_81 = arith.constant 4 : i32
    %295 = vector.broadcast %c4_i32_81 : i32 to vector<1x128xi32>
    %296 = arith.cmpi slt, %294, %295 : vector<1x128xi32>
    %297 = arith.andi %292, %296 : vector<1x128xi1>
    %298 = arith.extui %297 : vector<1x128xi1> to vector<1x128xi32>
    %299 = arith.sitofp %298 : vector<1x128xi32> to vector<1x128xf32>
    %cst_82 = arith.constant 0.000000e+00 : f32
    %300 = vector.broadcast %cst_82 : f32 to vector<4x2xf32>
    %301 = vector.extract_strided_slice %288 {offsets = [0, 0], sizes = [4, 126], strides = [1, 1]} : vector<4x128xf32> to vector<4x126xf32>
    %302 = tpu.concatenate %300, %301 in 1 : vector<4x2xf32>, vector<4x126xf32> -> vector<4x128xf32>
    %303 = vector.broadcast %299 : vector<1x128xf32> to vector<4x128xf32>
    %304 = arith.mulf %302, %303 : vector<4x128xf32>
    %c-1_i32_83 = arith.constant -1 : i32
    %305 = vector.broadcast %c-1_i32_83 : i32 to vector<1x128xi32>
    %306 = arith.addi %34, %305 : vector<1x128xi32>
    %c0_i32_84 = arith.constant 0 : i32
    %307 = vector.broadcast %c0_i32_84 : i32 to vector<1x128xi32>
    %308 = arith.cmpi sge, %306, %307 : vector<1x128xi32>
    %c-1_i32_85 = arith.constant -1 : i32
    %309 = vector.broadcast %c-1_i32_85 : i32 to vector<1x128xi32>
    %310 = arith.addi %34, %309 : vector<1x128xi32>
    %c4_i32_86 = arith.constant 4 : i32
    %311 = vector.broadcast %c4_i32_86 : i32 to vector<1x128xi32>
    %312 = arith.cmpi slt, %310, %311 : vector<1x128xi32>
    %313 = arith.andi %308, %312 : vector<1x128xi1>
    %314 = arith.extui %313 : vector<1x128xi1> to vector<1x128xi32>
    %315 = arith.sitofp %314 : vector<1x128xi32> to vector<1x128xf32>
    %cst_87 = arith.constant 0.000000e+00 : f32
    %316 = vector.broadcast %cst_87 : f32 to vector<4x1xf32>
    %317 = vector.extract_strided_slice %288 {offsets = [0, 0], sizes = [4, 127], strides = [1, 1]} : vector<4x128xf32> to vector<4x127xf32>
    %318 = tpu.concatenate %316, %317 in 1 : vector<4x1xf32>, vector<4x127xf32> -> vector<4x128xf32>
    %319 = vector.broadcast %315 : vector<1x128xf32> to vector<4x128xf32>
    %320 = arith.mulf %318, %319 : vector<4x128xf32>
    %c0_i32_88 = arith.constant 0 : i32
    %321 = vector.broadcast %c0_i32_88 : i32 to vector<1x128xi32>
    %322 = arith.addi %34, %321 : vector<1x128xi32>
    %c0_i32_89 = arith.constant 0 : i32
    %323 = vector.broadcast %c0_i32_89 : i32 to vector<1x128xi32>
    %324 = arith.cmpi sge, %322, %323 : vector<1x128xi32>
    %c0_i32_90 = arith.constant 0 : i32
    %325 = vector.broadcast %c0_i32_90 : i32 to vector<1x128xi32>
    %326 = arith.addi %34, %325 : vector<1x128xi32>
    %c4_i32_91 = arith.constant 4 : i32
    %327 = vector.broadcast %c4_i32_91 : i32 to vector<1x128xi32>
    %328 = arith.cmpi slt, %326, %327 : vector<1x128xi32>
    %329 = arith.andi %324, %328 : vector<1x128xi1>
    %330 = arith.extui %329 : vector<1x128xi1> to vector<1x128xi32>
    %331 = arith.sitofp %330 : vector<1x128xi32> to vector<1x128xf32>
    %332 = vector.broadcast %331 : vector<1x128xf32> to vector<4x128xf32>
    %333 = arith.mulf %288, %332 : vector<4x128xf32>
    %c1_i32_92 = arith.constant 1 : i32
    %334 = vector.broadcast %c1_i32_92 : i32 to vector<1x128xi32>
    %335 = arith.addi %34, %334 : vector<1x128xi32>
    %c0_i32_93 = arith.constant 0 : i32
    %336 = vector.broadcast %c0_i32_93 : i32 to vector<1x128xi32>
    %337 = arith.cmpi sge, %335, %336 : vector<1x128xi32>
    %c1_i32_94 = arith.constant 1 : i32
    %338 = vector.broadcast %c1_i32_94 : i32 to vector<1x128xi32>
    %339 = arith.addi %34, %338 : vector<1x128xi32>
    %c4_i32_95 = arith.constant 4 : i32
    %340 = vector.broadcast %c4_i32_95 : i32 to vector<1x128xi32>
    %341 = arith.cmpi slt, %339, %340 : vector<1x128xi32>
    %342 = arith.andi %337, %341 : vector<1x128xi1>
    %343 = arith.extui %342 : vector<1x128xi1> to vector<1x128xi32>
    %344 = arith.sitofp %343 : vector<1x128xi32> to vector<1x128xf32>
    %cst_96 = arith.constant 0.000000e+00 : f32
    %345 = vector.broadcast %cst_96 : f32 to vector<4x1xf32>
    %346 = vector.extract_strided_slice %288 {offsets = [0, 1], sizes = [4, 127], strides = [1, 1]} : vector<4x128xf32> to vector<4x127xf32>
    %347 = tpu.concatenate %346, %345 in 1 : vector<4x127xf32>, vector<4x1xf32> -> vector<4x128xf32>
    %348 = vector.broadcast %344 : vector<1x128xf32> to vector<4x128xf32>
    %349 = arith.mulf %347, %348 : vector<4x128xf32>
    %c2_i32 = arith.constant 2 : i32
    %350 = vector.broadcast %c2_i32 : i32 to vector<1x128xi32>
    %351 = arith.addi %34, %350 : vector<1x128xi32>
    %c0_i32_97 = arith.constant 0 : i32
    %352 = vector.broadcast %c0_i32_97 : i32 to vector<1x128xi32>
    %353 = arith.cmpi sge, %351, %352 : vector<1x128xi32>
    %c2_i32_98 = arith.constant 2 : i32
    %354 = vector.broadcast %c2_i32_98 : i32 to vector<1x128xi32>
    %355 = arith.addi %34, %354 : vector<1x128xi32>
    %c4_i32_99 = arith.constant 4 : i32
    %356 = vector.broadcast %c4_i32_99 : i32 to vector<1x128xi32>
    %357 = arith.cmpi slt, %355, %356 : vector<1x128xi32>
    %358 = arith.andi %353, %357 : vector<1x128xi1>
    %359 = arith.extui %358 : vector<1x128xi1> to vector<1x128xi32>
    %360 = arith.sitofp %359 : vector<1x128xi32> to vector<1x128xf32>
    %cst_100 = arith.constant 0.000000e+00 : f32
    %361 = vector.broadcast %cst_100 : f32 to vector<4x2xf32>
    %362 = vector.extract_strided_slice %288 {offsets = [0, 2], sizes = [4, 126], strides = [1, 1]} : vector<4x128xf32> to vector<4x126xf32>
    %363 = tpu.concatenate %362, %361 in 1 : vector<4x126xf32>, vector<4x2xf32> -> vector<4x128xf32>
    %364 = vector.broadcast %360 : vector<1x128xf32> to vector<4x128xf32>
    %365 = arith.mulf %363, %364 : vector<4x128xf32>
    %366 = tpu.concatenate %304, %320, %333, %349, %365 in 0 : vector<4x128xf32>, vector<4x128xf32>, vector<4x128xf32>, vector<4x128xf32>, vector<4x128xf32> -> vector<20x128xf32>
    %367 = tpu.concatenate %366, %35 in 0 : vector<20x128xf32>, vector<1x128xf32> -> vector<21x128xf32>
    %c0_101 = arith.constant 0 : index
    %c0_102 = arith.constant 0 : index
    %368 = vector.load %arg6[%c0_101, %c0_102] : memref<4x21xf32, #tpu.memory_space<vmem>>, vector<4x21xf32>
    %cst_103 = arith.constant dense<0.000000e+00> : vector<4x128xf32>
    %369 = tpu.matmul %368, %367, %cst_103 {dimension_numbers = #tpu.dot_dimension_numbers<[1], [0], [0], [1], [0, 0, 1, 1], [], []>} : vector<4x21xf32>, vector<21x128xf32>, vector<4x128xf32> -> vector<4x128xf32>
    %c0_104 = arith.constant 0 : index
    %c0_105 = arith.constant 0 : index
    %370 = vector.load %arg10[%c0_104, %c0_105] : memref<128x128xf32, #tpu.memory_space<vmem>>, vector<128x128xf32>
    %371 = arith.mulf %369, %369 : vector<4x128xf32>
    %cst_106 = arith.constant dense<0.000000e+00> : vector<4x128xf32>
    %372 = tpu.matmul %371, %370, %cst_106 {dimension_numbers = #tpu.dot_dimension_numbers<[1], [0], [0], [1], [0, 0, 1, 1], [], []>} : vector<4x128xf32>, vector<128x128xf32>, vector<4x128xf32> -> vector<4x128xf32>
    %cst_107 = arith.constant 1.000000e+00 : f32
    %373 = vector.broadcast %cst_107 : f32 to vector<4x128xf32>
    %374 = arith.addf %373, %372 : vector<4x128xf32>
    %375 = tpu.reciprocal %374 {approx = true} : vector<4x128xf32> -> vector<4x128xf32>
    %376 = arith.mulf %372, %375 : vector<4x128xf32>
    %377 = arith.mulf %376, %369 : vector<4x128xf32>
    %cst_108 = arith.constant 9.99999993E-9 : f32
    %378 = vector.broadcast %cst_108 : f32 to vector<4x128xf32>
    %379 = arith.addf %372, %378 : vector<4x128xf32>
    %380 = tpu.reciprocal %379 {approx = true} : vector<4x128xf32> -> vector<4x128xf32>
    %381 = arith.mulf %377, %380 : vector<4x128xf32>
    %c0_109 = arith.constant 0 : index
    %c0_110 = arith.constant 0 : index
    %382 = vector.load %arg12[%c0_109, %c0_110] : memref<128x128xf32, #tpu.memory_space<vmem>>, vector<128x128xf32>
    %cst_111 = arith.constant dense<0.000000e+00> : vector<4x128xf32>
    %383 = tpu.matmul %381, %382, %cst_111 {dimension_numbers = #tpu.dot_dimension_numbers<[1], [0], [0], [1], [0, 0, 1, 1], [], []>} : vector<4x128xf32>, vector<128x128xf32>, vector<4x128xf32> -> vector<4x128xf32>
    %384 = vector.extract_strided_slice %383 {offsets = [0, 0], sizes = [4, 32], strides = [1, 1]} : vector<4x128xf32> to vector<4x32xf32>
    %385 = vector.extract_strided_slice %383 {offsets = [0, 32], sizes = [4, 32], strides = [1, 1]} : vector<4x128xf32> to vector<4x32xf32>
    %386 = vector.extract_strided_slice %383 {offsets = [0, 64], sizes = [4, 32], strides = [1, 1]} : vector<4x128xf32> to vector<4x32xf32>
    %387 = vector.extract_strided_slice %383 {offsets = [0, 96], sizes = [4, 32], strides = [1, 1]} : vector<4x128xf32> to vector<4x32xf32>
    %c0_112 = arith.constant 0 : index
    %c0_113 = arith.constant 0 : index
    %388 = vector.load %arg11[%c0_112, %c0_113] : memref<32x32xf32, #tpu.memory_space<vmem>>, vector<32x32xf32>
    %cst_114 = arith.constant 0.000000e+00 : f32
    %389 = vector.broadcast %cst_114 : f32 to vector<4x32xf32>
    %cst_115 = arith.constant 0.000000e+00 : f32
    %390 = vector.broadcast %cst_115 : f32 to vector<4x32xf32>
    %cst_116 = arith.constant 0.000000e+00 : f32
    %391 = vector.broadcast %cst_116 : f32 to vector<4x32xf32>
    %cst_117 = arith.constant 0.000000e+00 : f32
    %392 = vector.broadcast %cst_117 : f32 to vector<4x32xf32>
    %393 = arith.maximumf %389, %390 : vector<4x32xf32>
    %394 = arith.maximumf %393, %391 : vector<4x32xf32>
    %395 = arith.maximumf %394, %392 : vector<4x32xf32>
    %396 = arith.subf %389, %395 : vector<4x32xf32>
    %397 = math.exp %396 : vector<4x32xf32>
    %398 = arith.subf %390, %395 : vector<4x32xf32>
    %399 = math.exp %398 : vector<4x32xf32>
    %400 = arith.subf %391, %395 : vector<4x32xf32>
    %401 = math.exp %400 : vector<4x32xf32>
    %402 = arith.subf %392, %395 : vector<4x32xf32>
    %403 = math.exp %402 : vector<4x32xf32>
    %404 = arith.addf %397, %399 : vector<4x32xf32>
    %405 = arith.addf %404, %401 : vector<4x32xf32>
    %406 = arith.addf %405, %403 : vector<4x32xf32>
    %407 = tpu.reciprocal %406 {approx = true} : vector<4x32xf32> -> vector<4x32xf32>
    %408 = arith.mulf %397, %407 : vector<4x32xf32>
    %409 = arith.mulf %408, %384 : vector<4x32xf32>
    %410 = arith.mulf %399, %407 : vector<4x32xf32>
    %411 = arith.mulf %410, %385 : vector<4x32xf32>
    %412 = arith.addf %409, %411 : vector<4x32xf32>
    %413 = arith.mulf %401, %407 : vector<4x32xf32>
    %414 = arith.mulf %413, %386 : vector<4x32xf32>
    %415 = arith.addf %412, %414 : vector<4x32xf32>
    %416 = arith.mulf %403, %407 : vector<4x32xf32>
    %417 = arith.mulf %416, %387 : vector<4x32xf32>
    %418 = arith.addf %415, %417 : vector<4x32xf32>
    %419 = arith.mulf %418, %418 : vector<4x32xf32>
    %cst_118 = arith.constant dense<0.000000e+00> : vector<4x32xf32>
    %420 = tpu.matmul %419, %388, %cst_118 {dimension_numbers = #tpu.dot_dimension_numbers<[1], [0], [0], [1], [0, 0, 1, 1], [], []>} : vector<4x32xf32>, vector<32x32xf32>, vector<4x32xf32> -> vector<4x32xf32>
    %cst_119 = arith.constant 1.000000e+00 : f32
    %421 = vector.broadcast %cst_119 : f32 to vector<4x32xf32>
    %422 = arith.addf %421, %420 : vector<4x32xf32>
    %423 = tpu.reciprocal %422 {approx = true} : vector<4x32xf32> -> vector<4x32xf32>
    %424 = arith.mulf %420, %423 : vector<4x32xf32>
    %425 = arith.mulf %424, %418 : vector<4x32xf32>
    %cst_120 = arith.constant 9.99999993E-9 : f32
    %426 = vector.broadcast %cst_120 : f32 to vector<4x32xf32>
    %427 = arith.addf %420, %426 : vector<4x32xf32>
    %428 = tpu.reciprocal %427 {approx = true} : vector<4x32xf32> -> vector<4x32xf32>
    %429 = arith.mulf %425, %428 : vector<4x32xf32>
    %430 = arith.mulf %384, %429 : vector<4x32xf32>
    %431 = arith.mulf %385, %429 : vector<4x32xf32>
    %432 = arith.mulf %386, %429 : vector<4x32xf32>
    %433 = arith.mulf %387, %429 : vector<4x32xf32>
    %434 = tpu.concatenate %430, %431, %432, %433 in 0 : vector<4x32xf32>, vector<4x32xf32>, vector<4x32xf32>, vector<4x32xf32> -> vector<16x32xf32>
    %cst_121 = arith.constant dense<0.000000e+00> : vector<16x32xf32>
    %435 = tpu.matmul %434, %388, %cst_121 {dimension_numbers = #tpu.dot_dimension_numbers<[1], [0], [0], [1], [0, 0, 1, 1], [], []>} : vector<16x32xf32>, vector<32x32xf32>, vector<16x32xf32> -> vector<16x32xf32>
    %436 = vector.extract_strided_slice %435 {offsets = [0, 0], sizes = [4, 32], strides = [1, 1]} : vector<16x32xf32> to vector<4x32xf32>
    %437 = arith.addf %389, %436 : vector<4x32xf32>
    %438 = vector.extract_strided_slice %435 {offsets = [4, 0], sizes = [4, 32], strides = [1, 1]} : vector<16x32xf32> to vector<4x32xf32>
    %439 = arith.addf %390, %438 : vector<4x32xf32>
    %440 = vector.extract_strided_slice %435 {offsets = [8, 0], sizes = [4, 32], strides = [1, 1]} : vector<16x32xf32> to vector<4x32xf32>
    %441 = arith.addf %391, %440 : vector<4x32xf32>
    %442 = vector.extract_strided_slice %435 {offsets = [12, 0], sizes = [4, 32], strides = [1, 1]} : vector<16x32xf32> to vector<4x32xf32>
    %443 = arith.addf %392, %442 : vector<4x32xf32>
    %444 = arith.maximumf %437, %439 : vector<4x32xf32>
    %445 = arith.maximumf %444, %441 : vector<4x32xf32>
    %446 = arith.maximumf %445, %443 : vector<4x32xf32>
    %447 = arith.subf %437, %446 : vector<4x32xf32>
    %448 = math.exp %447 : vector<4x32xf32>
    %449 = arith.subf %439, %446 : vector<4x32xf32>
    %450 = math.exp %449 : vector<4x32xf32>
    %451 = arith.subf %441, %446 : vector<4x32xf32>
    %452 = math.exp %451 : vector<4x32xf32>
    %453 = arith.subf %443, %446 : vector<4x32xf32>
    %454 = math.exp %453 : vector<4x32xf32>
    %455 = arith.addf %448, %450 : vector<4x32xf32>
    %456 = arith.addf %455, %452 : vector<4x32xf32>
    %457 = arith.addf %456, %454 : vector<4x32xf32>
    %458 = tpu.reciprocal %457 {approx = true} : vector<4x32xf32> -> vector<4x32xf32>
    %459 = arith.mulf %448, %458 : vector<4x32xf32>
    %460 = arith.mulf %459, %384 : vector<4x32xf32>
    %461 = arith.mulf %450, %458 : vector<4x32xf32>
    %462 = arith.mulf %461, %385 : vector<4x32xf32>
    %463 = arith.addf %460, %462 : vector<4x32xf32>
    %464 = arith.mulf %452, %458 : vector<4x32xf32>
    %465 = arith.mulf %464, %386 : vector<4x32xf32>
    %466 = arith.addf %463, %465 : vector<4x32xf32>
    %467 = arith.mulf %454, %458 : vector<4x32xf32>
    %468 = arith.mulf %467, %387 : vector<4x32xf32>
    %469 = arith.addf %466, %468 : vector<4x32xf32>
    %470 = arith.mulf %469, %469 : vector<4x32xf32>
    %cst_122 = arith.constant dense<0.000000e+00> : vector<4x32xf32>
    %471 = tpu.matmul %470, %388, %cst_122 {dimension_numbers = #tpu.dot_dimension_numbers<[1], [0], [0], [1], [0, 0, 1, 1], [], []>} : vector<4x32xf32>, vector<32x32xf32>, vector<4x32xf32> -> vector<4x32xf32>
    %cst_123 = arith.constant 1.000000e+00 : f32
    %472 = vector.broadcast %cst_123 : f32 to vector<4x32xf32>
    %473 = arith.addf %472, %471 : vector<4x32xf32>
    %474 = tpu.reciprocal %473 {approx = true} : vector<4x32xf32> -> vector<4x32xf32>
    %475 = arith.mulf %471, %474 : vector<4x32xf32>
    %476 = arith.mulf %475, %469 : vector<4x32xf32>
    %cst_124 = arith.constant 9.99999993E-9 : f32
    %477 = vector.broadcast %cst_124 : f32 to vector<4x32xf32>
    %478 = arith.addf %471, %477 : vector<4x32xf32>
    %479 = tpu.reciprocal %478 {approx = true} : vector<4x32xf32> -> vector<4x32xf32>
    %480 = arith.mulf %476, %479 : vector<4x32xf32>
    %c0_125 = arith.constant 0 : index
    %c0_126 = arith.constant 0 : index
    %481 = vector.load %arg8[%c0_125, %c0_126] : memref<32x768xf32, #tpu.memory_space<vmem>>, vector<32x768xf32>
    %cst_127 = arith.constant dense<0.000000e+00> : vector<4x768xf32>
    %482 = tpu.matmul %480, %481, %cst_127 {dimension_numbers = #tpu.dot_dimension_numbers<[1], [0], [0], [1], [0, 0, 1, 1], [], []>} : vector<4x32xf32>, vector<32x768xf32>, vector<4x768xf32> -> vector<4x768xf32>
    %483 = vector.extract_strided_slice %285 {offsets = [0, 0], sizes = [4, 128], strides = [1, 1]} : vector<16x128xf32> to vector<4x128xf32>
    %c0_128 = arith.constant 0 : index
    %c0_129 = arith.constant 0 : index
    %484 = vector.load %arg7[%c0_128, %c0_129] : memref<512x768xf32, #tpu.memory_space<vmem>>, vector<128x768xf32>
    %cst_130 = arith.constant dense<0.000000e+00> : vector<4x768xf32>
    %485 = tpu.matmul %483, %484, %cst_130 {dimension_numbers = #tpu.dot_dimension_numbers<[1], [0], [0], [1], [0, 0, 1, 1], [], []>} : vector<4x128xf32>, vector<128x768xf32>, vector<4x768xf32> -> vector<4x768xf32>
    %486 = arith.addf %482, %485 : vector<4x768xf32>
    %487 = vector.extract_strided_slice %285 {offsets = [4, 0], sizes = [4, 128], strides = [1, 1]} : vector<16x128xf32> to vector<4x128xf32>
    %c128 = arith.constant 128 : index
    %c0_131 = arith.constant 0 : index
    %488 = vector.load %arg7[%c128, %c0_131] : memref<512x768xf32, #tpu.memory_space<vmem>>, vector<128x768xf32>
    %cst_132 = arith.constant dense<0.000000e+00> : vector<4x768xf32>
    %489 = tpu.matmul %487, %488, %cst_132 {dimension_numbers = #tpu.dot_dimension_numbers<[1], [0], [0], [1], [0, 0, 1, 1], [], []>} : vector<4x128xf32>, vector<128x768xf32>, vector<4x768xf32> -> vector<4x768xf32>
    %490 = arith.addf %486, %489 : vector<4x768xf32>
    %491 = vector.extract_strided_slice %285 {offsets = [8, 0], sizes = [4, 128], strides = [1, 1]} : vector<16x128xf32> to vector<4x128xf32>
    %c256 = arith.constant 256 : index
    %c0_133 = arith.constant 0 : index
    %492 = vector.load %arg7[%c256, %c0_133] : memref<512x768xf32, #tpu.memory_space<vmem>>, vector<128x768xf32>
    %cst_134 = arith.constant dense<0.000000e+00> : vector<4x768xf32>
    %493 = tpu.matmul %491, %492, %cst_134 {dimension_numbers = #tpu.dot_dimension_numbers<[1], [0], [0], [1], [0, 0, 1, 1], [], []>} : vector<4x128xf32>, vector<128x768xf32>, vector<4x768xf32> -> vector<4x768xf32>
    %494 = arith.addf %490, %493 : vector<4x768xf32>
    %495 = vector.extract_strided_slice %285 {offsets = [12, 0], sizes = [4, 128], strides = [1, 1]} : vector<16x128xf32> to vector<4x128xf32>
    %c384 = arith.constant 384 : index
    %c0_135 = arith.constant 0 : index
    %496 = vector.load %arg7[%c384, %c0_135] : memref<512x768xf32, #tpu.memory_space<vmem>>, vector<128x768xf32>
    %cst_136 = arith.constant dense<0.000000e+00> : vector<4x768xf32>
    %497 = tpu.matmul %495, %496, %cst_136 {dimension_numbers = #tpu.dot_dimension_numbers<[1], [0], [0], [1], [0, 0, 1, 1], [], []>} : vector<4x128xf32>, vector<128x768xf32>, vector<4x768xf32> -> vector<4x768xf32>
    %498 = arith.addf %494, %497 : vector<4x768xf32>
    %499 = vector.extract_strided_slice %498 {offsets = [0, 0], sizes = [1, 768], strides = [1, 1]} : vector<4x768xf32> to vector<1x768xf32>
    %500 = vector.extract_strided_slice %498 {offsets = [1, 0], sizes = [1, 768], strides = [1, 1]} : vector<4x768xf32> to vector<1x768xf32>
    %501 = vector.extract_strided_slice %498 {offsets = [2, 0], sizes = [1, 768], strides = [1, 1]} : vector<4x768xf32> to vector<1x768xf32>
    %502 = vector.extract_strided_slice %498 {offsets = [3, 0], sizes = [1, 768], strides = [1, 1]} : vector<4x768xf32> to vector<1x768xf32>
    %c0_137 = arith.constant 0 : index
    %c0_138 = arith.constant 0 : index
    %503 = vector.load %arg13[%c0_137, %c0_138] : memref<768x768xf32, #tpu.memory_space<vmem>>, vector<768x768xf32>
    %cst_139 = arith.constant 0.000000e+00 : f32
    %504 = vector.broadcast %cst_139 : f32 to vector<1x768xf32>
    %cst_140 = arith.constant 0.000000e+00 : f32
    %505 = vector.broadcast %cst_140 : f32 to vector<1x768xf32>
    %cst_141 = arith.constant 0.000000e+00 : f32
    %506 = vector.broadcast %cst_141 : f32 to vector<1x768xf32>
    %cst_142 = arith.constant 0.000000e+00 : f32
    %507 = vector.broadcast %cst_142 : f32 to vector<1x768xf32>
    %508 = arith.maximumf %504, %505 : vector<1x768xf32>
    %509 = arith.maximumf %508, %506 : vector<1x768xf32>
    %510 = arith.maximumf %509, %507 : vector<1x768xf32>
    %511 = arith.subf %504, %510 : vector<1x768xf32>
    %512 = math.exp %511 : vector<1x768xf32>
    %513 = arith.subf %505, %510 : vector<1x768xf32>
    %514 = math.exp %513 : vector<1x768xf32>
    %515 = arith.subf %506, %510 : vector<1x768xf32>
    %516 = math.exp %515 : vector<1x768xf32>
    %517 = arith.subf %507, %510 : vector<1x768xf32>
    %518 = math.exp %517 : vector<1x768xf32>
    %519 = arith.addf %512, %514 : vector<1x768xf32>
    %520 = arith.addf %519, %516 : vector<1x768xf32>
    %521 = arith.addf %520, %518 : vector<1x768xf32>
    %522 = tpu.reciprocal %521 {approx = true} : vector<1x768xf32> -> vector<1x768xf32>
    %523 = arith.mulf %512, %522 : vector<1x768xf32>
    %524 = arith.mulf %523, %499 : vector<1x768xf32>
    %525 = arith.mulf %514, %522 : vector<1x768xf32>
    %526 = arith.mulf %525, %500 : vector<1x768xf32>
    %527 = arith.addf %524, %526 : vector<1x768xf32>
    %528 = arith.mulf %516, %522 : vector<1x768xf32>
    %529 = arith.mulf %528, %501 : vector<1x768xf32>
    %530 = arith.addf %527, %529 : vector<1x768xf32>
    %531 = arith.mulf %518, %522 : vector<1x768xf32>
    %532 = arith.mulf %531, %502 : vector<1x768xf32>
    %533 = arith.addf %530, %532 : vector<1x768xf32>
    %534 = arith.mulf %533, %533 : vector<1x768xf32>
    %cst_143 = arith.constant dense<0.000000e+00> : vector<1x768xf32>
    %535 = tpu.matmul %534, %503, %cst_143 {dimension_numbers = #tpu.dot_dimension_numbers<[1], [0], [0], [1], [0, 0, 1, 1], [], []>} : vector<1x768xf32>, vector<768x768xf32>, vector<1x768xf32> -> vector<1x768xf32>
    %cst_144 = arith.constant 1.000000e+00 : f32
    %536 = vector.broadcast %cst_144 : f32 to vector<1x768xf32>
    %537 = arith.addf %536, %535 : vector<1x768xf32>
    %538 = tpu.reciprocal %537 {approx = true} : vector<1x768xf32> -> vector<1x768xf32>
    %539 = arith.mulf %535, %538 : vector<1x768xf32>
    %540 = arith.mulf %539, %533 : vector<1x768xf32>
    %cst_145 = arith.constant 9.99999993E-9 : f32
    %541 = vector.broadcast %cst_145 : f32 to vector<1x768xf32>
    %542 = arith.addf %535, %541 : vector<1x768xf32>
    %543 = tpu.reciprocal %542 {approx = true} : vector<1x768xf32> -> vector<1x768xf32>
    %544 = arith.mulf %540, %543 : vector<1x768xf32>
    %545 = arith.mulf %499, %544 : vector<1x768xf32>
    %546 = arith.mulf %500, %544 : vector<1x768xf32>
    %547 = arith.mulf %501, %544 : vector<1x768xf32>
    %548 = arith.mulf %502, %544 : vector<1x768xf32>
    %549 = tpu.concatenate %545, %546, %547, %548 in 0 : vector<1x768xf32>, vector<1x768xf32>, vector<1x768xf32>, vector<1x768xf32> -> vector<4x768xf32>
    %cst_146 = arith.constant dense<0.000000e+00> : vector<4x768xf32>
    %550 = tpu.matmul %549, %503, %cst_146 {dimension_numbers = #tpu.dot_dimension_numbers<[1], [0], [0], [1], [0, 0, 1, 1], [], []>} : vector<4x768xf32>, vector<768x768xf32>, vector<4x768xf32> -> vector<4x768xf32>
    %551 = vector.extract_strided_slice %550 {offsets = [0, 0], sizes = [1, 768], strides = [1, 1]} : vector<4x768xf32> to vector<1x768xf32>
    %552 = arith.addf %504, %551 : vector<1x768xf32>
    %553 = vector.extract_strided_slice %550 {offsets = [1, 0], sizes = [1, 768], strides = [1, 1]} : vector<4x768xf32> to vector<1x768xf32>
    %554 = arith.addf %505, %553 : vector<1x768xf32>
    %555 = vector.extract_strided_slice %550 {offsets = [2, 0], sizes = [1, 768], strides = [1, 1]} : vector<4x768xf32> to vector<1x768xf32>
    %556 = arith.addf %506, %555 : vector<1x768xf32>
    %557 = vector.extract_strided_slice %550 {offsets = [3, 0], sizes = [1, 768], strides = [1, 1]} : vector<4x768xf32> to vector<1x768xf32>
    %558 = arith.addf %507, %557 : vector<1x768xf32>
    %559 = arith.maximumf %552, %554 : vector<1x768xf32>
    %560 = arith.maximumf %559, %556 : vector<1x768xf32>
    %561 = arith.maximumf %560, %558 : vector<1x768xf32>
    %562 = arith.subf %552, %561 : vector<1x768xf32>
    %563 = math.exp %562 : vector<1x768xf32>
    %564 = arith.subf %554, %561 : vector<1x768xf32>
    %565 = math.exp %564 : vector<1x768xf32>
    %566 = arith.subf %556, %561 : vector<1x768xf32>
    %567 = math.exp %566 : vector<1x768xf32>
    %568 = arith.subf %558, %561 : vector<1x768xf32>
    %569 = math.exp %568 : vector<1x768xf32>
    %570 = arith.addf %563, %565 : vector<1x768xf32>
    %571 = arith.addf %570, %567 : vector<1x768xf32>
    %572 = arith.addf %571, %569 : vector<1x768xf32>
    %573 = tpu.reciprocal %572 {approx = true} : vector<1x768xf32> -> vector<1x768xf32>
    %574 = arith.mulf %563, %573 : vector<1x768xf32>
    %575 = arith.mulf %574, %499 : vector<1x768xf32>
    %576 = arith.mulf %565, %573 : vector<1x768xf32>
    %577 = arith.mulf %576, %500 : vector<1x768xf32>
    %578 = arith.addf %575, %577 : vector<1x768xf32>
    %579 = arith.mulf %567, %573 : vector<1x768xf32>
    %580 = arith.mulf %579, %501 : vector<1x768xf32>
    %581 = arith.addf %578, %580 : vector<1x768xf32>
    %582 = arith.mulf %569, %573 : vector<1x768xf32>
    %583 = arith.mulf %582, %502 : vector<1x768xf32>
    %584 = arith.addf %581, %583 : vector<1x768xf32>
    %585 = arith.mulf %584, %584 : vector<1x768xf32>
    %cst_147 = arith.constant dense<0.000000e+00> : vector<1x768xf32>
    %586 = tpu.matmul %585, %503, %cst_147 {dimension_numbers = #tpu.dot_dimension_numbers<[1], [0], [0], [1], [0, 0, 1, 1], [], []>} : vector<1x768xf32>, vector<768x768xf32>, vector<1x768xf32> -> vector<1x768xf32>
    %cst_148 = arith.constant 1.000000e+00 : f32
    %587 = vector.broadcast %cst_148 : f32 to vector<1x768xf32>
    %588 = arith.addf %587, %586 : vector<1x768xf32>
    %589 = tpu.reciprocal %588 {approx = true} : vector<1x768xf32> -> vector<1x768xf32>
    %590 = arith.mulf %586, %589 : vector<1x768xf32>
    %591 = arith.mulf %590, %584 : vector<1x768xf32>
    %cst_149 = arith.constant 9.99999993E-9 : f32
    %592 = vector.broadcast %cst_149 : f32 to vector<1x768xf32>
    %593 = arith.addf %586, %592 : vector<1x768xf32>
    %594 = tpu.reciprocal %593 {approx = true} : vector<1x768xf32> -> vector<1x768xf32>
    %595 = arith.mulf %591, %594 : vector<1x768xf32>
    %c0_150 = arith.constant 0 : index
    %c0_151 = arith.constant 0 : index
    %c0_152 = arith.constant 0 : index
    %596 = vector.load %arg14[%c0_150, %c0_151, %c0_152] : memref<1x1x768xf32, #tpu.memory_space<vmem>>, vector<1x1x768xf32>
    %597 = vector.shape_cast %596 : vector<1x1x768xf32> to vector<1x768xf32>
    %598 = vector.shape_cast %595 : vector<1x768xf32> to vector<1x1x768xf32>
    tpu.vector_store %arg14[%c0_150, %c0_151, %c0_152], %598 {strides = array<i32>} : memref<1x1x768xf32, #tpu.memory_space<vmem>>, vector<1x1x768xf32>,
    return
  }
  func.func @transform_0(%arg0: i32) -> (i32, i32, i32) {
    %c0_i32 = arith.constant 0 : i32
    %c0_i32_0 = arith.constant 0 : i32
    %c0_i32_1 = arith.constant 0 : i32
    return %arg0, %c0_i32, %c0_i32_0 : i32, i32, i32
  }
  func.func @transform_1(%arg0: i32) -> (i32, i32) {
    %c0_i32 = arith.constant 0 : i32
    %c0_i32_0 = arith.constant 0 : i32
    %c0_i32_1 = arith.constant 0 : i32
    return %c0_i32, %c0_i32_0 : i32, i32
  }
  func.func @transform_2(%arg0: i32) -> (i32, i32) {
    %c0_i32 = arith.constant 0 : i32
    %c0_i32_0 = arith.constant 0 : i32
    %c0_i32_1 = arith.constant 0 : i32
    return %c0_i32, %c0_i32_0 : i32, i32
  }
  func.func @transform_3(%arg0: i32) -> (i32, i32) {
    %c0_i32 = arith.constant 0 : i32
    %c0_i32_0 = arith.constant 0 : i32
    %c0_i32_1 = arith.constant 0 : i32
    return %c0_i32, %c0_i32_0 : i32, i32
  }
  func.func @transform_4(%arg0: i32) -> (i32, i32) {
    %c0_i32 = arith.constant 0 : i32
    %c0_i32_0 = arith.constant 0 : i32
    %c0_i32_1 = arith.constant 0 : i32
    return %c0_i32, %c0_i32_0 : i32, i32
  }
  func.func @transform_5(%arg0: i32) -> (i32, i32) {
    %c0_i32 = arith.constant 0 : i32
    %c0_i32_0 = arith.constant 0 : i32
    %c0_i32_1 = arith.constant 0 : i32
    return %c0_i32, %c0_i32_0 : i32, i32
  }
  func.func @transform_6(%arg0: i32) -> (i32, i32) {
    %c0_i32 = arith.constant 0 : i32
    %c0_i32_0 = arith.constant 0 : i32
    %c0_i32_1 = arith.constant 0 : i32
    return %c0_i32, %c0_i32_0 : i32, i32
  }
  func.func @transform_7(%arg0: i32) -> (i32, i32) {
    %c0_i32 = arith.constant 0 : i32
    %c0_i32_0 = arith.constant 0 : i32
    %c0_i32_1 = arith.constant 0 : i32
    return %c0_i32, %c0_i32_0 : i32, i32
  }
  func.func @transform_8(%arg0: i32) -> (i32, i32) {
    %c0_i32 = arith.constant 0 : i32
    %c0_i32_0 = arith.constant 0 : i32
    %c0_i32_1 = arith.constant 0 : i32
    return %c0_i32, %c0_i32_0 : i32, i32
  }
  func.func @transform_9(%arg0: i32) -> (i32, i32) {
    %c0_i32 = arith.constant 0 : i32
    %c0_i32_0 = arith.constant 0 : i32
    %c0_i32_1 = arith.constant 0 : i32
    return %c0_i32, %c0_i32_0 : i32, i32
  }
  func.func @transform_10(%arg0: i32) -> (i32, i32) {
    %c0_i32 = arith.constant 0 : i32
    %c0_i32_0 = arith.constant 0 : i32
    %c0_i32_1 = arith.constant 0 : i32
    return %c0_i32, %c0_i32_0 : i32, i32
  }
  func.func @transform_11(%arg0: i32) -> (i32, i32) {
    %c0_i32 = arith.constant 0 : i32
    %c0_i32_0 = arith.constant 0 : i32
    %c0_i32_1 = arith.constant 0 : i32
    return %c0_i32, %c0_i32_0 : i32, i32
  }
  func.func @transform_12(%arg0: i32) -> (i32, i32) {
    %c0_i32 = arith.constant 0 : i32
    %c0_i32_0 = arith.constant 0 : i32
    %c0_i32_1 = arith.constant 0 : i32
    return %c0_i32, %c0_i32_0 : i32, i32
  }
  func.func @transform_13(%arg0: i32) -> (i32, i32, i32) {
    %c0_i32 = arith.constant 0 : i32
    %c0_i32_0 = arith.constant 0 : i32
    %c0_i32_1 = arith.constant 0 : i32
    return %arg0, %c0_i32, %c0_i32_0 : i32, i32, i32
  }
}

</mosaic_0001>

<llo_original>
// kernel: tile.8
$region0: #{tile.8}
  #allocation0 [shape = 's32[1]{0}', space=sflag, size = 0x4, scoped, tag = 'scoped memory for tile.8']
  %s0 = inlined_call_operand.vmem [shape: f32[16], index: 0, kind: input, shape index: {}]
  %s1 = inlined_call_operand.vmem [shape: f32[4,16], index: 1, kind: output, shape index: {}]
  // Predicated region
  $region2: #{tile.8} parent=0 // pred_check
    _
  $region3: #{tile.8} parent=0 // pred_check_branch
    %3 = sbr.rel (0) target = $region5
  $region4: #{tile.8} parent=0 // pred_region
    _
  $region5: #{tile.8} parent=0 // pred_fallthru
    _
  %v4 = vld [vmem:[%s0] ss:$0 sm:$0xff]
  %5 = vst [vmem:[%s1] sm:$0xf] %v4

// kernel: tile.0
$region0: #{tile.0}
  %s0 = inlined_call_operand.vmem [shape: f32[4,16], index: 0, kind: input, shape index: {}]
  %s1 = inlined_call_operand.vmem [shape: f32[64,1], index: 1, kind: output, shape index: {}]
  $region1: #{tile.0} parent=0
    #allocation0 [shape = 'u8[4096]{0}', space=vmem, size = 0x1000, scoped, tag = 'scoped mem for input reshape']
    %s3 = sshllo.u32 0, 4
    %v4 = vld [vmem:[%s0] sm:%s3]
    %5 = vst [vmem:[#allocation0] sm:%s3] %v4
    %v6 = vld [vmem:[#allocation0] sm:$0xf]
    %vm7 = vcmask 7168
    %8 = vst.msk [vmem:[%s1] ss:$16 sm:$0x3] %vm7, %v6
    %9 = vst.msk [vmem:[%s1] ss:$16 sm:$0xc] %vm7, %v6
    %v10 = vld [vmem:[#allocation0] sm:$0xf]
    %11 = vrot.lane.b32.xlu0 %v10, 127
    %v12 = vpop.permute.xlu0 %11
    %vm13 = vcmask 7168
    %s14 = scalar_lea.vmem %s1, 1
    %15 = vst.msk [vmem:[%s14] ss:$16 sm:$0x3] %vm13, %v12
    %s16 = scalar_lea.vmem %s1, 1
    %17 = vst.msk [vmem:[%s16] ss:$16 sm:$0xc] %vm13, %v12
    %v18 = vld [vmem:[#allocation0] sm:$0xf]
    %19 = vrot.lane.b32.xlu0 %v18, 126
    %v20 = vpop.permute.xlu0 %19
    %vm21 = vcmask 7168
    %s22 = scalar_lea.vmem %s1, 2
    %23 = vst.msk [vmem:[%s22] ss:$16 sm:$0x3] %vm21, %v20
    %s24 = scalar_lea.vmem %s1, 2
    %25 = vst.msk [vmem:[%s24] ss:$16 sm:$0xc] %vm21, %v20
    %v26 = vld [vmem:[#allocation0] sm:$0xf]
    %27 = vrot.lane.b32.xlu0 %v26, 125
    %v28 = vpop.permute.xlu0 %27
    %vm29 = vcmask 7168
    %s30 = scalar_lea.vmem %s1, 3
    %31 = vst.msk [vmem:[%s30] ss:$16 sm:$0x3] %vm29, %v28
    %s32 = scalar_lea.vmem %s1, 3
    %33 = vst.msk [vmem:[%s32] ss:$16 sm:$0xc] %vm29, %v28
    %v34 = vld [vmem:[#allocation0] sm:$0xf]
    %35 = vrot.lane.b32.xlu0 %v34, 124
    %v36 = vpop.permute.xlu0 %35
    %vm37 = vcmask 7168
    %s38 = scalar_lea.vmem %s1, 4
    %39 = vst.msk [vmem:[%s38] ss:$16 sm:$0x3] %vm37, %v36
    %s40 = scalar_lea.vmem %s1, 4
    %41 = vst.msk [vmem:[%s40] ss:$16 sm:$0xc] %vm37, %v36
    %v42 = vld [vmem:[#allocation0] sm:$0xf]
    %43 = vrot.lane.b32.xlu0 %v42, 123
    %v44 = vpop.permute.xlu0 %43
    %vm45 = vcmask 7168
    %s46 = scalar_lea.vmem %s1, 5
    %47 = vst.msk [vmem:[%s46] ss:$16 sm:$0x3] %vm45, %v44
    %s48 = scalar_lea.vmem %s1, 5
    %49 = vst.msk [vmem:[%s48] ss:$16 sm:$0xc] %vm45, %v44
    %v50 = vld [vmem:[#allocation0] sm:$0xf]
    %51 = vrot.lane.b32.xlu0 %v50, 122
    %v52 = vpop.permute.xlu0 %51
    %vm53 = vcmask 7168
    %s54 = scalar_lea.vmem %s1, 6
    %55 = vst.msk [vmem:[%s54] ss:$16 sm:$0x3] %vm53, %v52
    %s56 = scalar_lea.vmem %s1, 6
    %57 = vst.msk [vmem:[%s56] ss:$16 sm:$0xc] %vm53, %v52
    %v58 = vld [vmem:[#allocation0] sm:$0xf]
    %59 = vrot.lane.b32.xlu0 %v58, 121
    %v60 = vpop.permute.xlu0 %59
    %vm61 = vcmask 7168
    %s62 = scalar_lea.vmem %s1, 7
    %63 = vst.msk [vmem:[%s62] ss:$16 sm:$0x3] %vm61, %v60
    %s64 = scalar_lea.vmem %s1, 7
    %65 = vst.msk [vmem:[%s64] ss:$16 sm:$0xc] %vm61, %v60
    %v66 = vld [vmem:[#allocation0] sm:$0xf]
    %67 = vrot.lane.b32.xlu0 %v66, 120
    %v68 = vpop.permute.xlu0 %67
    %vm69 = vcmask 7168
    %s70 = scalar_lea.vmem %s1, 8
    %71 = vst.msk [vmem:[%s70] ss:$16 sm:$0x3] %vm69, %v68
    %s72 = scalar_lea.vmem %s1, 8
    %73 = vst.msk [vmem:[%s72] ss:$16 sm:$0xc] %vm69, %v68
    %v74 = vld [vmem:[#allocation0] sm:$0xf]
    %75 = vrot.lane.b32.xlu0 %v74, 119
    %v76 = vpop.permute.xlu0 %75
    %vm77 = vcmask 7168
    %s78 = scalar_lea.vmem %s1, 9
    %79 = vst.msk [vmem:[%s78] ss:$16 sm:$0x3] %vm77, %v76
    %s80 = scalar_lea.vmem %s1, 9
    %81 = vst.msk [vmem:[%s80] ss:$16 sm:$0xc] %vm77, %v76
    %v82 = vld [vmem:[#allocation0] sm:$0xf]
    %83 = vrot.lane.b32.xlu0 %v82, 118
    %v84 = vpop.permute.xlu0 %83
    %vm85 = vcmask 7168
    %s86 = scalar_lea.vmem %s1, 10
    %87 = vst.msk [vmem:[%s86] ss:$16 sm:$0x3] %vm85, %v84
    %s88 = scalar_lea.vmem %s1, 10
    %89 = vst.msk [vmem:[%s88] ss:$16 sm:$0xc] %vm85, %v84
    %v90 = vld [vmem:[#allocation0] sm:$0xf]
    %91 = vrot.lane.b32.xlu0 %v90, 117
    %v92 = vpop.permute.xlu0 %91
    %vm93 = vcmask 7168
    %s94 = scalar_lea.vmem %s1, 11
    %95 = vst.msk [vmem:[%s94] ss:$16 sm:$0x3] %vm93, %v92
    %s96 = scalar_lea.vmem %s1, 11
    %97 = vst.msk [vmem:[%s96] ss:$16 sm:$0xc] %vm93, %v92
    %v98 = vld [vmem:[#allocation0] sm:$0xf]
    %99 = vrot.lane.b32.xlu0 %v98, 116
    %v100 = vpop.permute.xlu0 %99
    %vm101 = vcmask 7168
    %s102 = scalar_lea.vmem %s1, 12
    %103 = vst.msk [vmem:[%s102] ss:$16 sm:$0x3] %vm101, %v100
    %s104 = scalar_lea.vmem %s1, 12
    %105 = vst.msk [vmem:[%s104] ss:$16 sm:$0xc] %vm101, %v100
    %v106 = vld [vmem:[#allocation0] sm:$0xf]
    %107 = vrot.lane.b32.xlu0 %v106, 115
    %v108 = vpop.permute.xlu0 %107
    %vm109 = vcmask 7168
    %s110 = scalar_lea.vmem %s1, 13
    %111 = vst.msk [vmem:[%s110] ss:$16 sm:$0x3] %vm109, %v108
    %s112 = scalar_lea.vmem %s1, 13
    %113 = vst.msk [vmem:[%s112] ss:$16 sm:$0xc] %vm109, %v108
    %v114 = vld [vmem:[#allocation0] sm:$0xf]
    %115 = vrot.lane.b32.xlu0 %v114, 114
    %v116 = vpop.permute.xlu0 %115
    %vm117 = vcmask 7168
    %s118 = scalar_lea.vmem %s1, 14
    %119 = vst.msk [vmem:[%s118] ss:$16 sm:$0x3] %vm117, %v116
    %s120 = scalar_lea.vmem %s1, 14
    %121 = vst.msk [vmem:[%s120] ss:$16 sm:$0xc] %vm117, %v116
    %v122 = vld [vmem:[#allocation0] sm:$0xf]
    %123 = vrot.lane.b32.xlu0 %v122, 113
    %v124 = vpop.permute.xlu0 %123
    %vm125 = vcmask 7168
    %s126 = scalar_lea.vmem %s1, 15
    %127 = vst.msk [vmem:[%s126] ss:$16 sm:$0x3] %vm125, %v124
    %s128 = scalar_lea.vmem %s1, 15
    %129 = vst.msk [vmem:[%s128] ss:$16 sm:$0xc] %vm125, %v124

// kernel: timecaps_forward.1
$region0: #{timecaps_forward.1}
  #allocation0 [shape = 'u32[]', space=smem, size = 0x4, offset = 0x4, fixed_abs, tag = 'smem constant byte address 0x4 - core index']
  #allocation1 [shape = 'u32[144,128]{1,0:T(1,128)}', space=vmem, size = 0x12000, scoped, tag = 'internal scratch']
  %s0 = inlined_call_operand.vmem [shape: f32[2,1,128], index: 0, kind: input, shape index: {}]
  %s1 = inlined_call_operand.vmem [shape: f32[8,3], index: 1, kind: input, shape index: {}]
  %s2 = inlined_call_operand.vmem [shape: f32[8,24], index: 2, kind: input, shape index: {}]
  %s3 = inlined_call_operand.vmem [shape: f32[64,25], index: 3, kind: input, shape index: {}]
  %s4 = inlined_call_operand.vmem [shape: f32[4,9], index: 4, kind: input, shape index: {}]
  %s5 = inlined_call_operand.vmem [shape: f32[4,21], index: 5, kind: input, shape index: {}]
  %s6 = inlined_call_operand.vmem [shape: f32[512,768], index: 6, kind: input, shape index: {}]
  %s7 = inlined_call_operand.vmem [shape: f32[32,768], index: 7, kind: input, shape index: {}]
  %s8 = inlined_call_operand.vmem [shape: f32[128,128], index: 8, kind: input, shape index: {}]
  %s9 = inlined_call_operand.vmem [shape: f32[128,128], index: 9, kind: input, shape index: {}]
  %s10 = inlined_call_operand.vmem [shape: f32[32,32], index: 10, kind: input, shape index: {}]
  %s11 = inlined_call_operand.vmem [shape: f32[128,128], index: 11, kind: input, shape index: {}]
  %s12 = inlined_call_operand.vmem [shape: f32[768,768], index: 12, kind: input, shape index: {}]
  %s13 = inlined_call_operand.vmem [shape: f32[2,1,768], index: 13, kind: output, shape index: {}]
  %s14 = sld [smem:[#allocation0]]
  $region85: #{timecaps_forward.1} parent=0
    _
  %s16 = ssub.s32 1, %s14
  %s17 = scalar_select 0, %s16, %s14
  loop: start=0, step=1, limit=4
  $region2: #{timecaps_forward.1} parent=0 // loop_pre_header
    _
  $region3: #{timecaps_forward.1} parent=0 // loop_header
    %s19 = sphi 0, %s23
    %p20 = scmp.ge.s32.totalorder %s19, 4
    %s29 = sphi 0, %s31
    %s32 = sphi 0, %s29
    %s33 = sphi 0, %s32
    %s49 = sphi 0, %s33
    %s53 = sphi 0, %s53
    %s55 = sphi 0, %s53
    %s56 = sphi 0, %s55
    %s70 = sphi 0, %s56
    %s74 = sphi 0, %s74
    %s76 = sphi 0, %s74
    %s77 = sphi 0, %s76
    %s91 = sphi 0, %s77
    %s95 = sphi 0, %s95
    %s97 = sphi 0, %s95
    %s98 = sphi 0, %s97
    %s112 = sphi 0, %s98
    %s116 = sphi 0, %s116
    %s118 = sphi 0, %s116
    %s119 = sphi 0, %s118
    %s133 = sphi 0, %s119
    %s137 = sphi 0, %s137
    %s139 = sphi 0, %s137
    %s140 = sphi 0, %s139
    %s154 = sphi 0, %s140
    %s158 = sphi 0, %s158
    %s160 = sphi 0, %s158
    %s161 = sphi 0, %s160
    %s175 = sphi 0, %s161
    %s179 = sphi 0, %s179
    %s181 = sphi 0, %s179
    %s182 = sphi 0, %s181
    %s196 = sphi 0, %s182
    %s200 = sphi 0, %s200
    %s202 = sphi 0, %s200
    %s203 = sphi 0, %s202
    %s217 = sphi 0, %s203
    %s221 = sphi 0, %s221
    %s223 = sphi 0, %s221
    %s224 = sphi 0, %s223
    %s238 = sphi 0, %s224
    %s242 = sphi 0, %s242
    %s244 = sphi 0, %s242
    %s245 = sphi 0, %s244
    %s259 = sphi 0, %s245
    %s263 = sphi 0, %s263
    %s265 = sphi 0, %s263
    %s266 = sphi 0, %s265
    %s280 = sphi 0, %s266
    %s284 = sphi 0, %s284
    %s286 = sphi 0, %s284
    %s287 = sphi 0, %s286
    %s301 = sphi 0, %s287
    %s307 = sphi 0, %s309
    %s310 = sphi 0, %s307
    %s311 = sphi 0, %s310
    %s327 = sphi 0, %s311
  $region4: #{timecaps_forward.1} parent=0 // loop_header_branch
    %22 = sbr.rel (%p20) target = $region8
  $region5: #{timecaps_forward.1} parent=0 // loop_body
    %s24 = ssub.s32 %s19, 1
    %s25 = ssub.s32 %s19, 2
    %s26 = sadd.s32 %s19, 1
    %s27 = ssub.s32 %s19, %s26
    %p28 = scmp.eq.s32.totalorder %s27, 0
    %s30 = sadd.s32 %s29, 1
    %s31 = scalar_select %p28, %s29, %s30
    %p34 = pneg %p28
    %p35 = scmp.eq.s32.totalorder %s19, 1
    %p36 = por %p34, %p35
    %p37 = scmp.ne.s32.totalorder %s29, %s32
    %p38 = scmp.eq.s32.totalorder %s19, 0
    %p39 = por %p37, %p38
    %p40 = scmp.ne.s32.totalorder %s29, %s32
    %p41 = scmp.eq.s32.totalorder %s24, 1
    %p42 = por %p40, %p41
    %p43 = scmp.ne.s32.totalorder %s32, %s33
    %p44 = scmp.eq.s32.totalorder %s24, 0
    %p45 = por %p43, %p44
    %p46 = scmp.ne.s32.totalorder %s32, %s33
    %p47 = scmp.eq.s32.totalorder %s25, 1
    %p48 = por %p46, %p47
    %p50 = scmp.ne.s32.totalorder %s33, %s49
    %p51 = scmp.eq.s32.totalorder %s25, 0
    %p52 = por %p50, %p51
    %s54 = sadd.s32 %s53, 1
    %p57 = scmp.eq.s32.totalorder %s19, 1
    %p58 = scmp.ne.s32.totalorder %s53, %s55
    %p59 = scmp.eq.s32.totalorder %s19, 0
    %p60 = por %p58, %p59
    %p61 = scmp.ne.s32.totalorder %s53, %s55
    %p62 = scmp.eq.s32.totalorder %s24, 1
    %p63 = por %p61, %p62
    %p64 = scmp.ne.s32.totalorder %s55, %s56
    %p65 = scmp.eq.s32.totalorder %s24, 0
    %p66 = por %p64, %p65
    %p67 = scmp.ne.s32.totalorder %s55, %s56
    %p68 = scmp.eq.s32.totalorder %s25, 1
    %p69 = por %p67, %p68
    %p71 = scmp.ne.s32.totalorder %s56, %s70
    %p72 = scmp.eq.s32.totalorder %s25, 0
    %p73 = por %p71, %p72
    %s75 = sadd.s32 %s74, 1
    %p78 = scmp.eq.s32.totalorder %s19, 1
    %p79 = scmp.ne.s32.totalorder %s74, %s76
    %p80 = scmp.eq.s32.totalorder %s19, 0
    %p81 = por %p79, %p80
    %p82 = scmp.ne.s32.totalorder %s74, %s76
    %p83 = scmp.eq.s32.totalorder %s24, 1
    %p84 = por %p82, %p83
    %p85 = scmp.ne.s32.totalorder %s76, %s77
    %p86 = scmp.eq.s32.totalorder %s24, 0
    %p87 = por %p85, %p86
    %p88 = scmp.ne.s32.totalorder %s76, %s77
    %p89 = scmp.eq.s32.totalorder %s25, 1
    %p90 = por %p88, %p89
    %p92 = scmp.ne.s32.totalorder %s77, %s91
    %p93 = scmp.eq.s32.totalorder %s25, 0
    %p94 = por %p92, %p93
    %s96 = sadd.s32 %s95, 1
    %p99 = scmp.eq.s32.totalorder %s19, 1
    %p100 = scmp.ne.s32.totalorder %s95, %s97
    %p101 = scmp.eq.s32.totalorder %s19, 0
    %p102 = por %p100, %p101
    %p103 = scmp.ne.s32.totalorder %s95, %s97
    %p104 = scmp.eq.s32.totalorder %s24, 1
    %p105 = por %p103, %p104
    %p106 = scmp.ne.s32.totalorder %s97, %s98
    %p107 = scmp.eq.s32.totalorder %s24, 0
    %p108 = por %p106, %p107
    %p109 = scmp.ne.s32.totalorder %s97, %s98
    %p110 = scmp.eq.s32.totalorder %s25, 1
    %p111 = por %p109, %p110
    %p113 = scmp.ne.s32.totalorder %s98, %s112
    %p114 = scmp.eq.s32.totalorder %s25, 0
    %p115 = por %p113, %p114
    %s117 = sadd.s32 %s116, 1
    %p120 = scmp.eq.s32.totalorder %s19, 1
    %p121 = scmp.ne.s32.totalorder %s116, %s118
    %p122 = scmp.eq.s32.totalorder %s19, 0
    %p123 = por %p121, %p122
    %p124 = scmp.ne.s32.totalorder %s116, %s118
    %p125 = scmp.eq.s32.totalorder %s24, 1
    %p126 = por %p124, %p125
    %p127 = scmp.ne.s32.totalorder %s118, %s119
    %p128 = scmp.eq.s32.totalorder %s24, 0
    %p129 = por %p127, %p128
    %p130 = scmp.ne.s32.totalorder %s118, %s119
    %p131 = scmp.eq.s32.totalorder %s25, 1
    %p132 = por %p130, %p131
    %p134 = scmp.ne.s32.totalorder %s119, %s133
    %p135 = scmp.eq.s32.totalorder %s25, 0
    %p136 = por %p134, %p135
    %s138 = sadd.s32 %s137, 1
    %p141 = scmp.eq.s32.totalorder %s19, 1
    %p142 = scmp.ne.s32.totalorder %s137, %s139
    %p143 = scmp.eq.s32.totalorder %s19, 0
    %p144 = por %p142, %p143
    %p145 = scmp.ne.s32.totalorder %s137, %s139
    %p146 = scmp.eq.s32.totalorder %s24, 1
    %p147 = por %p145, %p146
    %p148 = scmp.ne.s32.totalorder %s139, %s140
    %p149 = scmp.eq.s32.totalorder %s24, 0
    %p150 = por %p148, %p149
    %p151 = scmp.ne.s32.totalorder %s139, %s140
    %p152 = scmp.eq.s32.totalorder %s25, 1
    %p153 = por %p151, %p152
    %p155 = scmp.ne.s32.totalorder %s140, %s154
    %p156 = scmp.eq.s32.totalorder %s25, 0
    %p157 = por %p155, %p156
    %s159 = sadd.s32 %s158, 1
    %p162 = scmp.eq.s32.totalorder %s19, 1
    %p163 = scmp.ne.s32.totalorder %s158, %s160
    %p164 = scmp.eq.s32.totalorder %s19, 0
    %p165 = por %p163, %p164
    %p166 = scmp.ne.s32.totalorder %s158, %s160
    %p167 = scmp.eq.s32.totalorder %s24, 1
    %p168 = por %p166, %p167
    %p169 = scmp.ne.s32.totalorder %s160, %s161
    %p170 = scmp.eq.s32.totalorder %s24, 0
    %p171 = por %p169, %p170
    %p172 = scmp.ne.s32.totalorder %s160, %s161
    %p173 = scmp.eq.s32.totalorder %s25, 1
    %p174 = por %p172, %p173
    %p176 = scmp.ne.s32.totalorder %s161, %s175
    %p177 = scmp.eq.s32.totalorder %s25, 0
    %p178 = por %p176, %p177
    %s180 = sadd.s32 %s179, 1
    %p183 = scmp.eq.s32.totalorder %s19, 1
    %p184 = scmp.ne.s32.totalorder %s179, %s181
    %p185 = scmp.eq.s32.totalorder %s19, 0
    %p186 = por %p184, %p185
    %p187 = scmp.ne.s32.totalorder %s179, %s181
    %p188 = scmp.eq.s32.totalorder %s24, 1
    %p189 = por %p187, %p188
    %p190 = scmp.ne.s32.totalorder %s181, %s182
    %p191 = scmp.eq.s32.totalorder %s24, 0
    %p192 = por %p190, %p191
    %p193 = scmp.ne.s32.totalorder %s181, %s182
    %p194 = scmp.eq.s32.totalorder %s25, 1
    %p195 = por %p193, %p194
    %p197 = scmp.ne.s32.totalorder %s182, %s196
    %p198 = scmp.eq.s32.totalorder %s25, 0
    %p199 = por %p197, %p198
    %s201 = sadd.s32 %s200, 1
    %p204 = scmp.eq.s32.totalorder %s19, 1
    %p205 = scmp.ne.s32.totalorder %s200, %s202
    %p206 = scmp.eq.s32.totalorder %s19, 0
    %p207 = por %p205, %p206
    %p208 = scmp.ne.s32.totalorder %s200, %s202
    %p209 = scmp.eq.s32.totalorder %s24, 1
    %p210 = por %p208, %p209
    %p211 = scmp.ne.s32.totalorder %s202, %s203
    %p212 = scmp.eq.s32.totalorder %s24, 0
    %p213 = por %p211, %p212
    %p214 = scmp.ne.s32.totalorder %s202, %s203
    %p215 = scmp.eq.s32.totalorder %s25, 1
    %p216 = por %p214, %p215
    %p218 = scmp.ne.s32.totalorder %s203, %s217
    %p219 = scmp.eq.s32.totalorder %s25, 0
    %p220 = por %p218, %p219
    %s222 = sadd.s32 %s221, 1
    %p225 = scmp.eq.s32.totalorder %s19, 1
    %p226 = scmp.ne.s32.totalorder %s221, %s223
    %p227 = scmp.eq.s32.totalorder %s19, 0
    %p228 = por %p226, %p227
    %p229 = scmp.ne.s32.totalorder %s221, %s223
    %p230 = scmp.eq.s32.totalorder %s24, 1
    %p231 = por %p229, %p230
    %p232 = scmp.ne.s32.totalorder %s223, %s224
    %p233 = scmp.eq.s32.totalorder %s24, 0
    %p234 = por %p232, %p233
    %p235 = scmp.ne.s32.totalorder %s223, %s224
    %p236 = scmp.eq.s32.totalorder %s25, 1
    %p237 = por %p235, %p236
    %p239 = scmp.ne.s32.totalorder %s224, %s238
    %p240 = scmp.eq.s32.totalorder %s25, 0
    %p241 = por %p239, %p240
    %s243 = sadd.s32 %s242, 1
    %p246 = scmp.eq.s32.totalorder %s19, 1
    %p247 = scmp.ne.s32.totalorder %s242, %s244
    %p248 = scmp.eq.s32.totalorder %s19, 0
    %p249 = por %p247, %p248
    %p250 = scmp.ne.s32.totalorder %s242, %s244
    %p251 = scmp.eq.s32.totalorder %s24, 1
    %p252 = por %p250, %p251
    %p253 = scmp.ne.s32.totalorder %s244, %s245
    %p254 = scmp.eq.s32.totalorder %s24, 0
    %p255 = por %p253, %p254
    %p256 = scmp.ne.s32.totalorder %s244, %s245
    %p257 = scmp.eq.s32.totalorder %s25, 1
    %p258 = por %p256, %p257
    %p260 = scmp.ne.s32.totalorder %s245, %s259
    %p261 = scmp.eq.s32.totalorder %s25, 0
    %p262 = por %p260, %p261
    %s264 = sadd.s32 %s263, 1
    %p267 = scmp.eq.s32.totalorder %s19, 1
    %p268 = scmp.ne.s32.totalorder %s263, %s265
    %p269 = scmp.eq.s32.totalorder %s19, 0
    %p270 = por %p268, %p269
    %p271 = scmp.ne.s32.totalorder %s263, %s265
    %p272 = scmp.eq.s32.totalorder %s24, 1
    %p273 = por %p271, %p272
    %p274 = scmp.ne.s32.totalorder %s265, %s266
    %p275 = scmp.eq.s32.totalorder %s24, 0
    %p276 = por %p274, %p275
    %p277 = scmp.ne.s32.totalorder %s265, %s266
    %p278 = scmp.eq.s32.totalorder %s25, 1
    %p279 = por %p277, %p278
    %p281 = scmp.ne.s32.totalorder %s266, %s280
    %p282 = scmp.eq.s32.totalorder %s25, 0
    %p283 = por %p281, %p282
    %s285 = sadd.s32 %s284, 1
    %p288 = scmp.eq.s32.totalorder %s19, 1
    %p289 = scmp.ne.s32.totalorder %s284, %s286
    %p290 = scmp.eq.s32.totalorder %s19, 0
    %p291 = por %p289, %p290
    %p292 = scmp.ne.s32.totalorder %s284, %s286
    %p293 = scmp.eq.s32.totalorder %s24, 1
    %p294 = por %p292, %p293
    %p295 = scmp.ne.s32.totalorder %s286, %s287
    %p296 = scmp.eq.s32.totalorder %s24, 0
    %p297 = por %p295, %p296
    %p298 = scmp.ne.s32.totalorder %s286, %s287
    %p299 = scmp.eq.s32.totalorder %s25, 1
    %p300 = por %p298, %p299
    %p302 = scmp.ne.s32.totalorder %s287, %s301
    %p303 = scmp.eq.s32.totalorder %s25, 0
    %p304 = por %p302, %p303
    %s305 = ssub.s32 %s19, %s26
    %p306 = scmp.eq.s32.totalorder %s305, 0
    %s308 = sadd.s32 %s307, 1
    %s309 = scalar_select %p306, %s307, %s308
    %p312 = pneg %p306
    %p313 = scmp.eq.s32.totalorder %s19, 1
    %p314 = por %p312, %p313
    %p315 = scmp.ne.s32.totalorder %s307, %s310
    %p316 = scmp.eq.s32.totalorder %s19, 0
    %p317 = por %p315, %p316
    %p318 = scmp.ne.s32.totalorder %s307, %s310
    %p319 = scmp.eq.s32.totalorder %s24, 1
    %p320 = por %p318, %p319
    %p321 = scmp.ne.s32.totalorder %s310, %s311
    %p322 = scmp.eq.s32.totalorder %s24, 0
    %p323 = por %p321, %p322
    %p324 = scmp.ne.s32.totalorder %s310, %s311
    %p325 = scmp.eq.s32.totalorder %s25, 1
    %p326 = por %p324, %p325
    %p328 = scmp.ne.s32.totalorder %s311, %s327
    %p329 = scmp.eq.s32.totalorder %s25, 0
    %p330 = por %p328, %p329
    %p331 = scmp.le.s32.totalorder 1, %s19
    %p332 = scmp.lt.s32.totalorder %s19, 3
    %p333 = pnand %p331, %p332
    %p334 = pneg %p333
    // Predicated region
    $region9: #{timecaps_forward.1} parent=5 // pred_check
      _
    $region10: #{timecaps_forward.1} parent=5 // pred_check_branch
      %336 = sbr.rel (%p333) target = $region12
    $region11: #{timecaps_forward.1} parent=5 // pred_region
      %s337 = ssub.s32 %s19, 1
      // Predicated region
      $region13: #{timecaps_forward.1} parent=11 // pred_check
        %p338 = pneg %p66
      $region14: #{timecaps_forward.1} parent=11 // pred_check_branch
        %340 = sbr.rel (%p338) target = $region16
      $region15: #{timecaps_forward.1} parent=11 // pred_region
        _
      $region16: #{timecaps_forward.1} parent=11 // pred_fallthru
        _
      // Predicated region
      $region17: #{timecaps_forward.1} parent=11 // pred_check
        %p341 = pneg %p87
      $region18: #{timecaps_forward.1} parent=11 // pred_check_branch
        %343 = sbr.rel (%p341) target = $region20
      $region19: #{timecaps_forward.1} parent=11 // pred_region
        _
      $region20: #{timecaps_forward.1} parent=11 // pred_fallthru
        _
      // Predicated region
      $region21: #{timecaps_forward.1} parent=11 // pred_check
        %p344 = pneg %p108
      $region22: #{timecaps_forward.1} parent=11 // pred_check_branch
        %346 = sbr.rel (%p344) target = $region24
      $region23: #{timecaps_forward.1} parent=11 // pred_region
        _
      $region24: #{timecaps_forward.1} parent=11 // pred_fallthru
        _
      // Predicated region
      $region25: #{timecaps_forward.1} parent=11 // pred_check
        %p347 = pneg %p129
      $region26: #{timecaps_forward.1} parent=11 // pred_check_branch
        %349 = sbr.rel (%p347) target = $region28
      $region27: #{timecaps_forward.1} parent=11 // pred_region
        _
      $region28: #{timecaps_forward.1} parent=11 // pred_fallthru
        _
      // Predicated region
      $region29: #{timecaps_forward.1} parent=11 // pred_check
        %p350 = pneg %p150
      $region30: #{timecaps_forward.1} parent=11 // pred_check_branch
        %352 = sbr.rel (%p350) target = $region32
      $region31: #{timecaps_forward.1} parent=11 // pred_region
        _
      $region32: #{timecaps_forward.1} parent=11 // pred_fallthru
        _
      // Predicated region
      $region33: #{timecaps_forward.1} parent=11 // pred_check
        %p353 = pneg %p171
      $region34: #{timecaps_forward.1} parent=11 // pred_check_branch
        %355 = sbr.rel (%p353) target = $region36
      $region35: #{timecaps_forward.1} parent=11 // pred_region
        _
      $region36: #{timecaps_forward.1} parent=11 // pred_fallthru
        _
      // Predicated region
      $region37: #{timecaps_forward.1} parent=11 // pred_check
        %p356 = pneg %p192
      $region38: #{timecaps_forward.1} parent=11 // pred_check_branch
        %358 = sbr.rel (%p356) target = $region40
      $region39: #{timecaps_forward.1} parent=11 // pred_region
        _
      $region40: #{timecaps_forward.1} parent=11 // pred_fallthru
        _
      // Predicated region
      $region41: #{timecaps_forward.1} parent=11 // pred_check
        %p359 = pneg %p213
      $region42: #{timecaps_forward.1} parent=11 // pred_check_branch
        %361 = sbr.rel (%p359) target = $region44
      $region43: #{timecaps_forward.1} parent=11 // pred_region
        _
      $region44: #{timecaps_forward.1} parent=11 // pred_fallthru
        _
      // Predicated region
      $region45: #{timecaps_forward.1} parent=11 // pred_check
        %p362 = pneg %p234
      $region46: #{timecaps_forward.1} parent=11 // pred_check_branch
        %364 = sbr.rel (%p362) target = $region48
      $region47: #{timecaps_forward.1} parent=11 // pred_region
        _
      $region48: #{timecaps_forward.1} parent=11 // pred_fallthru
        _
      // Predicated region
      $region49: #{timecaps_forward.1} parent=11 // pred_check
        %p365 = pneg %p255
      $region50: #{timecaps_forward.1} parent=11 // pred_check_branch
        %367 = sbr.rel (%p365) target = $region52
      $region51: #{timecaps_forward.1} parent=11 // pred_region
        _
      $region52: #{timecaps_forward.1} parent=11 // pred_fallthru
        _
      // Predicated region
      $region53: #{timecaps_forward.1} parent=11 // pred_check
        %p368 = pneg %p276
      $region54: #{timecaps_forward.1} parent=11 // pred_check_branch
        %370 = sbr.rel (%p368) target = $region56
      $region55: #{timecaps_forward.1} parent=11 // pred_region
        _
      $region56: #{timecaps_forward.1} parent=11 // pred_fallthru
        _
      // Predicated region
      $region57: #{timecaps_forward.1} parent=11 // pred_check
        %p371 = pneg %p297
      $region58: #{timecaps_forward.1} parent=11 // pred_check_branch
        %373 = sbr.rel (%p371) target = $region60
      $region59: #{timecaps_forward.1} parent=11 // pred_region
        _
      $region60: #{timecaps_forward.1} parent=11 // pred_fallthru
        _
    $region12: #{timecaps_forward.1} parent=5 // pred_fallthru
      _
    %p374 = scmp.lt.s32.totalorder %s19, 2
    // Predicated region
    $region61: #{timecaps_forward.1} parent=5 // pred_check
      %p375 = pneg %p374
    $region62: #{timecaps_forward.1} parent=5 // pred_check_branch
      %377 = sbr.rel (%p375) target = $region64
    $region63: #{timecaps_forward.1} parent=5 // pred_region
      // Predicated region
      $region65: #{timecaps_forward.1} parent=63 // pred_check
        %p378 = pneg %p39
      $region66: #{timecaps_forward.1} parent=63 // pred_check_branch
        %380 = sbr.rel (%p378) target = $region68
      $region67: #{timecaps_forward.1} parent=63 // pred_region
        %p381 = scmp.lt.s32.totalorder %s19, 1
        %s382 = scalar_select %p381, %s19, 1
        %s383 = scalar_lea.vmem %s0, %s382
      $region68: #{timecaps_forward.1} parent=63 // pred_fallthru
        _
    $region64: #{timecaps_forward.1} parent=5 // pred_fallthru
      _
    %p384 = scmp.le.s32.totalorder 1, %s19
    %p385 = scmp.lt.s32.totalorder %s19, 3
    %p386 = pnand %p384, %p385
    %p387 = pneg %p386
    // Predicated region
    $region69: #{timecaps_forward.1} parent=5 // pred_check
      _
    $region70: #{timecaps_forward.1} parent=5 // pred_check_branch
      %389 = sbr.rel (%p386) target = $region72
    $region71: #{timecaps_forward.1} parent=5 // pred_region
      %s390 = ssub.s32 %s19, 1
      %p391 = scmp.lt.s32.totalorder %s24, 1
      %s392 = scalar_select %p391, %s24, 1
      %s393 = scalar_lea.vmem %s0, %s392
      %p394 = pneg %p45
      %p395 = pneg %p42
      %p396 = pneg %p66
      %p397 = pneg %p63
      %p398 = pneg %p87
      %p399 = pneg %p84
      %p400 = pneg %p108
      %p401 = pneg %p105
      %p402 = pneg %p129
      %p403 = pneg %p126
      %p404 = pneg %p150
      %p405 = pneg %p147
      %p406 = pneg %p171
      %p407 = pneg %p168
      %p408 = pneg %p192
      %p409 = pneg %p189
      %p410 = pneg %p213
      %p411 = pneg %p210
      %p412 = pneg %p234
      %p413 = pneg %p231
      %p414 = pneg %p255
      %p415 = pneg %p252
      %p416 = pneg %p276
      %p417 = pneg %p273
      %p418 = pneg %p297
      %p419 = pneg %p294
      %p420 = pneg %p323
      %p421 = pneg %p320
      %p422 = scmp.lt.s32.totalorder %s24, 1
      %s423 = scalar_select %p422, %s24, 1
      %s424 = smul.addr %s423, 6
      %s425 = scalar_lea.vmem %s13, %s424
      %p426 = scmp.lt.s32.totalorder %s24, 1
      %s427 = scalar_select %p426, %s24, 1
      %s428 = scalar_lea.vmem %s0, %s427
      %p429 = scmp.lt.s32.totalorder %s24, 1
      %s430 = scalar_select %p429, %s24, 1
      %s431 = smul.addr %s430, 6
      %s432 = scalar_lea.vmem %s13, %s431
      %v433 = vld [vmem:[%s428] sm:$0x1]
      %v434 = vlaneseq
      %v435 = vand.u32 %v434, 127
      %vm436 = vcmp.lt.s32.totalorder %v435, 0
      %v437 = vsub.s32 0, %v435
      %v438 = vsel %vm436, %v437, %v435
      %v439 = vshrl.u32 %v438, 4
      %v440 = vand.u32 %v438, 15
      %v441 = vsub.s32 0, %v440
      %v442 = vsel %vm436, %v441, %v440
      %vm443 = vcmp.ne.s32.totalorder %v442, 0
      %vm444 = vcmp.lt.s32.totalorder %v442, 0
      %vm445 = vmand %vm444, %vm443
      %v446 = vadd.s32 %v442, 16
      %v447 = vsel %vm445, %v446, %v442
      %vm448 = vcmp.lt.s32.totalorder %v435, 0
      %v449 = vsub.s32 0, %v435
      %v450 = vsel %vm448, %v449, %v435
      %v451 = vshrl.u32 %v450, 2
      %v452 = vand.u32 %v450, 3
      %v453 = vsub.s32 0, %v452
      %v454 = vsel %vm448, %v453, %v452
      %vm455 = vcmp.ne.s32.totalorder %v454, 0
      %vm456 = vcmp.lt.s32.totalorder %v454, 0
      %vm457 = vmand %vm456, %vm455
      %v458 = vadd.s32 %v454, 4
      %v459 = vsel %vm457, %v458, %v454
      %v460 = vld [vmem:[%s1] sm:$0xff]
      %v461 = vadd.s32 %v447, 4294967295
      %vm462 = vcmp.ge.s32.totalorder %v461, 0
      %vm463 = vcmp.lt.s32.totalorder %v461, 16
      %vm464 = vmand %vm462, %vm463
      %v465 = vsel %vm464, 1, 0
      %v466 = vcvt.s32.f32 %v465
      %v468 = vlaneseq
      %v469 = vshrl.u32 %v468, 7
      %v470 = vsub.s32 0, %v469
      %v471 = vrot.slane %v433, %v470
      %472 = vrot.lane.b32.xlu0 %v471, 1
      %v473 = vpop.permute.xlu0 %472
      %vm475 = vcmask 7168
      %v476 = vsel %vm475, 0.0, %v473
      %v477 = vmul.f32 %v476, %v466
      %vm478 = vcmp.ge.s32.totalorder %v447, 0
      %vm479 = vcmp.lt.s32.totalorder %v447, 16
      %vm480 = vmand %vm478, %vm479
      %v481 = vsel %vm480, 1, 0
      %v482 = vcvt.s32.f32 %v481
      %v483 = vmul.f32 %v433, %v482
      %v484 = vadd.s32 %v447, 1
      %vm485 = vcmp.ge.s32.totalorder %v484, 0
      %vm486 = vcmp.lt.s32.totalorder %v484, 16
      %vm487 = vmand %vm485, %vm486
      %v488 = vsel %vm487, 1, 0
      %v489 = vcvt.s32.f32 %v488
      %490 = vrot.lane.b32.xlu0 %v471, 127
      %v491 = vpop.permute.xlu0 %490
      %vm493 = vcmask 1039360
      %v494 = vsel %vm493, %v491, 0.0
      %v495 = vmul.f32 %v494, %v489
      %v497 = vlaneseq
      %v498 = vshrl.u32 %v497, 7
      %v499 = vsub.s32 0, %v498
      %v500 = vrot.slane %v483, %v499
      %v503 = vrot.slane %v495, 6
      %vm505 = vcmask 1040384
      %v506 = vsel %vm505, %v477, %v500
      %vm507 = vcmask 1041408
      %v508 = vsel %vm507, %v506, %v503
      %vm509 = vcmask 23552
      %v511 = vsel %vm509, %v460, 0
      %vm513 = vcmask 1042432
      %v515 = vsel %vm513, %v508, 0
      %517 = vmatprep.subr.mxu0 0.0
      %518 = vmatpush1.msra.mxu0 %v515
      %519 = vmatprep.subr.mxu0 0.0
      %520 = vmatpush1.msra.mxu0 0.0
      %521 = vmatprep.subr.mxu0 0.0
      %522 = vmatpush1.msra.mxu0 0.0
      %523 = vmatprep.subr.mxu0 0.0
      %524 = vmatpush1.msra.mxu0 0.0
      %525 = vmatprep.subr.mxu0 0.0
      %526 = vmatpush1.msra.mxu0 0.0
      %527 = vmatprep.subr.mxu0 0.0
      %528 = vmatpush1.msra.mxu0 0.0
      %529 = vmatprep.subr.mxu0 0.0
      %530 = vmatpush1.msra.mxu0 0.0
      %531 = vmatprep.subr.mxu0 0.0
      %532 = vmatpush1.msra.mxu0 0.0
      %533 = vmatprep.subr.mxu0 0.0
      %534 = vmatpush1.msra.mxu0 0.0
      %535 = vmatprep.subr.mxu0 0.0
      %536 = vmatpush1.msra.mxu0 0.0
      %537 = vmatprep.subr.mxu0 0.0
      %538 = vmatpush1.msra.mxu0 0.0
      %539 = vmatprep.subr.mxu0 0.0
      %540 = vmatpush1.msra.mxu0 0.0
      %541 = vmatprep.subr.mxu0 0.0
      %542 = vmatpush1.msra.mxu0 0.0
      %543 = vmatprep.subr.mxu0 0.0
      %544 = vmatpush1.msra.mxu0 0.0
      %545 = vmatprep.subr.mxu0 0.0
      %546 = vmatpush1.msra.mxu0 0.0
      %547 = vmatprep.subr.mxu0 0.0
      %548 = vmatpush1.msra.mxu0 0.0
      %549 = vmatprep.subr.mxu0 0.0
      %550 = vmatpush1.msra.mxu0 0.0
      %551 = vmatprep.subr.mxu0 0.0
      %552 = vmatpush1.msra.mxu0 0.0
      %553 = vmatprep.subr.mxu0 0.0
      %554 = vmatpush1.msra.mxu0 0.0
      %555 = vmatprep.subr.mxu0 0.0
      %556 = vmatpush1.msra.mxu0 0.0
      %557 = vmatprep.subr.mxu0 0.0
      %558 = vmatpush1.msra.mxu0 0.0
      %559 = vmatprep.subr.mxu0 0.0
      %560 = vmatpush1.msra.mxu0 0.0
      %561 = vmatprep.subr.mxu0 0.0
      %562 = vmatpush1.msra.mxu0 0.0
      %563 = vmatprep.subr.mxu0 0.0
      %564 = vmatpush1.msra.mxu0 0.0
      %565 = vmatprep.subr.mxu0 0.0
      %566 = vmatpush1.msra.mxu0 0.0
      %567 = vmatprep.subr.mxu0 0.0
      %568 = vmatpush1.msra.mxu0 0.0
      %569 = vmatprep.subr.mxu0 0.0
      %570 = vmatpush1.msra.mxu0 0.0
      %571 = vmatprep.subr.mxu0 0.0
      %572 = vmatpush1.msra.mxu0 0.0
      %573 = vmatprep.subr.mxu0 0.0
      %574 = vmatpush1.msra.mxu0 0.0
      %575 = vmatprep.subr.mxu0 0.0
      %576 = vmatpush1.msra.mxu0 0.0
      %577 = vmatprep.subr.mxu0 0.0
      %578 = vmatpush1.msra.mxu0 0.0
      %579 = vmatprep.subr.mxu0 0.0
      %580 = vmatpush1.msra.mxu0 0.0
      %581 = vmatprep.mubr.f32.mxu0 0.0
      %582 = vmatmul.mubr.f32.gmra.mrb[0].mxu0 %v511
      %v583 = vpop.f32.mrb[0].mxu0
      %v584 = vadd.f32 0.0, %v583
      %v585 = vpop.f32.mrb[0].mxu0
      %586 = vdwg.mxu0
      %v587 = vld [vmem:[%s2] sm:$0xff]
      %589 = vrot.lane.b32.xlu0 %v584, 1
      %v590 = vpop.permute.xlu0 %589
      %v592 = vsel %vm475, 0.0, %v590
      %v593 = vmul.f32 %v592, %v466
      %v594 = vmul.f32 %v584, %v482
      %595 = vrot.lane.b32.xlu0 %v584, 127
      %v596 = vpop.permute.xlu0 %595
      %v598 = vsel %vm493, %v596, 0.0
      %v599 = vmul.f32 %v598, %v489
      %vm600 = vcmask 195584
      %v602 = vsel %vm600, %v587, 0
      %604 = vmatprep.subr.mxu0 0.0
      %605 = vmatpush1.msra.mxu0 %v593
      %606 = vmatprep.subr.mxu0 0.0
      %607 = vmatpush1.msra.mxu0 %v594
      %608 = vmatprep.subr.mxu0 0.0
      %609 = vmatpush1.msra.mxu0 %v599
      %610 = vmatprep.subr.mxu0 0.0
      %611 = vmatpush1.msra.mxu0 0.0
      %612 = vmatprep.subr.mxu0 0.0
      %613 = vmatpush1.msra.mxu0 0.0
      %614 = vmatprep.subr.mxu0 0.0
      %615 = vmatpush1.msra.mxu0 0.0
      %616 = vmatprep.subr.mxu0 0.0
      %617 = vmatpush1.msra.mxu0 0.0
      %618 = vmatprep.subr.mxu0 0.0
      %619 = vmatpush1.msra.mxu0 0.0
      %620 = vmatprep.subr.mxu0 0.0
      %621 = vmatpush1.msra.mxu0 0.0
      %622 = vmatprep.subr.mxu0 0.0
      %623 = vmatpush1.msra.mxu0 0.0
      %624 = vmatprep.subr.mxu0 0.0
      %625 = vmatpush1.msra.mxu0 0.0
      %626 = vmatprep.subr.mxu0 0.0
      %627 = vmatpush1.msra.mxu0 0.0
      %628 = vmatprep.subr.mxu0 0.0
      %629 = vmatpush1.msra.mxu0 0.0
      %630 = vmatprep.subr.mxu0 0.0
      %631 = vmatpush1.msra.mxu0 0.0
      %632 = vmatprep.subr.mxu0 0.0
      %633 = vmatpush1.msra.mxu0 0.0
      %634 = vmatprep.subr.mxu0 0.0
      %635 = vmatpush1.msra.mxu0 0.0
      %636 = vmatprep.subr.mxu0 0.0
      %637 = vmatpush1.msra.mxu0 0.0
      %638 = vmatprep.subr.mxu0 0.0
      %639 = vmatpush1.msra.mxu0 0.0
      %640 = vmatprep.subr.mxu0 0.0
      %641 = vmatpush1.msra.mxu0 0.0
      %642 = vmatprep.subr.mxu0 0.0
      %643 = vmatpush1.msra.mxu0 0.0
      %644 = vmatprep.subr.mxu0 0.0
      %645 = vmatpush1.msra.mxu0 0.0
      %646 = vmatprep.subr.mxu0 0.0
      %647 = vmatpush1.msra.mxu0 0.0
      %648 = vmatprep.subr.mxu0 0.0
      %649 = vmatpush1.msra.mxu0 0.0
      %650 = vmatprep.subr.mxu0 0.0
      %651 = vmatpush1.msra.mxu0 0.0
      %652 = vmatprep.subr.mxu0 0.0
      %653 = vmatpush1.msra.mxu0 0.0
      %654 = vmatprep.subr.mxu0 0.0
      %655 = vmatpush1.msra.mxu0 0.0
      %656 = vmatprep.subr.mxu0 0.0
      %657 = vmatpush1.msra.mxu0 0.0
      %658 = vmatprep.subr.mxu0 0.0
      %659 = vmatpush1.msra.mxu0 0.0
      %660 = vmatprep.subr.mxu0 0.0
      %661 = vmatpush1.msra.mxu0 0.0
      %662 = vmatprep.subr.mxu0 0.0
      %663 = vmatpush1.msra.mxu0 0.0
      %664 = vmatprep.subr.mxu0 0.0
      %665 = vmatpush1.msra.mxu0 0.0
      %666 = vmatprep.subr.mxu0 0.0
      %667 = vmatpush1.msra.mxu0 0.0
      %668 = vmatprep.mubr.f32.mxu0 0.0
      %669 = vmatmul.mubr.f32.gmra.mrb[0].mxu0 %v602
      %v670 = vpop.f32.mrb[0].mxu0
      %v671 = vadd.f32 0.0, %v670
      %v672 = vpop.f32.mrb[0].mxu0
      %673 = vdwg.mxu0
      %v674 = vld [vmem:[%s8] sm:$0xff]
      %v675 = vld [vmem:[%s8 + $0x8] sm:$0xff]
      %v676 = vld [vmem:[%s8 + $0x10] sm:$0xff]
      %v677 = vld [vmem:[%s8 + $0x18] sm:$0xff]
      %v678 = vld [vmem:[%s8 + $0x20] sm:$0xff]
      %v679 = vld [vmem:[%s8 + $0x28] sm:$0xff]
      %v680 = vld [vmem:[%s8 + $0x30] sm:$0xff]
      %v681 = vld [vmem:[%s8 + $0x38] sm:$0xff]
      %v682 = vld [vmem:[%s8 + $0x40] sm:$0xff]
      %v683 = vld [vmem:[%s8 + $0x48] sm:$0xff]
      %v684 = vld [vmem:[%s8 + $0x50] sm:$0xff]
      %v685 = vld [vmem:[%s8 + $0x58] sm:$0xff]
      %v686 = vld [vmem:[%s8 + $0x60] sm:$0xff]
      %v687 = vld [vmem:[%s8 + $0x68] sm:$0xff]
      %v688 = vld [vmem:[%s8 + $0x70] sm:$0xff]
      %v689 = vld [vmem:[%s8 + $0x78] sm:$0xff]
      %v690 = vmul.f32 %v671, %v671
      %691 = vmatprep.subr.mxu0 0.0
      %692 = vmatpush1.msra.mxu0 %v674
      %693 = vmatprep.subr.mxu0 0.0
      %694 = vmatpush1.msra.mxu0 %v675
      %695 = vmatprep.subr.mxu0 0.0
      %696 = vmatpush1.msra.mxu0 %v676
      %697 = vmatprep.subr.mxu0 0.0
      %698 = vmatpush1.msra.mxu0 %v677
      %699 = vmatprep.subr.mxu0 0.0
      %700 = vmatpush1.msra.mxu0 %v678
      %701 = vmatprep.subr.mxu0 0.0
      %702 = vmatpush1.msra.mxu0 %v679
      %703 = vmatprep.subr.mxu0 0.0
      %704 = vmatpush1.msra.mxu0 %v680
      %705 = vmatprep.subr.mxu0 0.0
      %706 = vmatpush1.msra.mxu0 %v681
      %707 = vmatprep.subr.mxu0 0.0
      %708 = vmatpush1.msra.mxu0 %v682
      %709 = vmatprep.subr.mxu0 0.0
      %710 = vmatpush1.msra.mxu0 %v683
      %711 = vmatprep.subr.mxu0 0.0
      %712 = vmatpush1.msra.mxu0 %v684
      %713 = vmatprep.subr.mxu0 0.0
      %714 = vmatpush1.msra.mxu0 %v685
      %715 = vmatprep.subr.mxu0 0.0
      %716 = vmatpush1.msra.mxu0 %v686
      %717 = vmatprep.subr.mxu0 0.0
      %718 = vmatpush1.msra.mxu0 %v687
      %719 = vmatprep.subr.mxu0 0.0
      %720 = vmatpush1.msra.mxu0 %v688
      %721 = vmatprep.subr.mxu0 0.0
      %722 = vmatpush1.msra.mxu0 %v689
      %723 = vmatprep.subr.mxu0 0.0
      %724 = vmatpush1.msra.mxu0 0.0
      %725 = vmatprep.subr.mxu0 0.0
      %726 = vmatpush1.msra.mxu0 0.0
      %727 = vmatprep.subr.mxu0 0.0
      %728 = vmatpush1.msra.mxu0 0.0
      %729 = vmatprep.subr.mxu0 0.0
      %730 = vmatpush1.msra.mxu0 0.0
      %731 = vmatprep.subr.mxu0 0.0
      %732 = vmatpush1.msra.mxu0 0.0
      %733 = vmatprep.subr.mxu0 0.0
      %734 = vmatpush1.msra.mxu0 0.0
      %735 = vmatprep.subr.mxu0 0.0
      %736 = vmatpush1.msra.mxu0 0.0
      %737 = vmatprep.subr.mxu0 0.0
      %738 = vmatpush1.msra.mxu0 0.0
      %739 = vmatprep.subr.mxu0 0.0
      %740 = vmatpush1.msra.mxu0 0.0
      %741 = vmatprep.subr.mxu0 0.0
      %742 = vmatpush1.msra.mxu0 0.0
      %743 = vmatprep.subr.mxu0 0.0
      %744 = vmatpush1.msra.mxu0 0.0
      %745 = vmatprep.subr.mxu0 0.0
      %746 = vmatpush1.msra.mxu0 0.0
      %747 = vmatprep.subr.mxu0 0.0
      %748 = vmatpush1.msra.mxu0 0.0
      %749 = vmatprep.subr.mxu0 0.0
      %750 = vmatpush1.msra.mxu0 0.0
      %751 = vmatprep.subr.mxu0 0.0
      %752 = vmatpush1.msra.mxu0 0.0
      %753 = vmatprep.subr.mxu0 0.0
      %754 = vmatpush1.msra.mxu0 0.0
      %755 = vmatprep.mubr.f32.mxu0 0.0
      %756 = vmatmul.mubr.f32.gmra.mrb[0].mxu0 %v690
      %v757 = vpop.f32.mrb[0].mxu0
      %v758 = vadd.f32 0.0, %v757
      %v759 = vpop.f32.mrb[0].mxu0
      %760 = vdwg.mxu0
      %v761 = vadd.f32 %v758, 1.0
      %v762 = vrcp.pop %v761
      %v763 = vmul.f32 %v758, %v762
      %v764 = vmul.f32 %v763, %v671
      %v765 = vadd.f32 %v758, 1e-08
      %v766 = vrcp.pop %v765
      %v767 = vmul.f32 %v764, %v766
      %769 = vrot.lane.b32.xlu0 %v767, 1
      %v770 = vpop.permute.xlu0 %769
      %v772 = vsel %vm475, 0.0, %v770
      %v773 = vmul.f32 %v772, %v466
      %v774 = vmul.f32 %v767, %v482
      %775 = vrot.lane.b32.xlu0 %v767, 127
      %v776 = vpop.permute.xlu0 %775
      %v778 = vsel %vm493, %v776, 0.0
      %v779 = vmul.f32 %v778, %v489
      %v780 = vld [vmem:[%s3] sm:$0xff]
      %v781 = vld [vmem:[%s3 + $0x8] sm:$0xff]
      %v782 = vld [vmem:[%s3 + $0x10] sm:$0xff]
      %v783 = vld [vmem:[%s3 + $0x18] sm:$0xff]
      %v784 = vld [vmem:[%s3 + $0x20] sm:$0xff]
      %v785 = vld [vmem:[%s3 + $0x28] sm:$0xff]
      %v786 = vld [vmem:[%s3 + $0x30] sm:$0xff]
      %v787 = vld [vmem:[%s3 + $0x38] sm:$0xff]
      %vm788 = vcmask 203776
      %v790 = vsel %vm788, %v780, 0
      %v793 = vsel %vm788, %v781, 0
      %v796 = vsel %vm788, %v782, 0
      %v799 = vsel %vm788, %v783, 0
      %v802 = vsel %vm788, %v784, 0
      %v805 = vsel %vm788, %v785, 0
      %v808 = vsel %vm788, %v786, 0
      %v811 = vsel %vm788, %v787, 0
      %v814 = vsel %vm505, 1.0, 0
      %816 = vmatprep.subr.mxu0 0.0
      %817 = vmatpush1.msra.mxu0 %v773
      %818 = vmatprep.subr.mxu0 0.0
      %819 = vmatpush1.msra.mxu0 %v774
      %820 = vmatprep.subr.mxu0 0.0
      %821 = vmatpush1.msra.mxu0 %v779
      %822 = vmatprep.subr.mxu0 0.0
      %823 = vmatpush1.msra.mxu0 %v814
      %824 = vmatprep.subr.mxu0 0.0
      %825 = vmatpush1.msra.mxu0 0.0
      %826 = vmatprep.subr.mxu0 0.0
      %827 = vmatpush1.msra.mxu0 0.0
      %828 = vmatprep.subr.mxu0 0.0
      %829 = vmatpush1.msra.mxu0 0.0
      %830 = vmatprep.subr.mxu0 0.0
      %831 = vmatpush1.msra.mxu0 0.0
      %832 = vmatprep.subr.mxu0 0.0
      %833 = vmatpush1.msra.mxu0 0.0
      %834 = vmatprep.subr.mxu0 0.0
      %835 = vmatpush1.msra.mxu0 0.0
      %836 = vmatprep.subr.mxu0 0.0
      %837 = vmatpush1.msra.mxu0 0.0
      %838 = vmatprep.subr.mxu0 0.0
      %839 = vmatpush1.msra.mxu0 0.0
      %840 = vmatprep.subr.mxu0 0.0
      %841 = vmatpush1.msra.mxu0 0.0
      %842 = vmatprep.subr.mxu0 0.0
      %843 = vmatpush1.msra.mxu0 0.0
      %844 = vmatprep.subr.mxu0 0.0
      %845 = vmatpush1.msra.mxu0 0.0
      %846 = vmatprep.subr.mxu0 0.0
      %847 = vmatpush1.msra.mxu0 0.0
      %848 = vmatprep.subr.mxu0 0.0
      %849 = vmatpush1.msra.mxu0 0.0
      %850 = vmatprep.subr.mxu0 0.0
      %851 = vmatpush1.msra.mxu0 0.0
      %852 = vmatprep.subr.mxu0 0.0
      %853 = vmatpush1.msra.mxu0 0.0
      %854 = vmatprep.subr.mxu0 0.0
      %855 = vmatpush1.msra.mxu0 0.0
      %856 = vmatprep.subr.mxu0 0.0
      %857 = vmatpush1.msra.mxu0 0.0
      %858 = vmatprep.subr.mxu0 0.0
      %859 = vmatpush1.msra.mxu0 0.0
      %860 = vmatprep.subr.mxu0 0.0
      %861 = vmatpush1.msra.mxu0 0.0
      %862 = vmatprep.subr.mxu0 0.0
      %863 = vmatpush1.msra.mxu0 0.0
      %864 = vmatprep.subr.mxu0 0.0
      %865 = vmatpush1.msra.mxu0 0.0
      %866 = vmatprep.subr.mxu0 0.0
      %867 = vmatpush1.msra.mxu0 0.0
      %868 = vmatprep.subr.mxu0 0.0
      %869 = vmatpush1.msra.mxu0 0.0
      %870 = vmatprep.subr.mxu0 0.0
      %871 = vmatpush1.msra.mxu0 0.0
      %872 = vmatprep.subr.mxu0 0.0
      %873 = vmatpush1.msra.mxu0 0.0
      %874 = vmatprep.subr.mxu0 0.0
      %875 = vmatpush1.msra.mxu0 0.0
      %876 = vmatprep.subr.mxu0 0.0
      %877 = vmatpush1.msra.mxu0 0.0
      %878 = vmatprep.subr.mxu0 0.0
      %879 = vmatpush1.msra.mxu0 0.0
      %880 = vmatprep.mubr.f32.mxu0 0.0
      %881 = vmatmul.mubr.f32.gmra.mrb[0].mxu0 %v790
      %v882 = vpop.f32.mrb[0].mxu0
      %v883 = vadd.f32 0.0, %v882
      %v884 = vpop.f32.mrb[0].mxu0
      %885 = vmatprep.mubr.f32.mxu0 0.0
      %886 = vmatmul.mubr.f32.gmra.mrb[0].mxu0 %v793
      %v887 = vpop.f32.mrb[0].mxu0
      %v888 = vadd.f32 0.0, %v887
      %v889 = vpop.f32.mrb[0].mxu0
      %890 = vmatprep.mubr.f32.mxu0 0.0
      %891 = vmatmul.mubr.f32.gmra.mrb[0].mxu0 %v796
      %v892 = vpop.f32.mrb[0].mxu0
      %v893 = vadd.f32 0.0, %v892
      %v894 = vpop.f32.mrb[0].mxu0
      %895 = vmatprep.mubr.f32.mxu0 0.0
      %896 = vmatmul.mubr.f32.gmra.mrb[0].mxu0 %v799
      %v897 = vpop.f32.mrb[0].mxu0
      %v898 = vadd.f32 0.0, %v897
      %v899 = vpop.f32.mrb[0].mxu0
      %900 = vmatprep.mubr.f32.mxu0 0.0
      %901 = vmatmul.mubr.f32.gmra.mrb[0].mxu0 %v802
      %v902 = vpop.f32.mrb[0].mxu0
      %v903 = vadd.f32 0.0, %v902
      %v904 = vpop.f32.mrb[0].mxu0
      %905 = vmatprep.mubr.f32.mxu0 0.0
      %906 = vmatmul.mubr.f32.gmra.mrb[0].mxu0 %v805
      %v907 = vpop.f32.mrb[0].mxu0
      %v908 = vadd.f32 0.0, %v907
      %v909 = vpop.f32.mrb[0].mxu0
      %910 = vmatprep.mubr.f32.mxu0 0.0
      %911 = vmatmul.mubr.f32.gmra.mrb[0].mxu0 %v808
      %v912 = vpop.f32.mrb[0].mxu0
      %v913 = vadd.f32 0.0, %v912
      %v914 = vpop.f32.mrb[0].mxu0
      %915 = vmatprep.mubr.f32.mxu0 0.0
      %916 = vmatmul.mubr.f32.gmra.mrb[0].mxu0 %v811
      %v917 = vpop.f32.mrb[0].mxu0
      %v918 = vadd.f32 0.0, %v917
      %v919 = vpop.f32.mrb[0].mxu0
      %920 = vdwg.mxu0
      %v921 = vrcp.pop 4.0
      %v922 = vmul.f32 %v921, %v883
      %v923 = vmul.f32 %v921, %v888
      %v924 = vmul.f32 %v921, %v893
      %v925 = vmul.f32 %v921, %v898
      %v926 = vadd.f32 %v922, %v924
      %v927 = vadd.f32 %v923, %v925
      %v928 = vmul.f32 %v921, %v903
      %v929 = vmul.f32 %v921, %v908
      %v930 = vadd.f32 %v926, %v928
      %v931 = vadd.f32 %v927, %v929
      %v932 = vmul.f32 %v921, %v913
      %v933 = vmul.f32 %v921, %v918
      %v934 = vadd.f32 %v930, %v932
      %v935 = vadd.f32 %v931, %v933
      %v936 = vmul.f32 %v934, %v934
      %v937 = vmul.f32 %v935, %v935
      %938 = vmatprep.subr.mxu0 0.0
      %939 = vmatpush1.msra.mxu0 %v674
      %940 = vmatprep.subr.mxu0 0.0
      %941 = vmatpush1.msra.mxu0 %v675
      %942 = vmatprep.subr.mxu0 0.0
      %943 = vmatpush1.msra.mxu0 %v676
      %944 = vmatprep.subr.mxu0 0.0
      %945 = vmatpush1.msra.mxu0 %v677
      %946 = vmatprep.subr.mxu0 0.0
      %947 = vmatpush1.msra.mxu0 %v678
      %948 = vmatprep.subr.mxu0 0.0
      %949 = vmatpush1.msra.mxu0 %v679
      %950 = vmatprep.subr.mxu0 0.0
      %951 = vmatpush1.msra.mxu0 %v680
      %952 = vmatprep.subr.mxu0 0.0
      %953 = vmatpush1.msra.mxu0 %v681
      %954 = vmatprep.subr.mxu0 0.0
      %955 = vmatpush1.msra.mxu0 %v682
      %956 = vmatprep.subr.mxu0 0.0
      %957 = vmatpush1.msra.mxu0 %v683
      %958 = vmatprep.subr.mxu0 0.0
      %959 = vmatpush1.msra.mxu0 %v684
      %960 = vmatprep.subr.mxu0 0.0
      %961 = vmatpush1.msra.mxu0 %v685
      %962 = vmatprep.subr.mxu0 0.0
      %963 = vmatpush1.msra.mxu0 %v686
      %964 = vmatprep.subr.mxu0 0.0
      %965 = vmatpush1.msra.mxu0 %v687
      %966 = vmatprep.subr.mxu0 0.0
      %967 = vmatpush1.msra.mxu0 %v688
      %968 = vmatprep.subr.mxu0 0.0
      %969 = vmatpush1.msra.mxu0 %v689
      %970 = vmatprep.subr.mxu0 0.0
      %971 = vmatpush1.msra.mxu0 0.0
      %972 = vmatprep.subr.mxu0 0.0
      %973 = vmatpush1.msra.mxu0 0.0
      %974 = vmatprep.subr.mxu0 0.0
      %975 = vmatpush1.msra.mxu0 0.0
      %976 = vmatprep.subr.mxu0 0.0
      %977 = vmatpush1.msra.mxu0 0.0
      %978 = vmatprep.subr.mxu0 0.0
      %979 = vmatpush1.msra.mxu0 0.0
      %980 = vmatprep.subr.mxu0 0.0
      %981 = vmatpush1.msra.mxu0 0.0
      %982 = vmatprep.subr.mxu0 0.0
      %983 = vmatpush1.msra.mxu0 0.0
      %984 = vmatprep.subr.mxu0 0.0
      %985 = vmatpush1.msra.mxu0 0.0
      %986 = vmatprep.subr.mxu0 0.0
      %987 = vmatpush1.msra.mxu0 0.0
      %988 = vmatprep.subr.mxu0 0.0
      %989 = vmatpush1.msra.mxu0 0.0
      %990 = vmatprep.subr.mxu0 0.0
      %991 = vmatpush1.msra.mxu0 0.0
      %992 = vmatprep.subr.mxu0 0.0
      %993 = vmatpush1.msra.mxu0 0.0
      %994 = vmatprep.subr.mxu0 0.0
      %995 = vmatpush1.msra.mxu0 0.0
      %996 = vmatprep.subr.mxu0 0.0
      %997 = vmatpush1.msra.mxu0 0.0
      %998 = vmatprep.subr.mxu0 0.0
      %999 = vmatpush1.msra.mxu0 0.0
      %1000 = vmatprep.subr.mxu0 0.0
      %1001 = vmatpush1.msra.mxu0 0.0
      %1002 = vmatprep.mubr.f32.mxu0 0.0
      %1003 = vmatmul.mubr.f32.gmra.mrb[0].mxu0 %v936
      %v1004 = vpop.f32.mrb[0].mxu0
      %v1005 = vadd.f32 0.0, %v1004
      %v1006 = vpop.f32.mrb[0].mxu0
      %1007 = vmatprep.mubr.f32.mxu0 0.0
      %1008 = vmatmul.mubr.f32.gmra.mrb[0].mxu0 %v937
      %v1009 = vpop.f32.mrb[0].mxu0
      %v1010 = vadd.f32 0.0, %v1009
      %v1011 = vpop.f32.mrb[0].mxu0
      %1012 = vdwg.mxu0
      %v1013 = vadd.f32 %v1005, 1.0
      %v1014 = vadd.f32 %v1010, 1.0
      %v1015 = vrcp.pop %v1013
      %v1016 = vrcp.pop %v1014
      %v1017 = vmul.f32 %v1005, %v1015
      %v1018 = vmul.f32 %v1010, %v1016
      %v1019 = vmul.f32 %v1017, %v934
      %v1020 = vmul.f32 %v1018, %v935
      %v1021 = vadd.f32 %v1005, 1e-08
      %v1022 = vadd.f32 %v1010, 1e-08
      %v1023 = vrcp.pop %v1021
      %v1024 = vrcp.pop %v1022
      %v1025 = vmul.f32 %v1019, %v1023
      %v1026 = vmul.f32 %v1020, %v1024
      %v1027 = vmul.f32 %v883, %v1025
      %v1028 = vmul.f32 %v888, %v1026
      %v1029 = vmul.f32 %v893, %v1025
      %v1030 = vmul.f32 %v898, %v1026
      %v1031 = vmul.f32 %v903, %v1025
      %v1032 = vmul.f32 %v908, %v1026
      %v1033 = vmul.f32 %v913, %v1025
      %v1034 = vmul.f32 %v918, %v1026
      %1035 = vmatprep.subr.mxu0 0.0
      %1036 = vmatpush1.msra.mxu0 %v674
      %1037 = vmatprep.subr.mxu0 0.0
      %1038 = vmatpush1.msra.mxu0 %v675
      %1039 = vmatprep.subr.mxu0 0.0
      %1040 = vmatpush1.msra.mxu0 %v676
      %1041 = vmatprep.subr.mxu0 0.0
      %1042 = vmatpush1.msra.mxu0 %v677
      %1043 = vmatprep.subr.mxu0 0.0
      %1044 = vmatpush1.msra.mxu0 %v678
      %1045 = vmatprep.subr.mxu0 0.0
      %1046 = vmatpush1.msra.mxu0 %v679
      %1047 = vmatprep.subr.mxu0 0.0
      %1048 = vmatpush1.msra.mxu0 %v680
      %1049 = vmatprep.subr.mxu0 0.0
      %1050 = vmatpush1.msra.mxu0 %v681
      %1051 = vmatprep.subr.mxu0 0.0
      %1052 = vmatpush1.msra.mxu0 %v682
      %1053 = vmatprep.subr.mxu0 0.0
      %1054 = vmatpush1.msra.mxu0 %v683
      %1055 = vmatprep.subr.mxu0 0.0
      %1056 = vmatpush1.msra.mxu0 %v684
      %1057 = vmatprep.subr.mxu0 0.0
      %1058 = vmatpush1.msra.mxu0 %v685
      %1059 = vmatprep.subr.mxu0 0.0
      %1060 = vmatpush1.msra.mxu0 %v686
      %1061 = vmatprep.subr.mxu0 0.0
      %1062 = vmatpush1.msra.mxu0 %v687
      %1063 = vmatprep.subr.mxu0 0.0
      %1064 = vmatpush1.msra.mxu0 %v688
      %1065 = vmatprep.subr.mxu0 0.0
      %1066 = vmatpush1.msra.mxu0 %v689
      %1067 = vmatprep.subr.mxu0 0.0
      %1068 = vmatpush1.msra.mxu0 0.0
      %1069 = vmatprep.subr.mxu0 0.0
      %1070 = vmatpush1.msra.mxu0 0.0
      %1071 = vmatprep.subr.mxu0 0.0
      %1072 = vmatpush1.msra.mxu0 0.0
      %1073 = vmatprep.subr.mxu0 0.0
      %1074 = vmatpush1.msra.mxu0 0.0
      %1075 = vmatprep.subr.mxu0 0.0
      %1076 = vmatpush1.msra.mxu0 0.0
      %1077 = vmatprep.subr.mxu0 0.0
      %1078 = vmatpush1.msra.mxu0 0.0
      %1079 = vmatprep.subr.mxu0 0.0
      %1080 = vmatpush1.msra.mxu0 0.0
      %1081 = vmatprep.subr.mxu0 0.0
      %1082 = vmatpush1.msra.mxu0 0.0
      %1083 = vmatprep.subr.mxu0 0.0
      %1084 = vmatpush1.msra.mxu0 0.0
      %1085 = vmatprep.subr.mxu0 0.0
      %1086 = vmatpush1.msra.mxu0 0.0
      %1087 = vmatprep.subr.mxu0 0.0
      %1088 = vmatpush1.msra.mxu0 0.0
      %1089 = vmatprep.subr.mxu0 0.0
      %1090 = vmatpush1.msra.mxu0 0.0
      %1091 = vmatprep.subr.mxu0 0.0
      %1092 = vmatpush1.msra.mxu0 0.0
      %1093 = vmatprep.subr.mxu0 0.0
      %1094 = vmatpush1.msra.mxu0 0.0
      %1095 = vmatprep.subr.mxu0 0.0
      %1096 = vmatpush1.msra.mxu0 0.0
      %1097 = vmatprep.subr.mxu0 0.0
      %1098 = vmatpush1.msra.mxu0 0.0
      %1099 = vmatprep.mubr.f32.mxu0 0.0
      %1100 = vmatmul.mubr.f32.gmra.mrb[0].mxu0 %v1027
      %v1101 = vpop.f32.mrb[0].mxu0
      %v1102 = vadd.f32 0.0, %v1101
      %v1103 = vpop.f32.mrb[0].mxu0
      %1104 = vmatprep.mubr.f32.mxu0 0.0
      %1105 = vmatmul.mubr.f32.gmra.mrb[0].mxu0 %v1028
      %v1106 = vpop.f32.mrb[0].mxu0
      %v1107 = vadd.f32 0.0, %v1106
      %v1108 = vpop.f32.mrb[0].mxu0
      %1109 = vmatprep.mubr.f32.mxu0 0.0
      %1110 = vmatmul.mubr.f32.gmra.mrb[0].mxu0 %v1029
      %v1111 = vpop.f32.mrb[0].mxu0
      %v1112 = vadd.f32 0.0, %v1111
      %v1113 = vpop.f32.mrb[0].mxu0
      %1114 = vmatprep.mubr.f32.mxu0 0.0
      %1115 = vmatmul.mubr.f32.gmra.mrb[0].mxu0 %v1030
      %v1116 = vpop.f32.mrb[0].mxu0
      %v1117 = vadd.f32 0.0, %v1116
      %v1118 = vpop.f32.mrb[0].mxu0
      %1119 = vmatprep.mubr.f32.mxu0 0.0
      %1120 = vmatmul.mubr.f32.gmra.mrb[0].mxu0 %v1031
      %v1121 = vpop.f32.mrb[0].mxu0
      %v1122 = vadd.f32 0.0, %v1121
      %v1123 = vpop.f32.mrb[0].mxu0
      %1124 = vmatprep.mubr.f32.mxu0 0.0
      %1125 = vmatmul.mubr.f32.gmra.mrb[0].mxu0 %v1032
      %v1126 = vpop.f32.mrb[0].mxu0
      %v1127 = vadd.f32 0.0, %v1126
      %v1128 = vpop.f32.mrb[0].mxu0
      %1129 = vmatprep.mubr.f32.mxu0 0.0
      %1130 = vmatmul.mubr.f32.gmra.mrb[0].mxu0 %v1033
      %v1131 = vpop.f32.mrb[0].mxu0
      %v1132 = vadd.f32 0.0, %v1131
      %v1133 = vpop.f32.mrb[0].mxu0
      %1134 = vmatprep.mubr.f32.mxu0 0.0
      %1135 = vmatmul.mubr.f32.gmra.mrb[0].mxu0 %v1034
      %v1136 = vpop.f32.mrb[0].mxu0
      %v1137 = vadd.f32 0.0, %v1136
      %v1138 = vpop.f32.mrb[0].mxu0
      %1139 = vdwg.mxu0
      %v1140 = vadd.f32 %v1102, 0.0
      %v1141 = vadd.f32 %v1107, 0.0
      %v1142 = vadd.f32 %v1112, 0.0
      %v1143 = vadd.f32 %v1117, 0.0
      %v1144 = vadd.f32 %v1122, 0.0
      %v1145 = vadd.f32 %v1127, 0.0
      %v1146 = vadd.f32 %v1132, 0.0
      %v1147 = vadd.f32 %v1137, 0.0
      %v1148 = vmax.f32 %v1140, %v1142
      %v1149 = vmax.f32 %v1141, %v1143
      %v1150 = vmax.f32 %v1148, %v1144
      %v1151 = vmax.f32 %v1149, %v1145
      %v1152 = vmax.f32 %v1150, %v1146
      %v1153 = vmax.f32 %v1151, %v1147
      %v1154 = vsub.f32 %v1140, %v1152
      %v1155 = vsub.f32 %v1141, %v1153
      %v1156 = vmul.f32 %v1154, 1.442695
      %v1157 = vpow.pop %v1156
      %v1158 = vmul.f32 %v1155, 1.442695
      %v1159 = vpow.pop %v1158
      %v1160 = vsub.f32 %v1142, %v1152
      %v1161 = vsub.f32 %v1143, %v1153
      %v1162 = vmul.f32 %v1160, 1.442695
      %v1163 = vpow.pop %v1162
      %v1164 = vmul.f32 %v1161, 1.442695
      %v1165 = vpow.pop %v1164
      %v1166 = vsub.f32 %v1144, %v1152
      %v1167 = vsub.f32 %v1145, %v1153
      %v1168 = vmul.f32 %v1166, 1.442695
      %v1169 = vpow.pop %v1168
      %v1170 = vmul.f32 %v1167, 1.442695
      %v1171 = vpow.pop %v1170
      %v1172 = vsub.f32 %v1146, %v1152
      %v1173 = vsub.f32 %v1147, %v1153
      %v1174 = vmul.f32 %v1172, 1.442695
      %v1175 = vpow.pop %v1174
      %v1176 = vmul.f32 %v1173, 1.442695
      %v1177 = vpow.pop %v1176
      %v1178 = vadd.f32 %v1157, %v1163
      %v1179 = vadd.f32 %v1159, %v1165
      %v1180 = vadd.f32 %v1178, %v1169
      %v1181 = vadd.f32 %v1179, %v1171
      %v1182 = vadd.f32 %v1180, %v1175
      %v1183 = vadd.f32 %v1181, %v1177
      %v1184 = vrcp.pop %v1182
      %v1185 = vrcp.pop %v1183
      %v1186 = vmul.f32 %v1157, %v1184
      %v1187 = vmul.f32 %v1159, %v1185
      %v1188 = vmul.f32 %v1186, %v883
      %v1189 = vmul.f32 %v1187, %v888
      %v1190 = vmul.f32 %v1163, %v1184
      %v1191 = vmul.f32 %v1165, %v1185
      %v1192 = vmul.f32 %v1190, %v893
      %v1193 = vmul.f32 %v1191, %v898
      %v1194 = vadd.f32 %v1188, %v1192
      %v1195 = vadd.f32 %v1189, %v1193
      %v1196 = vmul.f32 %v1169, %v1184
      %v1197 = vmul.f32 %v1171, %v1185
      %v1198 = vmul.f32 %v1196, %v903
      %v1199 = vmul.f32 %v1197, %v908
      %v1200 = vadd.f32 %v1194, %v1198
      %v1201 = vadd.f32 %v1195, %v1199
      %v1202 = vmul.f32 %v1175, %v1184
      %v1203 = vmul.f32 %v1177, %v1185
      %v1204 = vmul.f32 %v1202, %v913
      %v1205 = vmul.f32 %v1203, %v918
      %v1206 = vadd.f32 %v1200, %v1204
      %v1207 = vadd.f32 %v1201, %v1205
      %v1208 = vmul.f32 %v1206, %v1206
      %v1209 = vmul.f32 %v1207, %v1207
      %1210 = vmatprep.subr.mxu0 0.0
      %1211 = vmatpush1.msra.mxu0 %v674
      %1212 = vmatprep.subr.mxu0 0.0
      %1213 = vmatpush1.msra.mxu0 %v675
      %1214 = vmatprep.subr.mxu0 0.0
      %1215 = vmatpush1.msra.mxu0 %v676
      %1216 = vmatprep.subr.mxu0 0.0
      %1217 = vmatpush1.msra.mxu0 %v677
      %1218 = vmatprep.subr.mxu0 0.0
      %1219 = vmatpush1.msra.mxu0 %v678
      %1220 = vmatprep.subr.mxu0 0.0
      %1221 = vmatpush1.msra.mxu0 %v679
      %1222 = vmatprep.subr.mxu0 0.0
      %1223 = vmatpush1.msra.mxu0 %v680
      %1224 = vmatprep.subr.mxu0 0.0
      %1225 = vmatpush1.msra.mxu0 %v681
      %1226 = vmatprep.subr.mxu0 0.0
      %1227 = vmatpush1.msra.mxu0 %v682
      %1228 = vmatprep.subr.mxu0 0.0
      %1229 = vmatpush1.msra.mxu0 %v683
      %1230 = vmatprep.subr.mxu0 0.0
      %1231 = vmatpush1.msra.mxu0 %v684
      %1232 = vmatprep.subr.mxu0 0.0
      %1233 = vmatpush1.msra.mxu0 %v685
      %1234 = vmatprep.subr.mxu0 0.0
      %1235 = vmatpush1.msra.mxu0 %v686
      %1236 = vmatprep.subr.mxu0 0.0
      %1237 = vmatpush1.msra.mxu0 %v687
      %1238 = vmatprep.subr.mxu0 0.0
      %1239 = vmatpush1.msra.mxu0 %v688
      %1240 = vmatprep.subr.mxu0 0.0
      %1241 = vmatpush1.msra.mxu0 %v689
      %1242 = vmatprep.subr.mxu0 0.0
      %1243 = vmatpush1.msra.mxu0 0.0
      %1244 = vmatprep.subr.mxu0 0.0
      %1245 = vmatpush1.msra.mxu0 0.0
      %1246 = vmatprep.subr.mxu0 0.0
      %1247 = vmatpush1.msra.mxu0 0.0
      %1248 = vmatprep.subr.mxu0 0.0
      %1249 = vmatpush1.msra.mxu0 0.0
      %1250 = vmatprep.subr.mxu0 0.0
      %1251 = vmatpush1.msra.mxu0 0.0
      %1252 = vmatprep.subr.mxu0 0.0
      %1253 = vmatpush1.msra.mxu0 0.0
      %1254 = vmatprep.subr.mxu0 0.0
      %1255 = vmatpush1.msra.mxu0 0.0
      %1256 = vmatprep.subr.mxu0 0.0
      %1257 = vmatpush1.msra.mxu0 0.0
      %1258 = vmatprep.subr.mxu0 0.0
      %1259 = vmatpush1.msra.mxu0 0.0
      %1260 = vmatprep.subr.mxu0 0.0
      %1261 = vmatpush1.msra.mxu0 0.0
      %1262 = vmatprep.subr.mxu0 0.0
      %1263 = vmatpush1.msra.mxu0 0.0
      %1264 = vmatprep.subr.mxu0 0.0
      %1265 = vmatpush1.msra.mxu0 0.0
      %1266 = vmatprep.subr.mxu0 0.0
      %1267 = vmatpush1.msra.mxu0 0.0
      %1268 = vmatprep.subr.mxu0 0.0
      %1269 = vmatpush1.msra.mxu0 0.0
      %1270 = vmatprep.subr.mxu0 0.0
      %1271 = vmatpush1.msra.mxu0 0.0
      %1272 = vmatprep.subr.mxu0 0.0
      %1273 = vmatpush1.msra.mxu0 0.0
      %1274 = vmatprep.mubr.f32.mxu0 0.0
      %1275 = vmatmul.mubr.f32.gmra.mrb[0].mxu0 %v1208
      %v1276 = vpop.f32.mrb[0].mxu0
      %v1277 = vadd.f32 0.0, %v1276
      %v1278 = vpop.f32.mrb[0].mxu0
      %1279 = vmatprep.mubr.f32.mxu0 0.0
      %1280 = vmatmul.mubr.f32.gmra.mrb[0].mxu0 %v1209
      %v1281 = vpop.f32.mrb[0].mxu0
      %v1282 = vadd.f32 0.0, %v1281
      %v1283 = vpop.f32.mrb[0].mxu0
      %1284 = vdwg.mxu0
      %v1285 = vadd.f32 %v1277, 1.0
      %v1286 = vadd.f32 %v1282, 1.0
      %v1287 = vrcp.pop %v1285
      %v1288 = vrcp.pop %v1286
      %v1289 = vmul.f32 %v1277, %v1287
      %v1290 = vmul.f32 %v1282, %v1288
      %v1291 = vmul.f32 %v1289, %v1206
      %v1292 = vmul.f32 %v1290, %v1207
      %v1293 = vadd.f32 %v1277, 1e-08
      %v1294 = vadd.f32 %v1282, 1e-08
      %v1295 = vrcp.pop %v1293
      %v1296 = vrcp.pop %v1294
      %v1297 = vmul.f32 %v1291, %v1295
      %v1298 = vmul.f32 %v1292, %v1296
      %v1299 = vld [vmem:[%s4] sm:$0xf]
      %vm1300 = vcmask 72704
      %v1302 = vsel %vm1300, %v1299, 0
      %1304 = vmatprep.subr.mxu0 0.0
      %1305 = vmatpush1.msra.mxu0 %v584
      %1306 = vmatprep.subr.mxu0 0.0
      %1307 = vmatpush1.msra.mxu0 %v814
      %1308 = vmatprep.subr.mxu0 0.0
      %1309 = vmatpush1.msra.mxu0 0.0
      %1310 = vmatprep.subr.mxu0 0.0
      %1311 = vmatpush1.msra.mxu0 0.0
      %1312 = vmatprep.subr.mxu0 0.0
      %1313 = vmatpush1.msra.mxu0 0.0
      %1314 = vmatprep.subr.mxu0 0.0
      %1315 = vmatpush1.msra.mxu0 0.0
      %1316 = vmatprep.subr.mxu0 0.0
      %1317 = vmatpush1.msra.mxu0 0.0
      %1318 = vmatprep.subr.mxu0 0.0
      %1319 = vmatpush1.msra.mxu0 0.0
      %1320 = vmatprep.subr.mxu0 0.0
      %1321 = vmatpush1.msra.mxu0 0.0
      %1322 = vmatprep.subr.mxu0 0.0
      %1323 = vmatpush1.msra.mxu0 0.0
      %1324 = vmatprep.subr.mxu0 0.0
      %1325 = vmatpush1.msra.mxu0 0.0
      %1326 = vmatprep.subr.mxu0 0.0
      %1327 = vmatpush1.msra.mxu0 0.0
      %1328 = vmatprep.subr.mxu0 0.0
      %1329 = vmatpush1.msra.mxu0 0.0
      %1330 = vmatprep.subr.mxu0 0.0
      %1331 = vmatpush1.msra.mxu0 0.0
      %1332 = vmatprep.subr.mxu0 0.0
      %1333 = vmatpush1.msra.mxu0 0.0
      %1334 = vmatprep.subr.mxu0 0.0
      %1335 = vmatpush1.msra.mxu0 0.0
      %1336 = vmatprep.subr.mxu0 0.0
      %1337 = vmatpush1.msra.mxu0 0.0
      %1338 = vmatprep.subr.mxu0 0.0
      %1339 = vmatpush1.msra.mxu0 0.0
      %1340 = vmatprep.subr.mxu0 0.0
      %1341 = vmatpush1.msra.mxu0 0.0
      %1342 = vmatprep.subr.mxu0 0.0
      %1343 = vmatpush1.msra.mxu0 0.0
      %1344 = vmatprep.subr.mxu0 0.0
      %1345 = vmatpush1.msra.mxu0 0.0
      %1346 = vmatprep.subr.mxu0 0.0
      %1347 = vmatpush1.msra.mxu0 0.0
      %1348 = vmatprep.subr.mxu0 0.0
      %1349 = vmatpush1.msra.mxu0 0.0
      %1350 = vmatprep.subr.mxu0 0.0
      %1351 = vmatpush1.msra.mxu0 0.0
      %1352 = vmatprep.subr.mxu0 0.0
      %1353 = vmatpush1.msra.mxu0 0.0
      %1354 = vmatprep.subr.mxu0 0.0
      %1355 = vmatpush1.msra.mxu0 0.0
      %1356 = vmatprep.subr.mxu0 0.0
      %1357 = vmatpush1.msra.mxu0 0.0
      %1358 = vmatprep.subr.mxu0 0.0
      %1359 = vmatpush1.msra.mxu0 0.0
      %1360 = vmatprep.subr.mxu0 0.0
      %1361 = vmatpush1.msra.mxu0 0.0
      %1362 = vmatprep.subr.mxu0 0.0
      %1363 = vmatpush1.msra.mxu0 0.0
      %1364 = vmatprep.subr.mxu0 0.0
      %1365 = vmatpush1.msra.mxu0 0.0
      %1366 = vmatprep.subr.mxu0 0.0
      %1367 = vmatpush1.msra.mxu0 0.0
      %1368 = vmatprep.mubr.f32.mxu0 0.0
      %1369 = vmatmul.mubr.f32.gmra.mrb[0].mxu0 %v1302
      %v1370 = vpop.f32.mrb[0].mxu0
      %v1371 = vadd.f32 0.0, %v1370
      %v1372 = vpop.f32.mrb[0].mxu0
      %1373 = vdwg.mxu0
      %v1374 = vadd.s32 %v459, 4294967294
      %vm1375 = vcmp.ge.s32.totalorder %v1374, 0
      %vm1376 = vcmp.lt.s32.totalorder %v1374, 4
      %vm1377 = vmand %vm1375, %vm1376
      %v1378 = vsel %vm1377, 1, 0
      %v1379 = vcvt.s32.f32 %v1378
      %1381 = vrot.lane.b32.xlu0 %v1371, 2
      %v1382 = vpop.permute.xlu0 %1381
      %vm1384 = vcmask 15360
      %v1385 = vsel %vm1384, 0.0, %v1382
      %v1386 = vmul.f32 %v1385, %v1379
      %v1387 = vadd.s32 %v459, 4294967295
      %vm1388 = vcmp.ge.s32.totalorder %v1387, 0
      %vm1389 = vcmp.lt.s32.totalorder %v1387, 4
      %vm1390 = vmand %vm1388, %vm1389
      %v1391 = vsel %vm1390, 1, 0
      %v1392 = vcvt.s32.f32 %v1391
      %1393 = vrot.lane.b32.xlu0 %v1371, 1
      %v1394 = vpop.permute.xlu0 %1393
      %v1396 = vsel %vm475, 0.0, %v1394
      %v1397 = vmul.f32 %v1396, %v1392
      %vm1398 = vcmp.ge.s32.totalorder %v459, 0
      %vm1399 = vcmp.lt.s32.totalorder %v459, 4
      %vm1400 = vmand %vm1398, %vm1399
      %v1401 = vsel %vm1400, 1, 0
      %v1402 = vcvt.s32.f32 %v1401
      %v1403 = vmul.f32 %v1371, %v1402
      %v1404 = vadd.s32 %v459, 1
      %vm1405 = vcmp.ge.s32.totalorder %v1404, 0
      %vm1406 = vcmp.lt.s32.totalorder %v1404, 4
      %vm1407 = vmand %vm1405, %vm1406
      %v1408 = vsel %vm1407, 1, 0
      %v1409 = vcvt.s32.f32 %v1408
      %1410 = vrot.lane.b32.xlu0 %v1371, 127
      %v1411 = vpop.permute.xlu0 %1410
      %v1413 = vsel %vm493, %v1411, 0.0
      %v1414 = vmul.f32 %v1413, %v1409
      %v1415 = vadd.s32 %v459, 2
      %vm1416 = vcmp.ge.s32.totalorder %v1415, 0
      %vm1417 = vcmp.lt.s32.totalorder %v1415, 4
      %vm1418 = vmand %vm1416, %vm1417
      %v1419 = vsel %vm1418, 1, 0
      %v1420 = vcvt.s32.f32 %v1419
      %1421 = vrot.lane.b32.xlu0 %v1371, 126
      %v1422 = vpop.permute.xlu0 %1421
      %vm1424 = vcmask 1031168
      %v1425 = vsel %vm1424, %v1422, 0.0
      %v1426 = vmul.f32 %v1425, %v1420
      %v1428 = vrot.slane %v1397, 4
      %v1431 = vrot.slane %v1414, 4
      %vm1433 = vcmask 1043456
      %v1434 = vsel %vm1433, %v1386, %v1428
      %v1435 = vsel %vm1433, %v1403, %v1431
      %v1436 = vsel %vm1433, %v1426, 1.0
      %v1437 = vld [vmem:[%s5] sm:$0xf]
      %vm1438 = vcmask 171008
      %v1440 = vsel %vm1438, %v1437, 0
      %vm1442 = vcmask 1044480
      %v1444 = vsel %vm1442, %v1436, 0
      %1446 = vmatprep.subr.mxu0 0.0
      %1447 = vmatpush1.msra.mxu0 %v1434
      %1448 = vmatprep.subr.mxu0 0.0
      %1449 = vmatpush1.msra.mxu0 %v1435
      %1450 = vmatprep.subr.mxu0 0.0
      %1451 = vmatpush1.msra.mxu0 %v1444
      %1452 = vmatprep.subr.mxu0 0.0
      %1453 = vmatpush1.msra.mxu0 0.0
      %1454 = vmatprep.subr.mxu0 0.0
      %1455 = vmatpush1.msra.mxu0 0.0
      %1456 = vmatprep.subr.mxu0 0.0
      %1457 = vmatpush1.msra.mxu0 0.0
      %1458 = vmatprep.subr.mxu0 0.0
      %1459 = vmatpush1.msra.mxu0 0.0
      %1460 = vmatprep.subr.mxu0 0.0
      %1461 = vmatpush1.msra.mxu0 0.0
      %1462 = vmatprep.subr.mxu0 0.0
      %1463 = vmatpush1.msra.mxu0 0.0
      %1464 = vmatprep.subr.mxu0 0.0
      %1465 = vmatpush1.msra.mxu0 0.0
      %1466 = vmatprep.subr.mxu0 0.0
      %1467 = vmatpush1.msra.mxu0 0.0
      %1468 = vmatprep.subr.mxu0 0.0
      %1469 = vmatpush1.msra.mxu0 0.0
      %1470 = vmatprep.subr.mxu0 0.0
      %1471 = vmatpush1.msra.mxu0 0.0
      %1472 = vmatprep.subr.mxu0 0.0
      %1473 = vmatpush1.msra.mxu0 0.0
      %1474 = vmatprep.subr.mxu0 0.0
      %1475 = vmatpush1.msra.mxu0 0.0
      %1476 = vmatprep.subr.mxu0 0.0
      %1477 = vmatpush1.msra.mxu0 0.0
      %1478 = vmatprep.subr.mxu0 0.0
      %1479 = vmatpush1.msra.mxu0 0.0
      %1480 = vmatprep.subr.mxu0 0.0
      %1481 = vmatpush1.msra.mxu0 0.0
      %1482 = vmatprep.subr.mxu0 0.0
      %1483 = vmatpush1.msra.mxu0 0.0
      %1484 = vmatprep.subr.mxu0 0.0
      %1485 = vmatpush1.msra.mxu0 0.0
      %1486 = vmatprep.subr.mxu0 0.0
      %1487 = vmatpush1.msra.mxu0 0.0
      %1488 = vmatprep.subr.mxu0 0.0
      %1489 = vmatpush1.msra.mxu0 0.0
      %1490 = vmatprep.subr.mxu0 0.0
      %1491 = vmatpush1.msra.mxu0 0.0
      %1492 = vmatprep.subr.mxu0 0.0
      %1493 = vmatpush1.msra.mxu0 0.0
      %1494 = vmatprep.subr.mxu0 0.0
      %1495 = vmatpush1.msra.mxu0 0.0
      %1496 = vmatprep.subr.mxu0 0.0
      %1497 = vmatpush1.msra.mxu0 0.0
      %1498 = vmatprep.subr.mxu0 0.0
      %1499 = vmatpush1.msra.mxu0 0.0
      %1500 = vmatprep.subr.mxu0 0.0
      %1501 = vmatpush1.msra.mxu0 0.0
      %1502 = vmatprep.subr.mxu0 0.0
      %1503 = vmatpush1.msra.mxu0 0.0
      %1504 = vmatprep.subr.mxu0 0.0
      %1505 = vmatpush1.msra.mxu0 0.0
      %1506 = vmatprep.subr.mxu0 0.0
      %1507 = vmatpush1.msra.mxu0 0.0
      %1508 = vmatprep.subr.mxu0 0.0
      %1509 = vmatpush1.msra.mxu0 0.0
      %1510 = vmatprep.mubr.f32.mxu0 0.0
      %1511 = vmatmul.mubr.f32.gmra.mrb[0].mxu0 %v1440
      %v1512 = vpop.f32.mrb[0].mxu0
      %v1513 = vadd.f32 0.0, %v1512
      %v1514 = vpop.f32.mrb[0].mxu0
      %1515 = vdwg.mxu0
      %v1516 = vld [vmem:[%s9] sm:$0xff]
      %v1517 = vld [vmem:[%s9 + $0x8] sm:$0xff]
      %v1518 = vld [vmem:[%s9 + $0x10] sm:$0xff]
      %v1519 = vld [vmem:[%s9 + $0x18] sm:$0xff]
      %v1520 = vld [vmem:[%s9 + $0x20] sm:$0xff]
      %v1521 = vld [vmem:[%s9 + $0x28] sm:$0xff]
      %v1522 = vld [vmem:[%s9 + $0x30] sm:$0xff]
      %v1523 = vld [vmem:[%s9 + $0x38] sm:$0xff]
      %v1524 = vld [vmem:[%s9 + $0x40] sm:$0xff]
      %v1525 = vld [vmem:[%s9 + $0x48] sm:$0xff]
      %v1526 = vld [vmem:[%s9 + $0x50] sm:$0xff]
      %v1527 = vld [vmem:[%s9 + $0x58] sm:$0xff]
      %v1528 = vld [vmem:[%s9 + $0x60] sm:$0xff]
      %v1529 = vld [vmem:[%s9 + $0x68] sm:$0xff]
      %v1530 = vld [vmem:[%s9 + $0x70] sm:$0xff]
      %v1531 = vld [vmem:[%s9 + $0x78] sm:$0xff]
      %v1532 = vmul.f32 %v1513, %v1513
      %1533 = vmatprep.subr.mxu0 0.0
      %1534 = vmatpush1.msra.mxu0 %v1516
      %1535 = vmatprep.subr.mxu0 0.0
      %1536 = vmatpush1.msra.mxu0 %v1517
      %1537 = vmatprep.subr.mxu0 0.0
      %1538 = vmatpush1.msra.mxu0 %v1518
      %1539 = vmatprep.subr.mxu0 0.0
      %1540 = vmatpush1.msra.mxu0 %v1519
      %1541 = vmatprep.subr.mxu0 0.0
      %1542 = vmatpush1.msra.mxu0 %v1520
      %1543 = vmatprep.subr.mxu0 0.0
      %1544 = vmatpush1.msra.mxu0 %v1521
      %1545 = vmatprep.subr.mxu0 0.0
      %1546 = vmatpush1.msra.mxu0 %v1522
      %1547 = vmatprep.subr.mxu0 0.0
      %1548 = vmatpush1.msra.mxu0 %v1523
      %1549 = vmatprep.subr.mxu0 0.0
      %1550 = vmatpush1.msra.mxu0 %v1524
      %1551 = vmatprep.subr.mxu0 0.0
      %1552 = vmatpush1.msra.mxu0 %v1525
      %1553 = vmatprep.subr.mxu0 0.0
      %1554 = vmatpush1.msra.mxu0 %v1526
      %1555 = vmatprep.subr.mxu0 0.0
      %1556 = vmatpush1.msra.mxu0 %v1527
      %1557 = vmatprep.subr.mxu0 0.0
      %1558 = vmatpush1.msra.mxu0 %v1528
      %1559 = vmatprep.subr.mxu0 0.0
      %1560 = vmatpush1.msra.mxu0 %v1529
      %1561 = vmatprep.subr.mxu0 0.0
      %1562 = vmatpush1.msra.mxu0 %v1530
      %1563 = vmatprep.subr.mxu0 0.0
      %1564 = vmatpush1.msra.mxu0 %v1531
      %1565 = vmatprep.subr.mxu0 0.0
      %1566 = vmatpush1.msra.mxu0 0.0
      %1567 = vmatprep.subr.mxu0 0.0
      %1568 = vmatpush1.msra.mxu0 0.0
      %1569 = vmatprep.subr.mxu0 0.0
      %1570 = vmatpush1.msra.mxu0 0.0
      %1571 = vmatprep.subr.mxu0 0.0
      %1572 = vmatpush1.msra.mxu0 0.0
      %1573 = vmatprep.subr.mxu0 0.0
      %1574 = vmatpush1.msra.mxu0 0.0
      %1575 = vmatprep.subr.mxu0 0.0
      %1576 = vmatpush1.msra.mxu0 0.0
      %1577 = vmatprep.subr.mxu0 0.0
      %1578 = vmatpush1.msra.mxu0 0.0
      %1579 = vmatprep.subr.mxu0 0.0
      %1580 = vmatpush1.msra.mxu0 0.0
      %1581 = vmatprep.subr.mxu0 0.0
      %1582 = vmatpush1.msra.mxu0 0.0
      %1583 = vmatprep.subr.mxu0 0.0
      %1584 = vmatpush1.msra.mxu0 0.0
      %1585 = vmatprep.subr.mxu0 0.0
      %1586 = vmatpush1.msra.mxu0 0.0
      %1587 = vmatprep.subr.mxu0 0.0
      %1588 = vmatpush1.msra.mxu0 0.0
      %1589 = vmatprep.subr.mxu0 0.0
      %1590 = vmatpush1.msra.mxu0 0.0
      %1591 = vmatprep.subr.mxu0 0.0
      %1592 = vmatpush1.msra.mxu0 0.0
      %1593 = vmatprep.subr.mxu0 0.0
      %1594 = vmatpush1.msra.mxu0 0.0
      %1595 = vmatprep.subr.mxu0 0.0
      %1596 = vmatpush1.msra.mxu0 0.0
      %1597 = vmatprep.mubr.f32.mxu0 0.0
      %1598 = vmatmul.mubr.f32.gmra.mrb[0].mxu0 %v1532
      %v1599 = vpop.f32.mrb[0].mxu0
      %v1600 = vadd.f32 0.0, %v1599
      %v1601 = vpop.f32.mrb[0].mxu0
      %1602 = vdwg.mxu0
      %v1603 = vadd.f32 %v1600, 1.0
      %v1604 = vrcp.pop %v1603
      %v1605 = vmul.f32 %v1600, %v1604
      %v1606 = vmul.f32 %v1605, %v1513
      %v1607 = vadd.f32 %v1600, 1e-08
      %v1608 = vrcp.pop %v1607
      %v1609 = vmul.f32 %v1606, %v1608
      %v1610 = vld [vmem:[%s11] sm:$0xff]
      %v1611 = vld [vmem:[%s11 + $0x8] sm:$0xff]
      %v1612 = vld [vmem:[%s11 + $0x10] sm:$0xff]
      %v1613 = vld [vmem:[%s11 + $0x18] sm:$0xff]
      %v1614 = vld [vmem:[%s11 + $0x20] sm:$0xff]
      %v1615 = vld [vmem:[%s11 + $0x28] sm:$0xff]
      %v1616 = vld [vmem:[%s11 + $0x30] sm:$0xff]
      %v1617 = vld [vmem:[%s11 + $0x38] sm:$0xff]
      %v1618 = vld [vmem:[%s11 + $0x40] sm:$0xff]
      %v1619 = vld [vmem:[%s11 + $0x48] sm:$0xff]
      %v1620 = vld [vmem:[%s11 + $0x50] sm:$0xff]
      %v1621 = vld [vmem:[%s11 + $0x58] sm:$0xff]
      %v1622 = vld [vmem:[%s11 + $0x60] sm:$0xff]
      %v1623 = vld [vmem:[%s11 + $0x68] sm:$0xff]
      %v1624 = vld [vmem:[%s11 + $0x70] sm:$0xff]
      %v1625 = vld [vmem:[%s11 + $0x78] sm:$0xff]
      %1626 = vmatprep.subr.mxu0 0.0
      %1627 = vmatpush1.msra.mxu0 %v1610
      %1628 = vmatprep.subr.mxu0 0.0
      %1629 = vmatpush1.msra.mxu0 %v1611
      %1630 = vmatprep.subr.mxu0 0.0
      %1631 = vmatpush1.msra.mxu0 %v1612
      %1632 = vmatprep.subr.mxu0 0.0
      %1633 = vmatpush1.msra.mxu0 %v1613
      %1634 = vmatprep.subr.mxu0 0.0
      %1635 = vmatpush1.msra.mxu0 %v1614
      %1636 = vmatprep.subr.mxu0 0.0
      %1637 = vmatpush1.msra.mxu0 %v1615
      %1638 = vmatprep.subr.mxu0 0.0
      %1639 = vmatpush1.msra.mxu0 %v1616
      %1640 = vmatprep.subr.mxu0 0.0
      %1641 = vmatpush1.msra.mxu0 %v1617
      %1642 = vmatprep.subr.mxu0 0.0
      %1643 = vmatpush1.msra.mxu0 %v1618
      %1644 = vmatprep.subr.mxu0 0.0
      %1645 = vmatpush1.msra.mxu0 %v1619
      %1646 = vmatprep.subr.mxu0 0.0
      %1647 = vmatpush1.msra.mxu0 %v1620
      %1648 = vmatprep.subr.mxu0 0.0
      %1649 = vmatpush1.msra.mxu0 %v1621
      %1650 = vmatprep.subr.mxu0 0.0
      %1651 = vmatpush1.msra.mxu0 %v1622
      %1652 = vmatprep.subr.mxu0 0.0
      %1653 = vmatpush1.msra.mxu0 %v1623
      %1654 = vmatprep.subr.mxu0 0.0
      %1655 = vmatpush1.msra.mxu0 %v1624
      %1656 = vmatprep.subr.mxu0 0.0
      %1657 = vmatpush1.msra.mxu0 %v1625
      %1658 = vmatprep.subr.mxu0 0.0
      %1659 = vmatpush1.msra.mxu0 0.0
      %1660 = vmatprep.subr.mxu0 0.0
      %1661 = vmatpush1.msra.mxu0 0.0
      %1662 = vmatprep.subr.mxu0 0.0
      %1663 = vmatpush1.msra.mxu0 0.0
      %1664 = vmatprep.subr.mxu0 0.0
      %1665 = vmatpush1.msra.mxu0 0.0
      %1666 = vmatprep.subr.mxu0 0.0
      %1667 = vmatpush1.msra.mxu0 0.0
      %1668 = vmatprep.subr.mxu0 0.0
      %1669 = vmatpush1.msra.mxu0 0.0
      %1670 = vmatprep.subr.mxu0 0.0
      %1671 = vmatpush1.msra.mxu0 0.0
      %1672 = vmatprep.subr.mxu0 0.0
      %1673 = vmatpush1.msra.mxu0 0.0
      %1674 = vmatprep.subr.mxu0 0.0
      %1675 = vmatpush1.msra.mxu0 0.0
      %1676 = vmatprep.subr.mxu0 0.0
      %1677 = vmatpush1.msra.mxu0 0.0
      %1678 = vmatprep.subr.mxu0 0.0
      %1679 = vmatpush1.msra.mxu0 0.0
      %1680 = vmatprep.subr.mxu0 0.0
      %1681 = vmatpush1.msra.mxu0 0.0
      %1682 = vmatprep.subr.mxu0 0.0
      %1683 = vmatpush1.msra.mxu0 0.0
      %1684 = vmatprep.subr.mxu0 0.0
      %1685 = vmatpush1.msra.mxu0 0.0
      %1686 = vmatprep.subr.mxu0 0.0
      %1687 = vmatpush1.msra.mxu0 0.0
      %1688 = vmatprep.subr.mxu0 0.0
      %1689 = vmatpush1.msra.mxu0 0.0
      %1690 = vmatprep.mubr.f32.mxu0 0.0
      %1691 = vmatmul.mubr.f32.gmra.mrb[0].mxu0 %v1609
      %v1692 = vpop.f32.mrb[0].mxu0
      %v1693 = vadd.f32 0.0, %v1692
      %v1694 = vpop.f32.mrb[0].mxu0
      %1695 = vdwg.mxu0
      %v1696 = vld [vmem:[%s10] sm:$0xff]
      %v1697 = vld [vmem:[%s10 + $0x8] sm:$0xff]
      %v1698 = vld [vmem:[%s10 + $0x10] sm:$0xff]
      %v1699 = vld [vmem:[%s10 + $0x18] sm:$0xff]
      %v1700 = vmul.f32 %v921, %v1693
      %1702 = vrot.lane.b32.xlu0 %v1700, 96
      %v1703 = vpop.permute.xlu0 %1702
      %v1705 = vadd.f32 %v1700, %v1703
      %1706 = vrot.lane.b32.xlu0 %v1700, 64
      %v1707 = vpop.permute.xlu0 %1706
      %v1709 = vadd.f32 %v1705, %v1707
      %1710 = vrot.lane.b32.xlu0 %v1700, 32
      %v1711 = vpop.permute.xlu0 %1710
      %v1713 = vadd.f32 %v1709, %v1711
      %v1714 = vmul.f32 %v1713, %v1713
      %vm1715 = vcmask 261120
      %v1717 = vsel %vm1715, %v1714, 0
      %1719 = vmatprep.subr.mxu0 0.0
      %1720 = vmatpush1.msra.mxu0 %v1696
      %1721 = vmatprep.subr.mxu0 0.0
      %1722 = vmatpush1.msra.mxu0 %v1697
      %1723 = vmatprep.subr.mxu0 0.0
      %1724 = vmatpush1.msra.mxu0 %v1698
      %1725 = vmatprep.subr.mxu0 0.0
      %1726 = vmatpush1.msra.mxu0 %v1699
      %1727 = vmatprep.subr.mxu0 0.0
      %1728 = vmatpush1.msra.mxu0 0.0
      %1729 = vmatprep.subr.mxu0 0.0
      %1730 = vmatpush1.msra.mxu0 0.0
      %1731 = vmatprep.subr.mxu0 0.0
      %1732 = vmatpush1.msra.mxu0 0.0
      %1733 = vmatprep.subr.mxu0 0.0
      %1734 = vmatpush1.msra.mxu0 0.0
      %1735 = vmatprep.subr.mxu0 0.0
      %1736 = vmatpush1.msra.mxu0 0.0
      %1737 = vmatprep.subr.mxu0 0.0
      %1738 = vmatpush1.msra.mxu0 0.0
      %1739 = vmatprep.subr.mxu0 0.0
      %1740 = vmatpush1.msra.mxu0 0.0
      %1741 = vmatprep.subr.mxu0 0.0
      %1742 = vmatpush1.msra.mxu0 0.0
      %1743 = vmatprep.subr.mxu0 0.0
      %1744 = vmatpush1.msra.mxu0 0.0
      %1745 = vmatprep.subr.mxu0 0.0
      %1746 = vmatpush1.msra.mxu0 0.0
      %1747 = vmatprep.subr.mxu0 0.0
      %1748 = vmatpush1.msra.mxu0 0.0
      %1749 = vmatprep.subr.mxu0 0.0
      %1750 = vmatpush1.msra.mxu0 0.0
      %1751 = vmatprep.subr.mxu0 0.0
      %1752 = vmatpush1.msra.mxu0 0.0
      %1753 = vmatprep.subr.mxu0 0.0
      %1754 = vmatpush1.msra.mxu0 0.0
      %1755 = vmatprep.subr.mxu0 0.0
      %1756 = vmatpush1.msra.mxu0 0.0
      %1757 = vmatprep.subr.mxu0 0.0
      %1758 = vmatpush1.msra.mxu0 0.0
      %1759 = vmatprep.subr.mxu0 0.0
      %1760 = vmatpush1.msra.mxu0 0.0
      %1761 = vmatprep.subr.mxu0 0.0
      %1762 = vmatpush1.msra.mxu0 0.0
      %1763 = vmatprep.subr.mxu0 0.0
      %1764 = vmatpush1.msra.mxu0 0.0
      %1765 = vmatprep.subr.mxu0 0.0
      %1766 = vmatpush1.msra.mxu0 0.0
      %1767 = vmatprep.subr.mxu0 0.0
      %1768 = vmatpush1.msra.mxu0 0.0
      %1769 = vmatprep.subr.mxu0 0.0
      %1770 = vmatpush1.msra.mxu0 0.0
      %1771 = vmatprep.subr.mxu0 0.0
      %1772 = vmatpush1.msra.mxu0 0.0
      %1773 = vmatprep.subr.mxu0 0.0
      %1774 = vmatpush1.msra.mxu0 0.0
      %1775 = vmatprep.subr.mxu0 0.0
      %1776 = vmatpush1.msra.mxu0 0.0
      %1777 = vmatprep.subr.mxu0 0.0
      %1778 = vmatpush1.msra.mxu0 0.0
      %1779 = vmatprep.subr.mxu0 0.0
      %1780 = vmatpush1.msra.mxu0 0.0
      %1781 = vmatprep.subr.mxu0 0.0
      %1782 = vmatpush1.msra.mxu0 0.0
      %1783 = vmatprep.mubr.f32.mxu0 0.0
      %1784 = vmatmul.mubr.f32.gmra.mrb[0].mxu0 %v1717
      %v1785 = vpop.f32.mrb[0].mxu0
      %v1786 = vadd.f32 0.0, %v1785
      %v1787 = vpop.f32.mrb[0].mxu0
      %1788 = vdwg.mxu0
      %v1789 = vadd.f32 %v1786, 1.0
      %v1790 = vrcp.pop %v1789
      %v1791 = vmul.f32 %v1786, %v1790
      %v1792 = vmul.f32 %v1791, %v1713
      %v1793 = vadd.f32 %v1786, 1e-08
      %v1794 = vrcp.pop %v1793
      %v1795 = vmul.f32 %v1792, %v1794
      %v1796 = vmul.f32 %v1693, %v1795
      %1798 = vrot.lane.b32.xlu0 %v1795, 32
      %v1799 = vpop.permute.xlu0 %1798
      %v1801 = vmul.f32 %v1693, %v1799
      %1802 = vrot.lane.b32.xlu0 %v1795, 64
      %v1803 = vpop.permute.xlu0 %1802
      %v1805 = vmul.f32 %v1693, %v1803
      %1806 = vrot.lane.b32.xlu0 %v1795, 96
      %v1807 = vpop.permute.xlu0 %1806
      %v1809 = vmul.f32 %v1693, %v1807
      %v1811 = vrot.slane %v1801, 4
      %1812 = vrot.lane.b32.xlu0 %v1811, 96
      %v1813 = vpop.permute.xlu0 %1812
      %1816 = vrot.lane.b32.xlu0 %v1805, 64
      %v1817 = vpop.permute.xlu0 %1816
      %v1820 = vrot.slane %v1809, 4
      %1821 = vrot.lane.b32.xlu0 %v1820, 32
      %v1822 = vpop.permute.xlu0 %1821
      %v1824 = vsel %vm1433, %v1796, %v1813
      %v1825 = vsel %vm1433, %v1817, %v1822
      %v1827 = vsel %vm1715, %v1824, 0
      %v1830 = vsel %vm1715, %v1825, 0
      %1832 = vmatprep.subr.mxu0 0.0
      %1833 = vmatpush1.msra.mxu0 %v1696
      %1834 = vmatprep.subr.mxu0 0.0
      %1835 = vmatpush1.msra.mxu0 %v1697
      %1836 = vmatprep.subr.mxu0 0.0
      %1837 = vmatpush1.msra.mxu0 %v1698
      %1838 = vmatprep.subr.mxu0 0.0
      %1839 = vmatpush1.msra.mxu0 %v1699
      %1840 = vmatprep.subr.mxu0 0.0
      %1841 = vmatpush1.msra.mxu0 0.0
      %1842 = vmatprep.subr.mxu0 0.0
      %1843 = vmatpush1.msra.mxu0 0.0
      %1844 = vmatprep.subr.mxu0 0.0
      %1845 = vmatpush1.msra.mxu0 0.0
      %1846 = vmatprep.subr.mxu0 0.0
      %1847 = vmatpush1.msra.mxu0 0.0
      %1848 = vmatprep.subr.mxu0 0.0
      %1849 = vmatpush1.msra.mxu0 0.0
      %1850 = vmatprep.subr.mxu0 0.0
      %1851 = vmatpush1.msra.mxu0 0.0
      %1852 = vmatprep.subr.mxu0 0.0
      %1853 = vmatpush1.msra.mxu0 0.0
      %1854 = vmatprep.subr.mxu0 0.0
      %1855 = vmatpush1.msra.mxu0 0.0
      %1856 = vmatprep.subr.mxu0 0.0
      %1857 = vmatpush1.msra.mxu0 0.0
      %1858 = vmatprep.subr.mxu0 0.0
      %1859 = vmatpush1.msra.mxu0 0.0
      %1860 = vmatprep.subr.mxu0 0.0
      %1861 = vmatpush1.msra.mxu0 0.0
      %1862 = vmatprep.subr.mxu0 0.0
      %1863 = vmatpush1.msra.mxu0 0.0
      %1864 = vmatprep.subr.mxu0 0.0
      %1865 = vmatpush1.msra.mxu0 0.0
      %1866 = vmatprep.subr.mxu0 0.0
      %1867 = vmatpush1.msra.mxu0 0.0
      %1868 = vmatprep.subr.mxu0 0.0
      %1869 = vmatpush1.msra.mxu0 0.0
      %1870 = vmatprep.subr.mxu0 0.0
      %1871 = vmatpush1.msra.mxu0 0.0
      %1872 = vmatprep.subr.mxu0 0.0
      %1873 = vmatpush1.msra.mxu0 0.0
      %1874 = vmatprep.subr.mxu0 0.0
      %1875 = vmatpush1.msra.mxu0 0.0
      %1876 = vmatprep.subr.mxu0 0.0
      %1877 = vmatpush1.msra.mxu0 0.0
      %1878 = vmatprep.subr.mxu0 0.0
      %1879 = vmatpush1.msra.mxu0 0.0
      %1880 = vmatprep.subr.mxu0 0.0
      %1881 = vmatpush1.msra.mxu0 0.0
      %1882 = vmatprep.subr.mxu0 0.0
      %1883 = vmatpush1.msra.mxu0 0.0
      %1884 = vmatprep.subr.mxu0 0.0
      %1885 = vmatpush1.msra.mxu0 0.0
      %1886 = vmatprep.subr.mxu0 0.0
      %1887 = vmatpush1.msra.mxu0 0.0
      %1888 = vmatprep.subr.mxu0 0.0
      %1889 = vmatpush1.msra.mxu0 0.0
      %1890 = vmatprep.subr.mxu0 0.0
      %1891 = vmatpush1.msra.mxu0 0.0
      %1892 = vmatprep.subr.mxu0 0.0
      %1893 = vmatpush1.msra.mxu0 0.0
      %1894 = vmatprep.subr.mxu0 0.0
      %1895 = vmatpush1.msra.mxu0 0.0
      %1896 = vmatprep.mubr.f32.mxu0 0.0
      %1897 = vmatmul.mubr.f32.gmra.mrb[0].mxu0 %v1827
      %v1898 = vpop.f32.mrb[0].mxu0
      %v1899 = vadd.f32 0.0, %v1898
      %v1900 = vpop.f32.mrb[0].mxu0
      %1901 = vmatprep.mubr.f32.mxu0 0.0
      %1902 = vmatmul.mubr.f32.gmra.mrb[0].mxu0 %v1830
      %v1903 = vpop.f32.mrb[0].mxu0
      %v1904 = vadd.f32 0.0, %v1903
      %v1905 = vpop.f32.mrb[0].mxu0
      %1906 = vdwg.mxu0
      %v1907 = vadd.f32 %v1899, 0.0
      %v1908 = vadd.f32 %v1904, 0.0
      %v1910 = vrot.slane %v1907, 4
      %v1912 = vmax.f32 %v1907, %v1910
      %v1913 = vmax.f32 %v1912, %v1908
      %v1915 = vrot.slane %v1908, 4
      %v1917 = vmax.f32 %v1913, %v1915
      %v1918 = vsub.f32 %v1907, %v1917
      %v1919 = vmul.f32 %v1918, 1.442695
      %v1920 = vpow.pop %v1919
      %v1922 = vrot.slane %v1917, 4
      %v1924 = vsub.f32 %v1907, %v1922
      %v1925 = vmul.f32 %v1924, 1.442695
      %v1926 = vpow.pop %v1925
      %v1927 = vsub.f32 %v1908, %v1917
      %v1928 = vmul.f32 %v1927, 1.442695
      %v1929 = vpow.pop %v1928
      %v1930 = vsub.f32 %v1908, %v1922
      %v1931 = vmul.f32 %v1930, 1.442695
      %v1932 = vpow.pop %v1931
      %v1934 = vrot.slane %v1926, 4
      %v1936 = vadd.f32 %v1920, %v1934
      %v1937 = vadd.f32 %v1936, %v1929
      %v1939 = vrot.slane %v1932, 4
      %v1941 = vadd.f32 %v1937, %v1939
      %v1942 = vrcp.pop %v1941
      %v1943 = vmul.f32 %v1920, %v1942
      %v1944 = vmul.f32 %v1943, %v1693
      %v1946 = vrot.slane %v1942, 4
      %v1948 = vmul.f32 %v1926, %v1946
      %v1950 = vrot.slane %v1693, 4
      %1951 = vrot.lane.b32.xlu0 %v1950, 96
      %v1952 = vpop.permute.xlu0 %1951
      %v1954 = vmul.f32 %v1948, %v1952
      %v1956 = vrot.slane %v1954, 4
      %v1958 = vadd.f32 %v1944, %v1956
      %v1959 = vmul.f32 %v1929, %v1942
      %1960 = vrot.lane.b32.xlu0 %v1693, 64
      %v1961 = vpop.permute.xlu0 %1960
      %v1963 = vmul.f32 %v1959, %v1961
      %v1964 = vadd.f32 %v1958, %v1963
      %v1965 = vmul.f32 %v1932, %v1946
      %1966 = vrot.lane.b32.xlu0 %v1950, 32
      %v1967 = vpop.permute.xlu0 %1966
      %v1969 = vmul.f32 %v1965, %v1967
      %v1971 = vrot.slane %v1969, 4
      %v1973 = vadd.f32 %v1964, %v1971
      %v1974 = vmul.f32 %v1973, %v1973
      %v1976 = vsel %vm1715, %v1974, 0
      %1978 = vmatprep.subr.mxu0 0.0
      %1979 = vmatpush1.msra.mxu0 %v1696
      %1980 = vmatprep.subr.mxu0 0.0
      %1981 = vmatpush1.msra.mxu0 %v1697
      %1982 = vmatprep.subr.mxu0 0.0
      %1983 = vmatpush1.msra.mxu0 %v1698
      %1984 = vmatprep.subr.mxu0 0.0
      %1985 = vmatpush1.msra.mxu0 %v1699
      %1986 = vmatprep.subr.mxu0 0.0
      %1987 = vmatpush1.msra.mxu0 0.0
      %1988 = vmatprep.subr.mxu0 0.0
      %1989 = vmatpush1.msra.mxu0 0.0
      %1990 = vmatprep.subr.mxu0 0.0
      %1991 = vmatpush1.msra.mxu0 0.0
      %1992 = vmatprep.subr.mxu0 0.0
      %1993 = vmatpush1.msra.mxu0 0.0
      %1994 = vmatprep.subr.mxu0 0.0
      %1995 = vmatpush1.msra.mxu0 0.0
      %1996 = vmatprep.subr.mxu0 0.0
      %1997 = vmatpush1.msra.mxu0 0.0
      %1998 = vmatprep.subr.mxu0 0.0
      %1999 = vmatpush1.msra.mxu0 0.0
      %2000 = vmatprep.subr.mxu0 0.0
      %2001 = vmatpush1.msra.mxu0 0.0
      %2002 = vmatprep.subr.mxu0 0.0
      %2003 = vmatpush1.msra.mxu0 0.0
      %2004 = vmatprep.subr.mxu0 0.0
      %2005 = vmatpush1.msra.mxu0 0.0
      %2006 = vmatprep.subr.mxu0 0.0
      %2007 = vmatpush1.msra.mxu0 0.0
      %2008 = vmatprep.subr.mxu0 0.0
      %2009 = vmatpush1.msra.mxu0 0.0
      %2010 = vmatprep.subr.mxu0 0.0
      %2011 = vmatpush1.msra.mxu0 0.0
      %2012 = vmatprep.subr.mxu0 0.0
      %2013 = vmatpush1.msra.mxu0 0.0
      %2014 = vmatprep.subr.mxu0 0.0
      %2015 = vmatpush1.msra.mxu0 0.0
      %2016 = vmatprep.subr.mxu0 0.0
      %2017 = vmatpush1.msra.mxu0 0.0
      %2018 = vmatprep.subr.mxu0 0.0
      %2019 = vmatpush1.msra.mxu0 0.0
      %2020 = vmatprep.subr.mxu0 0.0
      %2021 = vmatpush1.msra.mxu0 0.0
      %2022 = vmatprep.subr.mxu0 0.0
      %2023 = vmatpush1.msra.mxu0 0.0
      %2024 = vmatprep.subr.mxu0 0.0
      %2025 = vmatpush1.msra.mxu0 0.0
      %2026 = vmatprep.subr.mxu0 0.0
      %2027 = vmatpush1.msra.mxu0 0.0
      %2028 = vmatprep.subr.mxu0 0.0
      %2029 = vmatpush1.msra.mxu0 0.0
      %2030 = vmatprep.subr.mxu0 0.0
      %2031 = vmatpush1.msra.mxu0 0.0
      %2032 = vmatprep.subr.mxu0 0.0
      %2033 = vmatpush1.msra.mxu0 0.0
      %2034 = vmatprep.subr.mxu0 0.0
      %2035 = vmatpush1.msra.mxu0 0.0
      %2036 = vmatprep.subr.mxu0 0.0
      %2037 = vmatpush1.msra.mxu0 0.0
      %2038 = vmatprep.subr.mxu0 0.0
      %2039 = vmatpush1.msra.mxu0 0.0
      %2040 = vmatprep.subr.mxu0 0.0
      %2041 = vmatpush1.msra.mxu0 0.0
      %2042 = vmatprep.mubr.f32.mxu0 0.0
      %2043 = vmatmul.mubr.f32.gmra.mrb[0].mxu0 %v1976
      %v2044 = vpop.f32.mrb[0].mxu0
      %v2045 = vadd.f32 0.0, %v2044
      %v2046 = vpop.f32.mrb[0].mxu0
      %2047 = vdwg.mxu0
      %v2048 = vadd.f32 %v2045, 1.0
      %v2049 = vrcp.pop %v2048
      %v2050 = vmul.f32 %v2045, %v2049
      %v2051 = vmul.f32 %v2050, %v1973
      %v2052 = vadd.f32 %v2045, 1e-08
      %v2053 = vrcp.pop %v2052
      %v2054 = vmul.f32 %v2051, %v2053
      %v2055 = vld [vmem:[%s7] sm:$0xff]
      %v2056 = vld [vmem:[%s7 + $0x8] sm:$0xff]
      %v2057 = vld [vmem:[%s7 + $0x10] sm:$0xff]
      %v2058 = vld [vmem:[%s7 + $0x18] sm:$0xff]
      %v2059 = vld [vmem:[%s7 + $0x20] sm:$0xff]
      %v2060 = vld [vmem:[%s7 + $0x28] sm:$0xff]
      %v2061 = vld [vmem:[%s7 + $0x30] sm:$0xff]
      %v2062 = vld [vmem:[%s7 + $0x38] sm:$0xff]
      %v2063 = vld [vmem:[%s7 + $0x40] sm:$0xff]
      %v2064 = vld [vmem:[%s7 + $0x48] sm:$0xff]
      %v2065 = vld [vmem:[%s7 + $0x50] sm:$0xff]
      %v2066 = vld [vmem:[%s7 + $0x58] sm:$0xff]
      %v2067 = vld [vmem:[%s7 + $0x60] sm:$0xff]
      %v2068 = vld [vmem:[%s7 + $0x68] sm:$0xff]
      %v2069 = vld [vmem:[%s7 + $0x70] sm:$0xff]
      %v2070 = vld [vmem:[%s7 + $0x78] sm:$0xff]
      %v2071 = vld [vmem:[%s7 + $0x80] sm:$0xff]
      %v2072 = vld [vmem:[%s7 + $0x88] sm:$0xff]
      %v2073 = vld [vmem:[%s7 + $0x90] sm:$0xff]
      %v2074 = vld [vmem:[%s7 + $0x98] sm:$0xff]
      %v2075 = vld [vmem:[%s7 + $0xa0] sm:$0xff]
      %v2076 = vld [vmem:[%s7 + $0xa8] sm:$0xff]
      %v2077 = vld [vmem:[%s7 + $0xb0] sm:$0xff]
      %v2078 = vld [vmem:[%s7 + $0xb8] sm:$0xff]
      %v2079 = vld [vmem:[%s6] sm:$0xff]
      %v2080 = vld [vmem:[%s6 + $0x8] sm:$0xff]
      %v2081 = vld [vmem:[%s6 + $0x10] sm:$0xff]
      %v2082 = vld [vmem:[%s6 + $0x18] sm:$0xff]
      %v2083 = vld [vmem:[%s6 + $0x20] sm:$0xff]
      %v2084 = vld [vmem:[%s6 + $0x28] sm:$0xff]
      %v2085 = vld [vmem:[%s6 + $0x30] sm:$0xff]
      %v2086 = vld [vmem:[%s6 + $0x38] sm:$0xff]
      %v2087 = vld [vmem:[%s6 + $0x40] sm:$0xff]
      %v2088 = vld [vmem:[%s6 + $0x48] sm:$0xff]
      %v2089 = vld [vmem:[%s6 + $0x50] sm:$0xff]
      %v2090 = vld [vmem:[%s6 + $0x58] sm:$0xff]
      %v2091 = vld [vmem:[%s6 + $0x60] sm:$0xff]
      %v2092 = vld [vmem:[%s6 + $0x68] sm:$0xff]
      %v2093 = vld [vmem:[%s6 + $0x70] sm:$0xff]
      %v2094 = vld [vmem:[%s6 + $0x78] sm:$0xff]
      %v2095 = vld [vmem:[%s6 + $0x80] sm:$0xff]
      %v2096 = vld [vmem:[%s6 + $0x88] sm:$0xff]
      %v2097 = vld [vmem:[%s6 + $0x90] sm:$0xff]
      %v2098 = vld [vmem:[%s6 + $0x98] sm:$0xff]
      %v2099 = vld [vmem:[%s6 + $0xa0] sm:$0xff]
      %v2100 = vld [vmem:[%s6 + $0xa8] sm:$0xff]
      %v2101 = vld [vmem:[%s6 + $0xb0] sm:$0xff]
      %v2102 = vld [vmem:[%s6 + $0xb8] sm:$0xff]
      %v2103 = vld [vmem:[%s6 + $0xc0] sm:$0xff]
      %v2104 = vld [vmem:[%s6 + $0xc8] sm:$0xff]
      %v2105 = vld [vmem:[%s6 + $0xd0] sm:$0xff]
      %v2106 = vld [vmem:[%s6 + $0xd8] sm:$0xff]
      %v2107 = vld [vmem:[%s6 + $0xe0] sm:$0xff]
      %v2108 = vld [vmem:[%s6 + $0xe8] sm:$0xff]
      %v2109 = vld [vmem:[%s6 + $0xf0] sm:$0xff]
      %v2110 = vld [vmem:[%s6 + $0xf8] sm:$0xff]
      %v2111 = vld [vmem:[%s6 + $0x100] sm:$0xff]
      %v2112 = vld [vmem:[%s6 + $0x108] sm:$0xff]
      %v2113 = vld [vmem:[%s6 + $0x110] sm:$0xff]
      %v2114 = vld [vmem:[%s6 + $0x118] sm:$0xff]
      %v2115 = vld [vmem:[%s6 + $0x120] sm:$0xff]
      %v2116 = vld [vmem:[%s6 + $0x128] sm:$0xff]
      %v2117 = vld [vmem:[%s6 + $0x130] sm:$0xff]
      %v2118 = vld [vmem:[%s6 + $0x138] sm:$0xff]
      %v2119 = vld [vmem:[%s6 + $0x140] sm:$0xff]
      %v2120 = vld [vmem:[%s6 + $0x148] sm:$0xff]
      %v2121 = vld [vmem:[%s6 + $0x150] sm:$0xff]
      %v2122 = vld [vmem:[%s6 + $0x158] sm:$0xff]
      %v2123 = vld [vmem:[%s6 + $0x160] sm:$0xff]
      %v2124 = vld [vmem:[%s6 + $0x168] sm:$0xff]
      %v2125 = vld [vmem:[%s6 + $0x170] sm:$0xff]
      %v2126 = vld [vmem:[%s6 + $0x178] sm:$0xff]
      %v2127 = vld [vmem:[%s6 + $0x180] sm:$0xff]
      %v2128 = vld [vmem:[%s6 + $0x188] sm:$0xff]
      %v2129 = vld [vmem:[%s6 + $0x190] sm:$0xff]
      %v2130 = vld [vmem:[%s6 + $0x198] sm:$0xff]
      %v2131 = vld [vmem:[%s6 + $0x1a0] sm:$0xff]
      %v2132 = vld [vmem:[%s6 + $0x1a8] sm:$0xff]
      %v2133 = vld [vmem:[%s6 + $0x1b0] sm:$0xff]
      %v2134 = vld [vmem:[%s6 + $0x1b8] sm:$0xff]
      %v2135 = vld [vmem:[%s6 + $0x1c0] sm:$0xff]
      %v2136 = vld [vmem:[%s6 + $0x1c8] sm:$0xff]
      %v2137 = vld [vmem:[%s6 + $0x1d0] sm:$0xff]
      %v2138 = vld [vmem:[%s6 + $0x1d8] sm:$0xff]
      %v2139 = vld [vmem:[%s6 + $0x1e0] sm:$0xff]
      %v2140 = vld [vmem:[%s6 + $0x1e8] sm:$0xff]
      %v2141 = vld [vmem:[%s6 + $0x1f0] sm:$0xff]
      %v2142 = vld [vmem:[%s6 + $0x1f8] sm:$0xff]
      %v2143 = vld [vmem:[%s6 + $0x200] sm:$0xff]
      %v2144 = vld [vmem:[%s6 + $0x208] sm:$0xff]
      %v2145 = vld [vmem:[%s6 + $0x210] sm:$0xff]
      %v2146 = vld [vmem:[%s6 + $0x218] sm:$0xff]
      %v2147 = vld [vmem:[%s6 + $0x220] sm:$0xff]
      %v2148 = vld [vmem:[%s6 + $0x228] sm:$0xff]
      %v2149 = vld [vmem:[%s6 + $0x230] sm:$0xff]
      %v2150 = vld [vmem:[%s6 + $0x238] sm:$0xff]
      %v2151 = vld [vmem:[%s6 + $0x240] sm:$0xff]
      %v2152 = vld [vmem:[%s6 + $0x248] sm:$0xff]
      %v2153 = vld [vmem:[%s6 + $0x250] sm:$0xff]
      %v2154 = vld [vmem:[%s6 + $0x258] sm:$0xff]
      %v2155 = vld [vmem:[%s6 + $0x260] sm:$0xff]
      %v2156 = vld [vmem:[%s6 + $0x268] sm:$0xff]
      %v2157 = vld [vmem:[%s6 + $0x270] sm:$0xff]
      %v2158 = vld [vmem:[%s6 + $0x278] sm:$0xff]
      %v2159 = vld [vmem:[%s6 + $0x280] sm:$0xff]
      %v2160 = vld [vmem:[%s6 + $0x288] sm:$0xff]
      %v2161 = vld [vmem:[%s6 + $0x290] sm:$0xff]
      %v2162 = vld [vmem:[%s6 + $0x298] sm:$0xff]
      %v2163 = vld [vmem:[%s6 + $0x2a0] sm:$0xff]
      %v2164 = vld [vmem:[%s6 + $0x2a8] sm:$0xff]
      %v2165 = vld [vmem:[%s6 + $0x2b0] sm:$0xff]
      %v2166 = vld [vmem:[%s6 + $0x2b8] sm:$0xff]
      %v2167 = vld [vmem:[%s6 + $0x2c0] sm:$0xff]
      %v2168 = vld [vmem:[%s6 + $0x2c8] sm:$0xff]
      %v2169 = vld [vmem:[%s6 + $0x2d0] sm:$0xff]
      %v2170 = vld [vmem:[%s6 + $0x2d8] sm:$0xff]
      %v2171 = vld [vmem:[%s6 + $0x2e0] sm:$0xff]
      %v2172 = vld [vmem:[%s6 + $0x2e8] sm:$0xff]
      %v2173 = vld [vmem:[%s6 + $0x2f0] sm:$0xff]
      %v2174 = vld [vmem:[%s6 + $0x2f8] sm:$0xff]
      %2175 = vmatprep.subr.mxu0 %v2080
      %2176 = vmatpush1.msra.mxu0 %v2079
      %2177 = vmatprep.subr.mxu0 %v2086
      %2178 = vmatpush1.msra.mxu0 %v2085
      %2179 = vmatprep.subr.mxu0 %v2092
      %2180 = vmatpush1.msra.mxu0 %v2091
      %2181 = vmatprep.subr.mxu0 %v2098
      %2182 = vmatpush1.msra.mxu0 %v2097
      %2183 = vmatprep.subr.mxu0 %v2104
      %2184 = vmatpush1.msra.mxu0 %v2103
      %2185 = vmatprep.subr.mxu0 %v2110
      %2186 = vmatpush1.msra.mxu0 %v2109
      %2187 = vmatprep.subr.mxu0 %v2116
      %2188 = vmatpush1.msra.mxu0 %v2115
      %2189 = vmatprep.subr.mxu0 %v2122
      %2190 = vmatpush1.msra.mxu0 %v2121
      %2191 = vmatprep.subr.mxu0 %v2128
      %2192 = vmatpush1.msra.mxu0 %v2127
      %2193 = vmatprep.subr.mxu0 %v2134
      %2194 = vmatpush1.msra.mxu0 %v2133
      %2195 = vmatprep.subr.mxu0 %v2140
      %2196 = vmatpush1.msra.mxu0 %v2139
      %2197 = vmatprep.subr.mxu0 %v2146
      %2198 = vmatpush1.msra.mxu0 %v2145
      %2199 = vmatprep.subr.mxu0 %v2152
      %2200 = vmatpush1.msra.mxu0 %v2151
      %2201 = vmatprep.subr.mxu0 %v2158
      %2202 = vmatpush1.msra.mxu0 %v2157
      %2203 = vmatprep.subr.mxu0 %v2164
      %2204 = vmatpush1.msra.mxu0 %v2163
      %2205 = vmatprep.subr.mxu0 %v2170
      %2206 = vmatpush1.msra.mxu0 %v2169
      %2207 = vmatprep.subr.mxu0 0.0
      %2208 = vmatpush1.msra.mxu0 0.0
      %2209 = vmatprep.subr.mxu0 0.0
      %2210 = vmatpush1.msra.mxu0 0.0
      %2211 = vmatprep.subr.mxu0 0.0
      %2212 = vmatpush1.msra.mxu0 0.0
      %2213 = vmatprep.subr.mxu0 0.0
      %2214 = vmatpush1.msra.mxu0 0.0
      %2215 = vmatprep.subr.mxu0 0.0
      %2216 = vmatpush1.msra.mxu0 0.0
      %2217 = vmatprep.subr.mxu0 0.0
      %2218 = vmatpush1.msra.mxu0 0.0
      %2219 = vmatprep.subr.mxu0 0.0
      %2220 = vmatpush1.msra.mxu0 0.0
      %2221 = vmatprep.subr.mxu0 0.0
      %2222 = vmatpush1.msra.mxu0 0.0
      %2223 = vmatprep.subr.mxu0 0.0
      %2224 = vmatpush1.msra.mxu0 0.0
      %2225 = vmatprep.subr.mxu0 0.0
      %2226 = vmatpush1.msra.mxu0 0.0
      %2227 = vmatprep.subr.mxu0 0.0
      %2228 = vmatpush1.msra.mxu0 0.0
      %2229 = vmatprep.subr.mxu0 0.0
      %2230 = vmatpush1.msra.mxu0 0.0
      %2231 = vmatprep.subr.mxu0 0.0
      %2232 = vmatpush1.msra.mxu0 0.0
      %2233 = vmatprep.subr.mxu0 0.0
      %2234 = vmatpush1.msra.mxu0 0.0
      %2235 = vmatprep.subr.mxu0 0.0
      %2236 = vmatpush1.msra.mxu0 0.0
      %2237 = vmatprep.subr.mxu0 0.0
      %2238 = vmatpush1.msra.mxu0 0.0
      %2239 = vmatprep.mubr.f32.mxu0 0.0
      %2240 = vmatmul.mubr.f32.gmra.mrb[0].mxu0 %v1297
      %v2241 = vpop.f32.mrb[0].mxu0
      %v2242 = vadd.f32 0.0, %v2241
      %v2243 = vpop.f32.mrb[0].mxu0
      %v2244 = vadd.f32 0.0, %v2243
      %2245 = vdwg.mxu0
      %2246 = vmatprep.subr.mxu0 %v2082
      %2247 = vmatpush1.msra.mxu0 %v2081
      %2248 = vmatprep.subr.mxu0 %v2088
      %2249 = vmatpush1.msra.mxu0 %v2087
      %2250 = vmatprep.subr.mxu0 %v2094
      %2251 = vmatpush1.msra.mxu0 %v2093
      %2252 = vmatprep.subr.mxu0 %v2100
      %2253 = vmatpush1.msra.mxu0 %v2099
      %2254 = vmatprep.subr.mxu0 %v2106
      %2255 = vmatpush1.msra.mxu0 %v2105
      %2256 = vmatprep.subr.mxu0 %v2112
      %2257 = vmatpush1.msra.mxu0 %v2111
      %2258 = vmatprep.subr.mxu0 %v2118
      %2259 = vmatpush1.msra.mxu0 %v2117
      %2260 = vmatprep.subr.mxu0 %v2124
      %2261 = vmatpush1.msra.mxu0 %v2123
      %2262 = vmatprep.subr.mxu0 %v2130
      %2263 = vmatpush1.msra.mxu0 %v2129
      %2264 = vmatprep.subr.mxu0 %v2136
      %2265 = vmatpush1.msra.mxu0 %v2135
      %2266 = vmatprep.subr.mxu0 %v2142
      %2267 = vmatpush1.msra.mxu0 %v2141
      %2268 = vmatprep.subr.mxu0 %v2148
      %2269 = vmatpush1.msra.mxu0 %v2147
      %2270 = vmatprep.subr.mxu0 %v2154
      %2271 = vmatpush1.msra.mxu0 %v2153
      %2272 = vmatprep.subr.mxu0 %v2160
      %2273 = vmatpush1.msra.mxu0 %v2159
      %2274 = vmatprep.subr.mxu0 %v2166
      %2275 = vmatpush1.msra.mxu0 %v2165
      %2276 = vmatprep.subr.mxu0 %v2172
      %2277 = vmatpush1.msra.mxu0 %v2171
      %2278 = vmatprep.subr.mxu0 0.0
      %2279 = vmatpush1.msra.mxu0 0.0
      %2280 = vmatprep.subr.mxu0 0.0
      %2281 = vmatpush1.msra.mxu0 0.0
      %2282 = vmatprep.subr.mxu0 0.0
      %2283 = vmatpush1.msra.mxu0 0.0
      %2284 = vmatprep.subr.mxu0 0.0
      %2285 = vmatpush1.msra.mxu0 0.0
      %2286 = vmatprep.subr.mxu0 0.0
      %2287 = vmatpush1.msra.mxu0 0.0
      %2288 = vmatprep.subr.mxu0 0.0
      %2289 = vmatpush1.msra.mxu0 0.0
      %2290 = vmatprep.subr.mxu0 0.0
      %2291 = vmatpush1.msra.mxu0 0.0
      %2292 = vmatprep.subr.mxu0 0.0
      %2293 = vmatpush1.msra.mxu0 0.0
      %2294 = vmatprep.subr.mxu0 0.0
      %2295 = vmatpush1.msra.mxu0 0.0
      %2296 = vmatprep.subr.mxu0 0.0
      %2297 = vmatpush1.msra.mxu0 0.0
      %2298 = vmatprep.subr.mxu0 0.0
      %2299 = vmatpush1.msra.mxu0 0.0
      %2300 = vmatprep.subr.mxu0 0.0
      %2301 = vmatpush1.msra.mxu0 0.0
      %2302 = vmatprep.subr.mxu0 0.0
      %2303 = vmatpush1.msra.mxu0 0.0
      %2304 = vmatprep.subr.mxu0 0.0
      %2305 = vmatpush1.msra.mxu0 0.0
      %2306 = vmatprep.subr.mxu0 0.0
      %2307 = vmatpush1.msra.mxu0 0.0
      %2308 = vmatprep.subr.mxu0 0.0
      %2309 = vmatpush1.msra.mxu0 0.0
      %2310 = vmatprep.mubr.f32.mxu0 0.0
      %2311 = vmatmul.mubr.f32.gmra.mrb[0].mxu0 %v1297
      %v2312 = vpop.f32.mrb[0].mxu0
      %v2313 = vadd.f32 0.0, %v2312
      %v2314 = vpop.f32.mrb[0].mxu0
      %v2315 = vadd.f32 0.0, %v2314
      %2316 = vdwg.mxu0
      %2317 = vmatprep.subr.mxu0 %v2084
      %2318 = vmatpush1.msra.mxu0 %v2083
      %2319 = vmatprep.subr.mxu0 %v2090
      %2320 = vmatpush1.msra.mxu0 %v2089
      %2321 = vmatprep.subr.mxu0 %v2096
      %2322 = vmatpush1.msra.mxu0 %v2095
      %2323 = vmatprep.subr.mxu0 %v2102
      %2324 = vmatpush1.msra.mxu0 %v2101
      %2325 = vmatprep.subr.mxu0 %v2108
      %2326 = vmatpush1.msra.mxu0 %v2107
      %2327 = vmatprep.subr.mxu0 %v2114
      %2328 = vmatpush1.msra.mxu0 %v2113
      %2329 = vmatprep.subr.mxu0 %v2120
      %2330 = vmatpush1.msra.mxu0 %v2119
      %2331 = vmatprep.subr.mxu0 %v2126
      %2332 = vmatpush1.msra.mxu0 %v2125
      %2333 = vmatprep.subr.mxu0 %v2132
      %2334 = vmatpush1.msra.mxu0 %v2131
      %2335 = vmatprep.subr.mxu0 %v2138
      %2336 = vmatpush1.msra.mxu0 %v2137
      %2337 = vmatprep.subr.mxu0 %v2144
      %2338 = vmatpush1.msra.mxu0 %v2143
      %2339 = vmatprep.subr.mxu0 %v2150
      %2340 = vmatpush1.msra.mxu0 %v2149
      %2341 = vmatprep.subr.mxu0 %v2156
      %2342 = vmatpush1.msra.mxu0 %v2155
      %2343 = vmatprep.subr.mxu0 %v2162
      %2344 = vmatpush1.msra.mxu0 %v2161
      %2345 = vmatprep.subr.mxu0 %v2168
      %2346 = vmatpush1.msra.mxu0 %v2167
      %2347 = vmatprep.subr.mxu0 %v2174
      %2348 = vmatpush1.msra.mxu0 %v2173
      %2349 = vmatprep.subr.mxu0 0.0
      %2350 = vmatpush1.msra.mxu0 0.0
      %2351 = vmatprep.subr.mxu0 0.0
      %2352 = vmatpush1.msra.mxu0 0.0
      %2353 = vmatprep.subr.mxu0 0.0
      %2354 = vmatpush1.msra.mxu0 0.0
      %2355 = vmatprep.subr.mxu0 0.0
      %2356 = vmatpush1.msra.mxu0 0.0
      %2357 = vmatprep.subr.mxu0 0.0
      %2358 = vmatpush1.msra.mxu0 0.0
      %2359 = vmatprep.subr.mxu0 0.0
      %2360 = vmatpush1.msra.mxu0 0.0
      %2361 = vmatprep.subr.mxu0 0.0
      %2362 = vmatpush1.msra.mxu0 0.0
      %2363 = vmatprep.subr.mxu0 0.0
      %2364 = vmatpush1.msra.mxu0 0.0
      %2365 = vmatprep.subr.mxu0 0.0
      %2366 = vmatpush1.msra.mxu0 0.0
      %2367 = vmatprep.subr.mxu0 0.0
      %2368 = vmatpush1.msra.mxu0 0.0
      %2369 = vmatprep.subr.mxu0 0.0
      %2370 = vmatpush1.msra.mxu0 0.0
      %2371 = vmatprep.subr.mxu0 0.0
      %2372 = vmatpush1.msra.mxu0 0.0
      %2373 = vmatprep.subr.mxu0 0.0
      %2374 = vmatpush1.msra.mxu0 0.0
      %2375 = vmatprep.subr.mxu0 0.0
      %2376 = vmatpush1.msra.mxu0 0.0
      %2377 = vmatprep.subr.mxu0 0.0
      %2378 = vmatpush1.msra.mxu0 0.0
      %2379 = vmatprep.subr.mxu0 0.0
      %2380 = vmatpush1.msra.mxu0 0.0
      %2381 = vmatprep.mubr.f32.mxu0 0.0
      %2382 = vmatmul.mubr.f32.gmra.mrb[0].mxu0 %v1297
      %v2383 = vpop.f32.mrb[0].mxu0
      %v2384 = vadd.f32 0.0, %v2383
      %v2385 = vpop.f32.mrb[0].mxu0
      %v2386 = vadd.f32 0.0, %v2385
      %2387 = vdwg.mxu0
      %v2389 = vsel %vm1715, %v2054, 0
      %2391 = vmatprep.subr.mxu0 %v2056
      %2392 = vmatpush1.msra.mxu0 %v2055
      %2393 = vmatprep.subr.mxu0 %v2062
      %2394 = vmatpush1.msra.mxu0 %v2061
      %2395 = vmatprep.subr.mxu0 %v2068
      %2396 = vmatpush1.msra.mxu0 %v2067
      %2397 = vmatprep.subr.mxu0 %v2074
      %2398 = vmatpush1.msra.mxu0 %v2073
      %2399 = vmatprep.subr.mxu0 0.0
      %2400 = vmatpush1.msra.mxu0 0.0
      %2401 = vmatprep.subr.mxu0 0.0
      %2402 = vmatpush1.msra.mxu0 0.0
      %2403 = vmatprep.subr.mxu0 0.0
      %2404 = vmatpush1.msra.mxu0 0.0
      %2405 = vmatprep.subr.mxu0 0.0
      %2406 = vmatpush1.msra.mxu0 0.0
      %2407 = vmatprep.subr.mxu0 0.0
      %2408 = vmatpush1.msra.mxu0 0.0
      %2409 = vmatprep.subr.mxu0 0.0
      %2410 = vmatpush1.msra.mxu0 0.0
      %2411 = vmatprep.subr.mxu0 0.0
      %2412 = vmatpush1.msra.mxu0 0.0
      %2413 = vmatprep.subr.mxu0 0.0
      %2414 = vmatpush1.msra.mxu0 0.0
      %2415 = vmatprep.subr.mxu0 0.0
      %2416 = vmatpush1.msra.mxu0 0.0
      %2417 = vmatprep.subr.mxu0 0.0
      %2418 = vmatpush1.msra.mxu0 0.0
      %2419 = vmatprep.subr.mxu0 0.0
      %2420 = vmatpush1.msra.mxu0 0.0
      %2421 = vmatprep.subr.mxu0 0.0
      %2422 = vmatpush1.msra.mxu0 0.0
      %2423 = vmatprep.subr.mxu0 0.0
      %2424 = vmatpush1.msra.mxu0 0.0
      %2425 = vmatprep.subr.mxu0 0.0
      %2426 = vmatpush1.msra.mxu0 0.0
      %2427 = vmatprep.subr.mxu0 0.0
      %2428 = vmatpush1.msra.mxu0 0.0
      %2429 = vmatprep.subr.mxu0 0.0
      %2430 = vmatpush1.msra.mxu0 0.0
      %2431 = vmatprep.subr.mxu0 0.0
      %2432 = vmatpush1.msra.mxu0 0.0
      %2433 = vmatprep.subr.mxu0 0.0
      %2434 = vmatpush1.msra.mxu0 0.0
      %2435 = vmatprep.subr.mxu0 0.0
      %2436 = vmatpush1.msra.mxu0 0.0
      %2437 = vmatprep.subr.mxu0 0.0
      %2438 = vmatpush1.msra.mxu0 0.0
      %2439 = vmatprep.subr.mxu0 0.0
      %2440 = vmatpush1.msra.mxu0 0.0
      %2441 = vmatprep.subr.mxu0 0.0
      %2442 = vmatpush1.msra.mxu0 0.0
      %2443 = vmatprep.subr.mxu0 0.0
      %2444 = vmatpush1.msra.mxu0 0.0
      %2445 = vmatprep.subr.mxu0 0.0
      %2446 = vmatpush1.msra.mxu0 0.0
      %2447 = vmatprep.subr.mxu0 0.0
      %2448 = vmatpush1.msra.mxu0 0.0
      %2449 = vmatprep.subr.mxu0 0.0
      %2450 = vmatpush1.msra.mxu0 0.0
      %2451 = vmatprep.subr.mxu0 0.0
      %2452 = vmatpush1.msra.mxu0 0.0
      %2453 = vmatprep.subr.mxu0 0.0
      %2454 = vmatpush1.msra.mxu0 0.0
      %2455 = vmatprep.mubr.f32.mxu0 0.0
      %2456 = vmatmul.mubr.f32.gmra.mrb[0].mxu0 %v2389
      %v2457 = vpop.f32.mrb[0].mxu0
      %v2458 = vadd.f32 %v2242, %v2457
      %v2459 = vpop.f32.mrb[0].mxu0
      %v2460 = vadd.f32 %v2244, %v2459
      %2461 = vdwg.mxu0
      %2462 = vmatprep.subr.mxu0 %v2058
      %2463 = vmatpush1.msra.mxu0 %v2057
      %2464 = vmatprep.subr.mxu0 %v2064
      %2465 = vmatpush1.msra.mxu0 %v2063
      %2466 = vmatprep.subr.mxu0 %v2070
      %2467 = vmatpush1.msra.mxu0 %v2069
      %2468 = vmatprep.subr.mxu0 %v2076
      %2469 = vmatpush1.msra.mxu0 %v2075
      %2470 = vmatprep.subr.mxu0 0.0
      %2471 = vmatpush1.msra.mxu0 0.0
      %2472 = vmatprep.subr.mxu0 0.0
      %2473 = vmatpush1.msra.mxu0 0.0
      %2474 = vmatprep.subr.mxu0 0.0
      %2475 = vmatpush1.msra.mxu0 0.0
      %2476 = vmatprep.subr.mxu0 0.0
      %2477 = vmatpush1.msra.mxu0 0.0
      %2478 = vmatprep.subr.mxu0 0.0
      %2479 = vmatpush1.msra.mxu0 0.0
      %2480 = vmatprep.subr.mxu0 0.0
      %2481 = vmatpush1.msra.mxu0 0.0
      %2482 = vmatprep.subr.mxu0 0.0
      %2483 = vmatpush1.msra.mxu0 0.0
      %2484 = vmatprep.subr.mxu0 0.0
      %2485 = vmatpush1.msra.mxu0 0.0
      %2486 = vmatprep.subr.mxu0 0.0
      %2487 = vmatpush1.msra.mxu0 0.0
      %2488 = vmatprep.subr.mxu0 0.0
      %2489 = vmatpush1.msra.mxu0 0.0
      %2490 = vmatprep.subr.mxu0 0.0
      %2491 = vmatpush1.msra.mxu0 0.0
      %2492 = vmatprep.subr.mxu0 0.0
      %2493 = vmatpush1.msra.mxu0 0.0
      %2494 = vmatprep.subr.mxu0 0.0
      %2495 = vmatpush1.msra.mxu0 0.0
      %2496 = vmatprep.subr.mxu0 0.0
      %2497 = vmatpush1.msra.mxu0 0.0
      %2498 = vmatprep.subr.mxu0 0.0
      %2499 = vmatpush1.msra.mxu0 0.0
      %2500 = vmatprep.subr.mxu0 0.0
      %2501 = vmatpush1.msra.mxu0 0.0
      %2502 = vmatprep.subr.mxu0 0.0
      %2503 = vmatpush1.msra.mxu0 0.0
      %2504 = vmatprep.subr.mxu0 0.0
      %2505 = vmatpush1.msra.mxu0 0.0
      %2506 = vmatprep.subr.mxu0 0.0
      %2507 = vmatpush1.msra.mxu0 0.0
      %2508 = vmatprep.subr.mxu0 0.0
      %2509 = vmatpush1.msra.mxu0 0.0
      %2510 = vmatprep.subr.mxu0 0.0
      %2511 = vmatpush1.msra.mxu0 0.0
      %2512 = vmatprep.subr.mxu0 0.0
      %2513 = vmatpush1.msra.mxu0 0.0
      %2514 = vmatprep.subr.mxu0 0.0
      %2515 = vmatpush1.msra.mxu0 0.0
      %2516 = vmatprep.subr.mxu0 0.0
      %2517 = vmatpush1.msra.mxu0 0.0
      %2518 = vmatprep.subr.mxu0 0.0
      %2519 = vmatpush1.msra.mxu0 0.0
      %2520 = vmatprep.subr.mxu0 0.0
      %2521 = vmatpush1.msra.mxu0 0.0
      %2522 = vmatprep.subr.mxu0 0.0
      %2523 = vmatpush1.msra.mxu0 0.0
      %2524 = vmatprep.subr.mxu0 0.0
      %2525 = vmatpush1.msra.mxu0 0.0
      %2526 = vmatprep.mubr.f32.mxu0 0.0
      %2527 = vmatmul.mubr.f32.gmra.mrb[0].mxu0 %v2389
      %v2528 = vpop.f32.mrb[0].mxu0
      %v2529 = vadd.f32 %v2313, %v2528
      %v2530 = vpop.f32.mrb[0].mxu0
      %v2531 = vadd.f32 %v2315, %v2530
      %2532 = vdwg.mxu0
      %2533 = vmatprep.subr.mxu0 %v2060
      %2534 = vmatpush1.msra.mxu0 %v2059
      %2535 = vmatprep.subr.mxu0 %v2066
      %2536 = vmatpush1.msra.mxu0 %v2065
      %2537 = vmatprep.subr.mxu0 %v2072
      %2538 = vmatpush1.msra.mxu0 %v2071
      %2539 = vmatprep.subr.mxu0 %v2078
      %2540 = vmatpush1.msra.mxu0 %v2077
      %2541 = vmatprep.subr.mxu0 0.0
      %2542 = vmatpush1.msra.mxu0 0.0
      %2543 = vmatprep.subr.mxu0 0.0
      %2544 = vmatpush1.msra.mxu0 0.0
      %2545 = vmatprep.subr.mxu0 0.0
      %2546 = vmatpush1.msra.mxu0 0.0
      %2547 = vmatprep.subr.mxu0 0.0
      %2548 = vmatpush1.msra.mxu0 0.0
      %2549 = vmatprep.subr.mxu0 0.0
      %2550 = vmatpush1.msra.mxu0 0.0
      %2551 = vmatprep.subr.mxu0 0.0
      %2552 = vmatpush1.msra.mxu0 0.0
      %2553 = vmatprep.subr.mxu0 0.0
      %2554 = vmatpush1.msra.mxu0 0.0
      %2555 = vmatprep.subr.mxu0 0.0
      %2556 = vmatpush1.msra.mxu0 0.0
      %2557 = vmatprep.subr.mxu0 0.0
      %2558 = vmatpush1.msra.mxu0 0.0
      %2559 = vmatprep.subr.mxu0 0.0
      %2560 = vmatpush1.msra.mxu0 0.0
      %2561 = vmatprep.subr.mxu0 0.0
      %2562 = vmatpush1.msra.mxu0 0.0
      %2563 = vmatprep.subr.mxu0 0.0
      %2564 = vmatpush1.msra.mxu0 0.0
      %2565 = vmatprep.subr.mxu0 0.0
      %2566 = vmatpush1.msra.mxu0 0.0
      %2567 = vmatprep.subr.mxu0 0.0
      %2568 = vmatpush1.msra.mxu0 0.0
      %2569 = vmatprep.subr.mxu0 0.0
      %2570 = vmatpush1.msra.mxu0 0.0
      %2571 = vmatprep.subr.mxu0 0.0
      %2572 = vmatpush1.msra.mxu0 0.0
      %2573 = vmatprep.subr.mxu0 0.0
      %2574 = vmatpush1.msra.mxu0 0.0
      %2575 = vmatprep.subr.mxu0 0.0
      %2576 = vmatpush1.msra.mxu0 0.0
      %2577 = vmatprep.subr.mxu0 0.0
      %2578 = vmatpush1.msra.mxu0 0.0
      %2579 = vmatprep.subr.mxu0 0.0
      %2580 = vmatpush1.msra.mxu0 0.0
      %2581 = vmatprep.subr.mxu0 0.0
      %2582 = vmatpush1.msra.mxu0 0.0
      %2583 = vmatprep.subr.mxu0 0.0
      %2584 = vmatpush1.msra.mxu0 0.0
      %2585 = vmatprep.subr.mxu0 0.0
      %2586 = vmatpush1.msra.mxu0 0.0
      %2587 = vmatprep.subr.mxu0 0.0
      %2588 = vmatpush1.msra.mxu0 0.0
      %2589 = vmatprep.subr.mxu0 0.0
      %2590 = vmatpush1.msra.mxu0 0.0
      %2591 = vmatprep.subr.mxu0 0.0
      %2592 = vmatpush1.msra.mxu0 0.0
      %2593 = vmatprep.subr.mxu0 0.0
      %2594 = vmatpush1.msra.mxu0 0.0
      %2595 = vmatprep.subr.mxu0 0.0
      %2596 = vmatpush1.msra.mxu0 0.0
      %2597 = vmatprep.mubr.f32.mxu0 0.0
      %2598 = vmatmul.mubr.f32.gmra.mrb[0].mxu0 %v2389
      %v2599 = vpop.f32.mrb[0].mxu0
      %v2600 = vadd.f32 %v2384, %v2599
      %v2601 = vpop.f32.mrb[0].mxu0
      %v2602 = vadd.f32 %v2386, %v2601
      %2603 = vdwg.mxu0
      %v2604 = vld [vmem:[%s6 + $0x300] sm:$0xff]
      %v2605 = vld [vmem:[%s6 + $0x308] sm:$0xff]
      %v2606 = vld [vmem:[%s6 + $0x310] sm:$0xff]
      %v2607 = vld [vmem:[%s6 + $0x318] sm:$0xff]
      %v2608 = vld [vmem:[%s6 + $0x320] sm:$0xff]
      %v2609 = vld [vmem:[%s6 + $0x328] sm:$0xff]
      %v2610 = vld [vmem:[%s6 + $0x330] sm:$0xff]
      %v2611 = vld [vmem:[%s6 + $0x338] sm:$0xff]
      %v2612 = vld [vmem:[%s6 + $0x340] sm:$0xff]
      %v2613 = vld [vmem:[%s6 + $0x348] sm:$0xff]
      %v2614 = vld [vmem:[%s6 + $0x350] sm:$0xff]
      %v2615 = vld [vmem:[%s6 + $0x358] sm:$0xff]
      %v2616 = vld [vmem:[%s6 + $0x360] sm:$0xff]
      %v2617 = vld [vmem:[%s6 + $0x368] sm:$0xff]
      %v2618 = vld [vmem:[%s6 + $0x370] sm:$0xff]
      %v2619 = vld [vmem:[%s6 + $0x378] sm:$0xff]
      %v2620 = vld [vmem:[%s6 + $0x380] sm:$0xff]
      %v2621 = vld [vmem:[%s6 + $0x388] sm:$0xff]
      %v2622 = vld [vmem:[%s6 + $0x390] sm:$0xff]
      %v2623 = vld [vmem:[%s6 + $0x398] sm:$0xff]
      %v2624 = vld [vmem:[%s6 + $0x3a0] sm:$0xff]
      %v2625 = vld [vmem:[%s6 + $0x3a8] sm:$0xff]
      %v2626 = vld [vmem:[%s6 + $0x3b0] sm:$0xff]
      %v2627 = vld [vmem:[%s6 + $0x3b8] sm:$0xff]
      %v2628 = vld [vmem:[%s6 + $0x3c0] sm:$0xff]
      %v2629 = vld [vmem:[%s6 + $0x3c8] sm:$0xff]
      %v2630 = vld [vmem:[%s6 + $0x3d0] sm:$0xff]
      %v2631 = vld [vmem:[%s6 + $0x3d8] sm:$0xff]
      %v2632 = vld [vmem:[%s6 + $0x3e0] sm:$0xff]
      %v2633 = vld [vmem:[%s6 + $0x3e8] sm:$0xff]
      %v2634 = vld [vmem:[%s6 + $0x3f0] sm:$0xff]
      %v2635 = vld [vmem:[%s6 + $0x3f8] sm:$0xff]
      %v2636 = vld [vmem:[%s6 + $0x400] sm:$0xff]
      %v2637 = vld [vmem:[%s6 + $0x408] sm:$0xff]
      %v2638 = vld [vmem:[%s6 + $0x410] sm:$0xff]
      %v2639 = vld [vmem:[%s6 + $0x418] sm:$0xff]
      %v2640 = vld [vmem:[%s6 + $0x420] sm:$0xff]
      %v2641 = vld [vmem:[%s6 + $0x428] sm:$0xff]
      %v2642 = vld [vmem:[%s6 + $0x430] sm:$0xff]
      %v2643 = vld [vmem:[%s6 + $0x438] sm:$0xff]
      %v2644 = vld [vmem:[%s6 + $0x440] sm:$0xff]
      %v2645 = vld [vmem:[%s6 + $0x448] sm:$0xff]
      %v2646 = vld [vmem:[%s6 + $0x450] sm:$0xff]
      %v2647 = vld [vmem:[%s6 + $0x458] sm:$0xff]
      %v2648 = vld [vmem:[%s6 + $0x460] sm:$0xff]
      %v2649 = vld [vmem:[%s6 + $0x468] sm:$0xff]
      %v2650 = vld [vmem:[%s6 + $0x470] sm:$0xff]
      %v2651 = vld [vmem:[%s6 + $0x478] sm:$0xff]
      %v2652 = vld [vmem:[%s6 + $0x480] sm:$0xff]
      %v2653 = vld [vmem:[%s6 + $0x488] sm:$0xff]
      %v2654 = vld [vmem:[%s6 + $0x490] sm:$0xff]
      %v2655 = vld [vmem:[%s6 + $0x498] sm:$0xff]
      %v2656 = vld [vmem:[%s6 + $0x4a0] sm:$0xff]
      %v2657 = vld [vmem:[%s6 + $0x4a8] sm:$0xff]
      %v2658 = vld [vmem:[%s6 + $0x4b0] sm:$0xff]
      %v2659 = vld [vmem:[%s6 + $0x4b8] sm:$0xff]
      %v2660 = vld [vmem:[%s6 + $0x4c0] sm:$0xff]
      %v2661 = vld [vmem:[%s6 + $0x4c8] sm:$0xff]
      %v2662 = vld [vmem:[%s6 + $0x4d0] sm:$0xff]
      %v2663 = vld [vmem:[%s6 + $0x4d8] sm:$0xff]
      %v2664 = vld [vmem:[%s6 + $0x4e0] sm:$0xff]
      %v2665 = vld [vmem:[%s6 + $0x4e8] sm:$0xff]
      %v2666 = vld [vmem:[%s6 + $0x4f0] sm:$0xff]
      %v2667 = vld [vmem:[%s6 + $0x4f8] sm:$0xff]
      %v2668 = vld [vmem:[%s6 + $0x500] sm:$0xff]
      %v2669 = vld [vmem:[%s6 + $0x508] sm:$0xff]
      %v2670 = vld [vmem:[%s6 + $0x510] sm:$0xff]
      %v2671 = vld [vmem:[%s6 + $0x518] sm:$0xff]
      %v2672 = vld [vmem:[%s6 + $0x520] sm:$0xff]
      %v2673 = vld [vmem:[%s6 + $0x528] sm:$0xff]
      %v2674 = vld [vmem:[%s6 + $0x530] sm:$0xff]
      %v2675 = vld [vmem:[%s6 + $0x538] sm:$0xff]
      %v2676 = vld [vmem:[%s6 + $0x540] sm:$0xff]
      %v2677 = vld [vmem:[%s6 + $0x548] sm:$0xff]
      %v2678 = vld [vmem:[%s6 + $0x550] sm:$0xff]
      %v2679 = vld [vmem:[%s6 + $0x558] sm:$0xff]
      %v2680 = vld [vmem:[%s6 + $0x560] sm:$0xff]
      %v2681 = vld [vmem:[%s6 + $0x568] sm:$0xff]
      %v2682 = vld [vmem:[%s6 + $0x570] sm:$0xff]
      %v2683 = vld [vmem:[%s6 + $0x578] sm:$0xff]
      %v2684 = vld [vmem:[%s6 + $0x580] sm:$0xff]
      %v2685 = vld [vmem:[%s6 + $0x588] sm:$0xff]
      %v2686 = vld [vmem:[%s6 + $0x590] sm:$0xff]
      %v2687 = vld [vmem:[%s6 + $0x598] sm:$0xff]
      %v2688 = vld [vmem:[%s6 + $0x5a0] sm:$0xff]
      %v2689 = vld [vmem:[%s6 + $0x5a8] sm:$0xff]
      %v2690 = vld [vmem:[%s6 + $0x5b0] sm:$0xff]
      %v2691 = vld [vmem:[%s6 + $0x5b8] sm:$0xff]
      %v2692 = vld [vmem:[%s6 + $0x5c0] sm:$0xff]
      %v2693 = vld [vmem:[%s6 + $0x5c8] sm:$0xff]
      %v2694 = vld [vmem:[%s6 + $0x5d0] sm:$0xff]
      %v2695 = vld [vmem:[%s6 + $0x5d8] sm:$0xff]
      %v2696 = vld [vmem:[%s6 + $0x5e0] sm:$0xff]
      %v2697 = vld [vmem:[%s6 + $0x5e8] sm:$0xff]
      %v2698 = vld [vmem:[%s6 + $0x5f0] sm:$0xff]
      %v2699 = vld [vmem:[%s6 + $0x5f8] sm:$0xff]
      %v2701 = vrot.slane %v1297, 4
      %2703 = vmatprep.subr.mxu0 %v2605
      %2704 = vmatpush1.msra.mxu0 %v2604
      %2705 = vmatprep.subr.mxu0 %v2611
      %2706 = vmatpush1.msra.mxu0 %v2610
      %2707 = vmatprep.subr.mxu0 %v2617
      %2708 = vmatpush1.msra.mxu0 %v2616
      %2709 = vmatprep.subr.mxu0 %v2623
      %2710 = vmatpush1.msra.mxu0 %v2622
      %2711 = vmatprep.subr.mxu0 %v2629
      %2712 = vmatpush1.msra.mxu0 %v2628
      %2713 = vmatprep.subr.mxu0 %v2635
      %2714 = vmatpush1.msra.mxu0 %v2634
      %2715 = vmatprep.subr.mxu0 %v2641
      %2716 = vmatpush1.msra.mxu0 %v2640
      %2717 = vmatprep.subr.mxu0 %v2647
      %2718 = vmatpush1.msra.mxu0 %v2646
      %2719 = vmatprep.subr.mxu0 %v2653
      %2720 = vmatpush1.msra.mxu0 %v2652
      %2721 = vmatprep.subr.mxu0 %v2659
      %2722 = vmatpush1.msra.mxu0 %v2658
      %2723 = vmatprep.subr.mxu0 %v2665
      %2724 = vmatpush1.msra.mxu0 %v2664
      %2725 = vmatprep.subr.mxu0 %v2671
      %2726 = vmatpush1.msra.mxu0 %v2670
      %2727 = vmatprep.subr.mxu0 %v2677
      %2728 = vmatpush1.msra.mxu0 %v2676
      %2729 = vmatprep.subr.mxu0 %v2683
      %2730 = vmatpush1.msra.mxu0 %v2682
      %2731 = vmatprep.subr.mxu0 %v2689
      %2732 = vmatpush1.msra.mxu0 %v2688
      %2733 = vmatprep.subr.mxu0 %v2695
      %2734 = vmatpush1.msra.mxu0 %v2694
      %2735 = vmatprep.subr.mxu0 0.0
      %2736 = vmatpush1.msra.mxu0 0.0
      %2737 = vmatprep.subr.mxu0 0.0
      %2738 = vmatpush1.msra.mxu0 0.0
      %2739 = vmatprep.subr.mxu0 0.0
      %2740 = vmatpush1.msra.mxu0 0.0
      %2741 = vmatprep.subr.mxu0 0.0
      %2742 = vmatpush1.msra.mxu0 0.0
      %2743 = vmatprep.subr.mxu0 0.0
      %2744 = vmatpush1.msra.mxu0 0.0
      %2745 = vmatprep.subr.mxu0 0.0
      %2746 = vmatpush1.msra.mxu0 0.0
      %2747 = vmatprep.subr.mxu0 0.0
      %2748 = vmatpush1.msra.mxu0 0.0
      %2749 = vmatprep.subr.mxu0 0.0
      %2750 = vmatpush1.msra.mxu0 0.0
      %2751 = vmatprep.subr.mxu0 0.0
      %2752 = vmatpush1.msra.mxu0 0.0
      %2753 = vmatprep.subr.mxu0 0.0
      %2754 = vmatpush1.msra.mxu0 0.0
      %2755 = vmatprep.subr.mxu0 0.0
      %2756 = vmatpush1.msra.mxu0 0.0
      %2757 = vmatprep.subr.mxu0 0.0
      %2758 = vmatpush1.msra.mxu0 0.0
      %2759 = vmatprep.subr.mxu0 0.0
      %2760 = vmatpush1.msra.mxu0 0.0
      %2761 = vmatprep.subr.mxu0 0.0
      %2762 = vmatpush1.msra.mxu0 0.0
      %2763 = vmatprep.subr.mxu0 0.0
      %2764 = vmatpush1.msra.mxu0 0.0
      %2765 = vmatprep.subr.mxu0 0.0
      %2766 = vmatpush1.msra.mxu0 0.0
      %2767 = vmatprep.mubr.f32.mxu0 0.0
      %2768 = vmatmul.mubr.f32.gmra.mrb[0].mxu0 %v2701
      %v2769 = vpop.f32.mrb[0].mxu0
      %v2770 = vadd.f32 0.0, %v2769
      %v2771 = vpop.f32.mrb[0].mxu0
      %v2772 = vadd.f32 0.0, %v2771
      %2773 = vdwg.mxu0
      %2774 = vmatprep.subr.mxu0 %v2607
      %2775 = vmatpush1.msra.mxu0 %v2606
      %2776 = vmatprep.subr.mxu0 %v2613
      %2777 = vmatpush1.msra.mxu0 %v2612
      %2778 = vmatprep.subr.mxu0 %v2619
      %2779 = vmatpush1.msra.mxu0 %v2618
      %2780 = vmatprep.subr.mxu0 %v2625
      %2781 = vmatpush1.msra.mxu0 %v2624
      %2782 = vmatprep.subr.mxu0 %v2631
      %2783 = vmatpush1.msra.mxu0 %v2630
      %2784 = vmatprep.subr.mxu0 %v2637
      %2785 = vmatpush1.msra.mxu0 %v2636
      %2786 = vmatprep.subr.mxu0 %v2643
      %2787 = vmatpush1.msra.mxu0 %v2642
      %2788 = vmatprep.subr.mxu0 %v2649
      %2789 = vmatpush1.msra.mxu0 %v2648
      %2790 = vmatprep.subr.mxu0 %v2655
      %2791 = vmatpush1.msra.mxu0 %v2654
      %2792 = vmatprep.subr.mxu0 %v2661
      %2793 = vmatpush1.msra.mxu0 %v2660
      %2794 = vmatprep.subr.mxu0 %v2667
      %2795 = vmatpush1.msra.mxu0 %v2666
      %2796 = vmatprep.subr.mxu0 %v2673
      %2797 = vmatpush1.msra.mxu0 %v2672
      %2798 = vmatprep.subr.mxu0 %v2679
      %2799 = vmatpush1.msra.mxu0 %v2678
      %2800 = vmatprep.subr.mxu0 %v2685
      %2801 = vmatpush1.msra.mxu0 %v2684
      %2802 = vmatprep.subr.mxu0 %v2691
      %2803 = vmatpush1.msra.mxu0 %v2690
      %2804 = vmatprep.subr.mxu0 %v2697
      %2805 = vmatpush1.msra.mxu0 %v2696
      %2806 = vmatprep.subr.mxu0 0.0
      %2807 = vmatpush1.msra.mxu0 0.0
      %2808 = vmatprep.subr.mxu0 0.0
      %2809 = vmatpush1.msra.mxu0 0.0
      %2810 = vmatprep.subr.mxu0 0.0
      %2811 = vmatpush1.msra.mxu0 0.0
      %2812 = vmatprep.subr.mxu0 0.0
      %2813 = vmatpush1.msra.mxu0 0.0
      %2814 = vmatprep.subr.mxu0 0.0
      %2815 = vmatpush1.msra.mxu0 0.0
      %2816 = vmatprep.subr.mxu0 0.0
      %2817 = vmatpush1.msra.mxu0 0.0
      %2818 = vmatprep.subr.mxu0 0.0
      %2819 = vmatpush1.msra.mxu0 0.0
      %2820 = vmatprep.subr.mxu0 0.0
      %2821 = vmatpush1.msra.mxu0 0.0
      %2822 = vmatprep.subr.mxu0 0.0
      %2823 = vmatpush1.msra.mxu0 0.0
      %2824 = vmatprep.subr.mxu0 0.0
      %2825 = vmatpush1.msra.mxu0 0.0
      %2826 = vmatprep.subr.mxu0 0.0
      %2827 = vmatpush1.msra.mxu0 0.0
      %2828 = vmatprep.subr.mxu0 0.0
      %2829 = vmatpush1.msra.mxu0 0.0
      %2830 = vmatprep.subr.mxu0 0.0
      %2831 = vmatpush1.msra.mxu0 0.0
      %2832 = vmatprep.subr.mxu0 0.0
      %2833 = vmatpush1.msra.mxu0 0.0
      %2834 = vmatprep.subr.mxu0 0.0
      %2835 = vmatpush1.msra.mxu0 0.0
      %2836 = vmatprep.subr.mxu0 0.0
      %2837 = vmatpush1.msra.mxu0 0.0
      %2838 = vmatprep.mubr.f32.mxu0 0.0
      %2839 = vmatmul.mubr.f32.gmra.mrb[0].mxu0 %v2701
      %v2840 = vpop.f32.mrb[0].mxu0
      %v2841 = vadd.f32 0.0, %v2840
      %v2842 = vpop.f32.mrb[0].mxu0
      %v2843 = vadd.f32 0.0, %v2842
      %2844 = vdwg.mxu0
      %2845 = vmatprep.subr.mxu0 %v2609
      %2846 = vmatpush1.msra.mxu0 %v2608
      %2847 = vmatprep.subr.mxu0 %v2615
      %2848 = vmatpush1.msra.mxu0 %v2614
      %2849 = vmatprep.subr.mxu0 %v2621
      %2850 = vmatpush1.msra.mxu0 %v2620
      %2851 = vmatprep.subr.mxu0 %v2627
      %2852 = vmatpush1.msra.mxu0 %v2626
      %2853 = vmatprep.subr.mxu0 %v2633
      %2854 = vmatpush1.msra.mxu0 %v2632
      %2855 = vmatprep.subr.mxu0 %v2639
      %2856 = vmatpush1.msra.mxu0 %v2638
      %2857 = vmatprep.subr.mxu0 %v2645
      %2858 = vmatpush1.msra.mxu0 %v2644
      %2859 = vmatprep.subr.mxu0 %v2651
      %2860 = vmatpush1.msra.mxu0 %v2650
      %2861 = vmatprep.subr.mxu0 %v2657
      %2862 = vmatpush1.msra.mxu0 %v2656
      %2863 = vmatprep.subr.mxu0 %v2663
      %2864 = vmatpush1.msra.mxu0 %v2662
      %2865 = vmatprep.subr.mxu0 %v2669
      %2866 = vmatpush1.msra.mxu0 %v2668
      %2867 = vmatprep.subr.mxu0 %v2675
      %2868 = vmatpush1.msra.mxu0 %v2674
      %2869 = vmatprep.subr.mxu0 %v2681
      %2870 = vmatpush1.msra.mxu0 %v2680
      %2871 = vmatprep.subr.mxu0 %v2687
      %2872 = vmatpush1.msra.mxu0 %v2686
      %2873 = vmatprep.subr.mxu0 %v2693
      %2874 = vmatpush1.msra.mxu0 %v2692
      %2875 = vmatprep.subr.mxu0 %v2699
      %2876 = vmatpush1.msra.mxu0 %v2698
      %2877 = vmatprep.subr.mxu0 0.0
      %2878 = vmatpush1.msra.mxu0 0.0
      %2879 = vmatprep.subr.mxu0 0.0
      %2880 = vmatpush1.msra.mxu0 0.0
      %2881 = vmatprep.subr.mxu0 0.0
      %2882 = vmatpush1.msra.mxu0 0.0
      %2883 = vmatprep.subr.mxu0 0.0
      %2884 = vmatpush1.msra.mxu0 0.0
      %2885 = vmatprep.subr.mxu0 0.0
      %2886 = vmatpush1.msra.mxu0 0.0
      %2887 = vmatprep.subr.mxu0 0.0
      %2888 = vmatpush1.msra.mxu0 0.0
      %2889 = vmatprep.subr.mxu0 0.0
      %2890 = vmatpush1.msra.mxu0 0.0
      %2891 = vmatprep.subr.mxu0 0.0
      %2892 = vmatpush1.msra.mxu0 0.0
      %2893 = vmatprep.subr.mxu0 0.0
      %2894 = vmatpush1.msra.mxu0 0.0
      %2895 = vmatprep.subr.mxu0 0.0
      %2896 = vmatpush1.msra.mxu0 0.0
      %2897 = vmatprep.subr.mxu0 0.0
      %2898 = vmatpush1.msra.mxu0 0.0
      %2899 = vmatprep.subr.mxu0 0.0
      %2900 = vmatpush1.msra.mxu0 0.0
      %2901 = vmatprep.subr.mxu0 0.0
      %2902 = vmatpush1.msra.mxu0 0.0
      %2903 = vmatprep.subr.mxu0 0.0
      %2904 = vmatpush1.msra.mxu0 0.0
      %2905 = vmatprep.subr.mxu0 0.0
      %2906 = vmatpush1.msra.mxu0 0.0
      %2907 = vmatprep.subr.mxu0 0.0
      %2908 = vmatpush1.msra.mxu0 0.0
      %2909 = vmatprep.mubr.f32.mxu0 0.0
      %2910 = vmatmul.mubr.f32.gmra.mrb[0].mxu0 %v2701
      %v2911 = vpop.f32.mrb[0].mxu0
      %v2912 = vadd.f32 0.0, %v2911
      %v2913 = vpop.f32.mrb[0].mxu0
      %v2914 = vadd.f32 0.0, %v2913
      %2915 = vdwg.mxu0
      %v2916 = vadd.f32 %v2458, %v2770
      %v2917 = vadd.f32 %v2460, %v2772
      %v2918 = vadd.f32 %v2529, %v2841
      %v2919 = vadd.f32 %v2531, %v2843
      %v2920 = vadd.f32 %v2600, %v2912
      %v2921 = vadd.f32 %v2602, %v2914
      %v2922 = vld [vmem:[%s6 + $0x600] sm:$0xff]
      %v2923 = vld [vmem:[%s6 + $0x608] sm:$0xff]
      %v2924 = vld [vmem:[%s6 + $0x610] sm:$0xff]
      %v2925 = vld [vmem:[%s6 + $0x618] sm:$0xff]
      %v2926 = vld [vmem:[%s6 + $0x620] sm:$0xff]
      %v2927 = vld [vmem:[%s6 + $0x628] sm:$0xff]
      %v2928 = vld [vmem:[%s6 + $0x630] sm:$0xff]
      %v2929 = vld [vmem:[%s6 + $0x638] sm:$0xff]
      %v2930 = vld [vmem:[%s6 + $0x640] sm:$0xff]
      %v2931 = vld [vmem:[%s6 + $0x648] sm:$0xff]
      %v2932 = vld [vmem:[%s6 + $0x650] sm:$0xff]
      %v2933 = vld [vmem:[%s6 + $0x658] sm:$0xff]
      %v2934 = vld [vmem:[%s6 + $0x660] sm:$0xff]
      %v2935 = vld [vmem:[%s6 + $0x668] sm:$0xff]
      %v2936 = vld [vmem:[%s6 + $0x670] sm:$0xff]
      %v2937 = vld [vmem:[%s6 + $0x678] sm:$0xff]
      %v2938 = vld [vmem:[%s6 + $0x680] sm:$0xff]
      %v2939 = vld [vmem:[%s6 + $0x688] sm:$0xff]
      %v2940 = vld [vmem:[%s6 + $0x690] sm:$0xff]
      %v2941 = vld [vmem:[%s6 + $0x698] sm:$0xff]
      %v2942 = vld [vmem:[%s6 + $0x6a0] sm:$0xff]
      %v2943 = vld [vmem:[%s6 + $0x6a8] sm:$0xff]
      %v2944 = vld [vmem:[%s6 + $0x6b0] sm:$0xff]
      %v2945 = vld [vmem:[%s6 + $0x6b8] sm:$0xff]
      %v2946 = vld [vmem:[%s6 + $0x6c0] sm:$0xff]
      %v2947 = vld [vmem:[%s6 + $0x6c8] sm:$0xff]
      %v2948 = vld [vmem:[%s6 + $0x6d0] sm:$0xff]
      %v2949 = vld [vmem:[%s6 + $0x6d8] sm:$0xff]
      %v2950 = vld [vmem:[%s6 + $0x6e0] sm:$0xff]
      %v2951 = vld [vmem:[%s6 + $0x6e8] sm:$0xff]
      %v2952 = vld [vmem:[%s6 + $0x6f0] sm:$0xff]
      %v2953 = vld [vmem:[%s6 + $0x6f8] sm:$0xff]
      %v2954 = vld [vmem:[%s6 + $0x700] sm:$0xff]
      %v2955 = vld [vmem:[%s6 + $0x708] sm:$0xff]
      %v2956 = vld [vmem:[%s6 + $0x710] sm:$0xff]
      %v2957 = vld [vmem:[%s6 + $0x718] sm:$0xff]
      %v2958 = vld [vmem:[%s6 + $0x720] sm:$0xff]
      %v2959 = vld [vmem:[%s6 + $0x728] sm:$0xff]
      %v2960 = vld [vmem:[%s6 + $0x730] sm:$0xff]
      %v2961 = vld [vmem:[%s6 + $0x738] sm:$0xff]
      %v2962 = vld [vmem:[%s6 + $0x740] sm:$0xff]
      %v2963 = vld [vmem:[%s6 + $0x748] sm:$0xff]
      %v2964 = vld [vmem:[%s6 + $0x750] sm:$0xff]
      %v2965 = vld [vmem:[%s6 + $0x758] sm:$0xff]
      %v2966 = vld [vmem:[%s6 + $0x760] sm:$0xff]
      %v2967 = vld [vmem:[%s6 + $0x768] sm:$0xff]
      %v2968 = vld [vmem:[%s6 + $0x770] sm:$0xff]
      %v2969 = vld [vmem:[%s6 + $0x778] sm:$0xff]
      %v2970 = vld [vmem:[%s6 + $0x780] sm:$0xff]
      %v2971 = vld [vmem:[%s6 + $0x788] sm:$0xff]
      %v2972 = vld [vmem:[%s6 + $0x790] sm:$0xff]
      %v2973 = vld [vmem:[%s6 + $0x798] sm:$0xff]
      %v2974 = vld [vmem:[%s6 + $0x7a0] sm:$0xff]
      %v2975 = vld [vmem:[%s6 + $0x7a8] sm:$0xff]
      %v2976 = vld [vmem:[%s6 + $0x7b0] sm:$0xff]
      %v2977 = vld [vmem:[%s6 + $0x7b8] sm:$0xff]
      %v2978 = vld [vmem:[%s6 + $0x7c0] sm:$0xff]
      %v2979 = vld [vmem:[%s6 + $0x7c8] sm:$0xff]
      %v2980 = vld [vmem:[%s6 + $0x7d0] sm:$0xff]
      %v2981 = vld [vmem:[%s6 + $0x7d8] sm:$0xff]
      %v2982 = vld [vmem:[%s6 + $0x7e0] sm:$0xff]
      %v2983 = vld [vmem:[%s6 + $0x7e8] sm:$0xff]
      %v2984 = vld [vmem:[%s6 + $0x7f0] sm:$0xff]
      %v2985 = vld [vmem:[%s6 + $0x7f8] sm:$0xff]
      %v2986 = vld [vmem:[%s6 + $0x800] sm:$0xff]
      %v2987 = vld [vmem:[%s6 + $0x808] sm:$0xff]
      %v2988 = vld [vmem:[%s6 + $0x810] sm:$0xff]
      %v2989 = vld [vmem:[%s6 + $0x818] sm:$0xff]
      %v2990 = vld [vmem:[%s6 + $0x820] sm:$0xff]
      %v2991 = vld [vmem:[%s6 + $0x828] sm:$0xff]
      %v2992 = vld [vmem:[%s6 + $0x830] sm:$0xff]
      %v2993 = vld [vmem:[%s6 + $0x838] sm:$0xff]
      %v2994 = vld [vmem:[%s6 + $0x840] sm:$0xff]
      %v2995 = vld [vmem:[%s6 + $0x848] sm:$0xff]
      %v2996 = vld [vmem:[%s6 + $0x850] sm:$0xff]
      %v2997 = vld [vmem:[%s6 + $0x858] sm:$0xff]
      %v2998 = vld [vmem:[%s6 + $0x860] sm:$0xff]
      %v2999 = vld [vmem:[%s6 + $0x868] sm:$0xff]
      %v3000 = vld [vmem:[%s6 + $0x870] sm:$0xff]
      %v3001 = vld [vmem:[%s6 + $0x878] sm:$0xff]
      %v3002 = vld [vmem:[%s6 + $0x880] sm:$0xff]
      %v3003 = vld [vmem:[%s6 + $0x888] sm:$0xff]
      %v3004 = vld [vmem:[%s6 + $0x890] sm:$0xff]
      %v3005 = vld [vmem:[%s6 + $0x898] sm:$0xff]
      %v3006 = vld [vmem:[%s6 + $0x8a0] sm:$0xff]
      %v3007 = vld [vmem:[%s6 + $0x8a8] sm:$0xff]
      %v3008 = vld [vmem:[%s6 + $0x8b0] sm:$0xff]
      %v3009 = vld [vmem:[%s6 + $0x8b8] sm:$0xff]
      %v3010 = vld [vmem:[%s6 + $0x8c0] sm:$0xff]
      %v3011 = vld [vmem:[%s6 + $0x8c8] sm:$0xff]
      %v3012 = vld [vmem:[%s6 + $0x8d0] sm:$0xff]
      %v3013 = vld [vmem:[%s6 + $0x8d8] sm:$0xff]
      %v3014 = vld [vmem:[%s6 + $0x8e0] sm:$0xff]
      %v3015 = vld [vmem:[%s6 + $0x8e8] sm:$0xff]
      %v3016 = vld [vmem:[%s6 + $0x8f0] sm:$0xff]
      %v3017 = vld [vmem:[%s6 + $0x8f8] sm:$0xff]
      %3018 = vmatprep.subr.mxu0 %v2923
      %3019 = vmatpush1.msra.mxu0 %v2922
      %3020 = vmatprep.subr.mxu0 %v2929
      %3021 = vmatpush1.msra.mxu0 %v2928
      %3022 = vmatprep.subr.mxu0 %v2935
      %3023 = vmatpush1.msra.mxu0 %v2934
      %3024 = vmatprep.subr.mxu0 %v2941
      %3025 = vmatpush1.msra.mxu0 %v2940
      %3026 = vmatprep.subr.mxu0 %v2947
      %3027 = vmatpush1.msra.mxu0 %v2946
      %3028 = vmatprep.subr.mxu0 %v2953
      %3029 = vmatpush1.msra.mxu0 %v2952
      %3030 = vmatprep.subr.mxu0 %v2959
      %3031 = vmatpush1.msra.mxu0 %v2958
      %3032 = vmatprep.subr.mxu0 %v2965
      %3033 = vmatpush1.msra.mxu0 %v2964
      %3034 = vmatprep.subr.mxu0 %v2971
      %3035 = vmatpush1.msra.mxu0 %v2970
      %3036 = vmatprep.subr.mxu0 %v2977
      %3037 = vmatpush1.msra.mxu0 %v2976
      %3038 = vmatprep.subr.mxu0 %v2983
      %3039 = vmatpush1.msra.mxu0 %v2982
      %3040 = vmatprep.subr.mxu0 %v2989
      %3041 = vmatpush1.msra.mxu0 %v2988
      %3042 = vmatprep.subr.mxu0 %v2995
      %3043 = vmatpush1.msra.mxu0 %v2994
      %3044 = vmatprep.subr.mxu0 %v3001
      %3045 = vmatpush1.msra.mxu0 %v3000
      %3046 = vmatprep.subr.mxu0 %v3007
      %3047 = vmatpush1.msra.mxu0 %v3006
      %3048 = vmatprep.subr.mxu0 %v3013
      %3049 = vmatpush1.msra.mxu0 %v3012
      %3050 = vmatprep.subr.mxu0 0.0
      %3051 = vmatpush1.msra.mxu0 0.0
      %3052 = vmatprep.subr.mxu0 0.0
      %3053 = vmatpush1.msra.mxu0 0.0
      %3054 = vmatprep.subr.mxu0 0.0
      %3055 = vmatpush1.msra.mxu0 0.0
      %3056 = vmatprep.subr.mxu0 0.0
      %3057 = vmatpush1.msra.mxu0 0.0
      %3058 = vmatprep.subr.mxu0 0.0
      %3059 = vmatpush1.msra.mxu0 0.0
      %3060 = vmatprep.subr.mxu0 0.0
      %3061 = vmatpush1.msra.mxu0 0.0
      %3062 = vmatprep.subr.mxu0 0.0
      %3063 = vmatpush1.msra.mxu0 0.0
      %3064 = vmatprep.subr.mxu0 0.0
      %3065 = vmatpush1.msra.mxu0 0.0
      %3066 = vmatprep.subr.mxu0 0.0
      %3067 = vmatpush1.msra.mxu0 0.0
      %3068 = vmatprep.subr.mxu0 0.0
      %3069 = vmatpush1.msra.mxu0 0.0
      %3070 = vmatprep.subr.mxu0 0.0
      %3071 = vmatpush1.msra.mxu0 0.0
      %3072 = vmatprep.subr.mxu0 0.0
      %3073 = vmatpush1.msra.mxu0 0.0
      %3074 = vmatprep.subr.mxu0 0.0
      %3075 = vmatpush1.msra.mxu0 0.0
      %3076 = vmatprep.subr.mxu0 0.0
      %3077 = vmatpush1.msra.mxu0 0.0
      %3078 = vmatprep.subr.mxu0 0.0
      %3079 = vmatpush1.msra.mxu0 0.0
      %3080 = vmatprep.subr.mxu0 0.0
      %3081 = vmatpush1.msra.mxu0 0.0
      %3082 = vmatprep.mubr.f32.mxu0 0.0
      %3083 = vmatmul.mubr.f32.gmra.mrb[0].mxu0 %v1298
      %v3084 = vpop.f32.mrb[0].mxu0
      %v3085 = vadd.f32 0.0, %v3084
      %v3086 = vpop.f32.mrb[0].mxu0
      %v3087 = vadd.f32 0.0, %v3086
      %3088 = vdwg.mxu0
      %3089 = vmatprep.subr.mxu0 %v2925
      %3090 = vmatpush1.msra.mxu0 %v2924
      %3091 = vmatprep.subr.mxu0 %v2931
      %3092 = vmatpush1.msra.mxu0 %v2930
      %3093 = vmatprep.subr.mxu0 %v2937
      %3094 = vmatpush1.msra.mxu0 %v2936
      %3095 = vmatprep.subr.mxu0 %v2943
      %3096 = vmatpush1.msra.mxu0 %v2942
      %3097 = vmatprep.subr.mxu0 %v2949
      %3098 = vmatpush1.msra.mxu0 %v2948
      %3099 = vmatprep.subr.mxu0 %v2955
      %3100 = vmatpush1.msra.mxu0 %v2954
      %3101 = vmatprep.subr.mxu0 %v2961
      %3102 = vmatpush1.msra.mxu0 %v2960
      %3103 = vmatprep.subr.mxu0 %v2967
      %3104 = vmatpush1.msra.mxu0 %v2966
      %3105 = vmatprep.subr.mxu0 %v2973
      %3106 = vmatpush1.msra.mxu0 %v2972
      %3107 = vmatprep.subr.mxu0 %v2979
      %3108 = vmatpush1.msra.mxu0 %v2978
      %3109 = vmatprep.subr.mxu0 %v2985
      %3110 = vmatpush1.msra.mxu0 %v2984
      %3111 = vmatprep.subr.mxu0 %v2991
      %3112 = vmatpush1.msra.mxu0 %v2990
      %3113 = vmatprep.subr.mxu0 %v2997
      %3114 = vmatpush1.msra.mxu0 %v2996
      %3115 = vmatprep.subr.mxu0 %v3003
      %3116 = vmatpush1.msra.mxu0 %v3002
      %3117 = vmatprep.subr.mxu0 %v3009
      %3118 = vmatpush1.msra.mxu0 %v3008
      %3119 = vmatprep.subr.mxu0 %v3015
      %3120 = vmatpush1.msra.mxu0 %v3014
      %3121 = vmatprep.subr.mxu0 0.0
      %3122 = vmatpush1.msra.mxu0 0.0
      %3123 = vmatprep.subr.mxu0 0.0
      %3124 = vmatpush1.msra.mxu0 0.0
      %3125 = vmatprep.subr.mxu0 0.0
      %3126 = vmatpush1.msra.mxu0 0.0
      %3127 = vmatprep.subr.mxu0 0.0
      %3128 = vmatpush1.msra.mxu0 0.0
      %3129 = vmatprep.subr.mxu0 0.0
      %3130 = vmatpush1.msra.mxu0 0.0
      %3131 = vmatprep.subr.mxu0 0.0
      %3132 = vmatpush1.msra.mxu0 0.0
      %3133 = vmatprep.subr.mxu0 0.0
      %3134 = vmatpush1.msra.mxu0 0.0
      %3135 = vmatprep.subr.mxu0 0.0
      %3136 = vmatpush1.msra.mxu0 0.0
      %3137 = vmatprep.subr.mxu0 0.0
      %3138 = vmatpush1.msra.mxu0 0.0
      %3139 = vmatprep.subr.mxu0 0.0
      %3140 = vmatpush1.msra.mxu0 0.0
      %3141 = vmatprep.subr.mxu0 0.0
      %3142 = vmatpush1.msra.mxu0 0.0
      %3143 = vmatprep.subr.mxu0 0.0
      %3144 = vmatpush1.msra.mxu0 0.0
      %3145 = vmatprep.subr.mxu0 0.0
      %3146 = vmatpush1.msra.mxu0 0.0
      %3147 = vmatprep.subr.mxu0 0.0
      %3148 = vmatpush1.msra.mxu0 0.0
      %3149 = vmatprep.subr.mxu0 0.0
      %3150 = vmatpush1.msra.mxu0 0.0
      %3151 = vmatprep.subr.mxu0 0.0
      %3152 = vmatpush1.msra.mxu0 0.0
      %3153 = vmatprep.mubr.f32.mxu0 0.0
      %3154 = vmatmul.mubr.f32.gmra.mrb[0].mxu0 %v1298
      %v3155 = vpop.f32.mrb[0].mxu0
      %v3156 = vadd.f32 0.0, %v3155
      %v3157 = vpop.f32.mrb[0].mxu0
      %v3158 = vadd.f32 0.0, %v3157
      %3159 = vdwg.mxu0
      %3160 = vmatprep.subr.mxu0 %v2927
      %3161 = vmatpush1.msra.mxu0 %v2926
      %3162 = vmatprep.subr.mxu0 %v2933
      %3163 = vmatpush1.msra.mxu0 %v2932
      %3164 = vmatprep.subr.mxu0 %v2939
      %3165 = vmatpush1.msra.mxu0 %v2938
      %3166 = vmatprep.subr.mxu0 %v2945
      %3167 = vmatpush1.msra.mxu0 %v2944
      %3168 = vmatprep.subr.mxu0 %v2951
      %3169 = vmatpush1.msra.mxu0 %v2950
      %3170 = vmatprep.subr.mxu0 %v2957
      %3171 = vmatpush1.msra.mxu0 %v2956
      %3172 = vmatprep.subr.mxu0 %v2963
      %3173 = vmatpush1.msra.mxu0 %v2962
      %3174 = vmatprep.subr.mxu0 %v2969
      %3175 = vmatpush1.msra.mxu0 %v2968
      %3176 = vmatprep.subr.mxu0 %v2975
      %3177 = vmatpush1.msra.mxu0 %v2974
      %3178 = vmatprep.subr.mxu0 %v2981
      %3179 = vmatpush1.msra.mxu0 %v2980
      %3180 = vmatprep.subr.mxu0 %v2987
      %3181 = vmatpush1.msra.mxu0 %v2986
      %3182 = vmatprep.subr.mxu0 %v2993
      %3183 = vmatpush1.msra.mxu0 %v2992
      %3184 = vmatprep.subr.mxu0 %v2999
      %3185 = vmatpush1.msra.mxu0 %v2998
      %3186 = vmatprep.subr.mxu0 %v3005
      %3187 = vmatpush1.msra.mxu0 %v3004
      %3188 = vmatprep.subr.mxu0 %v3011
      %3189 = vmatpush1.msra.mxu0 %v3010
      %3190 = vmatprep.subr.mxu0 %v3017
      %3191 = vmatpush1.msra.mxu0 %v3016
      %3192 = vmatprep.subr.mxu0 0.0
      %3193 = vmatpush1.msra.mxu0 0.0
      %3194 = vmatprep.subr.mxu0 0.0
      %3195 = vmatpush1.msra.mxu0 0.0
      %3196 = vmatprep.subr.mxu0 0.0
      %3197 = vmatpush1.msra.mxu0 0.0
      %3198 = vmatprep.subr.mxu0 0.0
      %3199 = vmatpush1.msra.mxu0 0.0
      %3200 = vmatprep.subr.mxu0 0.0
      %3201 = vmatpush1.msra.mxu0 0.0
      %3202 = vmatprep.subr.mxu0 0.0
      %3203 = vmatpush1.msra.mxu0 0.0
      %3204 = vmatprep.subr.mxu0 0.0
      %3205 = vmatpush1.msra.mxu0 0.0
      %3206 = vmatprep.subr.mxu0 0.0
      %3207 = vmatpush1.msra.mxu0 0.0
      %3208 = vmatprep.subr.mxu0 0.0
      %3209 = vmatpush1.msra.mxu0 0.0
      %3210 = vmatprep.subr.mxu0 0.0
      %3211 = vmatpush1.msra.mxu0 0.0
      %3212 = vmatprep.subr.mxu0 0.0
      %3213 = vmatpush1.msra.mxu0 0.0
      %3214 = vmatprep.subr.mxu0 0.0
      %3215 = vmatpush1.msra.mxu0 0.0
      %3216 = vmatprep.subr.mxu0 0.0
      %3217 = vmatpush1.msra.mxu0 0.0
      %3218 = vmatprep.subr.mxu0 0.0
      %3219 = vmatpush1.msra.mxu0 0.0
      %3220 = vmatprep.subr.mxu0 0.0
      %3221 = vmatpush1.msra.mxu0 0.0
      %3222 = vmatprep.subr.mxu0 0.0
      %3223 = vmatpush1.msra.mxu0 0.0
      %3224 = vmatprep.mubr.f32.mxu0 0.0
      %3225 = vmatmul.mubr.f32.gmra.mrb[0].mxu0 %v1298
      %v3226 = vpop.f32.mrb[0].mxu0
      %v3227 = vadd.f32 0.0, %v3226
      %v3228 = vpop.f32.mrb[0].mxu0
      %v3229 = vadd.f32 0.0, %v3228
      %3230 = vdwg.mxu0
      %v3231 = vadd.f32 %v2916, %v3085
      %v3232 = vadd.f32 %v2917, %v3087
      %v3233 = vadd.f32 %v2918, %v3156
      %v3234 = vadd.f32 %v2919, %v3158
      %v3235 = vadd.f32 %v2920, %v3227
      %v3236 = vadd.f32 %v2921, %v3229
      %v3237 = vld [vmem:[%s6 + $0x900] sm:$0xff]
      %v3238 = vld [vmem:[%s6 + $0x908] sm:$0xff]
      %v3239 = vld [vmem:[%s6 + $0x910] sm:$0xff]
      %v3240 = vld [vmem:[%s6 + $0x918] sm:$0xff]
      %v3241 = vld [vmem:[%s6 + $0x920] sm:$0xff]
      %v3242 = vld [vmem:[%s6 + $0x928] sm:$0xff]
      %v3243 = vld [vmem:[%s6 + $0x930] sm:$0xff]
      %v3244 = vld [vmem:[%s6 + $0x938] sm:$0xff]
      %v3245 = vld [vmem:[%s6 + $0x940] sm:$0xff]
      %v3246 = vld [vmem:[%s6 + $0x948] sm:$0xff]
      %v3247 = vld [vmem:[%s6 + $0x950] sm:$0xff]
      %v3248 = vld [vmem:[%s6 + $0x958] sm:$0xff]
      %v3249 = vld [vmem:[%s6 + $0x960] sm:$0xff]
      %v3250 = vld [vmem:[%s6 + $0x968] sm:$0xff]
      %v3251 = vld [vmem:[%s6 + $0x970] sm:$0xff]
      %v3252 = vld [vmem:[%s6 + $0x978] sm:$0xff]
      %v3253 = vld [vmem:[%s6 + $0x980] sm:$0xff]
      %v3254 = vld [vmem:[%s6 + $0x988] sm:$0xff]
      %v3255 = vld [vmem:[%s6 + $0x990] sm:$0xff]
      %v3256 = vld [vmem:[%s6 + $0x998] sm:$0xff]
      %v3257 = vld [vmem:[%s6 + $0x9a0] sm:$0xff]
      %v3258 = vld [vmem:[%s6 + $0x9a8] sm:$0xff]
      %v3259 = vld [vmem:[%s6 + $0x9b0] sm:$0xff]
      %v3260 = vld [vmem:[%s6 + $0x9b8] sm:$0xff]
      %v3261 = vld [vmem:[%s6 + $0x9c0] sm:$0xff]
      %v3262 = vld [vmem:[%s6 + $0x9c8] sm:$0xff]
      %v3263 = vld [vmem:[%s6 + $0x9d0] sm:$0xff]
      %v3264 = vld [vmem:[%s6 + $0x9d8] sm:$0xff]
      %v3265 = vld [vmem:[%s6 + $0x9e0] sm:$0xff]
      %v3266 = vld [vmem:[%s6 + $0x9e8] sm:$0xff]
      %v3267 = vld [vmem:[%s6 + $0x9f0] sm:$0xff]
      %v3268 = vld [vmem:[%s6 + $0x9f8] sm:$0xff]
      %v3269 = vld [vmem:[%s6 + $0xa00] sm:$0xff]
      %v3270 = vld [vmem:[%s6 + $0xa08] sm:$0xff]
      %v3271 = vld [vmem:[%s6 + $0xa10] sm:$0xff]
      %v3272 = vld [vmem:[%s6 + $0xa18] sm:$0xff]
      %v3273 = vld [vmem:[%s6 + $0xa20] sm:$0xff]
      %v3274 = vld [vmem:[%s6 + $0xa28] sm:$0xff]
      %v3275 = vld [vmem:[%s6 + $0xa30] sm:$0xff]
      %v3276 = vld [vmem:[%s6 + $0xa38] sm:$0xff]
      %v3277 = vld [vmem:[%s6 + $0xa40] sm:$0xff]
      %v3278 = vld [vmem:[%s6 + $0xa48] sm:$0xff]
      %v3279 = vld [vmem:[%s6 + $0xa50] sm:$0xff]
      %v3280 = vld [vmem:[%s6 + $0xa58] sm:$0xff]
      %v3281 = vld [vmem:[%s6 + $0xa60] sm:$0xff]
      %v3282 = vld [vmem:[%s6 + $0xa68] sm:$0xff]
      %v3283 = vld [vmem:[%s6 + $0xa70] sm:$0xff]
      %v3284 = vld [vmem:[%s6 + $0xa78] sm:$0xff]
      %v3285 = vld [vmem:[%s6 + $0xa80] sm:$0xff]
      %v3286 = vld [vmem:[%s6 + $0xa88] sm:$0xff]
      %v3287 = vld [vmem:[%s6 + $0xa90] sm:$0xff]
      %v3288 = vld [vmem:[%s6 + $0xa98] sm:$0xff]
      %v3289 = vld [vmem:[%s6 + $0xaa0] sm:$0xff]
      %v3290 = vld [vmem:[%s6 + $0xaa8] sm:$0xff]
      %v3291 = vld [vmem:[%s6 + $0xab0] sm:$0xff]
      %v3292 = vld [vmem:[%s6 + $0xab8] sm:$0xff]
      %v3293 = vld [vmem:[%s6 + $0xac0] sm:$0xff]
      %v3294 = vld [vmem:[%s6 + $0xac8] sm:$0xff]
      %v3295 = vld [vmem:[%s6 + $0xad0] sm:$0xff]
      %v3296 = vld [vmem:[%s6 + $0xad8] sm:$0xff]
      %v3297 = vld [vmem:[%s6 + $0xae0] sm:$0xff]
      %v3298 = vld [vmem:[%s6 + $0xae8] sm:$0xff]
      %v3299 = vld [vmem:[%s6 + $0xaf0] sm:$0xff]
      %v3300 = vld [vmem:[%s6 + $0xaf8] sm:$0xff]
      %v3301 = vld [vmem:[%s6 + $0xb00] sm:$0xff]
      %v3302 = vld [vmem:[%s6 + $0xb08] sm:$0xff]
      %v3303 = vld [vmem:[%s6 + $0xb10] sm:$0xff]
      %v3304 = vld [vmem:[%s6 + $0xb18] sm:$0xff]
      %v3305 = vld [vmem:[%s6 + $0xb20] sm:$0xff]
      %v3306 = vld [vmem:[%s6 + $0xb28] sm:$0xff]
      %v3307 = vld [vmem:[%s6 + $0xb30] sm:$0xff]
      %v3308 = vld [vmem:[%s6 + $0xb38] sm:$0xff]
      %v3309 = vld [vmem:[%s6 + $0xb40] sm:$0xff]
      %v3310 = vld [vmem:[%s6 + $0xb48] sm:$0xff]
      %v3311 = vld [vmem:[%s6 + $0xb50] sm:$0xff]
      %v3312 = vld [vmem:[%s6 + $0xb58] sm:$0xff]
      %v3313 = vld [vmem:[%s6 + $0xb60] sm:$0xff]
      %v3314 = vld [vmem:[%s6 + $0xb68] sm:$0xff]
      %v3315 = vld [vmem:[%s6 + $0xb70] sm:$0xff]
      %v3316 = vld [vmem:[%s6 + $0xb78] sm:$0xff]
      %v3317 = vld [vmem:[%s6 + $0xb80] sm:$0xff]
      %v3318 = vld [vmem:[%s6 + $0xb88] sm:$0xff]
      %v3319 = vld [vmem:[%s6 + $0xb90] sm:$0xff]
      %v3320 = vld [vmem:[%s6 + $0xb98] sm:$0xff]
      %v3321 = vld [vmem:[%s6 + $0xba0] sm:$0xff]
      %v3322 = vld [vmem:[%s6 + $0xba8] sm:$0xff]
      %v3323 = vld [vmem:[%s6 + $0xbb0] sm:$0xff]
      %v3324 = vld [vmem:[%s6 + $0xbb8] sm:$0xff]
      %v3325 = vld [vmem:[%s6 + $0xbc0] sm:$0xff]
      %v3326 = vld [vmem:[%s6 + $0xbc8] sm:$0xff]
      %v3327 = vld [vmem:[%s6 + $0xbd0] sm:$0xff]
      %v3328 = vld [vmem:[%s6 + $0xbd8] sm:$0xff]
      %v3329 = vld [vmem:[%s6 + $0xbe0] sm:$0xff]
      %v3330 = vld [vmem:[%s6 + $0xbe8] sm:$0xff]
      %v3331 = vld [vmem:[%s6 + $0xbf0] sm:$0xff]
      %v3332 = vld [vmem:[%s6 + $0xbf8] sm:$0xff]
      %v3334 = vrot.slane %v1298, 4
      %3336 = vmatprep.subr.mxu0 %v3238
      %3337 = vmatpush1.msra.mxu0 %v3237
      %3338 = vmatprep.subr.mxu0 %v3244
      %3339 = vmatpush1.msra.mxu0 %v3243
      %3340 = vmatprep.subr.mxu0 %v3250
      %3341 = vmatpush1.msra.mxu0 %v3249
      %3342 = vmatprep.subr.mxu0 %v3256
      %3343 = vmatpush1.msra.mxu0 %v3255
      %3344 = vmatprep.subr.mxu0 %v3262
      %3345 = vmatpush1.msra.mxu0 %v3261
      %3346 = vmatprep.subr.mxu0 %v3268
      %3347 = vmatpush1.msra.mxu0 %v3267
      %3348 = vmatprep.subr.mxu0 %v3274
      %3349 = vmatpush1.msra.mxu0 %v3273
      %3350 = vmatprep.subr.mxu0 %v3280
      %3351 = vmatpush1.msra.mxu0 %v3279
      %3352 = vmatprep.subr.mxu0 %v3286
      %3353 = vmatpush1.msra.mxu0 %v3285
      %3354 = vmatprep.subr.mxu0 %v3292
      %3355 = vmatpush1.msra.mxu0 %v3291
      %3356 = vmatprep.subr.mxu0 %v3298
      %3357 = vmatpush1.msra.mxu0 %v3297
      %3358 = vmatprep.subr.mxu0 %v3304
      %3359 = vmatpush1.msra.mxu0 %v3303
      %3360 = vmatprep.subr.mxu0 %v3310
      %3361 = vmatpush1.msra.mxu0 %v3309
      %3362 = vmatprep.subr.mxu0 %v3316
      %3363 = vmatpush1.msra.mxu0 %v3315
      %3364 = vmatprep.subr.mxu0 %v3322
      %3365 = vmatpush1.msra.mxu0 %v3321
      %3366 = vmatprep.subr.mxu0 %v3328
      %3367 = vmatpush1.msra.mxu0 %v3327
      %3368 = vmatprep.subr.mxu0 0.0
      %3369 = vmatpush1.msra.mxu0 0.0
      %3370 = vmatprep.subr.mxu0 0.0
      %3371 = vmatpush1.msra.mxu0 0.0
      %3372 = vmatprep.subr.mxu0 0.0
      %3373 = vmatpush1.msra.mxu0 0.0
      %3374 = vmatprep.subr.mxu0 0.0
      %3375 = vmatpush1.msra.mxu0 0.0
      %3376 = vmatprep.subr.mxu0 0.0
      %3377 = vmatpush1.msra.mxu0 0.0
      %3378 = vmatprep.subr.mxu0 0.0
      %3379 = vmatpush1.msra.mxu0 0.0
      %3380 = vmatprep.subr.mxu0 0.0
      %3381 = vmatpush1.msra.mxu0 0.0
      %3382 = vmatprep.subr.mxu0 0.0
      %3383 = vmatpush1.msra.mxu0 0.0
      %3384 = vmatprep.subr.mxu0 0.0
      %3385 = vmatpush1.msra.mxu0 0.0
      %3386 = vmatprep.subr.mxu0 0.0
      %3387 = vmatpush1.msra.mxu0 0.0
      %3388 = vmatprep.subr.mxu0 0.0
      %3389 = vmatpush1.msra.mxu0 0.0
      %3390 = vmatprep.subr.mxu0 0.0
      %3391 = vmatpush1.msra.mxu0 0.0
      %3392 = vmatprep.subr.mxu0 0.0
      %3393 = vmatpush1.msra.mxu0 0.0
      %3394 = vmatprep.subr.mxu0 0.0
      %3395 = vmatpush1.msra.mxu0 0.0
      %3396 = vmatprep.subr.mxu0 0.0
      %3397 = vmatpush1.msra.mxu0 0.0
      %3398 = vmatprep.subr.mxu0 0.0
      %3399 = vmatpush1.msra.mxu0 0.0
      %3400 = vmatprep.mubr.f32.mxu0 0.0
      %3401 = vmatmul.mubr.f32.gmra.mrb[0].mxu0 %v3334
      %v3402 = vpop.f32.mrb[0].mxu0
      %v3403 = vadd.f32 0.0, %v3402
      %v3404 = vpop.f32.mrb[0].mxu0
      %v3405 = vadd.f32 0.0, %v3404
      %3406 = vdwg.mxu0
      %3407 = vmatprep.subr.mxu0 %v3240
      %3408 = vmatpush1.msra.mxu0 %v3239
      %3409 = vmatprep.subr.mxu0 %v3246
      %3410 = vmatpush1.msra.mxu0 %v3245
      %3411 = vmatprep.subr.mxu0 %v3252
      %3412 = vmatpush1.msra.mxu0 %v3251
      %3413 = vmatprep.subr.mxu0 %v3258
      %3414 = vmatpush1.msra.mxu0 %v3257
      %3415 = vmatprep.subr.mxu0 %v3264
      %3416 = vmatpush1.msra.mxu0 %v3263
      %3417 = vmatprep.subr.mxu0 %v3270
      %3418 = vmatpush1.msra.mxu0 %v3269
      %3419 = vmatprep.subr.mxu0 %v3276
      %3420 = vmatpush1.msra.mxu0 %v3275
      %3421 = vmatprep.subr.mxu0 %v3282
      %3422 = vmatpush1.msra.mxu0 %v3281
      %3423 = vmatprep.subr.mxu0 %v3288
      %3424 = vmatpush1.msra.mxu0 %v3287
      %3425 = vmatprep.subr.mxu0 %v3294
      %3426 = vmatpush1.msra.mxu0 %v3293
      %3427 = vmatprep.subr.mxu0 %v3300
      %3428 = vmatpush1.msra.mxu0 %v3299
      %3429 = vmatprep.subr.mxu0 %v3306
      %3430 = vmatpush1.msra.mxu0 %v3305
      %3431 = vmatprep.subr.mxu0 %v3312
      %3432 = vmatpush1.msra.mxu0 %v3311
      %3433 = vmatprep.subr.mxu0 %v3318
      %3434 = vmatpush1.msra.mxu0 %v3317
      %3435 = vmatprep.subr.mxu0 %v3324
      %3436 = vmatpush1.msra.mxu0 %v3323
      %3437 = vmatprep.subr.mxu0 %v3330
      %3438 = vmatpush1.msra.mxu0 %v3329
      %3439 = vmatprep.subr.mxu0 0.0
      %3440 = vmatpush1.msra.mxu0 0.0
      %3441 = vmatprep.subr.mxu0 0.0
      %3442 = vmatpush1.msra.mxu0 0.0
      %3443 = vmatprep.subr.mxu0 0.0
      %3444 = vmatpush1.msra.mxu0 0.0
      %3445 = vmatprep.subr.mxu0 0.0
      %3446 = vmatpush1.msra.mxu0 0.0
      %3447 = vmatprep.subr.mxu0 0.0
      %3448 = vmatpush1.msra.mxu0 0.0
      %3449 = vmatprep.subr.mxu0 0.0
      %3450 = vmatpush1.msra.mxu0 0.0
      %3451 = vmatprep.subr.mxu0 0.0
      %3452 = vmatpush1.msra.mxu0 0.0
      %3453 = vmatprep.subr.mxu0 0.0
      %3454 = vmatpush1.msra.mxu0 0.0
      %3455 = vmatprep.subr.mxu0 0.0
      %3456 = vmatpush1.msra.mxu0 0.0
      %3457 = vmatprep.subr.mxu0 0.0
      %3458 = vmatpush1.msra.mxu0 0.0
      %3459 = vmatprep.subr.mxu0 0.0
      %3460 = vmatpush1.msra.mxu0 0.0
      %3461 = vmatprep.subr.mxu0 0.0
      %3462 = vmatpush1.msra.mxu0 0.0
      %3463 = vmatprep.subr.mxu0 0.0
      %3464 = vmatpush1.msra.mxu0 0.0
      %3465 = vmatprep.subr.mxu0 0.0
      %3466 = vmatpush1.msra.mxu0 0.0
      %3467 = vmatprep.subr.mxu0 0.0
      %3468 = vmatpush1.msra.mxu0 0.0
      %3469 = vmatprep.subr.mxu0 0.0
      %3470 = vmatpush1.msra.mxu0 0.0
      %3471 = vmatprep.mubr.f32.mxu0 0.0
      %3472 = vmatmul.mubr.f32.gmra.mrb[0].mxu0 %v3334
      %v3473 = vpop.f32.mrb[0].mxu0
      %v3474 = vadd.f32 0.0, %v3473
      %v3475 = vpop.f32.mrb[0].mxu0
      %v3476 = vadd.f32 0.0, %v3475
      %3477 = vdwg.mxu0
      %3478 = vmatprep.subr.mxu0 %v3242
      %3479 = vmatpush1.msra.mxu0 %v3241
      %3480 = vmatprep.subr.mxu0 %v3248
      %3481 = vmatpush1.msra.mxu0 %v3247
      %3482 = vmatprep.subr.mxu0 %v3254
      %3483 = vmatpush1.msra.mxu0 %v3253
      %3484 = vmatprep.subr.mxu0 %v3260
      %3485 = vmatpush1.msra.mxu0 %v3259
      %3486 = vmatprep.subr.mxu0 %v3266
      %3487 = vmatpush1.msra.mxu0 %v3265
      %3488 = vmatprep.subr.mxu0 %v3272
      %3489 = vmatpush1.msra.mxu0 %v3271
      %3490 = vmatprep.subr.mxu0 %v3278
      %3491 = vmatpush1.msra.mxu0 %v3277
      %3492 = vmatprep.subr.mxu0 %v3284
      %3493 = vmatpush1.msra.mxu0 %v3283
      %3494 = vmatprep.subr.mxu0 %v3290
      %3495 = vmatpush1.msra.mxu0 %v3289
      %3496 = vmatprep.subr.mxu0 %v3296
      %3497 = vmatpush1.msra.mxu0 %v3295
      %3498 = vmatprep.subr.mxu0 %v3302
      %3499 = vmatpush1.msra.mxu0 %v3301
      %3500 = vmatprep.subr.mxu0 %v3308
      %3501 = vmatpush1.msra.mxu0 %v3307
      %3502 = vmatprep.subr.mxu0 %v3314
      %3503 = vmatpush1.msra.mxu0 %v3313
      %3504 = vmatprep.subr.mxu0 %v3320
      %3505 = vmatpush1.msra.mxu0 %v3319
      %3506 = vmatprep.subr.mxu0 %v3326
      %3507 = vmatpush1.msra.mxu0 %v3325
      %3508 = vmatprep.subr.mxu0 %v3332
      %3509 = vmatpush1.msra.mxu0 %v3331
      %3510 = vmatprep.subr.mxu0 0.0
      %3511 = vmatpush1.msra.mxu0 0.0
      %3512 = vmatprep.subr.mxu0 0.0
      %3513 = vmatpush1.msra.mxu0 0.0
      %3514 = vmatprep.subr.mxu0 0.0
      %3515 = vmatpush1.msra.mxu0 0.0
      %3516 = vmatprep.subr.mxu0 0.0
      %3517 = vmatpush1.msra.mxu0 0.0
      %3518 = vmatprep.subr.mxu0 0.0
      %3519 = vmatpush1.msra.mxu0 0.0
      %3520 = vmatprep.subr.mxu0 0.0
      %3521 = vmatpush1.msra.mxu0 0.0
      %3522 = vmatprep.subr.mxu0 0.0
      %3523 = vmatpush1.msra.mxu0 0.0
      %3524 = vmatprep.subr.mxu0 0.0
      %3525 = vmatpush1.msra.mxu0 0.0
      %3526 = vmatprep.subr.mxu0 0.0
      %3527 = vmatpush1.msra.mxu0 0.0
      %3528 = vmatprep.subr.mxu0 0.0
      %3529 = vmatpush1.msra.mxu0 0.0
      %3530 = vmatprep.subr.mxu0 0.0
      %3531 = vmatpush1.msra.mxu0 0.0
      %3532 = vmatprep.subr.mxu0 0.0
      %3533 = vmatpush1.msra.mxu0 0.0
      %3534 = vmatprep.subr.mxu0 0.0
      %3535 = vmatpush1.msra.mxu0 0.0
      %3536 = vmatprep.subr.mxu0 0.0
      %3537 = vmatpush1.msra.mxu0 0.0
      %3538 = vmatprep.subr.mxu0 0.0
      %3539 = vmatpush1.msra.mxu0 0.0
      %3540 = vmatprep.subr.mxu0 0.0
      %3541 = vmatpush1.msra.mxu0 0.0
      %3542 = vmatprep.mubr.f32.mxu0 0.0
      %3543 = vmatmul.mubr.f32.gmra.mrb[0].mxu0 %v3334
      %v3544 = vpop.f32.mrb[0].mxu0
      %v3545 = vadd.f32 0.0, %v3544
      %v3546 = vpop.f32.mrb[0].mxu0
      %v3547 = vadd.f32 0.0, %v3546
      %3548 = vdwg.mxu0
      %v3549 = vadd.f32 %v3231, %v3403
      %v3550 = vadd.f32 %v3232, %v3405
      %v3551 = vadd.f32 %v3233, %v3474
      %v3552 = vadd.f32 %v3234, %v3476
      %v3553 = vadd.f32 %v3235, %v3545
      %v3554 = vadd.f32 %v3236, %v3547
      %v3555 = vld [vmem:[%s12] sm:$0xff]
      %v3556 = vld [vmem:[%s12 + $0x8] sm:$0xff]
      %v3557 = vld [vmem:[%s12 + $0x10] sm:$0xff]
      %v3558 = vld [vmem:[%s12 + $0x18] sm:$0xff]
      %v3559 = vld [vmem:[%s12 + $0x20] sm:$0xff]
      %v3560 = vld [vmem:[%s12 + $0x28] sm:$0xff]
      %v3561 = vld [vmem:[%s12 + $0x30] sm:$0xff]
      %v3562 = vld [vmem:[%s12 + $0x38] sm:$0xff]
      %v3563 = vld [vmem:[%s12 + $0x40] sm:$0xff]
      %v3564 = vld [vmem:[%s12 + $0x48] sm:$0xff]
      %v3565 = vld [vmem:[%s12 + $0x50] sm:$0xff]
      %v3566 = vld [vmem:[%s12 + $0x58] sm:$0xff]
      %v3567 = vld [vmem:[%s12 + $0x60] sm:$0xff]
      %v3568 = vld [vmem:[%s12 + $0x68] sm:$0xff]
      %v3569 = vld [vmem:[%s12 + $0x70] sm:$0xff]
      %v3570 = vld [vmem:[%s12 + $0x78] sm:$0xff]
      %v3571 = vld [vmem:[%s12 + $0x80] sm:$0xff]
      %v3572 = vld [vmem:[%s12 + $0x88] sm:$0xff]
      %v3573 = vld [vmem:[%s12 + $0x90] sm:$0xff]
      %v3574 = vld [vmem:[%s12 + $0x98] sm:$0xff]
      %v3575 = vld [vmem:[%s12 + $0xa0] sm:$0xff]
      %v3576 = vld [vmem:[%s12 + $0xa8] sm:$0xff]
      %v3577 = vld [vmem:[%s12 + $0xb0] sm:$0xff]
      %v3578 = vld [vmem:[%s12 + $0xb8] sm:$0xff]
      %v3579 = vld [vmem:[%s12 + $0xc0] sm:$0xff]
      %v3580 = vld [vmem:[%s12 + $0xc8] sm:$0xff]
      %v3581 = vld [vmem:[%s12 + $0xd0] sm:$0xff]
      %v3582 = vld [vmem:[%s12 + $0xd8] sm:$0xff]
      %v3583 = vld [vmem:[%s12 + $0xe0] sm:$0xff]
      %v3584 = vld [vmem:[%s12 + $0xe8] sm:$0xff]
      %v3585 = vld [vmem:[%s12 + $0xf0] sm:$0xff]
      %v3586 = vld [vmem:[%s12 + $0xf8] sm:$0xff]
      %v3587 = vld [vmem:[%s12 + $0x100] sm:$0xff]
      %v3588 = vld [vmem:[%s12 + $0x108] sm:$0xff]
      %v3589 = vld [vmem:[%s12 + $0x110] sm:$0xff]
      %v3590 = vld [vmem:[%s12 + $0x118] sm:$0xff]
      %v3591 = vld [vmem:[%s12 + $0x120] sm:$0xff]
      %v3592 = vld [vmem:[%s12 + $0x128] sm:$0xff]
      %v3593 = vld [vmem:[%s12 + $0x130] sm:$0xff]
      %v3594 = vld [vmem:[%s12 + $0x138] sm:$0xff]
      %v3595 = vld [vmem:[%s12 + $0x140] sm:$0xff]
      %v3596 = vld [vmem:[%s12 + $0x148] sm:$0xff]
      %v3597 = vld [vmem:[%s12 + $0x150] sm:$0xff]
      %v3598 = vld [vmem:[%s12 + $0x158] sm:$0xff]
      %v3599 = vld [vmem:[%s12 + $0x160] sm:$0xff]
      %v3600 = vld [vmem:[%s12 + $0x168] sm:$0xff]
      %v3601 = vld [vmem:[%s12 + $0x170] sm:$0xff]
      %v3602 = vld [vmem:[%s12 + $0x178] sm:$0xff]
      %v3603 = vld [vmem:[%s12 + $0x180] sm:$0xff]
      %v3604 = vld [vmem:[%s12 + $0x188] sm:$0xff]
      %v3605 = vld [vmem:[%s12 + $0x190] sm:$0xff]
      %v3606 = vld [vmem:[%s12 + $0x198] sm:$0xff]
      %v3607 = vld [vmem:[%s12 + $0x1a0] sm:$0xff]
      %v3608 = vld [vmem:[%s12 + $0x1a8] sm:$0xff]
      %v3609 = vld [vmem:[%s12 + $0x1b0] sm:$0xff]
      %v3610 = vld [vmem:[%s12 + $0x1b8] sm:$0xff]
      %v3611 = vld [vmem:[%s12 + $0x1c0] sm:$0xff]
      %v3612 = vld [vmem:[%s12 + $0x1c8] sm:$0xff]
      %v3613 = vld [vmem:[%s12 + $0x1d0] sm:$0xff]
      %v3614 = vld [vmem:[%s12 + $0x1d8] sm:$0xff]
      %v3615 = vld [vmem:[%s12 + $0x1e0] sm:$0xff]
      %v3616 = vld [vmem:[%s12 + $0x1e8] sm:$0xff]
      %v3617 = vld [vmem:[%s12 + $0x1f0] sm:$0xff]
      %v3618 = vld [vmem:[%s12 + $0x1f8] sm:$0xff]
      %v3619 = vld [vmem:[%s12 + $0x200] sm:$0xff]
      %v3620 = vld [vmem:[%s12 + $0x208] sm:$0xff]
      %v3621 = vld [vmem:[%s12 + $0x210] sm:$0xff]
      %v3622 = vld [vmem:[%s12 + $0x218] sm:$0xff]
      %v3623 = vld [vmem:[%s12 + $0x220] sm:$0xff]
      %v3624 = vld [vmem:[%s12 + $0x228] sm:$0xff]
      %v3625 = vld [vmem:[%s12 + $0x230] sm:$0xff]
      %v3626 = vld [vmem:[%s12 + $0x238] sm:$0xff]
      %v3627 = vld [vmem:[%s12 + $0x240] sm:$0xff]
      %v3628 = vld [vmem:[%s12 + $0x248] sm:$0xff]
      %v3629 = vld [vmem:[%s12 + $0x250] sm:$0xff]
      %v3630 = vld [vmem:[%s12 + $0x258] sm:$0xff]
      %v3631 = vld [vmem:[%s12 + $0x260] sm:$0xff]
      %v3632 = vld [vmem:[%s12 + $0x268] sm:$0xff]
      %v3633 = vld [vmem:[%s12 + $0x270] sm:$0xff]
      %v3634 = vld [vmem:[%s12 + $0x278] sm:$0xff]
      %v3635 = vld [vmem:[%s12 + $0x280] sm:$0xff]
      %v3636 = vld [vmem:[%s12 + $0x288] sm:$0xff]
      %v3637 = vld [vmem:[%s12 + $0x290] sm:$0xff]
      %v3638 = vld [vmem:[%s12 + $0x298] sm:$0xff]
      %v3639 = vld [vmem:[%s12 + $0x2a0] sm:$0xff]
      %v3640 = vld [vmem:[%s12 + $0x2a8] sm:$0xff]
      %v3641 = vld [vmem:[%s12 + $0x2b0] sm:$0xff]
      %v3642 = vld [vmem:[%s12 + $0x2b8] sm:$0xff]
      %v3643 = vld [vmem:[%s12 + $0x2c0] sm:$0xff]
      %v3644 = vld [vmem:[%s12 + $0x2c8] sm:$0xff]
      %v3645 = vld [vmem:[%s12 + $0x2d0] sm:$0xff]
      %v3646 = vld [vmem:[%s12 + $0x2d8] sm:$0xff]
      %v3647 = vld [vmem:[%s12 + $0x2e0] sm:$0xff]
      %v3648 = vld [vmem:[%s12 + $0x2e8] sm:$0xff]
      %v3649 = vld [vmem:[%s12 + $0x2f0] sm:$0xff]
      %v3650 = vld [vmem:[%s12 + $0x2f8] sm:$0xff]
      %v3651 = vld [vmem:[%s12 + $0x300] sm:$0xff]
      %v3652 = vld [vmem:[%s12 + $0x308] sm:$0xff]
      %v3653 = vld [vmem:[%s12 + $0x310] sm:$0xff]
      %v3654 = vld [vmem:[%s12 + $0x318] sm:$0xff]
      %v3655 = vld [vmem:[%s12 + $0x320] sm:$0xff]
      %v3656 = vld [vmem:[%s12 + $0x328] sm:$0xff]
      %v3657 = vld [vmem:[%s12 + $0x330] sm:$0xff]
      %v3658 = vld [vmem:[%s12 + $0x338] sm:$0xff]
      %v3659 = vld [vmem:[%s12 + $0x340] sm:$0xff]
      %v3660 = vld [vmem:[%s12 + $0x348] sm:$0xff]
      %v3661 = vld [vmem:[%s12 + $0x350] sm:$0xff]
      %v3662 = vld [vmem:[%s12 + $0x358] sm:$0xff]
      %v3663 = vld [vmem:[%s12 + $0x360] sm:$0xff]
      %v3664 = vld [vmem:[%s12 + $0x368] sm:$0xff]
      %v3665 = vld [vmem:[%s12 + $0x370] sm:$0xff]
      %v3666 = vld [vmem:[%s12 + $0x378] sm:$0xff]
      %v3667 = vld [vmem:[%s12 + $0x380] sm:$0xff]
      %v3668 = vld [vmem:[%s12 + $0x388] sm:$0xff]
      %v3669 = vld [vmem:[%s12 + $0x390] sm:$0xff]
      %v3670 = vld [vmem:[%s12 + $0x398] sm:$0xff]
      %v3671 = vld [vmem:[%s12 + $0x3a0] sm:$0xff]
      %v3672 = vld [vmem:[%s12 + $0x3a8] sm:$0xff]
      %v3673 = vld [vmem:[%s12 + $0x3b0] sm:$0xff]
      %v3674 = vld [vmem:[%s12 + $0x3b8] sm:$0xff]
      %v3675 = vld [vmem:[%s12 + $0x3c0] sm:$0xff]
      %v3676 = vld [vmem:[%s12 + $0x3c8] sm:$0xff]
      %v3677 = vld [vmem:[%s12 + $0x3d0] sm:$0xff]
      %v3678 = vld [vmem:[%s12 + $0x3d8] sm:$0xff]
      %v3679 = vld [vmem:[%s12 + $0x3e0] sm:$0xff]
      %v3680 = vld [vmem:[%s12 + $0x3e8] sm:$0xff]
      %v3681 = vld [vmem:[%s12 + $0x3f0] sm:$0xff]
      %v3682 = vld [vmem:[%s12 + $0x3f8] sm:$0xff]
      %v3683 = vld [vmem:[%s12 + $0x400] sm:$0xff]
      %v3684 = vld [vmem:[%s12 + $0x408] sm:$0xff]
      %v3685 = vld [vmem:[%s12 + $0x410] sm:$0xff]
      %v3686 = vld [vmem:[%s12 + $0x418] sm:$0xff]
      %v3687 = vld [vmem:[%s12 + $0x420] sm:$0xff]
      %v3688 = vld [vmem:[%s12 + $0x428] sm:$0xff]
      %v3689 = vld [vmem:[%s12 + $0x430] sm:$0xff]
      %v3690 = vld [vmem:[%s12 + $0x438] sm:$0xff]
      %v3691 = vld [vmem:[%s12 + $0x440] sm:$0xff]
      %v3692 = vld [vmem:[%s12 + $0x448] sm:$0xff]
      %v3693 = vld [vmem:[%s12 + $0x450] sm:$0xff]
      %v3694 = vld [vmem:[%s12 + $0x458] sm:$0xff]
      %v3695 = vld [vmem:[%s12 + $0x460] sm:$0xff]
      %v3696 = vld [vmem:[%s12 + $0x468] sm:$0xff]
      %v3697 = vld [vmem:[%s12 + $0x470] sm:$0xff]
      %v3698 = vld [vmem:[%s12 + $0x478] sm:$0xff]
      %v3699 = vld [vmem:[%s12 + $0x480] sm:$0xff]
      %v3700 = vld [vmem:[%s12 + $0x488] sm:$0xff]
      %v3701 = vld [vmem:[%s12 + $0x490] sm:$0xff]
      %v3702 = vld [vmem:[%s12 + $0x498] sm:$0xff]
      %v3703 = vld [vmem:[%s12 + $0x4a0] sm:$0xff]
      %v3704 = vld [vmem:[%s12 + $0x4a8] sm:$0xff]
      %v3705 = vld [vmem:[%s12 + $0x4b0] sm:$0xff]
      %v3706 = vld [vmem:[%s12 + $0x4b8] sm:$0xff]
      %v3707 = vld [vmem:[%s12 + $0x4c0] sm:$0xff]
      %v3708 = vld [vmem:[%s12 + $0x4c8] sm:$0xff]
      %v3709 = vld [vmem:[%s12 + $0x4d0] sm:$0xff]
      %v3710 = vld [vmem:[%s12 + $0x4d8] sm:$0xff]
      %v3711 = vld [vmem:[%s12 + $0x4e0] sm:$0xff]
      %v3712 = vld [vmem:[%s12 + $0x4e8] sm:$0xff]
      %v3713 = vld [vmem:[%s12 + $0x4f0] sm:$0xff]
      %v3714 = vld [vmem:[%s12 + $0x4f8] sm:$0xff]
      %v3715 = vld [vmem:[%s12 + $0x500] sm:$0xff]
      %v3716 = vld [vmem:[%s12 + $0x508] sm:$0xff]
      %v3717 = vld [vmem:[%s12 + $0x510] sm:$0xff]
      %v3718 = vld [vmem:[%s12 + $0x518] sm:$0xff]
      %v3719 = vld [vmem:[%s12 + $0x520] sm:$0xff]
      %v3720 = vld [vmem:[%s12 + $0x528] sm:$0xff]
      %v3721 = vld [vmem:[%s12 + $0x530] sm:$0xff]
      %v3722 = vld [vmem:[%s12 + $0x538] sm:$0xff]
      %v3723 = vld [vmem:[%s12 + $0x540] sm:$0xff]
      %v3724 = vld [vmem:[%s12 + $0x548] sm:$0xff]
      %v3725 = vld [vmem:[%s12 + $0x550] sm:$0xff]
      %v3726 = vld [vmem:[%s12 + $0x558] sm:$0xff]
      %v3727 = vld [vmem:[%s12 + $0x560] sm:$0xff]
      %v3728 = vld [vmem:[%s12 + $0x568] sm:$0xff]
      %v3729 = vld [vmem:[%s12 + $0x570] sm:$0xff]
      %v3730 = vld [vmem:[%s12 + $0x578] sm:$0xff]
      %v3731 = vld [vmem:[%s12 + $0x580] sm:$0xff]
      %v3732 = vld [vmem:[%s12 + $0x588] sm:$0xff]
      %v3733 = vld [vmem:[%s12 + $0x590] sm:$0xff]
      %v3734 = vld [vmem:[%s12 + $0x598] sm:$0xff]
      %v3735 = vld [vmem:[%s12 + $0x5a0] sm:$0xff]
      %v3736 = vld [vmem:[%s12 + $0x5a8] sm:$0xff]
      %v3737 = vld [vmem:[%s12 + $0x5b0] sm:$0xff]
      %v3738 = vld [vmem:[%s12 + $0x5b8] sm:$0xff]
      %v3739 = vld [vmem:[%s12 + $0x5c0] sm:$0xff]
      %v3740 = vld [vmem:[%s12 + $0x5c8] sm:$0xff]
      %v3741 = vld [vmem:[%s12 + $0x5d0] sm:$0xff]
      %v3742 = vld [vmem:[%s12 + $0x5d8] sm:$0xff]
      %v3743 = vld [vmem:[%s12 + $0x5e0] sm:$0xff]
      %v3744 = vld [vmem:[%s12 + $0x5e8] sm:$0xff]
      %v3745 = vld [vmem:[%s12 + $0x5f0] sm:$0xff]
      %v3746 = vld [vmem:[%s12 + $0x5f8] sm:$0xff]
      %v3747 = vld [vmem:[%s12 + $0x600] sm:$0xff]
      %v3748 = vld [vmem:[%s12 + $0x608] sm:$0xff]
      %v3749 = vld [vmem:[%s12 + $0x610] sm:$0xff]
      %v3750 = vld [vmem:[%s12 + $0x618] sm:$0xff]
      %v3751 = vld [vmem:[%s12 + $0x620] sm:$0xff]
      %v3752 = vld [vmem:[%s12 + $0x628] sm:$0xff]
      %v3753 = vld [vmem:[%s12 + $0x630] sm:$0xff]
      %v3754 = vld [vmem:[%s12 + $0x638] sm:$0xff]
      %v3755 = vld [vmem:[%s12 + $0x640] sm:$0xff]
      %v3756 = vld [vmem:[%s12 + $0x648] sm:$0xff]
      %v3757 = vld [vmem:[%s12 + $0x650] sm:$0xff]
      %v3758 = vld [vmem:[%s12 + $0x658] sm:$0xff]
      %v3759 = vld [vmem:[%s12 + $0x660] sm:$0xff]
      %v3760 = vld [vmem:[%s12 + $0x668] sm:$0xff]
      %v3761 = vld [vmem:[%s12 + $0x670] sm:$0xff]
      %v3762 = vld [vmem:[%s12 + $0x678] sm:$0xff]
      %v3763 = vld [vmem:[%s12 + $0x680] sm:$0xff]
      %v3764 = vld [vmem:[%s12 + $0x688] sm:$0xff]
      %v3765 = vld [vmem:[%s12 + $0x690] sm:$0xff]
      %v3766 = vld [vmem:[%s12 + $0x698] sm:$0xff]
      %v3767 = vld [vmem:[%s12 + $0x6a0] sm:$0xff]
      %v3768 = vld [vmem:[%s12 + $0x6a8] sm:$0xff]
      %v3769 = vld [vmem:[%s12 + $0x6b0] sm:$0xff]
      %v3770 = vld [vmem:[%s12 + $0x6b8] sm:$0xff]
      %v3771 = vld [vmem:[%s12 + $0x6c0] sm:$0xff]
      %v3772 = vld [vmem:[%s12 + $0x6c8] sm:$0xff]
      %v3773 = vld [vmem:[%s12 + $0x6d0] sm:$0xff]
      %v3774 = vld [vmem:[%s12 + $0x6d8] sm:$0xff]
      %v3775 = vld [vmem:[%s12 + $0x6e0] sm:$0xff]
      %v3776 = vld [vmem:[%s12 + $0x6e8] sm:$0xff]
      %v3777 = vld [vmem:[%s12 + $0x6f0] sm:$0xff]
      %v3778 = vld [vmem:[%s12 + $0x6f8] sm:$0xff]
      %v3779 = vld [vmem:[%s12 + $0x700] sm:$0xff]
      %v3780 = vld [vmem:[%s12 + $0x708] sm:$0xff]
      %v3781 = vld [vmem:[%s12 + $0x710] sm:$0xff]
      %v3782 = vld [vmem:[%s12 + $0x718] sm:$0xff]
      %v3783 = vld [vmem:[%s12 + $0x720] sm:$0xff]
      %v3784 = vld [vmem:[%s12 + $0x728] sm:$0xff]
      %v3785 = vld [vmem:[%s12 + $0x730] sm:$0xff]
      %v3786 = vld [vmem:[%s12 + $0x738] sm:$0xff]
      %v3787 = vld [vmem:[%s12 + $0x740] sm:$0xff]
      %v3788 = vld [vmem:[%s12 + $0x748] sm:$0xff]
      %v3789 = vld [vmem:[%s12 + $0x750] sm:$0xff]
      %v3790 = vld [vmem:[%s12 + $0x758] sm:$0xff]
      %v3791 = vld [vmem:[%s12 + $0x760] sm:$0xff]
      %v3792 = vld [vmem:[%s12 + $0x768] sm:$0xff]
      %v3793 = vld [vmem:[%s12 + $0x770] sm:$0xff]
      %v3794 = vld [vmem:[%s12 + $0x778] sm:$0xff]
      %v3795 = vld [vmem:[%s12 + $0x780] sm:$0xff]
      %v3796 = vld [vmem:[%s12 + $0x788] sm:$0xff]
      %v3797 = vld [vmem:[%s12 + $0x790] sm:$0xff]
      %v3798 = vld [vmem:[%s12 + $0x798] sm:$0xff]
      %v3799 = vld [vmem:[%s12 + $0x7a0] sm:$0xff]
      %v3800 = vld [vmem:[%s12 + $0x7a8] sm:$0xff]
      %v3801 = vld [vmem:[%s12 + $0x7b0] sm:$0xff]
      %v3802 = vld [vmem:[%s12 + $0x7b8] sm:$0xff]
      %v3803 = vld [vmem:[%s12 + $0x7c0] sm:$0xff]
      %v3804 = vld [vmem:[%s12 + $0x7c8] sm:$0xff]
      %v3805 = vld [vmem:[%s12 + $0x7d0] sm:$0xff]
      %v3806 = vld [vmem:[%s12 + $0x7d8] sm:$0xff]
      %v3807 = vld [vmem:[%s12 + $0x7e0] sm:$0xff]
      %v3808 = vld [vmem:[%s12 + $0x7e8] sm:$0xff]
      %v3809 = vld [vmem:[%s12 + $0x7f0] sm:$0xff]
      %v3810 = vld [vmem:[%s12 + $0x7f8] sm:$0xff]
      %v3811 = vld [vmem:[%s12 + $0x800] sm:$0xff]
      %v3812 = vld [vmem:[%s12 + $0x808] sm:$0xff]
      %v3813 = vld [vmem:[%s12 + $0x810] sm:$0xff]
      %v3814 = vld [vmem:[%s12 + $0x818] sm:$0xff]
      %v3815 = vld [vmem:[%s12 + $0x820] sm:$0xff]
      %v3816 = vld [vmem:[%s12 + $0x828] sm:$0xff]
      %v3817 = vld [vmem:[%s12 + $0x830] sm:$0xff]
      %v3818 = vld [vmem:[%s12 + $0x838] sm:$0xff]
      %v3819 = vld [vmem:[%s12 + $0x840] sm:$0xff]
      %v3820 = vld [vmem:[%s12 + $0x848] sm:$0xff]
      %v3821 = vld [vmem:[%s12 + $0x850] sm:$0xff]
      %v3822 = vld [vmem:[%s12 + $0x858] sm:$0xff]
      %v3823 = vld [vmem:[%s12 + $0x860] sm:$0xff]
      %v3824 = vld [vmem:[%s12 + $0x868] sm:$0xff]
      %v3825 = vld [vmem:[%s12 + $0x870] sm:$0xff]
      %v3826 = vld [vmem:[%s12 + $0x878] sm:$0xff]
      %v3827 = vld [vmem:[%s12 + $0x880] sm:$0xff]
      %v3828 = vld [vmem:[%s12 + $0x888] sm:$0xff]
      %v3829 = vld [vmem:[%s12 + $0x890] sm:$0xff]
      %v3830 = vld [vmem:[%s12 + $0x898] sm:$0xff]
      %v3831 = vld [vmem:[%s12 + $0x8a0] sm:$0xff]
      %v3832 = vld [vmem:[%s12 + $0x8a8] sm:$0xff]
      %v3833 = vld [vmem:[%s12 + $0x8b0] sm:$0xff]
      %v3834 = vld [vmem:[%s12 + $0x8b8] sm:$0xff]
      %v3835 = vld [vmem:[%s12 + $0x8c0] sm:$0xff]
      %v3836 = vld [vmem:[%s12 + $0x8c8] sm:$0xff]
      %v3837 = vld [vmem:[%s12 + $0x8d0] sm:$0xff]
      %v3838 = vld [vmem:[%s12 + $0x8d8] sm:$0xff]
      %v3839 = vld [vmem:[%s12 + $0x8e0] sm:$0xff]
      %v3840 = vld [vmem:[%s12 + $0x8e8] sm:$0xff]
      %v3841 = vld [vmem:[%s12 + $0x8f0] sm:$0xff]
      %v3842 = vld [vmem:[%s12 + $0x8f8] sm:$0xff]
      %v3843 = vld [vmem:[%s12 + $0x900] sm:$0xff]
      %v3844 = vld [vmem:[%s12 + $0x908] sm:$0xff]
      %v3845 = vld [vmem:[%s12 + $0x910] sm:$0xff]
      %v3846 = vld [vmem:[%s12 + $0x918] sm:$0xff]
      %v3847 = vld [vmem:[%s12 + $0x920] sm:$0xff]
      %v3848 = vld [vmem:[%s12 + $0x928] sm:$0xff]
      %v3849 = vld [vmem:[%s12 + $0x930] sm:$0xff]
      %v3850 = vld [vmem:[%s12 + $0x938] sm:$0xff]
      %v3851 = vld [vmem:[%s12 + $0x940] sm:$0xff]
      %v3852 = vld [vmem:[%s12 + $0x948] sm:$0xff]
      %v3853 = vld [vmem:[%s12 + $0x950] sm:$0xff]
      %v3854 = vld [vmem:[%s12 + $0x958] sm:$0xff]
      %v3855 = vld [vmem:[%s12 + $0x960] sm:$0xff]
      %v3856 = vld [vmem:[%s12 + $0x968] sm:$0xff]
      %v3857 = vld [vmem:[%s12 + $0x970] sm:$0xff]
      %v3858 = vld [vmem:[%s12 + $0x978] sm:$0xff]
      %v3859 = vld [vmem:[%s12 + $0x980] sm:$0xff]
      %v3860 = vld [vmem:[%s12 + $0x988] sm:$0xff]
      %v3861 = vld [vmem:[%s12 + $0x990] sm:$0xff]
      %v3862 = vld [vmem:[%s12 + $0x998] sm:$0xff]
      %v3863 = vld [vmem:[%s12 + $0x9a0] sm:$0xff]
      %v3864 = vld [vmem:[%s12 + $0x9a8] sm:$0xff]
      %v3865 = vld [vmem:[%s12 + $0x9b0] sm:$0xff]
      %v3866 = vld [vmem:[%s12 + $0x9b8] sm:$0xff]
      %v3867 = vld [vmem:[%s12 + $0x9c0] sm:$0xff]
      %v3868 = vld [vmem:[%s12 + $0x9c8] sm:$0xff]
      %v3869 = vld [vmem:[%s12 + $0x9d0] sm:$0xff]
      %v3870 = vld [vmem:[%s12 + $0x9d8] sm:$0xff]
      %v3871 = vld [vmem:[%s12 + $0x9e0] sm:$0xff]
      %v3872 = vld [vmem:[%s12 + $0x9e8] sm:$0xff]
      %v3873 = vld [vmem:[%s12 + $0x9f0] sm:$0xff]
      %v3874 = vld [vmem:[%s12 + $0x9f8] sm:$0xff]
      %v3875 = vld [vmem:[%s12 + $0xa00] sm:$0xff]
      %v3876 = vld [vmem:[%s12 + $0xa08] sm:$0xff]
      %v3877 = vld [vmem:[%s12 + $0xa10] sm:$0xff]
      %v3878 = vld [vmem:[%s12 + $0xa18] sm:$0xff]
      %v3879 = vld [vmem:[%s12 + $0xa20] sm:$0xff]
      %v3880 = vld [vmem:[%s12 + $0xa28] sm:$0xff]
      %v3881 = vld [vmem:[%s12 + $0xa30] sm:$0xff]
      %v3882 = vld [vmem:[%s12 + $0xa38] sm:$0xff]
      %v3883 = vld [vmem:[%s12 + $0xa40] sm:$0xff]
      %v3884 = vld [vmem:[%s12 + $0xa48] sm:$0xff]
      %v3885 = vld [vmem:[%s12 + $0xa50] sm:$0xff]
      %v3886 = vld [vmem:[%s12 + $0xa58] sm:$0xff]
      %v3887 = vld [vmem:[%s12 + $0xa60] sm:$0xff]
      %v3888 = vld [vmem:[%s12 + $0xa68] sm:$0xff]
      %v3889 = vld [vmem:[%s12 + $0xa70] sm:$0xff]
      %v3890 = vld [vmem:[%s12 + $0xa78] sm:$0xff]
      %v3891 = vld [vmem:[%s12 + $0xa80] sm:$0xff]
      %v3892 = vld [vmem:[%s12 + $0xa88] sm:$0xff]
      %v3893 = vld [vmem:[%s12 + $0xa90] sm:$0xff]
      %v3894 = vld [vmem:[%s12 + $0xa98] sm:$0xff]
      %v3895 = vld [vmem:[%s12 + $0xaa0] sm:$0xff]
      %v3896 = vld [vmem:[%s12 + $0xaa8] sm:$0xff]
      %v3897 = vld [vmem:[%s12 + $0xab0] sm:$0xff]
      %v3898 = vld [vmem:[%s12 + $0xab8] sm:$0xff]
      %v3899 = vld [vmem:[%s12 + $0xac0] sm:$0xff]
      %v3900 = vld [vmem:[%s12 + $0xac8] sm:$0xff]
      %v3901 = vld [vmem:[%s12 + $0xad0] sm:$0xff]
      %v3902 = vld [vmem:[%s12 + $0xad8] sm:$0xff]
      %v3903 = vld [vmem:[%s12 + $0xae0] sm:$0xff]
      %v3904 = vld [vmem:[%s12 + $0xae8] sm:$0xff]
      %v3905 = vld [vmem:[%s12 + $0xaf0] sm:$0xff]
      %v3906 = vld [vmem:[%s12 + $0xaf8] sm:$0xff]
      %v3907 = vld [vmem:[%s12 + $0xb00] sm:$0xff]
      %v3908 = vld [vmem:[%s12 + $0xb08] sm:$0xff]
      %v3909 = vld [vmem:[%s12 + $0xb10] sm:$0xff]
      %v3910 = vld [vmem:[%s12 + $0xb18] sm:$0xff]
      %v3911 = vld [vmem:[%s12 + $0xb20] sm:$0xff]
      %v3912 = vld [vmem:[%s12 + $0xb28] sm:$0xff]
      %v3913 = vld [vmem:[%s12 + $0xb30] sm:$0xff]
      %v3914 = vld [vmem:[%s12 + $0xb38] sm:$0xff]
      %v3915 = vld [vmem:[%s12 + $0xb40] sm:$0xff]
      %v3916 = vld [vmem:[%s12 + $0xb48] sm:$0xff]
      %v3917 = vld [vmem:[%s12 + $0xb50] sm:$0xff]
      %v3918 = vld [vmem:[%s12 + $0xb58] sm:$0xff]
      %v3919 = vld [vmem:[%s12 + $0xb60] sm:$0xff]
      %v3920 = vld [vmem:[%s12 + $0xb68] sm:$0xff]
      %v3921 = vld [vmem:[%s12 + $0xb70] sm:$0xff]
      %v3922 = vld [vmem:[%s12 + $0xb78] sm:$0xff]
      %v3923 = vld [vmem:[%s12 + $0xb80] sm:$0xff]
      %v3924 = vld [vmem:[%s12 + $0xb88] sm:$0xff]
      %v3925 = vld [vmem:[%s12 + $0xb90] sm:$0xff]
      %v3926 = vld [vmem:[%s12 + $0xb98] sm:$0xff]
      %v3927 = vld [vmem:[%s12 + $0xba0] sm:$0xff]
      %v3928 = vld [vmem:[%s12 + $0xba8] sm:$0xff]
      %v3929 = vld [vmem:[%s12 + $0xbb0] sm:$0xff]
      %v3930 = vld [vmem:[%s12 + $0xbb8] sm:$0xff]
      %v3931 = vld [vmem:[%s12 + $0xbc0] sm:$0xff]
      %v3932 = vld [vmem:[%s12 + $0xbc8] sm:$0xff]
      %v3933 = vld [vmem:[%s12 + $0xbd0] sm:$0xff]
      %v3934 = vld [vmem:[%s12 + $0xbd8] sm:$0xff]
      %v3935 = vld [vmem:[%s12 + $0xbe0] sm:$0xff]
      %v3936 = vld [vmem:[%s12 + $0xbe8] sm:$0xff]
      %v3937 = vld [vmem:[%s12 + $0xbf0] sm:$0xff]
      %v3938 = vld [vmem:[%s12 + $0xbf8] sm:$0xff]
      %v3939 = vld [vmem:[%s12 + $0xc00] sm:$0xff]
      %v3940 = vld [vmem:[%s12 + $0xc08] sm:$0xff]
      %v3941 = vld [vmem:[%s12 + $0xc10] sm:$0xff]
      %v3942 = vld [vmem:[%s12 + $0xc18] sm:$0xff]
      %v3943 = vld [vmem:[%s12 + $0xc20] sm:$0xff]
      %v3944 = vld [vmem:[%s12 + $0xc28] sm:$0xff]
      %v3945 = vld [vmem:[%s12 + $0xc30] sm:$0xff]
      %v3946 = vld [vmem:[%s12 + $0xc38] sm:$0xff]
      %v3947 = vld [vmem:[%s12 + $0xc40] sm:$0xff]
      %v3948 = vld [vmem:[%s12 + $0xc48] sm:$0xff]
      %v3949 = vld [vmem:[%s12 + $0xc50] sm:$0xff]
      %v3950 = vld [vmem:[%s12 + $0xc58] sm:$0xff]
      %v3951 = vld [vmem:[%s12 + $0xc60] sm:$0xff]
      %v3952 = vld [vmem:[%s12 + $0xc68] sm:$0xff]
      %v3953 = vld [vmem:[%s12 + $0xc70] sm:$0xff]
      %v3954 = vld [vmem:[%s12 + $0xc78] sm:$0xff]
      %v3955 = vld [vmem:[%s12 + $0xc80] sm:$0xff]
      %v3956 = vld [vmem:[%s12 + $0xc88] sm:$0xff]
      %v3957 = vld [vmem:[%s12 + $0xc90] sm:$0xff]
      %v3958 = vld [vmem:[%s12 + $0xc98] sm:$0xff]
      %v3959 = vld [vmem:[%s12 + $0xca0] sm:$0xff]
      %v3960 = vld [vmem:[%s12 + $0xca8] sm:$0xff]
      %v3961 = vld [vmem:[%s12 + $0xcb0] sm:$0xff]
      %v3962 = vld [vmem:[%s12 + $0xcb8] sm:$0xff]
      %v3963 = vld [vmem:[%s12 + $0xcc0] sm:$0xff]
      %v3964 = vld [vmem:[%s12 + $0xcc8] sm:$0xff]
      %v3965 = vld [vmem:[%s12 + $0xcd0] sm:$0xff]
      %v3966 = vld [vmem:[%s12 + $0xcd8] sm:$0xff]
      %v3967 = vld [vmem:[%s12 + $0xce0] sm:$0xff]
      %v3968 = vld [vmem:[%s12 + $0xce8] sm:$0xff]
      %v3969 = vld [vmem:[%s12 + $0xcf0] sm:$0xff]
      %v3970 = vld [vmem:[%s12 + $0xcf8] sm:$0xff]
      %v3971 = vld [vmem:[%s12 + $0xd00] sm:$0xff]
      %v3972 = vld [vmem:[%s12 + $0xd08] sm:$0xff]
      %v3973 = vld [vmem:[%s12 + $0xd10] sm:$0xff]
      %v3974 = vld [vmem:[%s12 + $0xd18] sm:$0xff]
      %v3975 = vld [vmem:[%s12 + $0xd20] sm:$0xff]
      %v3976 = vld [vmem:[%s12 + $0xd28] sm:$0xff]
      %v3977 = vld [vmem:[%s12 + $0xd30] sm:$0xff]
      %v3978 = vld [vmem:[%s12 + $0xd38] sm:$0xff]
      %v3979 = vld [vmem:[%s12 + $0xd40] sm:$0xff]
      %v3980 = vld [vmem:[%s12 + $0xd48] sm:$0xff]
      %v3981 = vld [vmem:[%s12 + $0xd50] sm:$0xff]
      %v3982 = vld [vmem:[%s12 + $0xd58] sm:$0xff]
      %v3983 = vld [vmem:[%s12 + $0xd60] sm:$0xff]
      %v3984 = vld [vmem:[%s12 + $0xd68] sm:$0xff]
      %v3985 = vld [vmem:[%s12 + $0xd70] sm:$0xff]
      %v3986 = vld [vmem:[%s12 + $0xd78] sm:$0xff]
      %v3987 = vld [vmem:[%s12 + $0xd80] sm:$0xff]
      %v3988 = vld [vmem:[%s12 + $0xd88] sm:$0xff]
      %v3989 = vld [vmem:[%s12 + $0xd90] sm:$0xff]
      %v3990 = vld [vmem:[%s12 + $0xd98] sm:$0xff]
      %v3991 = vld [vmem:[%s12 + $0xda0] sm:$0xff]
      %v3992 = vld [vmem:[%s12 + $0xda8] sm:$0xff]
      %v3993 = vld [vmem:[%s12 + $0xdb0] sm:$0xff]
      %v3994 = vld [vmem:[%s12 + $0xdb8] sm:$0xff]
      %v3995 = vld [vmem:[%s12 + $0xdc0] sm:$0xff]
      %v3996 = vld [vmem:[%s12 + $0xdc8] sm:$0xff]
      %v3997 = vld [vmem:[%s12 + $0xdd0] sm:$0xff]
      %v3998 = vld [vmem:[%s12 + $0xdd8] sm:$0xff]
      %v3999 = vld [vmem:[%s12 + $0xde0] sm:$0xff]
      %v4000 = vld [vmem:[%s12 + $0xde8] sm:$0xff]
      %v4001 = vld [vmem:[%s12 + $0xdf0] sm:$0xff]
      %v4002 = vld [vmem:[%s12 + $0xdf8] sm:$0xff]
      %v4003 = vld [vmem:[%s12 + $0xe00] sm:$0xff]
      %v4004 = vld [vmem:[%s12 + $0xe08] sm:$0xff]
      %v4005 = vld [vmem:[%s12 + $0xe10] sm:$0xff]
      %v4006 = vld [vmem:[%s12 + $0xe18] sm:$0xff]
      %v4007 = vld [vmem:[%s12 + $0xe20] sm:$0xff]
      %v4008 = vld [vmem:[%s12 + $0xe28] sm:$0xff]
      %v4009 = vld [vmem:[%s12 + $0xe30] sm:$0xff]
      %v4010 = vld [vmem:[%s12 + $0xe38] sm:$0xff]
      %v4011 = vld [vmem:[%s12 + $0xe40] sm:$0xff]
      %v4012 = vld [vmem:[%s12 + $0xe48] sm:$0xff]
      %v4013 = vld [vmem:[%s12 + $0xe50] sm:$0xff]
      %v4014 = vld [vmem:[%s12 + $0xe58] sm:$0xff]
      %v4015 = vld [vmem:[%s12 + $0xe60] sm:$0xff]
      %v4016 = vld [vmem:[%s12 + $0xe68] sm:$0xff]
      %v4017 = vld [vmem:[%s12 + $0xe70] sm:$0xff]
      %v4018 = vld [vmem:[%s12 + $0xe78] sm:$0xff]
      %v4019 = vld [vmem:[%s12 + $0xe80] sm:$0xff]
      %v4020 = vld [vmem:[%s12 + $0xe88] sm:$0xff]
      %v4021 = vld [vmem:[%s12 + $0xe90] sm:$0xff]
      %v4022 = vld [vmem:[%s12 + $0xe98] sm:$0xff]
      %v4023 = vld [vmem:[%s12 + $0xea0] sm:$0xff]
      %v4024 = vld [vmem:[%s12 + $0xea8] sm:$0xff]
      %v4025 = vld [vmem:[%s12 + $0xeb0] sm:$0xff]
      %v4026 = vld [vmem:[%s12 + $0xeb8] sm:$0xff]
      %v4027 = vld [vmem:[%s12 + $0xec0] sm:$0xff]
      %v4028 = vld [vmem:[%s12 + $0xec8] sm:$0xff]
      %v4029 = vld [vmem:[%s12 + $0xed0] sm:$0xff]
      %v4030 = vld [vmem:[%s12 + $0xed8] sm:$0xff]
      %v4031 = vld [vmem:[%s12 + $0xee0] sm:$0xff]
      %v4032 = vld [vmem:[%s12 + $0xee8] sm:$0xff]
      %v4033 = vld [vmem:[%s12 + $0xef0] sm:$0xff]
      %v4034 = vld [vmem:[%s12 + $0xef8] sm:$0xff]
      %v4035 = vld [vmem:[%s12 + $0xf00] sm:$0xff]
      %v4036 = vld [vmem:[%s12 + $0xf08] sm:$0xff]
      %v4037 = vld [vmem:[%s12 + $0xf10] sm:$0xff]
      %v4038 = vld [vmem:[%s12 + $0xf18] sm:$0xff]
      %v4039 = vld [vmem:[%s12 + $0xf20] sm:$0xff]
      %v4040 = vld [vmem:[%s12 + $0xf28] sm:$0xff]
      %v4041 = vld [vmem:[%s12 + $0xf30] sm:$0xff]
      %v4042 = vld [vmem:[%s12 + $0xf38] sm:$0xff]
      %v4043 = vld [vmem:[%s12 + $0xf40] sm:$0xff]
      %v4044 = vld [vmem:[%s12 + $0xf48] sm:$0xff]
      %v4045 = vld [vmem:[%s12 + $0xf50] sm:$0xff]
      %v4046 = vld [vmem:[%s12 + $0xf58] sm:$0xff]
      %v4047 = vld [vmem:[%s12 + $0xf60] sm:$0xff]
      %v4048 = vld [vmem:[%s12 + $0xf68] sm:$0xff]
      %v4049 = vld [vmem:[%s12 + $0xf70] sm:$0xff]
      %v4050 = vld [vmem:[%s12 + $0xf78] sm:$0xff]
      %v4051 = vld [vmem:[%s12 + $0xf80] sm:$0xff]
      %v4052 = vld [vmem:[%s12 + $0xf88] sm:$0xff]
      %v4053 = vld [vmem:[%s12 + $0xf90] sm:$0xff]
      %v4054 = vld [vmem:[%s12 + $0xf98] sm:$0xff]
      %v4055 = vld [vmem:[%s12 + $0xfa0] sm:$0xff]
      %v4056 = vld [vmem:[%s12 + $0xfa8] sm:$0xff]
      %v4057 = vld [vmem:[%s12 + $0xfb0] sm:$0xff]
      %v4058 = vld [vmem:[%s12 + $0xfb8] sm:$0xff]
      %v4059 = vld [vmem:[%s12 + $0xfc0] sm:$0xff]
      %v4060 = vld [vmem:[%s12 + $0xfc8] sm:$0xff]
      %v4061 = vld [vmem:[%s12 + $0xfd0] sm:$0xff]
      %v4062 = vld [vmem:[%s12 + $0xfd8] sm:$0xff]
      %v4063 = vld [vmem:[%s12 + $0xfe0] sm:$0xff]
      %v4064 = vld [vmem:[%s12 + $0xfe8] sm:$0xff]
      %v4065 = vld [vmem:[%s12 + $0xff0] sm:$0xff]
      %v4066 = vld [vmem:[%s12 + $0xff8] sm:$0xff]
      %v4067 = vld [vmem:[%s12 + $0x1000] sm:$0xff]
      %v4068 = vld [vmem:[%s12 + $0x1008] sm:$0xff]
      %v4069 = vld [vmem:[%s12 + $0x1010] sm:$0xff]
      %v4070 = vld [vmem:[%s12 + $0x1018] sm:$0xff]
      %v4071 = vld [vmem:[%s12 + $0x1020] sm:$0xff]
      %v4072 = vld [vmem:[%s12 + $0x1028] sm:$0xff]
      %v4073 = vld [vmem:[%s12 + $0x1030] sm:$0xff]
      %v4074 = vld [vmem:[%s12 + $0x1038] sm:$0xff]
      %v4075 = vld [vmem:[%s12 + $0x1040] sm:$0xff]
      %v4076 = vld [vmem:[%s12 + $0x1048] sm:$0xff]
      %v4077 = vld [vmem:[%s12 + $0x1050] sm:$0xff]
      %v4078 = vld [vmem:[%s12 + $0x1058] sm:$0xff]
      %v4079 = vld [vmem:[%s12 + $0x1060] sm:$0xff]
      %v4080 = vld [vmem:[%s12 + $0x1068] sm:$0xff]
      %v4081 = vld [vmem:[%s12 + $0x1070] sm:$0xff]
      %v4082 = vld [vmem:[%s12 + $0x1078] sm:$0xff]
      %v4083 = vld [vmem:[%s12 + $0x1080] sm:$0xff]
      %v4084 = vld [vmem:[%s12 + $0x1088] sm:$0xff]
      %v4085 = vld [vmem:[%s12 + $0x1090] sm:$0xff]
      %v4086 = vld [vmem:[%s12 + $0x1098] sm:$0xff]
      %v4087 = vld [vmem:[%s12 + $0x10a0] sm:$0xff]
      %v4088 = vld [vmem:[%s12 + $0x10a8] sm:$0xff]
      %v4089 = vld [vmem:[%s12 + $0x10b0] sm:$0xff]
      %v4090 = vld [vmem:[%s12 + $0x10b8] sm:$0xff]
      %v4091 = vld [vmem:[%s12 + $0x10c0] sm:$0xff]
      %v4092 = vld [vmem:[%s12 + $0x10c8] sm:$0xff]
      %v4093 = vld [vmem:[%s12 + $0x10d0] sm:$0xff]
      %v4094 = vld [vmem:[%s12 + $0x10d8] sm:$0xff]
      %v4095 = vld [vmem:[%s12 + $0x10e0] sm:$0xff]
      %v4096 = vld [vmem:[%s12 + $0x10e8] sm:$0xff]
      %v4097 = vld [vmem:[%s12 + $0x10f0] sm:$0xff]
      %v4098 = vld [vmem:[%s12 + $0x10f8] sm:$0xff]
      %v4099 = vld [vmem:[%s12 + $0x1100] sm:$0xff]
      %v4100 = vld [vmem:[%s12 + $0x1108] sm:$0xff]
      %v4101 = vld [vmem:[%s12 + $0x1110] sm:$0xff]
      %v4102 = vld [vmem:[%s12 + $0x1118] sm:$0xff]
      %v4103 = vld [vmem:[%s12 + $0x1120] sm:$0xff]
      %v4104 = vld [vmem:[%s12 + $0x1128] sm:$0xff]
      %v4105 = vld [vmem:[%s12 + $0x1130] sm:$0xff]
      %v4106 = vld [vmem:[%s12 + $0x1138] sm:$0xff]
      %v4107 = vld [vmem:[%s12 + $0x1140] sm:$0xff]
      %v4108 = vld [vmem:[%s12 + $0x1148] sm:$0xff]
      %v4109 = vld [vmem:[%s12 + $0x1150] sm:$0xff]
      %v4110 = vld [vmem:[%s12 + $0x1158] sm:$0xff]
      %v4111 = vld [vmem:[%s12 + $0x1160] sm:$0xff]
      %v4112 = vld [vmem:[%s12 + $0x1168] sm:$0xff]
      %v4113 = vld [vmem:[%s12 + $0x1170] sm:$0xff]
      %v4114 = vld [vmem:[%s12 + $0x1178] sm:$0xff]
      %v4115 = vld [vmem:[%s12 + $0x1180] sm:$0xff]
      %v4116 = vld [vmem:[%s12 + $0x1188] sm:$0xff]
      %v4117 = vld [vmem:[%s12 + $0x1190] sm:$0xff]
      %v4118 = vld [vmem:[%s12 + $0x1198] sm:$0xff]
      %v4119 = vld [vmem:[%s12 + $0x11a0] sm:$0xff]
      %v4120 = vld [vmem:[%s12 + $0x11a8] sm:$0xff]
      %v4121 = vld [vmem:[%s12 + $0x11b0] sm:$0xff]
      %v4122 = vld [vmem:[%s12 + $0x11b8] sm:$0xff]
      %v4123 = vld [vmem:[%s12 + $0x11c0] sm:$0xff]
      %v4124 = vld [vmem:[%s12 + $0x11c8] sm:$0xff]
      %v4125 = vld [vmem:[%s12 + $0x11d0] sm:$0xff]
      %v4126 = vld [vmem:[%s12 + $0x11d8] sm:$0xff]
      %v4127 = vld [vmem:[%s12 + $0x11e0] sm:$0xff]
      %v4128 = vld [vmem:[%s12 + $0x11e8] sm:$0xff]
      %v4129 = vld [vmem:[%s12 + $0x11f0] sm:$0xff]
      %v4130 = vld [vmem:[%s12 + $0x11f8] sm:$0xff]
      %v4131 = vmul.f32 %v921, %v3549
      %v4132 = vmul.f32 %v921, %v3550
      %v4133 = vmul.f32 %v921, %v3551
      %v4134 = vmul.f32 %v921, %v3552
      %v4135 = vmul.f32 %v921, %v3553
      %v4136 = vmul.f32 %v921, %v3554
      %v4143 = vrot.slane %v4131, 1
      %v4144 = vrot.slane %v4132, 1
      %v4145 = vrot.slane %v4133, 1
      %v4146 = vrot.slane %v4134, 1
      %v4147 = vrot.slane %v4135, 1
      %v4148 = vrot.slane %v4136, 1
      %v4155 = vadd.f32 %v4131, %v4143
      %v4156 = vadd.f32 %v4132, %v4144
      %v4157 = vadd.f32 %v4133, %v4145
      %v4158 = vadd.f32 %v4134, %v4146
      %v4159 = vadd.f32 %v4135, %v4147
      %v4160 = vadd.f32 %v4136, %v4148
      %v4161 = vrot.slane %v4131, 2
      %v4162 = vrot.slane %v4132, 2
      %v4163 = vrot.slane %v4133, 2
      %v4164 = vrot.slane %v4134, 2
      %v4165 = vrot.slane %v4135, 2
      %v4166 = vrot.slane %v4136, 2
      %v4173 = vadd.f32 %v4155, %v4161
      %v4174 = vadd.f32 %v4156, %v4162
      %v4175 = vadd.f32 %v4157, %v4163
      %v4176 = vadd.f32 %v4158, %v4164
      %v4177 = vadd.f32 %v4159, %v4165
      %v4178 = vadd.f32 %v4160, %v4166
      %v4179 = vrot.slane %v4131, 3
      %v4180 = vrot.slane %v4132, 3
      %v4181 = vrot.slane %v4133, 3
      %v4182 = vrot.slane %v4134, 3
      %v4183 = vrot.slane %v4135, 3
      %v4184 = vrot.slane %v4136, 3
      %v4191 = vadd.f32 %v4173, %v4179
      %v4192 = vadd.f32 %v4174, %v4180
      %v4193 = vadd.f32 %v4175, %v4181
      %v4194 = vadd.f32 %v4176, %v4182
      %v4195 = vadd.f32 %v4177, %v4183
      %v4196 = vadd.f32 %v4178, %v4184
      %v4197 = vmul.f32 %v4191, %v4191
      %v4198 = vmul.f32 %v4192, %v4192
      %v4199 = vmul.f32 %v4193, %v4193
      %v4200 = vmul.f32 %v4194, %v4194
      %v4201 = vmul.f32 %v4195, %v4195
      %v4202 = vmul.f32 %v4196, %v4196
      %4203 = vmatprep.subr.mxu0 %v3556
      %4204 = vmatpush1.msra.mxu0 %v3555
      %4205 = vmatprep.subr.mxu0 %v3562
      %4206 = vmatpush1.msra.mxu0 %v3561
      %4207 = vmatprep.subr.mxu0 %v3568
      %4208 = vmatpush1.msra.mxu0 %v3567
      %4209 = vmatprep.subr.mxu0 %v3574
      %4210 = vmatpush1.msra.mxu0 %v3573
      %4211 = vmatprep.subr.mxu0 %v3580
      %4212 = vmatpush1.msra.mxu0 %v3579
      %4213 = vmatprep.subr.mxu0 %v3586
      %4214 = vmatpush1.msra.mxu0 %v3585
      %4215 = vmatprep.subr.mxu0 %v3592
      %4216 = vmatpush1.msra.mxu0 %v3591
      %4217 = vmatprep.subr.mxu0 %v3598
      %4218 = vmatpush1.msra.mxu0 %v3597
      %4219 = vmatprep.subr.mxu0 %v3604
      %4220 = vmatpush1.msra.mxu0 %v3603
      %4221 = vmatprep.subr.mxu0 %v3610
      %4222 = vmatpush1.msra.mxu0 %v3609
      %4223 = vmatprep.subr.mxu0 %v3616
      %4224 = vmatpush1.msra.mxu0 %v3615
      %4225 = vmatprep.subr.mxu0 %v3622
      %4226 = vmatpush1.msra.mxu0 %v3621
      %4227 = vmatprep.subr.mxu0 %v3628
      %4228 = vmatpush1.msra.mxu0 %v3627
      %4229 = vmatprep.subr.mxu0 %v3634
      %4230 = vmatpush1.msra.mxu0 %v3633
      %4231 = vmatprep.subr.mxu0 %v3640
      %4232 = vmatpush1.msra.mxu0 %v3639
      %4233 = vmatprep.subr.mxu0 %v3646
      %4234 = vmatpush1.msra.mxu0 %v3645
      %4235 = vmatprep.subr.mxu0 %v3652
      %4236 = vmatpush1.msra.mxu0 %v3651
      %4237 = vmatprep.subr.mxu0 %v3658
      %4238 = vmatpush1.msra.mxu0 %v3657
      %4239 = vmatprep.subr.mxu0 %v3664
      %4240 = vmatpush1.msra.mxu0 %v3663
      %4241 = vmatprep.subr.mxu0 %v3670
      %4242 = vmatpush1.msra.mxu0 %v3669
      %4243 = vmatprep.subr.mxu0 %v3676
      %4244 = vmatpush1.msra.mxu0 %v3675
      %4245 = vmatprep.subr.mxu0 %v3682
      %4246 = vmatpush1.msra.mxu0 %v3681
      %4247 = vmatprep.subr.mxu0 %v3688
      %4248 = vmatpush1.msra.mxu0 %v3687
      %4249 = vmatprep.subr.mxu0 %v3694
      %4250 = vmatpush1.msra.mxu0 %v3693
      %4251 = vmatprep.subr.mxu0 %v3700
      %4252 = vmatpush1.msra.mxu0 %v3699
      %4253 = vmatprep.subr.mxu0 %v3706
      %4254 = vmatpush1.msra.mxu0 %v3705
      %4255 = vmatprep.subr.mxu0 %v3712
      %4256 = vmatpush1.msra.mxu0 %v3711
      %4257 = vmatprep.subr.mxu0 %v3718
      %4258 = vmatpush1.msra.mxu0 %v3717
      %4259 = vmatprep.subr.mxu0 %v3724
      %4260 = vmatpush1.msra.mxu0 %v3723
      %4261 = vmatprep.subr.mxu0 %v3730
      %4262 = vmatpush1.msra.mxu0 %v3729
      %4263 = vmatprep.subr.mxu0 %v3736
      %4264 = vmatpush1.msra.mxu0 %v3735
      %4265 = vmatprep.subr.mxu0 %v3742
      %4266 = vmatpush1.msra.mxu0 %v3741
      %4267 = vmatprep.mubr.f32.mxu0 %v4198
      %4268 = vmatmul.mubr.f32.gmra.mrb[0].mxu0 %v4197
      %v4269 = vpop.f32.mrb[0].mxu0
      %v4270 = vadd.f32 0.0, %v4269
      %v4271 = vpop.f32.mrb[0].mxu0
      %v4272 = vadd.f32 0.0, %v4271
      %4273 = vdwg.mxu0
      %4274 = vmatprep.subr.mxu0 %v3748
      %4275 = vmatpush1.msra.mxu0 %v3747
      %4276 = vmatprep.subr.mxu0 %v3754
      %4277 = vmatpush1.msra.mxu0 %v3753
      %4278 = vmatprep.subr.mxu0 %v3760
      %4279 = vmatpush1.msra.mxu0 %v3759
      %4280 = vmatprep.subr.mxu0 %v3766
      %4281 = vmatpush1.msra.mxu0 %v3765
      %4282 = vmatprep.subr.mxu0 %v3772
      %4283 = vmatpush1.msra.mxu0 %v3771
      %4284 = vmatprep.subr.mxu0 %v3778
      %4285 = vmatpush1.msra.mxu0 %v3777
      %4286 = vmatprep.subr.mxu0 %v3784
      %4287 = vmatpush1.msra.mxu0 %v3783
      %4288 = vmatprep.subr.mxu0 %v3790
      %4289 = vmatpush1.msra.mxu0 %v3789
      %4290 = vmatprep.subr.mxu0 %v3796
      %4291 = vmatpush1.msra.mxu0 %v3795
      %4292 = vmatprep.subr.mxu0 %v3802
      %4293 = vmatpush1.msra.mxu0 %v3801
      %4294 = vmatprep.subr.mxu0 %v3808
      %4295 = vmatpush1.msra.mxu0 %v3807
      %4296 = vmatprep.subr.mxu0 %v3814
      %4297 = vmatpush1.msra.mxu0 %v3813
      %4298 = vmatprep.subr.mxu0 %v3820
      %4299 = vmatpush1.msra.mxu0 %v3819
      %4300 = vmatprep.subr.mxu0 %v3826
      %4301 = vmatpush1.msra.mxu0 %v3825
      %4302 = vmatprep.subr.mxu0 %v3832
      %4303 = vmatpush1.msra.mxu0 %v3831
      %4304 = vmatprep.subr.mxu0 %v3838
      %4305 = vmatpush1.msra.mxu0 %v3837
      %4306 = vmatprep.subr.mxu0 %v3844
      %4307 = vmatpush1.msra.mxu0 %v3843
      %4308 = vmatprep.subr.mxu0 %v3850
      %4309 = vmatpush1.msra.mxu0 %v3849
      %4310 = vmatprep.subr.mxu0 %v3856
      %4311 = vmatpush1.msra.mxu0 %v3855
      %4312 = vmatprep.subr.mxu0 %v3862
      %4313 = vmatpush1.msra.mxu0 %v3861
      %4314 = vmatprep.subr.mxu0 %v3868
      %4315 = vmatpush1.msra.mxu0 %v3867
      %4316 = vmatprep.subr.mxu0 %v3874
      %4317 = vmatpush1.msra.mxu0 %v3873
      %4318 = vmatprep.subr.mxu0 %v3880
      %4319 = vmatpush1.msra.mxu0 %v3879
      %4320 = vmatprep.subr.mxu0 %v3886
      %4321 = vmatpush1.msra.mxu0 %v3885
      %4322 = vmatprep.subr.mxu0 %v3892
      %4323 = vmatpush1.msra.mxu0 %v3891
      %4324 = vmatprep.subr.mxu0 %v3898
      %4325 = vmatpush1.msra.mxu0 %v3897
      %4326 = vmatprep.subr.mxu0 %v3904
      %4327 = vmatpush1.msra.mxu0 %v3903
      %4328 = vmatprep.subr.mxu0 %v3910
      %4329 = vmatpush1.msra.mxu0 %v3909
      %4330 = vmatprep.subr.mxu0 %v3916
      %4331 = vmatpush1.msra.mxu0 %v3915
      %4332 = vmatprep.subr.mxu0 %v3922
      %4333 = vmatpush1.msra.mxu0 %v3921
      %4334 = vmatprep.subr.mxu0 %v3928
      %4335 = vmatpush1.msra.mxu0 %v3927
      %4336 = vmatprep.subr.mxu0 %v3934
      %4337 = vmatpush1.msra.mxu0 %v3933
      %4338 = vmatprep.mubr.f32.mxu0 %v4200
      %4339 = vmatmul.mubr.f32.gmra.mrb[0].mxu0 %v4199
      %v4340 = vpop.f32.mrb[0].mxu0
      %v4341 = vadd.f32 %v4270, %v4340
      %v4342 = vpop.f32.mrb[0].mxu0
      %v4343 = vadd.f32 %v4272, %v4342
      %4344 = vdwg.mxu0
      %4345 = vmatprep.subr.mxu0 %v3940
      %4346 = vmatpush1.msra.mxu0 %v3939
      %4347 = vmatprep.subr.mxu0 %v3946
      %4348 = vmatpush1.msra.mxu0 %v3945
      %4349 = vmatprep.subr.mxu0 %v3952
      %4350 = vmatpush1.msra.mxu0 %v3951
      %4351 = vmatprep.subr.mxu0 %v3958
      %4352 = vmatpush1.msra.mxu0 %v3957
      %4353 = vmatprep.subr.mxu0 %v3964
      %4354 = vmatpush1.msra.mxu0 %v3963
      %4355 = vmatprep.subr.mxu0 %v3970
      %4356 = vmatpush1.msra.mxu0 %v3969
      %4357 = vmatprep.subr.mxu0 %v3976
      %4358 = vmatpush1.msra.mxu0 %v3975
      %4359 = vmatprep.subr.mxu0 %v3982
      %4360 = vmatpush1.msra.mxu0 %v3981
      %4361 = vmatprep.subr.mxu0 %v3988
      %4362 = vmatpush1.msra.mxu0 %v3987
      %4363 = vmatprep.subr.mxu0 %v3994
      %4364 = vmatpush1.msra.mxu0 %v3993
      %4365 = vmatprep.subr.mxu0 %v4000
      %4366 = vmatpush1.msra.mxu0 %v3999
      %4367 = vmatprep.subr.mxu0 %v4006
      %4368 = vmatpush1.msra.mxu0 %v4005
      %4369 = vmatprep.subr.mxu0 %v4012
      %4370 = vmatpush1.msra.mxu0 %v4011
      %4371 = vmatprep.subr.mxu0 %v4018
      %4372 = vmatpush1.msra.mxu0 %v4017
      %4373 = vmatprep.subr.mxu0 %v4024
      %4374 = vmatpush1.msra.mxu0 %v4023
      %4375 = vmatprep.subr.mxu0 %v4030
      %4376 = vmatpush1.msra.mxu0 %v4029
      %4377 = vmatprep.subr.mxu0 %v4036
      %4378 = vmatpush1.msra.mxu0 %v4035
      %4379 = vmatprep.subr.mxu0 %v4042
      %4380 = vmatpush1.msra.mxu0 %v4041
      %4381 = vmatprep.subr.mxu0 %v4048
      %4382 = vmatpush1.msra.mxu0 %v4047
      %4383 = vmatprep.subr.mxu0 %v4054
      %4384 = vmatpush1.msra.mxu0 %v4053
      %4385 = vmatprep.subr.mxu0 %v4060
      %4386 = vmatpush1.msra.mxu0 %v4059
      %4387 = vmatprep.subr.mxu0 %v4066
      %4388 = vmatpush1.msra.mxu0 %v4065
      %4389 = vmatprep.subr.mxu0 %v4072
      %4390 = vmatpush1.msra.mxu0 %v4071
      %4391 = vmatprep.subr.mxu0 %v4078
      %4392 = vmatpush1.msra.mxu0 %v4077
      %4393 = vmatprep.subr.mxu0 %v4084
      %4394 = vmatpush1.msra.mxu0 %v4083
      %4395 = vmatprep.subr.mxu0 %v4090
      %4396 = vmatpush1.msra.mxu0 %v4089
      %4397 = vmatprep.subr.mxu0 %v4096
      %4398 = vmatpush1.msra.mxu0 %v4095
      %4399 = vmatprep.subr.mxu0 %v4102
      %4400 = vmatpush1.msra.mxu0 %v4101
      %4401 = vmatprep.subr.mxu0 %v4108
      %4402 = vmatpush1.msra.mxu0 %v4107
      %4403 = vmatprep.subr.mxu0 %v4114
      %4404 = vmatpush1.msra.mxu0 %v4113
      %4405 = vmatprep.subr.mxu0 %v4120
      %4406 = vmatpush1.msra.mxu0 %v4119
      %4407 = vmatprep.subr.mxu0 %v4126
      %4408 = vmatpush1.msra.mxu0 %v4125
      %4409 = vmatprep.mubr.f32.mxu0 %v4202
      %4410 = vmatmul.mubr.f32.gmra.mrb[0].mxu0 %v4201
      %v4411 = vpop.f32.mrb[0].mxu0
      %v4412 = vadd.f32 %v4341, %v4411
      %v4413 = vpop.f32.mrb[0].mxu0
      %v4414 = vadd.f32 %v4343, %v4413
      %4415 = vdwg.mxu0
      %4416 = vmatprep.subr.mxu0 %v3558
      %4417 = vmatpush1.msra.mxu0 %v3557
      %4418 = vmatprep.subr.mxu0 %v3564
      %4419 = vmatpush1.msra.mxu0 %v3563
      %4420 = vmatprep.subr.mxu0 %v3570
      %4421 = vmatpush1.msra.mxu0 %v3569
      %4422 = vmatprep.subr.mxu0 %v3576
      %4423 = vmatpush1.msra.mxu0 %v3575
      %4424 = vmatprep.subr.mxu0 %v3582
      %4425 = vmatpush1.msra.mxu0 %v3581
      %4426 = vmatprep.subr.mxu0 %v3588
      %4427 = vmatpush1.msra.mxu0 %v3587
      %4428 = vmatprep.subr.mxu0 %v3594
      %4429 = vmatpush1.msra.mxu0 %v3593
      %4430 = vmatprep.subr.mxu0 %v3600
      %4431 = vmatpush1.msra.mxu0 %v3599
      %4432 = vmatprep.subr.mxu0 %v3606
      %4433 = vmatpush1.msra.mxu0 %v3605
      %4434 = vmatprep.subr.mxu0 %v3612
      %4435 = vmatpush1.msra.mxu0 %v3611
      %4436 = vmatprep.subr.mxu0 %v3618
      %4437 = vmatpush1.msra.mxu0 %v3617
      %4438 = vmatprep.subr.mxu0 %v3624
      %4439 = vmatpush1.msra.mxu0 %v3623
      %4440 = vmatprep.subr.mxu0 %v3630
      %4441 = vmatpush1.msra.mxu0 %v3629
      %4442 = vmatprep.subr.mxu0 %v3636
      %4443 = vmatpush1.msra.mxu0 %v3635
      %4444 = vmatprep.subr.mxu0 %v3642
      %4445 = vmatpush1.msra.mxu0 %v3641
      %4446 = vmatprep.subr.mxu0 %v3648
      %4447 = vmatpush1.msra.mxu0 %v3647
      %4448 = vmatprep.subr.mxu0 %v3654
      %4449 = vmatpush1.msra.mxu0 %v3653
      %4450 = vmatprep.subr.mxu0 %v3660
      %4451 = vmatpush1.msra.mxu0 %v3659
      %4452 = vmatprep.subr.mxu0 %v3666
      %4453 = vmatpush1.msra.mxu0 %v3665
      %4454 = vmatprep.subr.mxu0 %v3672
      %4455 = vmatpush1.msra.mxu0 %v3671
      %4456 = vmatprep.subr.mxu0 %v3678
      %4457 = vmatpush1.msra.mxu0 %v3677
      %4458 = vmatprep.subr.mxu0 %v3684
      %4459 = vmatpush1.msra.mxu0 %v3683
      %4460 = vmatprep.subr.mxu0 %v3690
      %4461 = vmatpush1.msra.mxu0 %v3689
      %4462 = vmatprep.subr.mxu0 %v3696
      %4463 = vmatpush1.msra.mxu0 %v3695
      %4464 = vmatprep.subr.mxu0 %v3702
      %4465 = vmatpush1.msra.mxu0 %v3701
      %4466 = vmatprep.subr.mxu0 %v3708
      %4467 = vmatpush1.msra.mxu0 %v3707
      %4468 = vmatprep.subr.mxu0 %v3714
      %4469 = vmatpush1.msra.mxu0 %v3713
      %4470 = vmatprep.subr.mxu0 %v3720
      %4471 = vmatpush1.msra.mxu0 %v3719
      %4472 = vmatprep.subr.mxu0 %v3726
      %4473 = vmatpush1.msra.mxu0 %v3725
      %4474 = vmatprep.subr.mxu0 %v3732
      %4475 = vmatpush1.msra.mxu0 %v3731
      %4476 = vmatprep.subr.mxu0 %v3738
      %4477 = vmatpush1.msra.mxu0 %v3737
      %4478 = vmatprep.subr.mxu0 %v3744
      %4479 = vmatpush1.msra.mxu0 %v3743
      %4480 = vmatprep.mubr.f32.mxu0 %v4198
      %4481 = vmatmul.mubr.f32.gmra.mrb[0].mxu0 %v4197
      %v4482 = vpop.f32.mrb[0].mxu0
      %v4483 = vadd.f32 0.0, %v4482
      %v4484 = vpop.f32.mrb[0].mxu0
      %v4485 = vadd.f32 0.0, %v4484
      %4486 = vdwg.mxu0
      %4487 = vmatprep.subr.mxu0 %v3750
      %4488 = vmatpush1.msra.mxu0 %v3749
      %4489 = vmatprep.subr.mxu0 %v3756
      %4490 = vmatpush1.msra.mxu0 %v3755
      %4491 = vmatprep.subr.mxu0 %v3762
      %4492 = vmatpush1.msra.mxu0 %v3761
      %4493 = vmatprep.subr.mxu0 %v3768
      %4494 = vmatpush1.msra.mxu0 %v3767
      %4495 = vmatprep.subr.mxu0 %v3774
      %4496 = vmatpush1.msra.mxu0 %v3773
      %4497 = vmatprep.subr.mxu0 %v3780
      %4498 = vmatpush1.msra.mxu0 %v3779
      %4499 = vmatprep.subr.mxu0 %v3786
      %4500 = vmatpush1.msra.mxu0 %v3785
      %4501 = vmatprep.subr.mxu0 %v3792
      %4502 = vmatpush1.msra.mxu0 %v3791
      %4503 = vmatprep.subr.mxu0 %v3798
      %4504 = vmatpush1.msra.mxu0 %v3797
      %4505 = vmatprep.subr.mxu0 %v3804
      %4506 = vmatpush1.msra.mxu0 %v3803
      %4507 = vmatprep.subr.mxu0 %v3810
      %4508 = vmatpush1.msra.mxu0 %v3809
      %4509 = vmatprep.subr.mxu0 %v3816
      %4510 = vmatpush1.msra.mxu0 %v3815
      %4511 = vmatprep.subr.mxu0 %v3822
      %4512 = vmatpush1.msra.mxu0 %v3821
      %4513 = vmatprep.subr.mxu0 %v3828
      %4514 = vmatpush1.msra.mxu0 %v3827
      %4515 = vmatprep.subr.mxu0 %v3834
      %4516 = vmatpush1.msra.mxu0 %v3833
      %4517 = vmatprep.subr.mxu0 %v3840
      %4518 = vmatpush1.msra.mxu0 %v3839
      %4519 = vmatprep.subr.mxu0 %v3846
      %4520 = vmatpush1.msra.mxu0 %v3845
      %4521 = vmatprep.subr.mxu0 %v3852
      %4522 = vmatpush1.msra.mxu0 %v3851
      %4523 = vmatprep.subr.mxu0 %v3858
      %4524 = vmatpush1.msra.mxu0 %v3857
      %4525 = vmatprep.subr.mxu0 %v3864
      %4526 = vmatpush1.msra.mxu0 %v3863
      %4527 = vmatprep.subr.mxu0 %v3870
      %4528 = vmatpush1.msra.mxu0 %v3869
      %4529 = vmatprep.subr.mxu0 %v3876
      %4530 = vmatpush1.msra.mxu0 %v3875
      %4531 = vmatprep.subr.mxu0 %v3882
      %4532 = vmatpush1.msra.mxu0 %v3881
      %4533 = vmatprep.subr.mxu0 %v3888
      %4534 = vmatpush1.msra.mxu0 %v3887
      %4535 = vmatprep.subr.mxu0 %v3894
      %4536 = vmatpush1.msra.mxu0 %v3893
      %4537 = vmatprep.subr.mxu0 %v3900
      %4538 = vmatpush1.msra.mxu0 %v3899
      %4539 = vmatprep.subr.mxu0 %v3906
      %4540 = vmatpush1.msra.mxu0 %v3905
      %4541 = vmatprep.subr.mxu0 %v3912
      %4542 = vmatpush1.msra.mxu0 %v3911
      %4543 = vmatprep.subr.mxu0 %v3918
      %4544 = vmatpush1.msra.mxu0 %v3917
      %4545 = vmatprep.subr.mxu0 %v3924
      %4546 = vmatpush1.msra.mxu0 %v3923
      %4547 = vmatprep.subr.mxu0 %v3930
      %4548 = vmatpush1.msra.mxu0 %v3929
      %4549 = vmatprep.subr.mxu0 %v3936
      %4550 = vmatpush1.msra.mxu0 %v3935
      %4551 = vmatprep.mubr.f32.mxu0 %v4200
      %4552 = vmatmul.mubr.f32.gmra.mrb[0].mxu0 %v4199
      %v4553 = vpop.f32.mrb[0].mxu0
      %v4554 = vadd.f32 %v4483, %v4553
      %v4555 = vpop.f32.mrb[0].mxu0
      %v4556 = vadd.f32 %v4485, %v4555
      %4557 = vdwg.mxu0
      %4558 = vmatprep.subr.mxu0 %v3942
      %4559 = vmatpush1.msra.mxu0 %v3941
      %4560 = vmatprep.subr.mxu0 %v3948
      %4561 = vmatpush1.msra.mxu0 %v3947
      %4562 = vmatprep.subr.mxu0 %v3954
      %4563 = vmatpush1.msra.mxu0 %v3953
      %4564 = vmatprep.subr.mxu0 %v3960
      %4565 = vmatpush1.msra.mxu0 %v3959
      %4566 = vmatprep.subr.mxu0 %v3966
      %4567 = vmatpush1.msra.mxu0 %v3965
      %4568 = vmatprep.subr.mxu0 %v3972
      %4569 = vmatpush1.msra.mxu0 %v3971
      %4570 = vmatprep.subr.mxu0 %v3978
      %4571 = vmatpush1.msra.mxu0 %v3977
      %4572 = vmatprep.subr.mxu0 %v3984
      %4573 = vmatpush1.msra.mxu0 %v3983
      %4574 = vmatprep.subr.mxu0 %v3990
      %4575 = vmatpush1.msra.mxu0 %v3989
      %4576 = vmatprep.subr.mxu0 %v3996
      %4577 = vmatpush1.msra.mxu0 %v3995
      %4578 = vmatprep.subr.mxu0 %v4002
      %4579 = vmatpush1.msra.mxu0 %v4001
      %4580 = vmatprep.subr.mxu0 %v4008
      %4581 = vmatpush1.msra.mxu0 %v4007
      %4582 = vmatprep.subr.mxu0 %v4014
      %4583 = vmatpush1.msra.mxu0 %v4013
      %4584 = vmatprep.subr.mxu0 %v4020
      %4585 = vmatpush1.msra.mxu0 %v4019
      %4586 = vmatprep.subr.mxu0 %v4026
      %4587 = vmatpush1.msra.mxu0 %v4025
      %4588 = vmatprep.subr.mxu0 %v4032
      %4589 = vmatpush1.msra.mxu0 %v4031
      %4590 = vmatprep.subr.mxu0 %v4038
      %4591 = vmatpush1.msra.mxu0 %v4037
      %4592 = vmatprep.subr.mxu0 %v4044
      %4593 = vmatpush1.msra.mxu0 %v4043
      %4594 = vmatprep.subr.mxu0 %v4050
      %4595 = vmatpush1.msra.mxu0 %v4049
      %4596 = vmatprep.subr.mxu0 %v4056
      %4597 = vmatpush1.msra.mxu0 %v4055
      %4598 = vmatprep.subr.mxu0 %v4062
      %4599 = vmatpush1.msra.mxu0 %v4061
      %4600 = vmatprep.subr.mxu0 %v4068
      %4601 = vmatpush1.msra.mxu0 %v4067
      %4602 = vmatprep.subr.mxu0 %v4074
      %4603 = vmatpush1.msra.mxu0 %v4073
      %4604 = vmatprep.subr.mxu0 %v4080
      %4605 = vmatpush1.msra.mxu0 %v4079
      %4606 = vmatprep.subr.mxu0 %v4086
      %4607 = vmatpush1.msra.mxu0 %v4085
      %4608 = vmatprep.subr.mxu0 %v4092
      %4609 = vmatpush1.msra.mxu0 %v4091
      %4610 = vmatprep.subr.mxu0 %v4098
      %4611 = vmatpush1.msra.mxu0 %v4097
      %4612 = vmatprep.subr.mxu0 %v4104
      %4613 = vmatpush1.msra.mxu0 %v4103
      %4614 = vmatprep.subr.mxu0 %v4110
      %4615 = vmatpush1.msra.mxu0 %v4109
      %4616 = vmatprep.subr.mxu0 %v4116
      %4617 = vmatpush1.msra.mxu0 %v4115
      %4618 = vmatprep.subr.mxu0 %v4122
      %4619 = vmatpush1.msra.mxu0 %v4121
      %4620 = vmatprep.subr.mxu0 %v4128
      %4621 = vmatpush1.msra.mxu0 %v4127
      %4622 = vmatprep.mubr.f32.mxu0 %v4202
      %4623 = vmatmul.mubr.f32.gmra.mrb[0].mxu0 %v4201
      %v4624 = vpop.f32.mrb[0].mxu0
      %v4625 = vadd.f32 %v4554, %v4624
      %v4626 = vpop.f32.mrb[0].mxu0
      %v4627 = vadd.f32 %v4556, %v4626
      %4628 = vdwg.mxu0
      %4629 = vmatprep.subr.mxu0 %v3560
      %4630 = vmatpush1.msra.mxu0 %v3559
      %4631 = vmatprep.subr.mxu0 %v3566
      %4632 = vmatpush1.msra.mxu0 %v3565
      %4633 = vmatprep.subr.mxu0 %v3572
      %4634 = vmatpush1.msra.mxu0 %v3571
      %4635 = vmatprep.subr.mxu0 %v3578
      %4636 = vmatpush1.msra.mxu0 %v3577
      %4637 = vmatprep.subr.mxu0 %v3584
      %4638 = vmatpush1.msra.mxu0 %v3583
      %4639 = vmatprep.subr.mxu0 %v3590
      %4640 = vmatpush1.msra.mxu0 %v3589
      %4641 = vmatprep.subr.mxu0 %v3596
      %4642 = vmatpush1.msra.mxu0 %v3595
      %4643 = vmatprep.subr.mxu0 %v3602
      %4644 = vmatpush1.msra.mxu0 %v3601
      %4645 = vmatprep.subr.mxu0 %v3608
      %4646 = vmatpush1.msra.mxu0 %v3607
      %4647 = vmatprep.subr.mxu0 %v3614
      %4648 = vmatpush1.msra.mxu0 %v3613
      %4649 = vmatprep.subr.mxu0 %v3620
      %4650 = vmatpush1.msra.mxu0 %v3619
      %4651 = vmatprep.subr.mxu0 %v3626
      %4652 = vmatpush1.msra.mxu0 %v3625
      %4653 = vmatprep.subr.mxu0 %v3632
      %4654 = vmatpush1.msra.mxu0 %v3631
      %4655 = vmatprep.subr.mxu0 %v3638
      %4656 = vmatpush1.msra.mxu0 %v3637
      %4657 = vmatprep.subr.mxu0 %v3644
      %4658 = vmatpush1.msra.mxu0 %v3643
      %4659 = vmatprep.subr.mxu0 %v3650
      %4660 = vmatpush1.msra.mxu0 %v3649
      %4661 = vmatprep.subr.mxu0 %v3656
      %4662 = vmatpush1.msra.mxu0 %v3655
      %4663 = vmatprep.subr.mxu0 %v3662
      %4664 = vmatpush1.msra.mxu0 %v3661
      %4665 = vmatprep.subr.mxu0 %v3668
      %4666 = vmatpush1.msra.mxu0 %v3667
      %4667 = vmatprep.subr.mxu0 %v3674
      %4668 = vmatpush1.msra.mxu0 %v3673
      %4669 = vmatprep.subr.mxu0 %v3680
      %4670 = vmatpush1.msra.mxu0 %v3679
      %4671 = vmatprep.subr.mxu0 %v3686
      %4672 = vmatpush1.msra.mxu0 %v3685
      %4673 = vmatprep.subr.mxu0 %v3692
      %4674 = vmatpush1.msra.mxu0 %v3691
      %4675 = vmatprep.subr.mxu0 %v3698
      %4676 = vmatpush1.msra.mxu0 %v3697
      %4677 = vmatprep.subr.mxu0 %v3704
      %4678 = vmatpush1.msra.mxu0 %v3703
      %4679 = vmatprep.subr.mxu0 %v3710
      %4680 = vmatpush1.msra.mxu0 %v3709
      %4681 = vmatprep.subr.mxu0 %v3716
      %4682 = vmatpush1.msra.mxu0 %v3715
      %4683 = vmatprep.subr.mxu0 %v3722
      %4684 = vmatpush1.msra.mxu0 %v3721
      %4685 = vmatprep.subr.mxu0 %v3728
      %4686 = vmatpush1.msra.mxu0 %v3727
      %4687 = vmatprep.subr.mxu0 %v3734
      %4688 = vmatpush1.msra.mxu0 %v3733
      %4689 = vmatprep.subr.mxu0 %v3740
      %4690 = vmatpush1.msra.mxu0 %v3739
      %4691 = vmatprep.subr.mxu0 %v3746
      %4692 = vmatpush1.msra.mxu0 %v3745
      %4693 = vmatprep.mubr.f32.mxu0 %v4198
      %4694 = vmatmul.mubr.f32.gmra.mrb[0].mxu0 %v4197
      %v4695 = vpop.f32.mrb[0].mxu0
      %v4696 = vadd.f32 0.0, %v4695
      %v4697 = vpop.f32.mrb[0].mxu0
      %v4698 = vadd.f32 0.0, %v4697
      %4699 = vdwg.mxu0
      %4700 = vmatprep.subr.mxu0 %v3752
      %4701 = vmatpush1.msra.mxu0 %v3751
      %4702 = vmatprep.subr.mxu0 %v3758
      %4703 = vmatpush1.msra.mxu0 %v3757
      %4704 = vmatprep.subr.mxu0 %v3764
      %4705 = vmatpush1.msra.mxu0 %v3763
      %4706 = vmatprep.subr.mxu0 %v3770
      %4707 = vmatpush1.msra.mxu0 %v3769
      %4708 = vmatprep.subr.mxu0 %v3776
      %4709 = vmatpush1.msra.mxu0 %v3775
      %4710 = vmatprep.subr.mxu0 %v3782
      %4711 = vmatpush1.msra.mxu0 %v3781
      %4712 = vmatprep.subr.mxu0 %v3788
      %4713 = vmatpush1.msra.mxu0 %v3787
      %4714 = vmatprep.subr.mxu0 %v3794
      %4715 = vmatpush1.msra.mxu0 %v3793
      %4716 = vmatprep.subr.mxu0 %v3800
      %4717 = vmatpush1.msra.mxu0 %v3799
      %4718 = vmatprep.subr.mxu0 %v3806
      %4719 = vmatpush1.msra.mxu0 %v3805
      %4720 = vmatprep.subr.mxu0 %v3812
      %4721 = vmatpush1.msra.mxu0 %v3811
      %4722 = vmatprep.subr.mxu0 %v3818
      %4723 = vmatpush1.msra.mxu0 %v3817
      %4724 = vmatprep.subr.mxu0 %v3824
      %4725 = vmatpush1.msra.mxu0 %v3823
      %4726 = vmatprep.subr.mxu0 %v3830
      %4727 = vmatpush1.msra.mxu0 %v3829
      %4728 = vmatprep.subr.mxu0 %v3836
      %4729 = vmatpush1.msra.mxu0 %v3835
      %4730 = vmatprep.subr.mxu0 %v3842
      %4731 = vmatpush1.msra.mxu0 %v3841
      %4732 = vmatprep.subr.mxu0 %v3848
      %4733 = vmatpush1.msra.mxu0 %v3847
      %4734 = vmatprep.subr.mxu0 %v3854
      %4735 = vmatpush1.msra.mxu0 %v3853
      %4736 = vmatprep.subr.mxu0 %v3860
      %4737 = vmatpush1.msra.mxu0 %v3859
      %4738 = vmatprep.subr.mxu0 %v3866
      %4739 = vmatpush1.msra.mxu0 %v3865
      %4740 = vmatprep.subr.mxu0 %v3872
      %4741 = vmatpush1.msra.mxu0 %v3871
      %4742 = vmatprep.subr.mxu0 %v3878
      %4743 = vmatpush1.msra.mxu0 %v3877
      %4744 = vmatprep.subr.mxu0 %v3884
      %4745 = vmatpush1.msra.mxu0 %v3883
      %4746 = vmatprep.subr.mxu0 %v3890
      %4747 = vmatpush1.msra.mxu0 %v3889
      %4748 = vmatprep.subr.mxu0 %v3896
      %4749 = vmatpush1.msra.mxu0 %v3895
      %4750 = vmatprep.subr.mxu0 %v3902
      %4751 = vmatpush1.msra.mxu0 %v3901
      %4752 = vmatprep.subr.mxu0 %v3908
      %4753 = vmatpush1.msra.mxu0 %v3907
      %4754 = vmatprep.subr.mxu0 %v3914
      %4755 = vmatpush1.msra.mxu0 %v3913
      %4756 = vmatprep.subr.mxu0 %v3920
      %4757 = vmatpush1.msra.mxu0 %v3919
      %4758 = vmatprep.subr.mxu0 %v3926
      %4759 = vmatpush1.msra.mxu0 %v3925
      %4760 = vmatprep.subr.mxu0 %v3932
      %4761 = vmatpush1.msra.mxu0 %v3931
      %4762 = vmatprep.subr.mxu0 %v3938
      %4763 = vmatpush1.msra.mxu0 %v3937
      %4764 = vmatprep.mubr.f32.mxu0 %v4200
      %4765 = vmatmul.mubr.f32.gmra.mrb[0].mxu0 %v4199
      %v4766 = vpop.f32.mrb[0].mxu0
      %v4767 = vadd.f32 %v4696, %v4766
      %v4768 = vpop.f32.mrb[0].mxu0
      %v4769 = vadd.f32 %v4698, %v4768
      %4770 = vdwg.mxu0
      %4771 = vmatprep.subr.mxu0 %v3944
      %4772 = vmatpush1.msra.mxu0 %v3943
      %4773 = vmatprep.subr.mxu0 %v3950
      %4774 = vmatpush1.msra.mxu0 %v3949
      %4775 = vmatprep.subr.mxu0 %v3956
      %4776 = vmatpush1.msra.mxu0 %v3955
      %4777 = vmatprep.subr.mxu0 %v3962
      %4778 = vmatpush1.msra.mxu0 %v3961
      %4779 = vmatprep.subr.mxu0 %v3968
      %4780 = vmatpush1.msra.mxu0 %v3967
      %4781 = vmatprep.subr.mxu0 %v3974
      %4782 = vmatpush1.msra.mxu0 %v3973
      %4783 = vmatprep.subr.mxu0 %v3980
      %4784 = vmatpush1.msra.mxu0 %v3979
      %4785 = vmatprep.subr.mxu0 %v3986
      %4786 = vmatpush1.msra.mxu0 %v3985
      %4787 = vmatprep.subr.mxu0 %v3992
      %4788 = vmatpush1.msra.mxu0 %v3991
      %4789 = vmatprep.subr.mxu0 %v3998
      %4790 = vmatpush1.msra.mxu0 %v3997
      %4791 = vmatprep.subr.mxu0 %v4004
      %4792 = vmatpush1.msra.mxu0 %v4003
      %4793 = vmatprep.subr.mxu0 %v4010
      %4794 = vmatpush1.msra.mxu0 %v4009
      %4795 = vmatprep.subr.mxu0 %v4016
      %4796 = vmatpush1.msra.mxu0 %v4015
      %4797 = vmatprep.subr.mxu0 %v4022
      %4798 = vmatpush1.msra.mxu0 %v4021
      %4799 = vmatprep.subr.mxu0 %v4028
      %4800 = vmatpush1.msra.mxu0 %v4027
      %4801 = vmatprep.subr.mxu0 %v4034
      %4802 = vmatpush1.msra.mxu0 %v4033
      %4803 = vmatprep.subr.mxu0 %v4040
      %4804 = vmatpush1.msra.mxu0 %v4039
      %4805 = vmatprep.subr.mxu0 %v4046
      %4806 = vmatpush1.msra.mxu0 %v4045
      %4807 = vmatprep.subr.mxu0 %v4052
      %4808 = vmatpush1.msra.mxu0 %v4051
      %4809 = vmatprep.subr.mxu0 %v4058
      %4810 = vmatpush1.msra.mxu0 %v4057
      %4811 = vmatprep.subr.mxu0 %v4064
      %4812 = vmatpush1.msra.mxu0 %v4063
      %4813 = vmatprep.subr.mxu0 %v4070
      %4814 = vmatpush1.msra.mxu0 %v4069
      %4815 = vmatprep.subr.mxu0 %v4076
      %4816 = vmatpush1.msra.mxu0 %v4075
      %4817 = vmatprep.subr.mxu0 %v4082
      %4818 = vmatpush1.msra.mxu0 %v4081
      %4819 = vmatprep.subr.mxu0 %v4088
      %4820 = vmatpush1.msra.mxu0 %v4087
      %4821 = vmatprep.subr.mxu0 %v4094
      %4822 = vmatpush1.msra.mxu0 %v4093
      %4823 = vmatprep.subr.mxu0 %v4100
      %4824 = vmatpush1.msra.mxu0 %v4099
      %4825 = vmatprep.subr.mxu0 %v4106
      %4826 = vmatpush1.msra.mxu0 %v4105
      %4827 = vmatprep.subr.mxu0 %v4112
      %4828 = vmatpush1.msra.mxu0 %v4111
      %4829 = vmatprep.subr.mxu0 %v4118
      %4830 = vmatpush1.msra.mxu0 %v4117
      %4831 = vmatprep.subr.mxu0 %v4124
      %4832 = vmatpush1.msra.mxu0 %v4123
      %4833 = vmatprep.subr.mxu0 %v4130
      %4834 = vmatpush1.msra.mxu0 %v4129
      %4835 = vmatprep.mubr.f32.mxu0 %v4202
      %4836 = vmatmul.mubr.f32.gmra.mrb[0].mxu0 %v4201
      %v4837 = vpop.f32.mrb[0].mxu0
      %v4838 = vadd.f32 %v4767, %v4837
      %v4839 = vpop.f32.mrb[0].mxu0
      %v4840 = vadd.f32 %v4769, %v4839
      %4841 = vdwg.mxu0
      %v4842 = vadd.f32 %v4412, 1.0
      %v4843 = vadd.f32 %v4414, 1.0
      %v4844 = vadd.f32 %v4625, 1.0
      %v4845 = vadd.f32 %v4627, 1.0
      %v4846 = vadd.f32 %v4838, 1.0
      %v4847 = vadd.f32 %v4840, 1.0
      %v4848 = vrcp.pop %v4842
      %v4849 = vrcp.pop %v4843
      %v4850 = vrcp.pop %v4844
      %v4851 = vrcp.pop %v4845
      %v4852 = vrcp.pop %v4846
      %v4853 = vrcp.pop %v4847
      %v4854 = vmul.f32 %v4412, %v4848
      %v4855 = vmul.f32 %v4414, %v4849
      %v4856 = vmul.f32 %v4625, %v4850
      %v4857 = vmul.f32 %v4627, %v4851
      %v4858 = vmul.f32 %v4838, %v4852
      %v4859 = vmul.f32 %v4840, %v4853
      %v4860 = vmul.f32 %v4854, %v4191
      %v4861 = vmul.f32 %v4855, %v4192
      %v4862 = vmul.f32 %v4856, %v4193
      %v4863 = vmul.f32 %v4857, %v4194
      %v4864 = vmul.f32 %v4858, %v4195
      %v4865 = vmul.f32 %v4859, %v4196
      %v4866 = vadd.f32 %v4412, 1e-08
      %v4867 = vadd.f32 %v4414, 1e-08
      %v4868 = vadd.f32 %v4625, 1e-08
      %v4869 = vadd.f32 %v4627, 1e-08
      %v4870 = vadd.f32 %v4838, 1e-08
      %v4871 = vadd.f32 %v4840, 1e-08
      %v4872 = vrcp.pop %v4866
      %v4873 = vrcp.pop %v4867
      %v4874 = vrcp.pop %v4868
      %v4875 = vrcp.pop %v4869
      %v4876 = vrcp.pop %v4870
      %v4877 = vrcp.pop %v4871
      %v4878 = vmul.f32 %v4860, %v4872
      %v4879 = vmul.f32 %v4861, %v4873
      %v4880 = vmul.f32 %v4862, %v4874
      %v4881 = vmul.f32 %v4863, %v4875
      %v4882 = vmul.f32 %v4864, %v4876
      %v4883 = vmul.f32 %v4865, %v4877
      %v4884 = vmul.f32 %v3549, %v4878
      %v4885 = vmul.f32 %v3550, %v4879
      %v4886 = vmul.f32 %v3551, %v4880
      %v4887 = vmul.f32 %v3552, %v4881
      %v4888 = vmul.f32 %v3553, %v4882
      %v4889 = vmul.f32 %v3554, %v4883
      %v4896 = vrot.slane %v4878, 7
      %v4897 = vrot.slane %v4879, 7
      %v4898 = vrot.slane %v4880, 7
      %v4899 = vrot.slane %v4881, 7
      %v4900 = vrot.slane %v4882, 7
      %v4901 = vrot.slane %v4883, 7
      %v4908 = vmul.f32 %v3549, %v4896
      %v4909 = vmul.f32 %v3550, %v4897
      %v4910 = vmul.f32 %v3551, %v4898
      %v4911 = vmul.f32 %v3552, %v4899
      %v4912 = vmul.f32 %v3553, %v4900
      %v4913 = vmul.f32 %v3554, %v4901
      %v4914 = vrot.slane %v4878, 6
      %v4915 = vrot.slane %v4879, 6
      %v4916 = vrot.slane %v4880, 6
      %v4917 = vrot.slane %v4881, 6
      %v4918 = vrot.slane %v4882, 6
      %v4919 = vrot.slane %v4883, 6
      %v4926 = vmul.f32 %v3549, %v4914
      %v4927 = vmul.f32 %v3550, %v4915
      %v4928 = vmul.f32 %v3551, %v4916
      %v4929 = vmul.f32 %v3552, %v4917
      %v4930 = vmul.f32 %v3553, %v4918
      %v4931 = vmul.f32 %v3554, %v4919
      %v4932 = vrot.slane %v4878, 5
      %v4933 = vrot.slane %v4879, 5
      %v4934 = vrot.slane %v4880, 5
      %v4935 = vrot.slane %v4881, 5
      %v4936 = vrot.slane %v4882, 5
      %v4937 = vrot.slane %v4883, 5
      %v4944 = vmul.f32 %v3549, %v4932
      %v4945 = vmul.f32 %v3550, %v4933
      %v4946 = vmul.f32 %v3551, %v4934
      %v4947 = vmul.f32 %v3552, %v4935
      %v4948 = vmul.f32 %v3553, %v4936
      %v4949 = vmul.f32 %v3554, %v4937
      %v4950 = vsel %vm505, %v4884, %v4908
      %v4951 = vsel %vm505, %v4885, %v4909
      %v4952 = vsel %vm505, %v4886, %v4910
      %v4953 = vsel %vm505, %v4887, %v4911
      %v4954 = vsel %vm505, %v4888, %v4912
      %v4955 = vsel %vm505, %v4889, %v4913
      %v4956 = vsel %vm507, %v4950, %v4926
      %v4957 = vsel %vm507, %v4951, %v4927
      %v4958 = vsel %vm507, %v4952, %v4928
      %v4959 = vsel %vm507, %v4953, %v4929
      %v4960 = vsel %vm507, %v4954, %v4930
      %v4961 = vsel %vm507, %v4955, %v4931
      %v4962 = vsel %vm513, %v4956, %v4944
      %v4963 = vsel %vm513, %v4957, %v4945
      %v4964 = vsel %vm513, %v4958, %v4946
      %v4965 = vsel %vm513, %v4959, %v4947
      %v4966 = vsel %vm513, %v4960, %v4948
      %v4967 = vsel %vm513, %v4961, %v4949
      %4968 = vmatprep.subr.mxu0 %v3556
      %4969 = vmatpush1.msra.mxu0 %v3555
      %4970 = vmatprep.subr.mxu0 %v3562
      %4971 = vmatpush1.msra.mxu0 %v3561
      %4972 = vmatprep.subr.mxu0 %v3568
      %4973 = vmatpush1.msra.mxu0 %v3567
      %4974 = vmatprep.subr.mxu0 %v3574
      %4975 = vmatpush1.msra.mxu0 %v3573
      %4976 = vmatprep.subr.mxu0 %v3580
      %4977 = vmatpush1.msra.mxu0 %v3579
      %4978 = vmatprep.subr.mxu0 %v3586
      %4979 = vmatpush1.msra.mxu0 %v3585
      %4980 = vmatprep.subr.mxu0 %v3592
      %4981 = vmatpush1.msra.mxu0 %v3591
      %4982 = vmatprep.subr.mxu0 %v3598
      %4983 = vmatpush1.msra.mxu0 %v3597
      %4984 = vmatprep.subr.mxu0 %v3604
      %4985 = vmatpush1.msra.mxu0 %v3603
      %4986 = vmatprep.subr.mxu0 %v3610
      %4987 = vmatpush1.msra.mxu0 %v3609
      %4988 = vmatprep.subr.mxu0 %v3616
      %4989 = vmatpush1.msra.mxu0 %v3615
      %4990 = vmatprep.subr.mxu0 %v3622
      %4991 = vmatpush1.msra.mxu0 %v3621
      %4992 = vmatprep.subr.mxu0 %v3628
      %4993 = vmatpush1.msra.mxu0 %v3627
      %4994 = vmatprep.subr.mxu0 %v3634
      %4995 = vmatpush1.msra.mxu0 %v3633
      %4996 = vmatprep.subr.mxu0 %v3640
      %4997 = vmatpush1.msra.mxu0 %v3639
      %4998 = vmatprep.subr.mxu0 %v3646
      %4999 = vmatpush1.msra.mxu0 %v3645
      %5000 = vmatprep.subr.mxu0 %v3652
      %5001 = vmatpush1.msra.mxu0 %v3651
      %5002 = vmatprep.subr.mxu0 %v3658
      %5003 = vmatpush1.msra.mxu0 %v3657
      %5004 = vmatprep.subr.mxu0 %v3664
      %5005 = vmatpush1.msra.mxu0 %v3663
      %5006 = vmatprep.subr.mxu0 %v3670
      %5007 = vmatpush1.msra.mxu0 %v3669
      %5008 = vmatprep.subr.mxu0 %v3676
      %5009 = vmatpush1.msra.mxu0 %v3675
      %5010 = vmatprep.subr.mxu0 %v3682
      %5011 = vmatpush1.msra.mxu0 %v3681
      %5012 = vmatprep.subr.mxu0 %v3688
      %5013 = vmatpush1.msra.mxu0 %v3687
      %5014 = vmatprep.subr.mxu0 %v3694
      %5015 = vmatpush1.msra.mxu0 %v3693
      %5016 = vmatprep.subr.mxu0 %v3700
      %5017 = vmatpush1.msra.mxu0 %v3699
      %5018 = vmatprep.subr.mxu0 %v3706
      %5019 = vmatpush1.msra.mxu0 %v3705
      %5020 = vmatprep.subr.mxu0 %v3712
      %5021 = vmatpush1.msra.mxu0 %v3711
      %5022 = vmatprep.subr.mxu0 %v3718
      %5023 = vmatpush1.msra.mxu0 %v3717
      %5024 = vmatprep.subr.mxu0 %v3724
      %5025 = vmatpush1.msra.mxu0 %v3723
      %5026 = vmatprep.subr.mxu0 %v3730
      %5027 = vmatpush1.msra.mxu0 %v3729
      %5028 = vmatprep.subr.mxu0 %v3736
      %5029 = vmatpush1.msra.mxu0 %v3735
      %5030 = vmatprep.subr.mxu0 %v3742
      %5031 = vmatpush1.msra.mxu0 %v3741
      %5032 = vmatprep.mubr.f32.mxu0 %v4963
      %5033 = vmatmul.mubr.f32.gmra.mrb[0].mxu0 %v4962
      %v5034 = vpop.f32.mrb[0].mxu0
      %v5035 = vadd.f32 0.0, %v5034
      %v5036 = vpop.f32.mrb[0].mxu0
      %v5037 = vadd.f32 0.0, %v5036
      %5038 = vdwg.mxu0
      %5039 = vmatprep.subr.mxu0 %v3748
      %5040 = vmatpush1.msra.mxu0 %v3747
      %5041 = vmatprep.subr.mxu0 %v3754
      %5042 = vmatpush1.msra.mxu0 %v3753
      %5043 = vmatprep.subr.mxu0 %v3760
      %5044 = vmatpush1.msra.mxu0 %v3759
      %5045 = vmatprep.subr.mxu0 %v3766
      %5046 = vmatpush1.msra.mxu0 %v3765
      %5047 = vmatprep.subr.mxu0 %v3772
      %5048 = vmatpush1.msra.mxu0 %v3771
      %5049 = vmatprep.subr.mxu0 %v3778
      %5050 = vmatpush1.msra.mxu0 %v3777
      %5051 = vmatprep.subr.mxu0 %v3784
      %5052 = vmatpush1.msra.mxu0 %v3783
      %5053 = vmatprep.subr.mxu0 %v3790
      %5054 = vmatpush1.msra.mxu0 %v3789
      %5055 = vmatprep.subr.mxu0 %v3796
      %5056 = vmatpush1.msra.mxu0 %v3795
      %5057 = vmatprep.subr.mxu0 %v3802
      %5058 = vmatpush1.msra.mxu0 %v3801
      %5059 = vmatprep.subr.mxu0 %v3808
      %5060 = vmatpush1.msra.mxu0 %v3807
      %5061 = vmatprep.subr.mxu0 %v3814
      %5062 = vmatpush1.msra.mxu0 %v3813
      %5063 = vmatprep.subr.mxu0 %v3820
      %5064 = vmatpush1.msra.mxu0 %v3819
      %5065 = vmatprep.subr.mxu0 %v3826
      %5066 = vmatpush1.msra.mxu0 %v3825
      %5067 = vmatprep.subr.mxu0 %v3832
      %5068 = vmatpush1.msra.mxu0 %v3831
      %5069 = vmatprep.subr.mxu0 %v3838
      %5070 = vmatpush1.msra.mxu0 %v3837
      %5071 = vmatprep.subr.mxu0 %v3844
      %5072 = vmatpush1.msra.mxu0 %v3843
      %5073 = vmatprep.subr.mxu0 %v3850
      %5074 = vmatpush1.msra.mxu0 %v3849
      %5075 = vmatprep.subr.mxu0 %v3856
      %5076 = vmatpush1.msra.mxu0 %v3855
      %5077 = vmatprep.subr.mxu0 %v3862
      %5078 = vmatpush1.msra.mxu0 %v3861
      %5079 = vmatprep.subr.mxu0 %v3868
      %5080 = vmatpush1.msra.mxu0 %v3867
      %5081 = vmatprep.subr.mxu0 %v3874
      %5082 = vmatpush1.msra.mxu0 %v3873
      %5083 = vmatprep.subr.mxu0 %v3880
      %5084 = vmatpush1.msra.mxu0 %v3879
      %5085 = vmatprep.subr.mxu0 %v3886
      %5086 = vmatpush1.msra.mxu0 %v3885
      %5087 = vmatprep.subr.mxu0 %v3892
      %5088 = vmatpush1.msra.mxu0 %v3891
      %5089 = vmatprep.subr.mxu0 %v3898
      %5090 = vmatpush1.msra.mxu0 %v3897
      %5091 = vmatprep.subr.mxu0 %v3904
      %5092 = vmatpush1.msra.mxu0 %v3903
      %5093 = vmatprep.subr.mxu0 %v3910
      %5094 = vmatpush1.msra.mxu0 %v3909
      %5095 = vmatprep.subr.mxu0 %v3916
      %5096 = vmatpush1.msra.mxu0 %v3915
      %5097 = vmatprep.subr.mxu0 %v3922
      %5098 = vmatpush1.msra.mxu0 %v3921
      %5099 = vmatprep.subr.mxu0 %v3928
      %5100 = vmatpush1.msra.mxu0 %v3927
      %5101 = vmatprep.subr.mxu0 %v3934
      %5102 = vmatpush1.msra.mxu0 %v3933
      %5103 = vmatprep.mubr.f32.mxu0 %v4965
      %5104 = vmatmul.mubr.f32.gmra.mrb[0].mxu0 %v4964
      %v5105 = vpop.f32.mrb[0].mxu0
      %v5106 = vadd.f32 %v5035, %v5105
      %v5107 = vpop.f32.mrb[0].mxu0
      %v5108 = vadd.f32 %v5037, %v5107
      %5109 = vdwg.mxu0
      %5110 = vmatprep.subr.mxu0 %v3940
      %5111 = vmatpush1.msra.mxu0 %v3939
      %5112 = vmatprep.subr.mxu0 %v3946
      %5113 = vmatpush1.msra.mxu0 %v3945
      %5114 = vmatprep.subr.mxu0 %v3952
      %5115 = vmatpush1.msra.mxu0 %v3951
      %5116 = vmatprep.subr.mxu0 %v3958
      %5117 = vmatpush1.msra.mxu0 %v3957
      %5118 = vmatprep.subr.mxu0 %v3964
      %5119 = vmatpush1.msra.mxu0 %v3963
      %5120 = vmatprep.subr.mxu0 %v3970
      %5121 = vmatpush1.msra.mxu0 %v3969
      %5122 = vmatprep.subr.mxu0 %v3976
      %5123 = vmatpush1.msra.mxu0 %v3975
      %5124 = vmatprep.subr.mxu0 %v3982
      %5125 = vmatpush1.msra.mxu0 %v3981
      %5126 = vmatprep.subr.mxu0 %v3988
      %5127 = vmatpush1.msra.mxu0 %v3987
      %5128 = vmatprep.subr.mxu0 %v3994
      %5129 = vmatpush1.msra.mxu0 %v3993
      %5130 = vmatprep.subr.mxu0 %v4000
      %5131 = vmatpush1.msra.mxu0 %v3999
      %5132 = vmatprep.subr.mxu0 %v4006
      %5133 = vmatpush1.msra.mxu0 %v4005
      %5134 = vmatprep.subr.mxu0 %v4012
      %5135 = vmatpush1.msra.mxu0 %v4011
      %5136 = vmatprep.subr.mxu0 %v4018
      %5137 = vmatpush1.msra.mxu0 %v4017
      %5138 = vmatprep.subr.mxu0 %v4024
      %5139 = vmatpush1.msra.mxu0 %v4023
      %5140 = vmatprep.subr.mxu0 %v4030
      %5141 = vmatpush1.msra.mxu0 %v4029
      %5142 = vmatprep.subr.mxu0 %v4036
      %5143 = vmatpush1.msra.mxu0 %v4035
      %5144 = vmatprep.subr.mxu0 %v4042
      %5145 = vmatpush1.msra.mxu0 %v4041
      %5146 = vmatprep.subr.mxu0 %v4048
      %5147 = vmatpush1.msra.mxu0 %v4047
      %5148 = vmatprep.subr.mxu0 %v4054
      %5149 = vmatpush1.msra.mxu0 %v4053
      %5150 = vmatprep.subr.mxu0 %v4060
      %5151 = vmatpush1.msra.mxu0 %v4059
      %5152 = vmatprep.subr.mxu0 %v4066
      %5153 = vmatpush1.msra.mxu0 %v4065
      %5154 = vmatprep.subr.mxu0 %v4072
      %5155 = vmatpush1.msra.mxu0 %v4071
      %5156 = vmatprep.subr.mxu0 %v4078
      %5157 = vmatpush1.msra.mxu0 %v4077
      %5158 = vmatprep.subr.mxu0 %v4084
      %5159 = vmatpush1.msra.mxu0 %v4083
      %5160 = vmatprep.subr.mxu0 %v4090
      %5161 = vmatpush1.msra.mxu0 %v4089
      %5162 = vmatprep.subr.mxu0 %v4096
      %5163 = vmatpush1.msra.mxu0 %v4095
      %5164 = vmatprep.subr.mxu0 %v4102
      %5165 = vmatpush1.msra.mxu0 %v4101
      %5166 = vmatprep.subr.mxu0 %v4108
      %5167 = vmatpush1.msra.mxu0 %v4107
      %5168 = vmatprep.subr.mxu0 %v4114
      %5169 = vmatpush1.msra.mxu0 %v4113
      %5170 = vmatprep.subr.mxu0 %v4120
      %5171 = vmatpush1.msra.mxu0 %v4119
      %5172 = vmatprep.subr.mxu0 %v4126
      %5173 = vmatpush1.msra.mxu0 %v4125
      %5174 = vmatprep.mubr.f32.mxu0 %v4967
      %5175 = vmatmul.mubr.f32.gmra.mrb[0].mxu0 %v4966
      %v5176 = vpop.f32.mrb[0].mxu0
      %v5177 = vadd.f32 %v5106, %v5176
      %v5178 = vpop.f32.mrb[0].mxu0
      %v5179 = vadd.f32 %v5108, %v5178
      %5180 = vdwg.mxu0
      %5181 = vmatprep.subr.mxu0 %v3558
      %5182 = vmatpush1.msra.mxu0 %v3557
      %5183 = vmatprep.subr.mxu0 %v3564
      %5184 = vmatpush1.msra.mxu0 %v3563
      %5185 = vmatprep.subr.mxu0 %v3570
      %5186 = vmatpush1.msra.mxu0 %v3569
      %5187 = vmatprep.subr.mxu0 %v3576
      %5188 = vmatpush1.msra.mxu0 %v3575
      %5189 = vmatprep.subr.mxu0 %v3582
      %5190 = vmatpush1.msra.mxu0 %v3581
      %5191 = vmatprep.subr.mxu0 %v3588
      %5192 = vmatpush1.msra.mxu0 %v3587
      %5193 = vmatprep.subr.mxu0 %v3594
      %5194 = vmatpush1.msra.mxu0 %v3593
      %5195 = vmatprep.subr.mxu0 %v3600
      %5196 = vmatpush1.msra.mxu0 %v3599
      %5197 = vmatprep.subr.mxu0 %v3606
      %5198 = vmatpush1.msra.mxu0 %v3605
      %5199 = vmatprep.subr.mxu0 %v3612
      %5200 = vmatpush1.msra.mxu0 %v3611
      %5201 = vmatprep.subr.mxu0 %v3618
      %5202 = vmatpush1.msra.mxu0 %v3617
      %5203 = vmatprep.subr.mxu0 %v3624
      %5204 = vmatpush1.msra.mxu0 %v3623
      %5205 = vmatprep.subr.mxu0 %v3630
      %5206 = vmatpush1.msra.mxu0 %v3629
      %5207 = vmatprep.subr.mxu0 %v3636
      %5208 = vmatpush1.msra.mxu0 %v3635
      %5209 = vmatprep.subr.mxu0 %v3642
      %5210 = vmatpush1.msra.mxu0 %v3641
      %5211 = vmatprep.subr.mxu0 %v3648
      %5212 = vmatpush1.msra.mxu0 %v3647
      %5213 = vmatprep.subr.mxu0 %v3654
      %5214 = vmatpush1.msra.mxu0 %v3653
      %5215 = vmatprep.subr.mxu0 %v3660
      %5216 = vmatpush1.msra.mxu0 %v3659
      %5217 = vmatprep.subr.mxu0 %v3666
      %5218 = vmatpush1.msra.mxu0 %v3665
      %5219 = vmatprep.subr.mxu0 %v3672
      %5220 = vmatpush1.msra.mxu0 %v3671
      %5221 = vmatprep.subr.mxu0 %v3678
      %5222 = vmatpush1.msra.mxu0 %v3677
      %5223 = vmatprep.subr.mxu0 %v3684
      %5224 = vmatpush1.msra.mxu0 %v3683
      %5225 = vmatprep.subr.mxu0 %v3690
      %5226 = vmatpush1.msra.mxu0 %v3689
      %5227 = vmatprep.subr.mxu0 %v3696
      %5228 = vmatpush1.msra.mxu0 %v3695
      %5229 = vmatprep.subr.mxu0 %v3702
      %5230 = vmatpush1.msra.mxu0 %v3701
      %5231 = vmatprep.subr.mxu0 %v3708
      %5232 = vmatpush1.msra.mxu0 %v3707
      %5233 = vmatprep.subr.mxu0 %v3714
      %5234 = vmatpush1.msra.mxu0 %v3713
      %5235 = vmatprep.subr.mxu0 %v3720
      %5236 = vmatpush1.msra.mxu0 %v3719
      %5237 = vmatprep.subr.mxu0 %v3726
      %5238 = vmatpush1.msra.mxu0 %v3725
      %5239 = vmatprep.subr.mxu0 %v3732
      %5240 = vmatpush1.msra.mxu0 %v3731
      %5241 = vmatprep.subr.mxu0 %v3738
      %5242 = vmatpush1.msra.mxu0 %v3737
      %5243 = vmatprep.subr.mxu0 %v3744
      %5244 = vmatpush1.msra.mxu0 %v3743
      %5245 = vmatprep.mubr.f32.mxu0 %v4963
      %5246 = vmatmul.mubr.f32.gmra.mrb[0].mxu0 %v4962
      %v5247 = vpop.f32.mrb[0].mxu0
      %v5248 = vadd.f32 0.0, %v5247
      %v5249 = vpop.f32.mrb[0].mxu0
      %v5250 = vadd.f32 0.0, %v5249
      %5251 = vdwg.mxu0
      %5252 = vmatprep.subr.mxu0 %v3750
      %5253 = vmatpush1.msra.mxu0 %v3749
      %5254 = vmatprep.subr.mxu0 %v3756
      %5255 = vmatpush1.msra.mxu0 %v3755
      %5256 = vmatprep.subr.mxu0 %v3762
      %5257 = vmatpush1.msra.mxu0 %v3761
      %5258 = vmatprep.subr.mxu0 %v3768
      %5259 = vmatpush1.msra.mxu0 %v3767
      %5260 = vmatprep.subr.mxu0 %v3774
      %5261 = vmatpush1.msra.mxu0 %v3773
      %5262 = vmatprep.subr.mxu0 %v3780
      %5263 = vmatpush1.msra.mxu0 %v3779
      %5264 = vmatprep.subr.mxu0 %v3786
      %5265 = vmatpush1.msra.mxu0 %v3785
      %5266 = vmatprep.subr.mxu0 %v3792
      %5267 = vmatpush1.msra.mxu0 %v3791
      %5268 = vmatprep.subr.mxu0 %v3798
      %5269 = vmatpush1.msra.mxu0 %v3797
      %5270 = vmatprep.subr.mxu0 %v3804
      %5271 = vmatpush1.msra.mxu0 %v3803
      %5272 = vmatprep.subr.mxu0 %v3810
      %5273 = vmatpush1.msra.mxu0 %v3809
      %5274 = vmatprep.subr.mxu0 %v3816
      %5275 = vmatpush1.msra.mxu0 %v3815
      %5276 = vmatprep.subr.mxu0 %v3822
      %5277 = vmatpush1.msra.mxu0 %v3821
      %5278 = vmatprep.subr.mxu0 %v3828
      %5279 = vmatpush1.msra.mxu0 %v3827
      %5280 = vmatprep.subr.mxu0 %v3834
      %5281 = vmatpush1.msra.mxu0 %v3833
      %5282 = vmatprep.subr.mxu0 %v3840
      %5283 = vmatpush1.msra.mxu0 %v3839
      %5284 = vmatprep.subr.mxu0 %v3846
      %5285 = vmatpush1.msra.mxu0 %v3845
      %5286 = vmatprep.subr.mxu0 %v3852
      %5287 = vmatpush1.msra.mxu0 %v3851
      %5288 = vmatprep.subr.mxu0 %v3858
      %5289 = vmatpush1.msra.mxu0 %v3857
      %5290 = vmatprep.subr.mxu0 %v3864
      %5291 = vmatpush1.msra.mxu0 %v3863
      %5292 = vmatprep.subr.mxu0 %v3870
      %5293 = vmatpush1.msra.mxu0 %v3869
      %5294 = vmatprep.subr.mxu0 %v3876
      %5295 = vmatpush1.msra.mxu0 %v3875
      %5296 = vmatprep.subr.mxu0 %v3882
      %5297 = vmatpush1.msra.mxu0 %v3881
      %5298 = vmatprep.subr.mxu0 %v3888
      %5299 = vmatpush1.msra.mxu0 %v3887
      %5300 = vmatprep.subr.mxu0 %v3894
      %5301 = vmatpush1.msra.mxu0 %v3893
      %5302 = vmatprep.subr.mxu0 %v3900
      %5303 = vmatpush1.msra.mxu0 %v3899
      %5304 = vmatprep.subr.mxu0 %v3906
      %5305 = vmatpush1.msra.mxu0 %v3905
      %5306 = vmatprep.subr.mxu0 %v3912
      %5307 = vmatpush1.msra.mxu0 %v3911
      %5308 = vmatprep.subr.mxu0 %v3918
      %5309 = vmatpush1.msra.mxu0 %v3917
      %5310 = vmatprep.subr.mxu0 %v3924
      %5311 = vmatpush1.msra.mxu0 %v3923
      %5312 = vmatprep.subr.mxu0 %v3930
      %5313 = vmatpush1.msra.mxu0 %v3929
      %5314 = vmatprep.subr.mxu0 %v3936
      %5315 = vmatpush1.msra.mxu0 %v3935
      %5316 = vmatprep.mubr.f32.mxu0 %v4965
      %5317 = vmatmul.mubr.f32.gmra.mrb[0].mxu0 %v4964
      %v5318 = vpop.f32.mrb[0].mxu0
      %v5319 = vadd.f32 %v5248, %v5318
      %v5320 = vpop.f32.mrb[0].mxu0
      %v5321 = vadd.f32 %v5250, %v5320
      %5322 = vdwg.mxu0
      %5323 = vmatprep.subr.mxu0 %v3942
      %5324 = vmatpush1.msra.mxu0 %v3941
      %5325 = vmatprep.subr.mxu0 %v3948
      %5326 = vmatpush1.msra.mxu0 %v3947
      %5327 = vmatprep.subr.mxu0 %v3954
      %5328 = vmatpush1.msra.mxu0 %v3953
      %5329 = vmatprep.subr.mxu0 %v3960
      %5330 = vmatpush1.msra.mxu0 %v3959
      %5331 = vmatprep.subr.mxu0 %v3966
      %5332 = vmatpush1.msra.mxu0 %v3965
      %5333 = vmatprep.subr.mxu0 %v3972
      %5334 = vmatpush1.msra.mxu0 %v3971
      %5335 = vmatprep.subr.mxu0 %v3978
      %5336 = vmatpush1.msra.mxu0 %v3977
      %5337 = vmatprep.subr.mxu0 %v3984
      %5338 = vmatpush1.msra.mxu0 %v3983
      %5339 = vmatprep.subr.mxu0 %v3990
      %5340 = vmatpush1.msra.mxu0 %v3989
      %5341 = vmatprep.subr.mxu0 %v3996
      %5342 = vmatpush1.msra.mxu0 %v3995
      %5343 = vmatprep.subr.mxu0 %v4002
      %5344 = vmatpush1.msra.mxu0 %v4001
      %5345 = vmatprep.subr.mxu0 %v4008
      %5346 = vmatpush1.msra.mxu0 %v4007
      %5347 = vmatprep.subr.mxu0 %v4014
      %5348 = vmatpush1.msra.mxu0 %v4013
      %5349 = vmatprep.subr.mxu0 %v4020
      %5350 = vmatpush1.msra.mxu0 %v4019
      %5351 = vmatprep.subr.mxu0 %v4026
      %5352 = vmatpush1.msra.mxu0 %v4025
      %5353 = vmatprep.subr.mxu0 %v4032
      %5354 = vmatpush1.msra.mxu0 %v4031
      %5355 = vmatprep.subr.mxu0 %v4038
      %5356 = vmatpush1.msra.mxu0 %v4037
      %5357 = vmatprep.subr.mxu0 %v4044
      %5358 = vmatpush1.msra.mxu0 %v4043
      %5359 = vmatprep.subr.mxu0 %v4050
      %5360 = vmatpush1.msra.mxu0 %v4049
      %5361 = vmatprep.subr.mxu0 %v4056
      %5362 = vmatpush1.msra.mxu0 %v4055
      %5363 = vmatprep.subr.mxu0 %v4062
      %5364 = vmatpush1.msra.mxu0 %v4061
      %5365 = vmatprep.subr.mxu0 %v4068
      %5366 = vmatpush1.msra.mxu0 %v4067
      %5367 = vmatprep.subr.mxu0 %v4074
      %5368 = vmatpush1.msra.mxu0 %v4073
      %5369 = vmatprep.subr.mxu0 %v4080
      %5370 = vmatpush1.msra.mxu0 %v4079
      %5371 = vmatprep.subr.mxu0 %v4086
      %5372 = vmatpush1.msra.mxu0 %v4085
      %5373 = vmatprep.subr.mxu0 %v4092
      %5374 = vmatpush1.msra.mxu0 %v4091
      %5375 = vmatprep.subr.mxu0 %v4098
      %5376 = vmatpush1.msra.mxu0 %v4097
      %5377 = vmatprep.subr.mxu0 %v4104
      %5378 = vmatpush1.msra.mxu0 %v4103
      %5379 = vmatprep.subr.mxu0 %v4110
      %5380 = vmatpush1.msra.mxu0 %v4109
      %5381 = vmatprep.subr.mxu0 %v4116
      %5382 = vmatpush1.msra.mxu0 %v4115
      %5383 = vmatprep.subr.mxu0 %v4122
      %5384 = vmatpush1.msra.mxu0 %v4121
      %5385 = vmatprep.subr.mxu0 %v4128
      %5386 = vmatpush1.msra.mxu0 %v4127
      %5387 = vmatprep.mubr.f32.mxu0 %v4967
      %5388 = vmatmul.mubr.f32.gmra.mrb[0].mxu0 %v4966
      %v5389 = vpop.f32.mrb[0].mxu0
      %v5390 = vadd.f32 %v5319, %v5389
      %v5391 = vpop.f32.mrb[0].mxu0
      %v5392 = vadd.f32 %v5321, %v5391
      %5393 = vdwg.mxu0
      %5394 = vmatprep.subr.mxu0 %v3560
      %5395 = vmatpush1.msra.mxu0 %v3559
      %5396 = vmatprep.subr.mxu0 %v3566
      %5397 = vmatpush1.msra.mxu0 %v3565
      %5398 = vmatprep.subr.mxu0 %v3572
      %5399 = vmatpush1.msra.mxu0 %v3571
      %5400 = vmatprep.subr.mxu0 %v3578
      %5401 = vmatpush1.msra.mxu0 %v3577
      %5402 = vmatprep.subr.mxu0 %v3584
      %5403 = vmatpush1.msra.mxu0 %v3583
      %5404 = vmatprep.subr.mxu0 %v3590
      %5405 = vmatpush1.msra.mxu0 %v3589
      %5406 = vmatprep.subr.mxu0 %v3596
      %5407 = vmatpush1.msra.mxu0 %v3595
      %5408 = vmatprep.subr.mxu0 %v3602
      %5409 = vmatpush1.msra.mxu0 %v3601
      %5410 = vmatprep.subr.mxu0 %v3608
      %5411 = vmatpush1.msra.mxu0 %v3607
      %5412 = vmatprep.subr.mxu0 %v3614
      %5413 = vmatpush1.msra.mxu0 %v3613
      %5414 = vmatprep.subr.mxu0 %v3620
      %5415 = vmatpush1.msra.mxu0 %v3619
      %5416 = vmatprep.subr.mxu0 %v3626
      %5417 = vmatpush1.msra.mxu0 %v3625
      %5418 = vmatprep.subr.mxu0 %v3632
      %5419 = vmatpush1.msra.mxu0 %v3631
      %5420 = vmatprep.subr.mxu0 %v3638
      %5421 = vmatpush1.msra.mxu0 %v3637
      %5422 = vmatprep.subr.mxu0 %v3644
      %5423 = vmatpush1.msra.mxu0 %v3643
      %5424 = vmatprep.subr.mxu0 %v3650
      %5425 = vmatpush1.msra.mxu0 %v3649
      %5426 = vmatprep.subr.mxu0 %v3656
      %5427 = vmatpush1.msra.mxu0 %v3655
      %5428 = vmatprep.subr.mxu0 %v3662
      %5429 = vmatpush1.msra.mxu0 %v3661
      %5430 = vmatprep.subr.mxu0 %v3668
      %5431 = vmatpush1.msra.mxu0 %v3667
      %5432 = vmatprep.subr.mxu0 %v3674
      %5433 = vmatpush1.msra.mxu0 %v3673
      %5434 = vmatprep.subr.mxu0 %v3680
      %5435 = vmatpush1.msra.mxu0 %v3679
      %5436 = vmatprep.subr.mxu0 %v3686
      %5437 = vmatpush1.msra.mxu0 %v3685
      %5438 = vmatprep.subr.mxu0 %v3692
      %5439 = vmatpush1.msra.mxu0 %v3691
      %5440 = vmatprep.subr.mxu0 %v3698
      %5441 = vmatpush1.msra.mxu0 %v3697
      %5442 = vmatprep.subr.mxu0 %v3704
      %5443 = vmatpush1.msra.mxu0 %v3703
      %5444 = vmatprep.subr.mxu0 %v3710
      %5445 = vmatpush1.msra.mxu0 %v3709
      %5446 = vmatprep.subr.mxu0 %v3716
      %5447 = vmatpush1.msra.mxu0 %v3715
      %5448 = vmatprep.subr.mxu0 %v3722
      %5449 = vmatpush1.msra.mxu0 %v3721
      %5450 = vmatprep.subr.mxu0 %v3728
      %5451 = vmatpush1.msra.mxu0 %v3727
      %5452 = vmatprep.subr.mxu0 %v3734
      %5453 = vmatpush1.msra.mxu0 %v3733
      %5454 = vmatprep.subr.mxu0 %v3740
      %5455 = vmatpush1.msra.mxu0 %v3739
      %5456 = vmatprep.subr.mxu0 %v3746
      %5457 = vmatpush1.msra.mxu0 %v3745
      %5458 = vmatprep.mubr.f32.mxu0 %v4963
      %5459 = vmatmul.mubr.f32.gmra.mrb[0].mxu0 %v4962
      %v5460 = vpop.f32.mrb[0].mxu0
      %v5461 = vadd.f32 0.0, %v5460
      %v5462 = vpop.f32.mrb[0].mxu0
      %v5463 = vadd.f32 0.0, %v5462
      %5464 = vdwg.mxu0
      %5465 = vmatprep.subr.mxu0 %v3752
      %5466 = vmatpush1.msra.mxu0 %v3751
      %5467 = vmatprep.subr.mxu0 %v3758
      %5468 = vmatpush1.msra.mxu0 %v3757
      %5469 = vmatprep.subr.mxu0 %v3764
      %5470 = vmatpush1.msra.mxu0 %v3763
      %5471 = vmatprep.subr.mxu0 %v3770
      %5472 = vmatpush1.msra.mxu0 %v3769
      %5473 = vmatprep.subr.mxu0 %v3776
      %5474 = vmatpush1.msra.mxu0 %v3775
      %5475 = vmatprep.subr.mxu0 %v3782
      %5476 = vmatpush1.msra.mxu0 %v3781
      %5477 = vmatprep.subr.mxu0 %v3788
      %5478 = vmatpush1.msra.mxu0 %v3787
      %5479 = vmatprep.subr.mxu0 %v3794
      %5480 = vmatpush1.msra.mxu0 %v3793
      %5481 = vmatprep.subr.mxu0 %v3800
      %5482 = vmatpush1.msra.mxu0 %v3799
      %5483 = vmatprep.subr.mxu0 %v3806
      %5484 = vmatpush1.msra.mxu0 %v3805
      %5485 = vmatprep.subr.mxu0 %v3812
      %5486 = vmatpush1.msra.mxu0 %v3811
      %5487 = vmatprep.subr.mxu0 %v3818
      %5488 = vmatpush1.msra.mxu0 %v3817
      %5489 = vmatprep.subr.mxu0 %v3824
      %5490 = vmatpush1.msra.mxu0 %v3823
      %5491 = vmatprep.subr.mxu0 %v3830
      %5492 = vmatpush1.msra.mxu0 %v3829
      %5493 = vmatprep.subr.mxu0 %v3836
      %5494 = vmatpush1.msra.mxu0 %v3835
      %5495 = vmatprep.subr.mxu0 %v3842
      %5496 = vmatpush1.msra.mxu0 %v3841
      %5497 = vmatprep.subr.mxu0 %v3848
      %5498 = vmatpush1.msra.mxu0 %v3847
      %5499 = vmatprep.subr.mxu0 %v3854
      %5500 = vmatpush1.msra.mxu0 %v3853
      %5501 = vmatprep.subr.mxu0 %v3860
      %5502 = vmatpush1.msra.mxu0 %v3859
      %5503 = vmatprep.subr.mxu0 %v3866
      %5504 = vmatpush1.msra.mxu0 %v3865
      %5505 = vmatprep.subr.mxu0 %v3872
      %5506 = vmatpush1.msra.mxu0 %v3871
      %5507 = vmatprep.subr.mxu0 %v3878
      %5508 = vmatpush1.msra.mxu0 %v3877
      %5509 = vmatprep.subr.mxu0 %v3884
      %5510 = vmatpush1.msra.mxu0 %v3883
      %5511 = vmatprep.subr.mxu0 %v3890
      %5512 = vmatpush1.msra.mxu0 %v3889
      %5513 = vmatprep.subr.mxu0 %v3896
      %5514 = vmatpush1.msra.mxu0 %v3895
      %5515 = vmatprep.subr.mxu0 %v3902
      %5516 = vmatpush1.msra.mxu0 %v3901
      %5517 = vmatprep.subr.mxu0 %v3908
      %5518 = vmatpush1.msra.mxu0 %v3907
      %5519 = vmatprep.subr.mxu0 %v3914
      %5520 = vmatpush1.msra.mxu0 %v3913
      %5521 = vmatprep.subr.mxu0 %v3920
      %5522 = vmatpush1.msra.mxu0 %v3919
      %5523 = vmatprep.subr.mxu0 %v3926
      %5524 = vmatpush1.msra.mxu0 %v3925
      %5525 = vmatprep.subr.mxu0 %v3932
      %5526 = vmatpush1.msra.mxu0 %v3931
      %5527 = vmatprep.subr.mxu0 %v3938
      %5528 = vmatpush1.msra.mxu0 %v3937
      %5529 = vmatprep.mubr.f32.mxu0 %v4965
      %5530 = vmatmul.mubr.f32.gmra.mrb[0].mxu0 %v4964
      %v5531 = vpop.f32.mrb[0].mxu0
      %v5532 = vadd.f32 %v5461, %v5531
      %v5533 = vpop.f32.mrb[0].mxu0
      %v5534 = vadd.f32 %v5463, %v5533
      %5535 = vdwg.mxu0
      %5536 = vmatprep.subr.mxu0 %v3944
      %5537 = vmatpush1.msra.mxu0 %v3943
      %5538 = vmatprep.subr.mxu0 %v3950
      %5539 = vmatpush1.msra.mxu0 %v3949
      %5540 = vmatprep.subr.mxu0 %v3956
      %5541 = vmatpush1.msra.mxu0 %v3955
      %5542 = vmatprep.subr.mxu0 %v3962
      %5543 = vmatpush1.msra.mxu0 %v3961
      %5544 = vmatprep.subr.mxu0 %v3968
      %5545 = vmatpush1.msra.mxu0 %v3967
      %5546 = vmatprep.subr.mxu0 %v3974
      %5547 = vmatpush1.msra.mxu0 %v3973
      %5548 = vmatprep.subr.mxu0 %v3980
      %5549 = vmatpush1.msra.mxu0 %v3979
      %5550 = vmatprep.subr.mxu0 %v3986
      %5551 = vmatpush1.msra.mxu0 %v3985
      %5552 = vmatprep.subr.mxu0 %v3992
      %5553 = vmatpush1.msra.mxu0 %v3991
      %5554 = vmatprep.subr.mxu0 %v3998
      %5555 = vmatpush1.msra.mxu0 %v3997
      %5556 = vmatprep.subr.mxu0 %v4004
      %5557 = vmatpush1.msra.mxu0 %v4003
      %5558 = vmatprep.subr.mxu0 %v4010
      %5559 = vmatpush1.msra.mxu0 %v4009
      %5560 = vmatprep.subr.mxu0 %v4016
      %5561 = vmatpush1.msra.mxu0 %v4015
      %5562 = vmatprep.subr.mxu0 %v4022
      %5563 = vmatpush1.msra.mxu0 %v4021
      %5564 = vmatprep.subr.mxu0 %v4028
      %5565 = vmatpush1.msra.mxu0 %v4027
      %5566 = vmatprep.subr.mxu0 %v4034
      %5567 = vmatpush1.msra.mxu0 %v4033
      %5568 = vmatprep.subr.mxu0 %v4040
      %5569 = vmatpush1.msra.mxu0 %v4039
      %5570 = vmatprep.subr.mxu0 %v4046
      %5571 = vmatpush1.msra.mxu0 %v4045
      %5572 = vmatprep.subr.mxu0 %v4052
      %5573 = vmatpush1.msra.mxu0 %v4051
      %5574 = vmatprep.subr.mxu0 %v4058
      %5575 = vmatpush1.msra.mxu0 %v4057
      %5576 = vmatprep.subr.mxu0 %v4064
      %5577 = vmatpush1.msra.mxu0 %v4063
      %5578 = vmatprep.subr.mxu0 %v4070
      %5579 = vmatpush1.msra.mxu0 %v4069
      %5580 = vmatprep.subr.mxu0 %v4076
      %5581 = vmatpush1.msra.mxu0 %v4075
      %5582 = vmatprep.subr.mxu0 %v4082
      %5583 = vmatpush1.msra.mxu0 %v4081
      %5584 = vmatprep.subr.mxu0 %v4088
      %5585 = vmatpush1.msra.mxu0 %v4087
      %5586 = vmatprep.subr.mxu0 %v4094
      %5587 = vmatpush1.msra.mxu0 %v4093
      %5588 = vmatprep.subr.mxu0 %v4100
      %5589 = vmatpush1.msra.mxu0 %v4099
      %5590 = vmatprep.subr.mxu0 %v4106
      %5591 = vmatpush1.msra.mxu0 %v4105
      %5592 = vmatprep.subr.mxu0 %v4112
      %5593 = vmatpush1.msra.mxu0 %v4111
      %5594 = vmatprep.subr.mxu0 %v4118
      %5595 = vmatpush1.msra.mxu0 %v4117
      %5596 = vmatprep.subr.mxu0 %v4124
      %5597 = vmatpush1.msra.mxu0 %v4123
      %5598 = vmatprep.subr.mxu0 %v4130
      %5599 = vmatpush1.msra.mxu0 %v4129
      %5600 = vmatprep.mubr.f32.mxu0 %v4967
      %5601 = vmatmul.mubr.f32.gmra.mrb[0].mxu0 %v4966
      %v5602 = vpop.f32.mrb[0].mxu0
      %v5603 = vadd.f32 %v5532, %v5602
      %v5604 = vpop.f32.mrb[0].mxu0
      %v5605 = vadd.f32 %v5534, %v5604
      %5606 = vdwg.mxu0
      %v5607 = vadd.f32 %v5177, 0.0
      %v5608 = vadd.f32 %v5179, 0.0
      %v5609 = vadd.f32 %v5390, 0.0
      %v5610 = vadd.f32 %v5392, 0.0
      %v5611 = vadd.f32 %v5603, 0.0
      %v5612 = vadd.f32 %v5605, 0.0
      %v5619 = vrot.slane %v5607, 1
      %v5620 = vrot.slane %v5608, 1
      %v5621 = vrot.slane %v5609, 1
      %v5622 = vrot.slane %v5610, 1
      %v5623 = vrot.slane %v5611, 1
      %v5624 = vrot.slane %v5612, 1
      %v5631 = vmax.f32 %v5607, %v5619
      %v5632 = vmax.f32 %v5608, %v5620
      %v5633 = vmax.f32 %v5609, %v5621
      %v5634 = vmax.f32 %v5610, %v5622
      %v5635 = vmax.f32 %v5611, %v5623
      %v5636 = vmax.f32 %v5612, %v5624
      %v5637 = vrot.slane %v5607, 2
      %v5638 = vrot.slane %v5608, 2
      %v5639 = vrot.slane %v5609, 2
      %v5640 = vrot.slane %v5610, 2
      %v5641 = vrot.slane %v5611, 2
      %v5642 = vrot.slane %v5612, 2
      %v5649 = vmax.f32 %v5631, %v5637
      %v5650 = vmax.f32 %v5632, %v5638
      %v5651 = vmax.f32 %v5633, %v5639
      %v5652 = vmax.f32 %v5634, %v5640
      %v5653 = vmax.f32 %v5635, %v5641
      %v5654 = vmax.f32 %v5636, %v5642
      %v5655 = vrot.slane %v5607, 3
      %v5656 = vrot.slane %v5608, 3
      %v5657 = vrot.slane %v5609, 3
      %v5658 = vrot.slane %v5610, 3
      %v5659 = vrot.slane %v5611, 3
      %v5660 = vrot.slane %v5612, 3
      %v5667 = vmax.f32 %v5649, %v5655
      %v5668 = vmax.f32 %v5650, %v5656
      %v5669 = vmax.f32 %v5651, %v5657
      %v5670 = vmax.f32 %v5652, %v5658
      %v5671 = vmax.f32 %v5653, %v5659
      %v5672 = vmax.f32 %v5654, %v5660
      %v5673 = vsub.f32 %v5607, %v5667
      %v5674 = vsub.f32 %v5608, %v5668
      %v5675 = vsub.f32 %v5609, %v5669
      %v5676 = vsub.f32 %v5610, %v5670
      %v5677 = vsub.f32 %v5611, %v5671
      %v5678 = vsub.f32 %v5612, %v5672
      %v5679 = vmul.f32 %v5673, 1.442695
      %v5680 = vpow.pop %v5679
      %v5681 = vmul.f32 %v5674, 1.442695
      %v5682 = vpow.pop %v5681
      %v5683 = vmul.f32 %v5675, 1.442695
      %v5684 = vpow.pop %v5683
      %v5685 = vmul.f32 %v5676, 1.442695
      %v5686 = vpow.pop %v5685
      %v5687 = vmul.f32 %v5677, 1.442695
      %v5688 = vpow.pop %v5687
      %v5689 = vmul.f32 %v5678, 1.442695
      %v5690 = vpow.pop %v5689
      %v5697 = vrot.slane %v5667, 7
      %v5698 = vrot.slane %v5668, 7
      %v5699 = vrot.slane %v5669, 7
      %v5700 = vrot.slane %v5670, 7
      %v5701 = vrot.slane %v5671, 7
      %v5702 = vrot.slane %v5672, 7
      %v5709 = vsub.f32 %v5607, %v5697
      %v5710 = vsub.f32 %v5608, %v5698
      %v5711 = vsub.f32 %v5609, %v5699
      %v5712 = vsub.f32 %v5610, %v5700
      %v5713 = vsub.f32 %v5611, %v5701
      %v5714 = vsub.f32 %v5612, %v5702
      %v5715 = vmul.f32 %v5709, 1.442695
      %v5716 = vpow.pop %v5715
      %v5717 = vmul.f32 %v5710, 1.442695
      %v5718 = vpow.pop %v5717
      %v5719 = vmul.f32 %v5711, 1.442695
      %v5720 = vpow.pop %v5719
      %v5721 = vmul.f32 %v5712, 1.442695
      %v5722 = vpow.pop %v5721
      %v5723 = vmul.f32 %v5713, 1.442695
      %v5724 = vpow.pop %v5723
      %v5725 = vmul.f32 %v5714, 1.442695
      %v5726 = vpow.pop %v5725
      %v5727 = vrot.slane %v5667, 6
      %v5728 = vrot.slane %v5668, 6
      %v5729 = vrot.slane %v5669, 6
      %v5730 = vrot.slane %v5670, 6
      %v5731 = vrot.slane %v5671, 6
      %v5732 = vrot.slane %v5672, 6
      %v5739 = vsub.f32 %v5607, %v5727
      %v5740 = vsub.f32 %v5608, %v5728
      %v5741 = vsub.f32 %v5609, %v5729
      %v5742 = vsub.f32 %v5610, %v5730
      %v5743 = vsub.f32 %v5611, %v5731
      %v5744 = vsub.f32 %v5612, %v5732
      %v5745 = vmul.f32 %v5739, 1.442695
      %v5746 = vpow.pop %v5745
      %v5747 = vmul.f32 %v5740, 1.442695
      %v5748 = vpow.pop %v5747
      %v5749 = vmul.f32 %v5741, 1.442695
      %v5750 = vpow.pop %v5749
      %v5751 = vmul.f32 %v5742, 1.442695
      %v5752 = vpow.pop %v5751
      %v5753 = vmul.f32 %v5743, 1.442695
      %v5754 = vpow.pop %v5753
      %v5755 = vmul.f32 %v5744, 1.442695
      %v5756 = vpow.pop %v5755
      %v5757 = vrot.slane %v5667, 5
      %v5758 = vrot.slane %v5668, 5
      %v5759 = vrot.slane %v5669, 5
      %v5760 = vrot.slane %v5670, 5
      %v5761 = vrot.slane %v5671, 5
      %v5762 = vrot.slane %v5672, 5
      %v5769 = vsub.f32 %v5607, %v5757
      %v5770 = vsub.f32 %v5608, %v5758
      %v5771 = vsub.f32 %v5609, %v5759
      %v5772 = vsub.f32 %v5610, %v5760
      %v5773 = vsub.f32 %v5611, %v5761
      %v5774 = vsub.f32 %v5612, %v5762
      %v5775 = vmul.f32 %v5769, 1.442695
      %v5776 = vpow.pop %v5775
      %v5777 = vmul.f32 %v5770, 1.442695
      %v5778 = vpow.pop %v5777
      %v5779 = vmul.f32 %v5771, 1.442695
      %v5780 = vpow.pop %v5779
      %v5781 = vmul.f32 %v5772, 1.442695
      %v5782 = vpow.pop %v5781
      %v5783 = vmul.f32 %v5773, 1.442695
      %v5784 = vpow.pop %v5783
      %v5785 = vmul.f32 %v5774, 1.442695
      %v5786 = vpow.pop %v5785
      %v5793 = vrot.slane %v5716, 1
      %v5794 = vrot.slane %v5718, 1
      %v5795 = vrot.slane %v5720, 1
      %v5796 = vrot.slane %v5722, 1
      %v5797 = vrot.slane %v5724, 1
      %v5798 = vrot.slane %v5726, 1
      %v5805 = vadd.f32 %v5680, %v5793
      %v5806 = vadd.f32 %v5682, %v5794
      %v5807 = vadd.f32 %v5684, %v5795
      %v5808 = vadd.f32 %v5686, %v5796
      %v5809 = vadd.f32 %v5688, %v5797
      %v5810 = vadd.f32 %v5690, %v5798
      %v5817 = vrot.slane %v5746, 2
      %v5818 = vrot.slane %v5748, 2
      %v5819 = vrot.slane %v5750, 2
      %v5820 = vrot.slane %v5752, 2
      %v5821 = vrot.slane %v5754, 2
      %v5822 = vrot.slane %v5756, 2
      %v5829 = vadd.f32 %v5805, %v5817
      %v5830 = vadd.f32 %v5806, %v5818
      %v5831 = vadd.f32 %v5807, %v5819
      %v5832 = vadd.f32 %v5808, %v5820
      %v5833 = vadd.f32 %v5809, %v5821
      %v5834 = vadd.f32 %v5810, %v5822
      %v5841 = vrot.slane %v5776, 3
      %v5842 = vrot.slane %v5778, 3
      %v5843 = vrot.slane %v5780, 3
      %v5844 = vrot.slane %v5782, 3
      %v5845 = vrot.slane %v5784, 3
      %v5846 = vrot.slane %v5786, 3
      %v5853 = vadd.f32 %v5829, %v5841
      %v5854 = vadd.f32 %v5830, %v5842
      %v5855 = vadd.f32 %v5831, %v5843
      %v5856 = vadd.f32 %v5832, %v5844
      %v5857 = vadd.f32 %v5833, %v5845
      %v5858 = vadd.f32 %v5834, %v5846
      %v5859 = vrcp.pop %v5853
      %v5860 = vrcp.pop %v5854
      %v5861 = vrcp.pop %v5855
      %v5862 = vrcp.pop %v5856
      %v5863 = vrcp.pop %v5857
      %v5864 = vrcp.pop %v5858
      %v5865 = vmul.f32 %v5680, %v5859
      %v5866 = vmul.f32 %v5682, %v5860
      %v5867 = vmul.f32 %v5684, %v5861
      %v5868 = vmul.f32 %v5686, %v5862
      %v5869 = vmul.f32 %v5688, %v5863
      %v5870 = vmul.f32 %v5690, %v5864
      %v5871 = vmul.f32 %v5865, %v3549
      %v5872 = vmul.f32 %v5866, %v3550
      %v5873 = vmul.f32 %v5867, %v3551
      %v5874 = vmul.f32 %v5868, %v3552
      %v5875 = vmul.f32 %v5869, %v3553
      %v5876 = vmul.f32 %v5870, %v3554
      %v5883 = vrot.slane %v5859, 7
      %v5884 = vrot.slane %v5860, 7
      %v5885 = vrot.slane %v5861, 7
      %v5886 = vrot.slane %v5862, 7
      %v5887 = vrot.slane %v5863, 7
      %v5888 = vrot.slane %v5864, 7
      %v5895 = vmul.f32 %v5716, %v5883
      %v5896 = vmul.f32 %v5718, %v5884
      %v5897 = vmul.f32 %v5720, %v5885
      %v5898 = vmul.f32 %v5722, %v5886
      %v5899 = vmul.f32 %v5724, %v5887
      %v5900 = vmul.f32 %v5726, %v5888
      %v5901 = vmul.f32 %v5895, %v3549
      %v5902 = vmul.f32 %v5896, %v3550
      %v5903 = vmul.f32 %v5897, %v3551
      %v5904 = vmul.f32 %v5898, %v3552
      %v5905 = vmul.f32 %v5899, %v3553
      %v5906 = vmul.f32 %v5900, %v3554
      %v5913 = vrot.slane %v5901, 1
      %v5914 = vrot.slane %v5902, 1
      %v5915 = vrot.slane %v5903, 1
      %v5916 = vrot.slane %v5904, 1
      %v5917 = vrot.slane %v5905, 1
      %v5918 = vrot.slane %v5906, 1
      %v5925 = vadd.f32 %v5871, %v5913
      %v5926 = vadd.f32 %v5872, %v5914
      %v5927 = vadd.f32 %v5873, %v5915
      %v5928 = vadd.f32 %v5874, %v5916
      %v5929 = vadd.f32 %v5875, %v5917
      %v5930 = vadd.f32 %v5876, %v5918
      %v5931 = vrot.slane %v5859, 6
      %v5932 = vrot.slane %v5860, 6
      %v5933 = vrot.slane %v5861, 6
      %v5934 = vrot.slane %v5862, 6
      %v5935 = vrot.slane %v5863, 6
      %v5936 = vrot.slane %v5864, 6
      %v5943 = vmul.f32 %v5746, %v5931
      %v5944 = vmul.f32 %v5748, %v5932
      %v5945 = vmul.f32 %v5750, %v5933
      %v5946 = vmul.f32 %v5752, %v5934
      %v5947 = vmul.f32 %v5754, %v5935
      %v5948 = vmul.f32 %v5756, %v5936
      %v5949 = vmul.f32 %v5943, %v3549
      %v5950 = vmul.f32 %v5944, %v3550
      %v5951 = vmul.f32 %v5945, %v3551
      %v5952 = vmul.f32 %v5946, %v3552
      %v5953 = vmul.f32 %v5947, %v3553
      %v5954 = vmul.f32 %v5948, %v3554
      %v5961 = vrot.slane %v5949, 2
      %v5962 = vrot.slane %v5950, 2
      %v5963 = vrot.slane %v5951, 2
      %v5964 = vrot.slane %v5952, 2
      %v5965 = vrot.slane %v5953, 2
      %v5966 = vrot.slane %v5954, 2
      %v5973 = vadd.f32 %v5925, %v5961
      %v5974 = vadd.f32 %v5926, %v5962
      %v5975 = vadd.f32 %v5927, %v5963
      %v5976 = vadd.f32 %v5928, %v5964
      %v5977 = vadd.f32 %v5929, %v5965
      %v5978 = vadd.f32 %v5930, %v5966
      %v5979 = vrot.slane %v5859, 5
      %v5980 = vrot.slane %v5860, 5
      %v5981 = vrot.slane %v5861, 5
      %v5982 = vrot.slane %v5862, 5
      %v5983 = vrot.slane %v5863, 5
      %v5984 = vrot.slane %v5864, 5
      %v5991 = vmul.f32 %v5776, %v5979
      %v5992 = vmul.f32 %v5778, %v5980
      %v5993 = vmul.f32 %v5780, %v5981
      %v5994 = vmul.f32 %v5782, %v5982
      %v5995 = vmul.f32 %v5784, %v5983
      %v5996 = vmul.f32 %v5786, %v5984
      %v5997 = vmul.f32 %v5991, %v3549
      %v5998 = vmul.f32 %v5992, %v3550
      %v5999 = vmul.f32 %v5993, %v3551
      %v6000 = vmul.f32 %v5994, %v3552
      %v6001 = vmul.f32 %v5995, %v3553
      %v6002 = vmul.f32 %v5996, %v3554
      %v6009 = vrot.slane %v5997, 3
      %v6010 = vrot.slane %v5998, 3
      %v6011 = vrot.slane %v5999, 3
      %v6012 = vrot.slane %v6000, 3
      %v6013 = vrot.slane %v6001, 3
      %v6014 = vrot.slane %v6002, 3
      %v6021 = vadd.f32 %v5973, %v6009
      %v6022 = vadd.f32 %v5974, %v6010
      %v6023 = vadd.f32 %v5975, %v6011
      %v6024 = vadd.f32 %v5976, %v6012
      %v6025 = vadd.f32 %v5977, %v6013
      %v6026 = vadd.f32 %v5978, %v6014
      %v6027 = vmul.f32 %v6021, %v6021
      %v6028 = vmul.f32 %v6022, %v6022
      %v6029 = vmul.f32 %v6023, %v6023
      %v6030 = vmul.f32 %v6024, %v6024
      %v6031 = vmul.f32 %v6025, %v6025
      %v6032 = vmul.f32 %v6026, %v6026
      %6033 = vmatprep.subr.mxu0 %v3556
      %6034 = vmatpush1.msra.mxu0 %v3555
      %6035 = vmatprep.subr.mxu0 %v3562
      %6036 = vmatpush1.msra.mxu0 %v3561
      %6037 = vmatprep.subr.mxu0 %v3568
      %6038 = vmatpush1.msra.mxu0 %v3567
      %6039 = vmatprep.subr.mxu0 %v3574
      %6040 = vmatpush1.msra.mxu0 %v3573
      %6041 = vmatprep.subr.mxu0 %v3580
      %6042 = vmatpush1.msra.mxu0 %v3579
      %6043 = vmatprep.subr.mxu0 %v3586
      %6044 = vmatpush1.msra.mxu0 %v3585
      %6045 = vmatprep.subr.mxu0 %v3592
      %6046 = vmatpush1.msra.mxu0 %v3591
      %6047 = vmatprep.subr.mxu0 %v3598
      %6048 = vmatpush1.msra.mxu0 %v3597
      %6049 = vmatprep.subr.mxu0 %v3604
      %6050 = vmatpush1.msra.mxu0 %v3603
      %6051 = vmatprep.subr.mxu0 %v3610
      %6052 = vmatpush1.msra.mxu0 %v3609
      %6053 = vmatprep.subr.mxu0 %v3616
      %6054 = vmatpush1.msra.mxu0 %v3615
      %6055 = vmatprep.subr.mxu0 %v3622
      %6056 = vmatpush1.msra.mxu0 %v3621
      %6057 = vmatprep.subr.mxu0 %v3628
      %6058 = vmatpush1.msra.mxu0 %v3627
      %6059 = vmatprep.subr.mxu0 %v3634
      %6060 = vmatpush1.msra.mxu0 %v3633
      %6061 = vmatprep.subr.mxu0 %v3640
      %6062 = vmatpush1.msra.mxu0 %v3639
      %6063 = vmatprep.subr.mxu0 %v3646
      %6064 = vmatpush1.msra.mxu0 %v3645
      %6065 = vmatprep.subr.mxu0 %v3652
      %6066 = vmatpush1.msra.mxu0 %v3651
      %6067 = vmatprep.subr.mxu0 %v3658
      %6068 = vmatpush1.msra.mxu0 %v3657
      %6069 = vmatprep.subr.mxu0 %v3664
      %6070 = vmatpush1.msra.mxu0 %v3663
      %6071 = vmatprep.subr.mxu0 %v3670
      %6072 = vmatpush1.msra.mxu0 %v3669
      %6073 = vmatprep.subr.mxu0 %v3676
      %6074 = vmatpush1.msra.mxu0 %v3675
      %6075 = vmatprep.subr.mxu0 %v3682
      %6076 = vmatpush1.msra.mxu0 %v3681
      %6077 = vmatprep.subr.mxu0 %v3688
      %6078 = vmatpush1.msra.mxu0 %v3687
      %6079 = vmatprep.subr.mxu0 %v3694
      %6080 = vmatpush1.msra.mxu0 %v3693
      %6081 = vmatprep.subr.mxu0 %v3700
      %6082 = vmatpush1.msra.mxu0 %v3699
      %6083 = vmatprep.subr.mxu0 %v3706
      %6084 = vmatpush1.msra.mxu0 %v3705
      %6085 = vmatprep.subr.mxu0 %v3712
      %6086 = vmatpush1.msra.mxu0 %v3711
      %6087 = vmatprep.subr.mxu0 %v3718
      %6088 = vmatpush1.msra.mxu0 %v3717
      %6089 = vmatprep.subr.mxu0 %v3724
      %6090 = vmatpush1.msra.mxu0 %v3723
      %6091 = vmatprep.subr.mxu0 %v3730
      %6092 = vmatpush1.msra.mxu0 %v3729
      %6093 = vmatprep.subr.mxu0 %v3736
      %6094 = vmatpush1.msra.mxu0 %v3735
      %6095 = vmatprep.subr.mxu0 %v3742
      %6096 = vmatpush1.msra.mxu0 %v3741
      %6097 = vmatprep.mubr.f32.mxu0 %v6028
      %6098 = vmatmul.mubr.f32.gmra.mrb[0].mxu0 %v6027
      %v6099 = vpop.f32.mrb[0].mxu0
      %v6100 = vadd.f32 0.0, %v6099
      %v6101 = vpop.f32.mrb[0].mxu0
      %v6102 = vadd.f32 0.0, %v6101
      %6103 = vdwg.mxu0
      %6104 = vmatprep.subr.mxu0 %v3748
      %6105 = vmatpush1.msra.mxu0 %v3747
      %6106 = vmatprep.subr.mxu0 %v3754
      %6107 = vmatpush1.msra.mxu0 %v3753
      %6108 = vmatprep.subr.mxu0 %v3760
      %6109 = vmatpush1.msra.mxu0 %v3759
      %6110 = vmatprep.subr.mxu0 %v3766
      %6111 = vmatpush1.msra.mxu0 %v3765
      %6112 = vmatprep.subr.mxu0 %v3772
      %6113 = vmatpush1.msra.mxu0 %v3771
      %6114 = vmatprep.subr.mxu0 %v3778
      %6115 = vmatpush1.msra.mxu0 %v3777
      %6116 = vmatprep.subr.mxu0 %v3784
      %6117 = vmatpush1.msra.mxu0 %v3783
      %6118 = vmatprep.subr.mxu0 %v3790
      %6119 = vmatpush1.msra.mxu0 %v3789
      %6120 = vmatprep.subr.mxu0 %v3796
      %6121 = vmatpush1.msra.mxu0 %v3795
      %6122 = vmatprep.subr.mxu0 %v3802
      %6123 = vmatpush1.msra.mxu0 %v3801
      %6124 = vmatprep.subr.mxu0 %v3808
      %6125 = vmatpush1.msra.mxu0 %v3807
      %6126 = vmatprep.subr.mxu0 %v3814
      %6127 = vmatpush1.msra.mxu0 %v3813
      %6128 = vmatprep.subr.mxu0 %v3820
      %6129 = vmatpush1.msra.mxu0 %v3819
      %6130 = vmatprep.subr.mxu0 %v3826
      %6131 = vmatpush1.msra.mxu0 %v3825
      %6132 = vmatprep.subr.mxu0 %v3832
      %6133 = vmatpush1.msra.mxu0 %v3831
      %6134 = vmatprep.subr.mxu0 %v3838
      %6135 = vmatpush1.msra.mxu0 %v3837
      %6136 = vmatprep.subr.mxu0 %v3844
      %6137 = vmatpush1.msra.mxu0 %v3843
      %6138 = vmatprep.subr.mxu0 %v3850
      %6139 = vmatpush1.msra.mxu0 %v3849
      %6140 = vmatprep.subr.mxu0 %v3856
      %6141 = vmatpush1.msra.mxu0 %v3855
      %6142 = vmatprep.subr.mxu0 %v3862
      %6143 = vmatpush1.msra.mxu0 %v3861
      %6144 = vmatprep.subr.mxu0 %v3868
      %6145 = vmatpush1.msra.mxu0 %v3867
      %6146 = vmatprep.subr.mxu0 %v3874
      %6147 = vmatpush1.msra.mxu0 %v3873
      %6148 = vmatprep.subr.mxu0 %v3880
      %6149 = vmatpush1.msra.mxu0 %v3879
      %6150 = vmatprep.subr.mxu0 %v3886
      %6151 = vmatpush1.msra.mxu0 %v3885
      %6152 = vmatprep.subr.mxu0 %v3892
      %6153 = vmatpush1.msra.mxu0 %v3891
      %6154 = vmatprep.subr.mxu0 %v3898
      %6155 = vmatpush1.msra.mxu0 %v3897
      %6156 = vmatprep.subr.mxu0 %v3904
      %6157 = vmatpush1.msra.mxu0 %v3903
      %6158 = vmatprep.subr.mxu0 %v3910
      %6159 = vmatpush1.msra.mxu0 %v3909
      %6160 = vmatprep.subr.mxu0 %v3916
      %6161 = vmatpush1.msra.mxu0 %v3915
      %6162 = vmatprep.subr.mxu0 %v3922
      %6163 = vmatpush1.msra.mxu0 %v3921
      %6164 = vmatprep.subr.mxu0 %v3928
      %6165 = vmatpush1.msra.mxu0 %v3927
      %6166 = vmatprep.subr.mxu0 %v3934
      %6167 = vmatpush1.msra.mxu0 %v3933
      %6168 = vmatprep.mubr.f32.mxu0 %v6030
      %6169 = vmatmul.mubr.f32.gmra.mrb[0].mxu0 %v6029
      %v6170 = vpop.f32.mrb[0].mxu0
      %v6171 = vadd.f32 %v6100, %v6170
      %v6172 = vpop.f32.mrb[0].mxu0
      %v6173 = vadd.f32 %v6102, %v6172
      %6174 = vdwg.mxu0
      %6175 = vmatprep.subr.mxu0 %v3940
      %6176 = vmatpush1.msra.mxu0 %v3939
      %6177 = vmatprep.subr.mxu0 %v3946
      %6178 = vmatpush1.msra.mxu0 %v3945
      %6179 = vmatprep.subr.mxu0 %v3952
      %6180 = vmatpush1.msra.mxu0 %v3951
      %6181 = vmatprep.subr.mxu0 %v3958
      %6182 = vmatpush1.msra.mxu0 %v3957
      %6183 = vmatprep.subr.mxu0 %v3964
      %6184 = vmatpush1.msra.mxu0 %v3963
      %6185 = vmatprep.subr.mxu0 %v3970
      %6186 = vmatpush1.msra.mxu0 %v3969
      %6187 = vmatprep.subr.mxu0 %v3976
      %6188 = vmatpush1.msra.mxu0 %v3975
      %6189 = vmatprep.subr.mxu0 %v3982
      %6190 = vmatpush1.msra.mxu0 %v3981
      %6191 = vmatprep.subr.mxu0 %v3988
      %6192 = vmatpush1.msra.mxu0 %v3987
      %6193 = vmatprep.subr.mxu0 %v3994
      %6194 = vmatpush1.msra.mxu0 %v3993
      %6195 = vmatprep.subr.mxu0 %v4000
      %6196 = vmatpush1.msra.mxu0 %v3999
      %6197 = vmatprep.subr.mxu0 %v4006
      %6198 = vmatpush1.msra.mxu0 %v4005
      %6199 = vmatprep.subr.mxu0 %v4012
      %6200 = vmatpush1.msra.mxu0 %v4011
      %6201 = vmatprep.subr.mxu0 %v4018
      %6202 = vmatpush1.msra.mxu0 %v4017
      %6203 = vmatprep.subr.mxu0 %v4024
      %6204 = vmatpush1.msra.mxu0 %v4023
      %6205 = vmatprep.subr.mxu0 %v4030
      %6206 = vmatpush1.msra.mxu0 %v4029
      %6207 = vmatprep.subr.mxu0 %v4036
      %6208 = vmatpush1.msra.mxu0 %v4035
      %6209 = vmatprep.subr.mxu0 %v4042
      %6210 = vmatpush1.msra.mxu0 %v4041
      %6211 = vmatprep.subr.mxu0 %v4048
      %6212 = vmatpush1.msra.mxu0 %v4047
      %6213 = vmatprep.subr.mxu0 %v4054
      %6214 = vmatpush1.msra.mxu0 %v4053
      %6215 = vmatprep.subr.mxu0 %v4060
      %6216 = vmatpush1.msra.mxu0 %v4059
      %6217 = vmatprep.subr.mxu0 %v4066
      %6218 = vmatpush1.msra.mxu0 %v4065
      %6219 = vmatprep.subr.mxu0 %v4072
      %6220 = vmatpush1.msra.mxu0 %v4071
      %6221 = vmatprep.subr.mxu0 %v4078
      %6222 = vmatpush1.msra.mxu0 %v4077
      %6223 = vmatprep.subr.mxu0 %v4084
      %6224 = vmatpush1.msra.mxu0 %v4083
      %6225 = vmatprep.subr.mxu0 %v4090
      %6226 = vmatpush1.msra.mxu0 %v4089
      %6227 = vmatprep.subr.mxu0 %v4096
      %6228 = vmatpush1.msra.mxu0 %v4095
      %6229 = vmatprep.subr.mxu0 %v4102
      %6230 = vmatpush1.msra.mxu0 %v4101
      %6231 = vmatprep.subr.mxu0 %v4108
      %6232 = vmatpush1.msra.mxu0 %v4107
      %6233 = vmatprep.subr.mxu0 %v4114
      %6234 = vmatpush1.msra.mxu0 %v4113
      %6235 = vmatprep.subr.mxu0 %v4120
      %6236 = vmatpush1.msra.mxu0 %v4119
      %6237 = vmatprep.subr.mxu0 %v4126
      %6238 = vmatpush1.msra.mxu0 %v4125
      %6239 = vmatprep.mubr.f32.mxu0 %v6032
      %6240 = vmatmul.mubr.f32.gmra.mrb[0].mxu0 %v6031
      %v6241 = vpop.f32.mrb[0].mxu0
      %v6242 = vadd.f32 %v6171, %v6241
      %v6243 = vpop.f32.mrb[0].mxu0
      %v6244 = vadd.f32 %v6173, %v6243
      %6245 = vdwg.mxu0
      %6246 = vmatprep.subr.mxu0 %v3558
      %6247 = vmatpush1.msra.mxu0 %v3557
      %6248 = vmatprep.subr.mxu0 %v3564
      %6249 = vmatpush1.msra.mxu0 %v3563
      %6250 = vmatprep.subr.mxu0 %v3570
      %6251 = vmatpush1.msra.mxu0 %v3569
      %6252 = vmatprep.subr.mxu0 %v3576
      %6253 = vmatpush1.msra.mxu0 %v3575
      %6254 = vmatprep.subr.mxu0 %v3582
      %6255 = vmatpush1.msra.mxu0 %v3581
      %6256 = vmatprep.subr.mxu0 %v3588
      %6257 = vmatpush1.msra.mxu0 %v3587
      %6258 = vmatprep.subr.mxu0 %v3594
      %6259 = vmatpush1.msra.mxu0 %v3593
      %6260 = vmatprep.subr.mxu0 %v3600
      %6261 = vmatpush1.msra.mxu0 %v3599
      %6262 = vmatprep.subr.mxu0 %v3606
      %6263 = vmatpush1.msra.mxu0 %v3605
      %6264 = vmatprep.subr.mxu0 %v3612
      %6265 = vmatpush1.msra.mxu0 %v3611
      %6266 = vmatprep.subr.mxu0 %v3618
      %6267 = vmatpush1.msra.mxu0 %v3617
      %6268 = vmatprep.subr.mxu0 %v3624
      %6269 = vmatpush1.msra.mxu0 %v3623
      %6270 = vmatprep.subr.mxu0 %v3630
      %6271 = vmatpush1.msra.mxu0 %v3629
      %6272 = vmatprep.subr.mxu0 %v3636
      %6273 = vmatpush1.msra.mxu0 %v3635
      %6274 = vmatprep.subr.mxu0 %v3642
      %6275 = vmatpush1.msra.mxu0 %v3641
      %6276 = vmatprep.subr.mxu0 %v3648
      %6277 = vmatpush1.msra.mxu0 %v3647
      %6278 = vmatprep.subr.mxu0 %v3654
      %6279 = vmatpush1.msra.mxu0 %v3653
      %6280 = vmatprep.subr.mxu0 %v3660
      %6281 = vmatpush1.msra.mxu0 %v3659
      %6282 = vmatprep.subr.mxu0 %v3666
      %6283 = vmatpush1.msra.mxu0 %v3665
      %6284 = vmatprep.subr.mxu0 %v3672
      %6285 = vmatpush1.msra.mxu0 %v3671
      %6286 = vmatprep.subr.mxu0 %v3678
      %6287 = vmatpush1.msra.mxu0 %v3677
      %6288 = vmatprep.subr.mxu0 %v3684
      %6289 = vmatpush1.msra.mxu0 %v3683
      %6290 = vmatprep.subr.mxu0 %v3690
      %6291 = vmatpush1.msra.mxu0 %v3689
      %6292 = vmatprep.subr.mxu0 %v3696
      %6293 = vmatpush1.msra.mxu0 %v3695
      %6294 = vmatprep.subr.mxu0 %v3702
      %6295 = vmatpush1.msra.mxu0 %v3701
      %6296 = vmatprep.subr.mxu0 %v3708
      %6297 = vmatpush1.msra.mxu0 %v3707
      %6298 = vmatprep.subr.mxu0 %v3714
      %6299 = vmatpush1.msra.mxu0 %v3713
      %6300 = vmatprep.subr.mxu0 %v3720
      %6301 = vmatpush1.msra.mxu0 %v3719
      %6302 = vmatprep.subr.mxu0 %v3726
      %6303 = vmatpush1.msra.mxu0 %v3725
      %6304 = vmatprep.subr.mxu0 %v3732
      %6305 = vmatpush1.msra.mxu0 %v3731
      %6306 = vmatprep.subr.mxu0 %v3738
      %6307 = vmatpush1.msra.mxu0 %v3737
      %6308 = vmatprep.subr.mxu0 %v3744
      %6309 = vmatpush1.msra.mxu0 %v3743
      %6310 = vmatprep.mubr.f32.mxu0 %v6028
      %6311 = vmatmul.mubr.f32.gmra.mrb[0].mxu0 %v6027
      %v6312 = vpop.f32.mrb[0].mxu0
      %v6313 = vadd.f32 0.0, %v6312
      %v6314 = vpop.f32.mrb[0].mxu0
      %v6315 = vadd.f32 0.0, %v6314
      %6316 = vdwg.mxu0
      %6317 = vmatprep.subr.mxu0 %v3750
      %6318 = vmatpush1.msra.mxu0 %v3749
      %6319 = vmatprep.subr.mxu0 %v3756
      %6320 = vmatpush1.msra.mxu0 %v3755
      %6321 = vmatprep.subr.mxu0 %v3762
      %6322 = vmatpush1.msra.mxu0 %v3761
      %6323 = vmatprep.subr.mxu0 %v3768
      %6324 = vmatpush1.msra.mxu0 %v3767
      %6325 = vmatprep.subr.mxu0 %v3774
      %6326 = vmatpush1.msra.mxu0 %v3773
      %6327 = vmatprep.subr.mxu0 %v3780
      %6328 = vmatpush1.msra.mxu0 %v3779
      %6329 = vmatprep.subr.mxu0 %v3786
      %6330 = vmatpush1.msra.mxu0 %v3785
      %6331 = vmatprep.subr.mxu0 %v3792
      %6332 = vmatpush1.msra.mxu0 %v3791
      %6333 = vmatprep.subr.mxu0 %v3798
      %6334 = vmatpush1.msra.mxu0 %v3797
      %6335 = vmatprep.subr.mxu0 %v3804
      %6336 = vmatpush1.msra.mxu0 %v3803
      %6337 = vmatprep.subr.mxu0 %v3810
      %6338 = vmatpush1.msra.mxu0 %v3809
      %6339 = vmatprep.subr.mxu0 %v3816
      %6340 = vmatpush1.msra.mxu0 %v3815
      %6341 = vmatprep.subr.mxu0 %v3822
      %6342 = vmatpush1.msra.mxu0 %v3821
      %6343 = vmatprep.subr.mxu0 %v3828
      %6344 = vmatpush1.msra.mxu0 %v3827
      %6345 = vmatprep.subr.mxu0 %v3834
      %6346 = vmatpush1.msra.mxu0 %v3833
      %6347 = vmatprep.subr.mxu0 %v3840
      %6348 = vmatpush1.msra.mxu0 %v3839
      %6349 = vmatprep.subr.mxu0 %v3846
      %6350 = vmatpush1.msra.mxu0 %v3845
      %6351 = vmatprep.subr.mxu0 %v3852
      %6352 = vmatpush1.msra.mxu0 %v3851
      %6353 = vmatprep.subr.mxu0 %v3858
      %6354 = vmatpush1.msra.mxu0 %v3857
      %6355 = vmatprep.subr.mxu0 %v3864
      %6356 = vmatpush1.msra.mxu0 %v3863
      %6357 = vmatprep.subr.mxu0 %v3870
      %6358 = vmatpush1.msra.mxu0 %v3869
      %6359 = vmatprep.subr.mxu0 %v3876
      %6360 = vmatpush1.msra.mxu0 %v3875
      %6361 = vmatprep.subr.mxu0 %v3882
      %6362 = vmatpush1.msra.mxu0 %v3881
      %6363 = vmatprep.subr.mxu0 %v3888
      %6364 = vmatpush1.msra.mxu0 %v3887
      %6365 = vmatprep.subr.mxu0 %v3894
      %6366 = vmatpush1.msra.mxu0 %v3893
      %6367 = vmatprep.subr.mxu0 %v3900
      %6368 = vmatpush1.msra.mxu0 %v3899
      %6369 = vmatprep.subr.mxu0 %v3906
      %6370 = vmatpush1.msra.mxu0 %v3905
      %6371 = vmatprep.subr.mxu0 %v3912
      %6372 = vmatpush1.msra.mxu0 %v3911
      %6373 = vmatprep.subr.mxu0 %v3918
      %6374 = vmatpush1.msra.mxu0 %v3917
      %6375 = vmatprep.subr.mxu0 %v3924
      %6376 = vmatpush1.msra.mxu0 %v3923
      %6377 = vmatprep.subr.mxu0 %v3930
      %6378 = vmatpush1.msra.mxu0 %v3929
      %6379 = vmatprep.subr.mxu0 %v3936
      %6380 = vmatpush1.msra.mxu0 %v3935
      %6381 = vmatprep.mubr.f32.mxu0 %v6030
      %6382 = vmatmul.mubr.f32.gmra.mrb[0].mxu0 %v6029
      %v6383 = vpop.f32.mrb[0].mxu0
      %v6384 = vadd.f32 %v6313, %v6383
      %v6385 = vpop.f32.mrb[0].mxu0
      %v6386 = vadd.f32 %v6315, %v6385
      %6387 = vdwg.mxu0
      %6388 = vmatprep.subr.mxu0 %v3942
      %6389 = vmatpush1.msra.mxu0 %v3941
      %6390 = vmatprep.subr.mxu0 %v3948
      %6391 = vmatpush1.msra.mxu0 %v3947
      %6392 = vmatprep.subr.mxu0 %v3954
      %6393 = vmatpush1.msra.mxu0 %v3953
      %6394 = vmatprep.subr.mxu0 %v3960
      %6395 = vmatpush1.msra.mxu0 %v3959
      %6396 = vmatprep.subr.mxu0 %v3966
      %6397 = vmatpush1.msra.mxu0 %v3965
      %6398 = vmatprep.subr.mxu0 %v3972
      %6399 = vmatpush1.msra.mxu0 %v3971
      %6400 = vmatprep.subr.mxu0 %v3978
      %6401 = vmatpush1.msra.mxu0 %v3977
      %6402 = vmatprep.subr.mxu0 %v3984
      %6403 = vmatpush1.msra.mxu0 %v3983
      %6404 = vmatprep.subr.mxu0 %v3990
      %6405 = vmatpush1.msra.mxu0 %v3989
      %6406 = vmatprep.subr.mxu0 %v3996
      %6407 = vmatpush1.msra.mxu0 %v3995
      %6408 = vmatprep.subr.mxu0 %v4002
      %6409 = vmatpush1.msra.mxu0 %v4001
      %6410 = vmatprep.subr.mxu0 %v4008
      %6411 = vmatpush1.msra.mxu0 %v4007
      %6412 = vmatprep.subr.mxu0 %v4014
      %6413 = vmatpush1.msra.mxu0 %v4013
      %6414 = vmatprep.subr.mxu0 %v4020
      %6415 = vmatpush1.msra.mxu0 %v4019
      %6416 = vmatprep.subr.mxu0 %v4026
      %6417 = vmatpush1.msra.mxu0 %v4025
      %6418 = vmatprep.subr.mxu0 %v4032
      %6419 = vmatpush1.msra.mxu0 %v4031
      %6420 = vmatprep.subr.mxu0 %v4038
      %6421 = vmatpush1.msra.mxu0 %v4037
      %6422 = vmatprep.subr.mxu0 %v4044
      %6423 = vmatpush1.msra.mxu0 %v4043
      %6424 = vmatprep.subr.mxu0 %v4050
      %6425 = vmatpush1.msra.mxu0 %v4049
      %6426 = vmatprep.subr.mxu0 %v4056
      %6427 = vmatpush1.msra.mxu0 %v4055
      %6428 = vmatprep.subr.mxu0 %v4062
      %6429 = vmatpush1.msra.mxu0 %v4061
      %6430 = vmatprep.subr.mxu0 %v4068
      %6431 = vmatpush1.msra.mxu0 %v4067
      %6432 = vmatprep.subr.mxu0 %v4074
      %6433 = vmatpush1.msra.mxu0 %v4073
      %6434 = vmatprep.subr.mxu0 %v4080
      %6435 = vmatpush1.msra.mxu0 %v4079
      %6436 = vmatprep.subr.mxu0 %v4086
      %6437 = vmatpush1.msra.mxu0 %v4085
      %6438 = vmatprep.subr.mxu0 %v4092
      %6439 = vmatpush1.msra.mxu0 %v4091
      %6440 = vmatprep.subr.mxu0 %v4098
      %6441 = vmatpush1.msra.mxu0 %v4097
      %6442 = vmatprep.subr.mxu0 %v4104
      %6443 = vmatpush1.msra.mxu0 %v4103
      %6444 = vmatprep.subr.mxu0 %v4110
      %6445 = vmatpush1.msra.mxu0 %v4109
      %6446 = vmatprep.subr.mxu0 %v4116
      %6447 = vmatpush1.msra.mxu0 %v4115
      %6448 = vmatprep.subr.mxu0 %v4122
      %6449 = vmatpush1.msra.mxu0 %v4121
      %6450 = vmatprep.subr.mxu0 %v4128
      %6451 = vmatpush1.msra.mxu0 %v4127
      %6452 = vmatprep.mubr.f32.mxu0 %v6032
      %6453 = vmatmul.mubr.f32.gmra.mrb[0].mxu0 %v6031
      %v6454 = vpop.f32.mrb[0].mxu0
      %v6455 = vadd.f32 %v6384, %v6454
      %v6456 = vpop.f32.mrb[0].mxu0
      %v6457 = vadd.f32 %v6386, %v6456
      %6458 = vdwg.mxu0
      %6459 = vmatprep.subr.mxu0 %v3560
      %6460 = vmatpush1.msra.mxu0 %v3559
      %6461 = vmatprep.subr.mxu0 %v3566
      %6462 = vmatpush1.msra.mxu0 %v3565
      %6463 = vmatprep.subr.mxu0 %v3572
      %6464 = vmatpush1.msra.mxu0 %v3571
      %6465 = vmatprep.subr.mxu0 %v3578
      %6466 = vmatpush1.msra.mxu0 %v3577
      %6467 = vmatprep.subr.mxu0 %v3584
      %6468 = vmatpush1.msra.mxu0 %v3583
      %6469 = vmatprep.subr.mxu0 %v3590
      %6470 = vmatpush1.msra.mxu0 %v3589
      %6471 = vmatprep.subr.mxu0 %v3596
      %6472 = vmatpush1.msra.mxu0 %v3595
      %6473 = vmatprep.subr.mxu0 %v3602
      %6474 = vmatpush1.msra.mxu0 %v3601
      %6475 = vmatprep.subr.mxu0 %v3608
      %6476 = vmatpush1.msra.mxu0 %v3607
      %6477 = vmatprep.subr.mxu0 %v3614
      %6478 = vmatpush1.msra.mxu0 %v3613
      %6479 = vmatprep.subr.mxu0 %v3620
      %6480 = vmatpush1.msra.mxu0 %v3619
      %6481 = vmatprep.subr.mxu0 %v3626
      %6482 = vmatpush1.msra.mxu0 %v3625
      %6483 = vmatprep.subr.mxu0 %v3632
      %6484 = vmatpush1.msra.mxu0 %v3631
      %6485 = vmatprep.subr.mxu0 %v3638
      %6486 = vmatpush1.msra.mxu0 %v3637
      %6487 = vmatprep.subr.mxu0 %v3644
      %6488 = vmatpush1.msra.mxu0 %v3643
      %6489 = vmatprep.subr.mxu0 %v3650
      %6490 = vmatpush1.msra.mxu0 %v3649
      %6491 = vmatprep.subr.mxu0 %v3656
      %6492 = vmatpush1.msra.mxu0 %v3655
      %6493 = vmatprep.subr.mxu0 %v3662
      %6494 = vmatpush1.msra.mxu0 %v3661
      %6495 = vmatprep.subr.mxu0 %v3668
      %6496 = vmatpush1.msra.mxu0 %v3667
      %6497 = vmatprep.subr.mxu0 %v3674
      %6498 = vmatpush1.msra.mxu0 %v3673
      %6499 = vmatprep.subr.mxu0 %v3680
      %6500 = vmatpush1.msra.mxu0 %v3679
      %6501 = vmatprep.subr.mxu0 %v3686
      %6502 = vmatpush1.msra.mxu0 %v3685
      %6503 = vmatprep.subr.mxu0 %v3692
      %6504 = vmatpush1.msra.mxu0 %v3691
      %6505 = vmatprep.subr.mxu0 %v3698
      %6506 = vmatpush1.msra.mxu0 %v3697
      %6507 = vmatprep.subr.mxu0 %v3704
      %6508 = vmatpush1.msra.mxu0 %v3703
      %6509 = vmatprep.subr.mxu0 %v3710
      %6510 = vmatpush1.msra.mxu0 %v3709
      %6511 = vmatprep.subr.mxu0 %v3716
      %6512 = vmatpush1.msra.mxu0 %v3715
      %6513 = vmatprep.subr.mxu0 %v3722
      %6514 = vmatpush1.msra.mxu0 %v3721
      %6515 = vmatprep.subr.mxu0 %v3728
      %6516 = vmatpush1.msra.mxu0 %v3727
      %6517 = vmatprep.subr.mxu0 %v3734
      %6518 = vmatpush1.msra.mxu0 %v3733
      %6519 = vmatprep.subr.mxu0 %v3740
      %6520 = vmatpush1.msra.mxu0 %v3739
      %6521 = vmatprep.subr.mxu0 %v3746
      %6522 = vmatpush1.msra.mxu0 %v3745
      %6523 = vmatprep.mubr.f32.mxu0 %v6028
      %6524 = vmatmul.mubr.f32.gmra.mrb[0].mxu0 %v6027
      %v6525 = vpop.f32.mrb[0].mxu0
      %v6526 = vadd.f32 0.0, %v6525
      %v6527 = vpop.f32.mrb[0].mxu0
      %v6528 = vadd.f32 0.0, %v6527
      %6529 = vdwg.mxu0
      %6530 = vmatprep.subr.mxu0 %v3752
      %6531 = vmatpush1.msra.mxu0 %v3751
      %6532 = vmatprep.subr.mxu0 %v3758
      %6533 = vmatpush1.msra.mxu0 %v3757
      %6534 = vmatprep.subr.mxu0 %v3764
      %6535 = vmatpush1.msra.mxu0 %v3763
      %6536 = vmatprep.subr.mxu0 %v3770
      %6537 = vmatpush1.msra.mxu0 %v3769
      %6538 = vmatprep.subr.mxu0 %v3776
      %6539 = vmatpush1.msra.mxu0 %v3775
      %6540 = vmatprep.subr.mxu0 %v3782
      %6541 = vmatpush1.msra.mxu0 %v3781
      %6542 = vmatprep.subr.mxu0 %v3788
      %6543 = vmatpush1.msra.mxu0 %v3787
      %6544 = vmatprep.subr.mxu0 %v3794
      %6545 = vmatpush1.msra.mxu0 %v3793
      %6546 = vmatprep.subr.mxu0 %v3800
      %6547 = vmatpush1.msra.mxu0 %v3799
      %6548 = vmatprep.subr.mxu0 %v3806
      %6549 = vmatpush1.msra.mxu0 %v3805
      %6550 = vmatprep.subr.mxu0 %v3812
      %6551 = vmatpush1.msra.mxu0 %v3811
      %6552 = vmatprep.subr.mxu0 %v3818
      %6553 = vmatpush1.msra.mxu0 %v3817
      %6554 = vmatprep.subr.mxu0 %v3824
      %6555 = vmatpush1.msra.mxu0 %v3823
      %6556 = vmatprep.subr.mxu0 %v3830
      %6557 = vmatpush1.msra.mxu0 %v3829
      %6558 = vmatprep.subr.mxu0 %v3836
      %6559 = vmatpush1.msra.mxu0 %v3835
      %6560 = vmatprep.subr.mxu0 %v3842
      %6561 = vmatpush1.msra.mxu0 %v3841
      %6562 = vmatprep.subr.mxu0 %v3848
      %6563 = vmatpush1.msra.mxu0 %v3847
      %6564 = vmatprep.subr.mxu0 %v3854
      %6565 = vmatpush1.msra.mxu0 %v3853
      %6566 = vmatprep.subr.mxu0 %v3860
      %6567 = vmatpush1.msra.mxu0 %v3859
      %6568 = vmatprep.subr.mxu0 %v3866
      %6569 = vmatpush1.msra.mxu0 %v3865
      %6570 = vmatprep.subr.mxu0 %v3872
      %6571 = vmatpush1.msra.mxu0 %v3871
      %6572 = vmatprep.subr.mxu0 %v3878
      %6573 = vmatpush1.msra.mxu0 %v3877
      %6574 = vmatprep.subr.mxu0 %v3884
      %6575 = vmatpush1.msra.mxu0 %v3883
      %6576 = vmatprep.subr.mxu0 %v3890
      %6577 = vmatpush1.msra.mxu0 %v3889
      %6578 = vmatprep.subr.mxu0 %v3896
      %6579 = vmatpush1.msra.mxu0 %v3895
      %6580 = vmatprep.subr.mxu0 %v3902
      %6581 = vmatpush1.msra.mxu0 %v3901
      %6582 = vmatprep.subr.mxu0 %v3908
      %6583 = vmatpush1.msra.mxu0 %v3907
      %6584 = vmatprep.subr.mxu0 %v3914
      %6585 = vmatpush1.msra.mxu0 %v3913
      %6586 = vmatprep.subr.mxu0 %v3920
      %6587 = vmatpush1.msra.mxu0 %v3919
      %6588 = vmatprep.subr.mxu0 %v3926
      %6589 = vmatpush1.msra.mxu0 %v3925
      %6590 = vmatprep.subr.mxu0 %v3932
      %6591 = vmatpush1.msra.mxu0 %v3931
      %6592 = vmatprep.subr.mxu0 %v3938
      %6593 = vmatpush1.msra.mxu0 %v3937
      %6594 = vmatprep.mubr.f32.mxu0 %v6030
      %6595 = vmatmul.mubr.f32.gmra.mrb[0].mxu0 %v6029
      %v6596 = vpop.f32.mrb[0].mxu0
      %v6597 = vadd.f32 %v6526, %v6596
      %v6598 = vpop.f32.mrb[0].mxu0
      %v6599 = vadd.f32 %v6528, %v6598
      %6600 = vdwg.mxu0
      %6601 = vmatprep.subr.mxu0 %v3944
      %6602 = vmatpush1.msra.mxu0 %v3943
      %6603 = vmatprep.subr.mxu0 %v3950
      %6604 = vmatpush1.msra.mxu0 %v3949
      %6605 = vmatprep.subr.mxu0 %v3956
      %6606 = vmatpush1.msra.mxu0 %v3955
      %6607 = vmatprep.subr.mxu0 %v3962
      %6608 = vmatpush1.msra.mxu0 %v3961
      %6609 = vmatprep.subr.mxu0 %v3968
      %6610 = vmatpush1.msra.mxu0 %v3967
      %6611 = vmatprep.subr.mxu0 %v3974
      %6612 = vmatpush1.msra.mxu0 %v3973
      %6613 = vmatprep.subr.mxu0 %v3980
      %6614 = vmatpush1.msra.mxu0 %v3979
      %6615 = vmatprep.subr.mxu0 %v3986
      %6616 = vmatpush1.msra.mxu0 %v3985
      %6617 = vmatprep.subr.mxu0 %v3992
      %6618 = vmatpush1.msra.mxu0 %v3991
      %6619 = vmatprep.subr.mxu0 %v3998
      %6620 = vmatpush1.msra.mxu0 %v3997
      %6621 = vmatprep.subr.mxu0 %v4004
      %6622 = vmatpush1.msra.mxu0 %v4003
      %6623 = vmatprep.subr.mxu0 %v4010
      %6624 = vmatpush1.msra.mxu0 %v4009
      %6625 = vmatprep.subr.mxu0 %v4016
      %6626 = vmatpush1.msra.mxu0 %v4015
      %6627 = vmatprep.subr.mxu0 %v4022
      %6628 = vmatpush1.msra.mxu0 %v4021
      %6629 = vmatprep.subr.mxu0 %v4028
      %6630 = vmatpush1.msra.mxu0 %v4027
      %6631 = vmatprep.subr.mxu0 %v4034
      %6632 = vmatpush1.msra.mxu0 %v4033
      %6633 = vmatprep.subr.mxu0 %v4040
      %6634 = vmatpush1.msra.mxu0 %v4039
      %6635 = vmatprep.subr.mxu0 %v4046
      %6636 = vmatpush1.msra.mxu0 %v4045
      %6637 = vmatprep.subr.mxu0 %v4052
      %6638 = vmatpush1.msra.mxu0 %v4051
      %6639 = vmatprep.subr.mxu0 %v4058
      %6640 = vmatpush1.msra.mxu0 %v4057
      %6641 = vmatprep.subr.mxu0 %v4064
      %6642 = vmatpush1.msra.mxu0 %v4063
      %6643 = vmatprep.subr.mxu0 %v4070
      %6644 = vmatpush1.msra.mxu0 %v4069
      %6645 = vmatprep.subr.mxu0 %v4076
      %6646 = vmatpush1.msra.mxu0 %v4075
      %6647 = vmatprep.subr.mxu0 %v4082
      %6648 = vmatpush1.msra.mxu0 %v4081
      %6649 = vmatprep.subr.mxu0 %v4088
      %6650 = vmatpush1.msra.mxu0 %v4087
      %6651 = vmatprep.subr.mxu0 %v4094
      %6652 = vmatpush1.msra.mxu0 %v4093
      %6653 = vmatprep.subr.mxu0 %v4100
      %6654 = vmatpush1.msra.mxu0 %v4099
      %6655 = vmatprep.subr.mxu0 %v4106
      %6656 = vmatpush1.msra.mxu0 %v4105
      %6657 = vmatprep.subr.mxu0 %v4112
      %6658 = vmatpush1.msra.mxu0 %v4111
      %6659 = vmatprep.subr.mxu0 %v4118
      %6660 = vmatpush1.msra.mxu0 %v4117
      %6661 = vmatprep.subr.mxu0 %v4124
      %6662 = vmatpush1.msra.mxu0 %v4123
      %6663 = vmatprep.subr.mxu0 %v4130
      %6664 = vmatpush1.msra.mxu0 %v4129
      %6665 = vmatprep.mubr.f32.mxu0 %v6032
      %6666 = vmatmul.mubr.f32.gmra.mrb[0].mxu0 %v6031
      %v6667 = vpop.f32.mrb[0].mxu0
      %v6668 = vadd.f32 %v6597, %v6667
      %v6669 = vpop.f32.mrb[0].mxu0
      %v6670 = vadd.f32 %v6599, %v6669
      %6671 = vdwg.mxu0
      %v6672 = vadd.f32 %v6242, 1.0
      %v6673 = vadd.f32 %v6244, 1.0
      %v6674 = vadd.f32 %v6455, 1.0
      %v6675 = vadd.f32 %v6457, 1.0
      %v6676 = vadd.f32 %v6668, 1.0
      %v6677 = vadd.f32 %v6670, 1.0
      %v6678 = vrcp.pop %v6672
      %v6679 = vrcp.pop %v6673
      %v6680 = vrcp.pop %v6674
      %v6681 = vrcp.pop %v6675
      %v6682 = vrcp.pop %v6676
      %v6683 = vrcp.pop %v6677
      %v6684 = vmul.f32 %v6242, %v6678
      %v6685 = vmul.f32 %v6244, %v6679
      %v6686 = vmul.f32 %v6455, %v6680
      %v6687 = vmul.f32 %v6457, %v6681
      %v6688 = vmul.f32 %v6668, %v6682
      %v6689 = vmul.f32 %v6670, %v6683
      %v6690 = vmul.f32 %v6684, %v6021
      %v6691 = vmul.f32 %v6685, %v6022
      %v6692 = vmul.f32 %v6686, %v6023
      %v6693 = vmul.f32 %v6687, %v6024
      %v6694 = vmul.f32 %v6688, %v6025
      %v6695 = vmul.f32 %v6689, %v6026
      %v6696 = vadd.f32 %v6242, 1e-08
      %v6697 = vadd.f32 %v6244, 1e-08
      %v6698 = vadd.f32 %v6455, 1e-08
      %v6699 = vadd.f32 %v6457, 1e-08
      %v6700 = vadd.f32 %v6668, 1e-08
      %v6701 = vadd.f32 %v6670, 1e-08
      %v6702 = vrcp.pop %v6696
      %v6703 = vrcp.pop %v6697
      %v6704 = vrcp.pop %v6698
      %v6705 = vrcp.pop %v6699
      %v6706 = vrcp.pop %v6700
      %v6707 = vrcp.pop %v6701
      %v6708 = vmul.f32 %v6690, %v6702
      %v6709 = vmul.f32 %v6691, %v6703
      %v6710 = vmul.f32 %v6692, %v6704
      %v6711 = vmul.f32 %v6693, %v6705
      %v6712 = vmul.f32 %v6694, %v6706
      %v6713 = vmul.f32 %v6695, %v6707
      %v6720 = vcombine.low %v6708, %v6709
      %v6721 = vcombine.low %v6710, %v6711
      %v6722 = vcombine.low %v6712, %v6713
      %v6724 = vunpack.c.l.s4 1966171168
      %v6725 = vunpack.c.0.s8 %v6724
      %v6726 = vlaneseq
      %v6727 = vshrl.u32 %v6726, 7
      %v6728 = vsub.s32 %v6725, %v6727
      %v6729 = vrot.slane %v6720, %v6728
      %v6731 = vunpack.c.l.s4 1966171168
      %v6732 = vunpack.c.0.s8 %v6731
      %v6733 = vlaneseq
      %v6734 = vshrl.u32 %v6733, 7
      %v6735 = vsub.s32 %v6732, %v6734
      %v6736 = vrot.slane %v6721, %v6735
      %v6738 = vunpack.c.l.s4 1966171168
      %v6739 = vunpack.c.0.s8 %v6738
      %v6740 = vlaneseq
      %v6741 = vshrl.u32 %v6740, 7
      %v6742 = vsub.s32 %v6739, %v6741
      %v6743 = vrot.slane %v6722, %v6742
      %v6744 = vcombine.low %v6729, %v6736
      %v6746 = vunpack.c.l.s4 1966171168
      %v6747 = vunpack.c.0.s8 %v6746
      %v6748 = vlaneseq
      %v6749 = vshrl.u32 %v6748, 7
      %v6750 = vsub.s32 %v6747, %v6749
      %v6751 = vrot.slane %v6744, %v6750
      %v6753 = vunpack.c.l.s4 1966171168
      %v6754 = vunpack.c.0.s8 %v6753
      %v6755 = vlaneseq
      %v6756 = vshrl.u32 %v6755, 7
      %v6757 = vsub.s32 %v6754, %v6756
      %v6758 = vrot.slane %v6743, %v6757
      %v6759 = vcombine.low %v6751, %v6758
      %v6761 = vlaneseq
      %vm6762 = vcmp.ge.s32.totalorder %v6761, 0
      %vm6763 = vcmp.lt.s32.totalorder %v6761, 768
      %vm6764 = vmand %vm6762, %vm6763
      %6765 = vst.msk [vmem:[%s432] sm:$0x3f] %vm6764, %v6759
      %p6766 = scmp.lt.s32.totalorder %s24, 1
      %s6767 = scalar_select %p6766, %s24, 1
      %s6768 = smul.addr %s6767, 6
      %s6769 = scalar_lea.vmem %s13, %s6768
      // Predicated region
      $region73: #{timecaps_forward.1} parent=71 // pred_check
        %p6770 = pneg %p320
      $region74: #{timecaps_forward.1} parent=71 // pred_check_branch
        %6772 = sbr.rel (%p6770) target = $region76
      $region75: #{timecaps_forward.1} parent=71 // pred_region
        _
      $region76: #{timecaps_forward.1} parent=71 // pred_fallthru
        _
    $region72: #{timecaps_forward.1} parent=5 // pred_fallthru
      _
    %p6773 = scmp.le.s32.totalorder 2, %s19
    // Predicated region
    $region77: #{timecaps_forward.1} parent=5 // pred_check
      %p6774 = pneg %p6773
    $region78: #{timecaps_forward.1} parent=5 // pred_check_branch
      %6776 = sbr.rel (%p6774) target = $region80
    $region79: #{timecaps_forward.1} parent=5 // pred_region
      %s6777 = ssub.s32 %s19, 2
      // Predicated region
      $region81: #{timecaps_forward.1} parent=79 // pred_check
        %p6778 = pneg %p326
      $region82: #{timecaps_forward.1} parent=79 // pred_check_branch
        %6780 = sbr.rel (%p6778) target = $region84
      $region83: #{timecaps_forward.1} parent=79 // pred_region
        %p6781 = scmp.lt.s32.totalorder %s25, 1
        %s6782 = scalar_select %p6781, %s25, 1
        %s6783 = smul.addr %s6782, 6
        %s6784 = scalar_lea.vmem %s13, %s6783
      $region84: #{timecaps_forward.1} parent=79 // pred_fallthru
        _
    $region80: #{timecaps_forward.1} parent=5 // pred_fallthru
      _
  $region6: #{timecaps_forward.1} parent=0 // loop_footer
    %s23 = sadd.s32 1, %s19
  $region7: #{timecaps_forward.1} parent=0 // loop_footer_branch
    %18 = sbr.rel target = $region3
  $region8: #{timecaps_forward.1} parent=0 // loop_exit
    _

</llo_original>
